<compile_context>
chip_gen: v6e
topology: v6e:2x2x1
jax: 0.10.0
libtpu: 0.0.40
codegen_flags: <defaults>
</compile_context>

<pallas_src>
import math

import numpy as np
import jax
import jax.numpy as jnp
from jax import lax
from jax.experimental import pallas as pl
from jax.experimental.pallas import tpu as pltpu

# ------------------------- model configuration ------------------------------
TRAIN_PERIODS = 56
STEPS = 15
N_MAX_SEQ = TRAIN_PERIODS + STEPS                                  # 71
INPUT_DIM = 4 + 6 + 4 + 8 + 8 + 2 + 5 + 5 + 5 + 3 + 10 + 2 + 2     # 64
DECODE_DIM = INPUT_DIM + STEPS - 1 - 1                             # 77 (propagate=False)

D_MODEL = 64
N_HEAD = 2
D_K = 32
D_V = 32
D_INNER = 128
N_LAYERS = 2
LN_EPS = 1e-3

L_E = TRAIN_PERIODS          # encoder sequence length (56)
S_PAD = 16                   # decoder seq padded 15 -> 16 (sublane-aligned rows)
DEC_PAD = 128                # decoder feature dim padded 77 -> 128 (lane-aligned K)
QKV = 3 * D_MODEL            # 192 (fused Q|K|V projection width)
QKV_PAD = 256                # fused projection padded to 2 full lane tiles
HEAD_PAD = 128               # lane-dense head output width (real output = col 0)

# embedding tables: name -> (num_embeddings, dim); max_norm == dim for every table
EMB_SPECS = {
    "item_class": (337, 8),
    "item_family": (33, 8),
    "store_type": (5, 2),
    "store_cluster": (17, 5),
    "store": (54, 5),
    "store_city": (22, 5),
    "day": (31, 10),
    "month": (6, 2),
    "year": (3, 2),
    "weekday": (7, 3),
}
EMB_ORDER = ["item_class", "item_family", "store_type", "store_cluster",
             "store", "store_city", "day", "month", "year", "weekday"]
EMB_COL = {name: 4 + i for i, name in enumerate(EMB_ORDER)}


# ---------------------------- fused Pallas kernel ----------------------------
def _transformer_kernel(*refs):
    (xe_ref, xd_ref, pose_ref, posd_ref,
     emap_w, dmap_w,
     e_qkvw, e_qkvb, e_pow, e_pob, e_ln1a, e_ln1b,
     e_w1, e_b1, e_w2, e_b2, e_ln2a, e_ln2b,
     d_sqkvw, d_sqkvb, d_spow, d_spob, d_ln1a, d_ln1b,
     d_cqkvw, d_cqkvb, d_cpow, d_cpob, d_ln2a, d_ln2b,
     d_w1, d_b1, d_w2, d_b2, d_ln3a, d_ln3b,
     s_w1, s_b1, s_lna, s_lnb, s_w2, s_b2,
     o_w1, o_b1, o_lna, o_lnb, o_w2, o_b2,
     step_out, reg_out,
     q_scr, kv_scr) = refs

    f32 = jnp.float32
    bf16 = jnp.bfloat16
    scale = 1.0 / math.sqrt(D_K)

    def mm(a, b):
        # bf16 operands on the MXU, f32 accumulation.
        return jnp.dot(a.astype(bf16), b.astype(bf16), preferred_element_type=f32)

    def mm_t(a, b):
        # a @ b.T via dot_general contracting last dims (no explicit XLU transpose).
        return lax.dot_general(a.astype(bf16), b.astype(bf16),
                               (((1,), (1,)), ((), ())),
                               preferred_element_type=f32)

    def layer_norm(x, a, b):
        # reference LayerNormalization: unbiased std (d-1 divisor), eps added to
        # the STD (not variance) -- intentionally different from torch.nn.LayerNorm.
        mu = jnp.mean(x, axis=-1, keepdims=True)
        diff = x - mu
        var = jnp.sum(diff * diff, axis=-1, keepdims=True) * (1.0 / (D_MODEL - 1))
        return diff / (jnp.sqrt(var) + LN_EPS) * a + b

    def softmax_rows(s):
        s = s - jnp.max(s, axis=-1, keepdims=True)
        e = jnp.exp(s)
        return e * pl.reciprocal(jnp.sum(e, axis=-1, keepdims=True), approx=True)

    def attention(lq, lk, kv_ref, kv_off, bias):
        # Per-head Q/K/V windows are static, lane-aligned scratch-ref reads.
        # Head outputs stay in registers and are concatenated for the output
        # projection (no VMEM bounce).
        outs = []
        for h in range(N_HEAD):
            q = q_scr[0:lq, h * D_K:(h + 1) * D_K]
            k = kv_ref[0:lk, kv_off + h * D_K:kv_off + (h + 1) * D_K]
            v = kv_ref[0:lk, kv_off + D_MODEL + h * D_V:kv_off + D_MODEL + (h + 1) * D_V]
            s = mm_t(q, k) * scale
            if bias is not None:
                s = s + bias
            outs.append(mm(softmax_rows(s), v))
        return jnp.concatenate(outs, axis=-1)                        # (lq, 64)

    def self_attention(x2d, lq, w_ref, b_ref, l, pw, pb, bias):
        q_scr[0:lq, :] = mm(x2d, w_ref[l]) + b_ref[l]                # fused Q|K|V|pad
        o = attention(lq, lq, q_scr, D_MODEL, bias)
        return mm(o, pw) + pb

    def cross_attention(xq, xkv, lq, lk, w_ref, b_ref, l, pw, pb):
        w = w_ref[l]
        b = b_ref[l]
        # query side: Q slice only (64 cols); enc side: K|V slice only (128 cols)
        q_scr[0:lq, 0:D_MODEL] = mm(xq, w[:, 0:D_MODEL]) + b[:, 0:D_MODEL]
        kv_scr[0:lk, :] = mm(xkv, w[:, D_MODEL:3 * D_MODEL]) + b[:, D_MODEL:3 * D_MODEL]
        o = attention(lq, lk, kv_scr, 0, None)
        return mm(o, pw) + pb

    def ffn(x2d, w1, b1, w2, b2):
        h = jnp.maximum(mm(x2d, w1) + b1, 0.0)
        return mm(h, w2) + b2

    def head(x2d, w1, b1, lna, lnb, w2, b2):
        h = jnp.maximum(mm(x2d, w1) + b1, 0.0)
        h = layer_norm(h, lna, lnb)
        return mm(h, w2) + b2                                        # lane-dense (.,128)

    # causal (subsequent-position) additive mask, built ONCE per grid step
    rows_i = lax.broadcasted_iota(jnp.int32, (S_PAD, S_PAD), 0)
    cols_i = lax.broadcasted_iota(jnp.int32, (S_PAD, S_PAD), 1)
    causal_bias = jnp.where(cols_i > rows_i, f32(-1e30), f32(0.0))

    # ------------------------------ encoder ----------------------------------
    # (this grid step processes one batch element; map bias folded into pos)
    enc = mm(xe_ref[...], emap_w[...]) + pose_ref[...]               # (56, 64)
    for l in range(N_LAYERS):
        a = self_attention(enc, L_E, e_qkvw, e_qkvb, l, e_pow[l], e_pob[l], None)
        enc = layer_norm(a + enc, e_ln1a[l], e_ln1b[l])
        f = ffn(enc, e_w1[l], e_b1[l], e_w2[l], e_b2[l])
        enc = layer_norm(f + enc, e_ln2a[l], e_ln2b[l])

    # step-one head: only the last 8-row sublane tile (rows 48..55) is needed;
    # row 7 (== enc row 55) and column 0 are selected outside the kernel.
    step_out[...] = head(enc[L_E - 8:L_E, :], s_w1[...], s_b1[...],
                         s_lna[...], s_lnb[...], s_w2[...], s_b2[...])

    # ------------------------------ decoder ----------------------------------
    dec = mm(xd_ref[...], dmap_w[...]) + posd_ref[...]               # (16, 64)
    for l in range(N_LAYERS):
        a = self_attention(dec, S_PAD, d_sqkvw, d_sqkvb, l, d_spow[l], d_spob[l],
                           causal_bias)
        dec = layer_norm(a + dec, d_ln1a[l], d_ln1b[l])
        a2 = cross_attention(dec, enc, S_PAD, L_E, d_cqkvw, d_cqkvb, l,
                             d_cpow[l], d_cpob[l])
        dec = layer_norm(a2 + dec, d_ln2a[l], d_ln2b[l])
        f = ffn(dec, d_w1[l], d_b1[l], d_w2[l], d_b2[l])
        dec = layer_norm(f + dec, d_ln3a[l], d_ln3b[l])

    # output head over every (padded) decoder row; pad row / pad cols dropped outside.
    reg_out[...] = head(dec, o_w1[...], o_b1[...], o_lna[...], o_lnb[...],
                        o_w2[...], o_b2[...])


# ------------------------------ preprocess_x ---------------------------------
def _emb_lookup(table, idx, max_norm):
    rows = jnp.take(table, idx, axis=0)
    norm = jnp.sqrt(jnp.sum(rows * rows, axis=-1, keepdims=True))
    scale = jnp.minimum(1.0, max_norm / jnp.maximum(norm, 1e-7))   # nn.Embedding max_norm
    return rows * scale


def preprocess_x(p, x, x_d, x_i):
    B = x.shape[0]
    embs = [_emb_lookup(p["emb"][n], x_i[:, :, EMB_COL[n]], float(EMB_SPECS[n][1]))
            for n in EMB_ORDER]
    emb = jnp.concatenate(embs, axis=2)                            # (B, 71, 50)

    x_d_enc = jnp.broadcast_to(x_d[:, None, :], (B, TRAIN_PERIODS, x_d.shape[1]))
    x_encode = jnp.concatenate([
        x[:, :TRAIN_PERIODS, :2],
        x[:, :TRAIN_PERIODS, 2:4],
        x_d_enc,
        x_i[:, :TRAIN_PERIODS, :2].astype(jnp.float32),
        x_i[:, :TRAIN_PERIODS, 2:4].astype(jnp.float32),
        emb[:, :TRAIN_PERIODS, :],
    ], axis=2)                                                     # (B, 56, 64)

    step_idx = jnp.broadcast_to(jnp.eye(STEPS, dtype=jnp.float32)[None], (B, STEPS, STEPS))
    x_d_dec = jnp.broadcast_to(x_d[:, None, :], (B, STEPS, x_d.shape[1]))
    x_decode = jnp.concatenate([
        x[:, TRAIN_PERIODS:, 1:2],                                 # index_select [1, 3] (propagate=False)
        x[:, TRAIN_PERIODS:, 3:4],
        x_d_dec,
        emb[:, TRAIN_PERIODS:, :],
        x_i[:, TRAIN_PERIODS:, :2].astype(jnp.float32),
        x_i[:, TRAIN_PERIODS:, 2:4].astype(jnp.float32),
        step_idx,
    ], axis=2)                                                     # (B, 15, 77)
    return x_encode, x_decode


# --------------------------------- forward -----------------------------------
def _pad_last(a, new_width):
    return jnp.pad(a, [(0, 0)] * (a.ndim - 1) + [(0, new_width - a.shape[-1])])


def _prep_stack(stk, weight_idx, qkv_idx):
    # 3-D stacked weights pass through (QKV weights padded 192->256);
    # 2-D stacked biases / LN params -> (L, 1, N)
    out = []
    for i, a in enumerate(stk):
        if i in qkv_idx:
            a = _pad_last(a, QKV_PAD)
        if i not in weight_idx:
            a = a[:, None, :]
        out.append(a)
    return out


def _prep_head(h):
    w1, b1, lna, lnb, w2, b2 = h
    w2p = _pad_last(w2, HEAD_PAD)                                  # (64,1) -> (64,128)
    b2p = _pad_last(b2, HEAD_PAD)                                  # (1,)   -> (128,)
    return [w1, b1[None, :], lna[None, :], lnb[None, :], w2p, b2p[None, :]]


def forward(p, x, x_d, x_i):
    B = x.shape[0]
    x_encode, x_decode = preprocess_x(p, x, x_d, x_i)              # (B,56,64), (B,15,77)

    # pad decoder: seq 15->16 (aligned per-batch row slabs), features 77->128
    # (aligned matmul K).  Padding is inert: zero features x zero weight rows,
    # pad key row masked by the causal mask, pad outputs dropped.
    x_dec_pad = jnp.zeros((B, S_PAD, DEC_PAD), jnp.float32)
    x_dec_pad = x_dec_pad.at[:, :STEPS, :DECODE_DIM].set(x_decode)
    dmap_w_pad = jnp.zeros((DEC_PAD, D_MODEL), jnp.float32).at[:DECODE_DIM].set(p["dec_map_w"])

    # positional encodings with the mapping biases pre-folded in (saves two
    # per-row VPU adds on the kernel entry chain).  src_pos = arange(56),
    # tgt_pos = arange(15); table row 0 is the zero "padding" row.
    pos_e = p["pos_table"][:TRAIN_PERIODS] + p["enc_map_b"][None, :]          # (56, 64)
    pos_d = (jnp.zeros((S_PAD, D_MODEL), jnp.float32)
             .at[:STEPS].set(p["pos_table"][:STEPS])
             + p["dec_map_b"][None, :])                                       # (16, 64)

    enc_in = x_encode.reshape(B * TRAIN_PERIODS, INPUT_DIM)
    dec_in = x_dec_pad.reshape(B * S_PAD, DEC_PAD)

    args = [enc_in, dec_in, pos_e, pos_d, p["enc_map_w"], dmap_w_pad,
            *_prep_stack(p["encoder"], {0, 2, 6, 8}, {0, 1}),
            *_prep_stack(p["decoder"], {0, 2, 6, 8, 12, 14}, {0, 1, 6, 7}),
            *_prep_head(p["step_one"]),
            *_prep_head(p["output"])]

    def const_spec(a):
        nd = a.ndim

        def imap(b):
            return (0,) * nd

        return pl.BlockSpec(a.shape, imap)

    in_specs = ([pl.BlockSpec((L_E, INPUT_DIM), lambda b: (b, 0)),
                 pl.BlockSpec((S_PAD, DEC_PAD), lambda b: (b, 0))]
                + [const_spec(a) for a in args[2:]])

    step_all, reg_all = pl.pallas_call(
        _transformer_kernel,
        out_shape=(jax.ShapeDtypeStruct((B * 8, HEAD_PAD), jnp.float32),
                   jax.ShapeDtypeStruct((B * S_PAD, HEAD_PAD), jnp.float32)),
        grid_spec=pltpu.PrefetchScalarGridSpec(
            num_scalar_prefetch=0,
            grid=(B,),
            in_specs=in_specs,
            out_specs=(pl.BlockSpec((8, HEAD_PAD), lambda b: (b, 0)),
                       pl.BlockSpec((S_PAD, HEAD_PAD), lambda b: (b, 0))),
            scratch_shapes=[pltpu.VMEM((L_E, QKV_PAD), jnp.float32),      # fused Q|K|V slab
                            pltpu.VMEM((L_E, 2 * D_MODEL), jnp.float32)]  # cross-attn K|V slab
        ),
        compiler_params=pltpu.CompilerParams(
            dimension_semantics=("parallel",),
            vmem_limit_bytes=32 * 1024 * 1024),
    )(*args)

    step_one = step_all.reshape(B, 8, HEAD_PAD)[:, 7, 0:1]         # enc row 55, real col 0
    reg = reg_all.reshape(B, S_PAD, HEAD_PAD)[:, :STEPS, 0]        # drop pad row + pad cols
    return jnp.concatenate([step_one, reg], axis=1)                # (B, 16)


# ----------------------------- parameter init ---------------------------------
def position_encoding_table(n_position, d):
    pos = np.arange(n_position)[:, None].astype(np.float64)
    j = np.arange(d)[None, :].astype(np.float64)
    angle = pos / np.power(10000.0, 2.0 * (j // 2) / d)
    table = np.zeros((n_position, d), dtype=np.float64)
    table[:, 0::2] = np.sin(angle[:, 0::2])
    table[:, 1::2] = np.cos(angle[:, 1::2])
    table[0, :] = 0.0                                              # padding row (pos 0)
    return jnp.asarray(table, jnp.float32)


def _dense(key, fan_in, fan_out):
    w = jax.random.normal(key, (fan_in, fan_out), jnp.float32) / jnp.sqrt(jnp.float32(fan_in))
    return w, jnp.zeros((fan_out,), jnp.float32)


def _ln(d):
    return jnp.ones((d,), jnp.float32), jnp.zeros((d,), jnp.float32)


def init_params(key):
    keys = iter(jax.random.split(key, 512))
    p = {}
    p["emb"] = {name: jax.random.normal(next(keys), (n, d), jnp.float32) * 0.1
                for name, (n, d) in EMB_SPECS.items()}
    p["enc_map_w"], p["enc_map_b"] = _dense(next(keys), INPUT_DIM, D_MODEL)
    p["dec_map_w"], p["dec_map_b"] = _dense(next(keys), DECODE_DIM, D_MODEL)

    def attn_pack():
        wq, _ = _dense(next(keys), D_MODEL, N_HEAD * D_K)
        wk, _ = _dense(next(keys), D_MODEL, N_HEAD * D_K)
        wv, _ = _dense(next(keys), D_MODEL, N_HEAD * D_V)
        po_w, po_b = _dense(next(keys), N_HEAD * D_V, D_MODEL)
        return (jnp.concatenate([wq, wk, wv], axis=1),             # fused Q|K|V (64,192)
                jnp.zeros((QKV,), jnp.float32), po_w, po_b)

    enc_layers = []
    for _ in range(N_LAYERS):
        qkv_w, qkv_b, po_w, po_b = attn_pack()
        w1, b1 = _dense(next(keys), D_MODEL, D_INNER)
        w2, b2 = _dense(next(keys), D_INNER, D_MODEL)
        ln1a, ln1b = _ln(D_MODEL)
        ln2a, ln2b = _ln(D_MODEL)
        enc_layers.append((qkv_w, qkv_b, po_w, po_b, ln1a, ln1b,
                           w1, b1, w2, b2, ln2a, ln2b))
    p["encoder"] = tuple(jnp.stack(a) for a in zip(*enc_layers))

    dec_layers = []
    for _ in range(N_LAYERS):
        s_qkv_w, s_qkv_b, s_po_w, s_po_b = attn_pack()
        c_qkv_w, c_qkv_b, c_po_w, c_po_b = attn_pack()
        w1, b1 = _dense(next(keys), D_MODEL, D_INNER)
        w2, b2 = _dense(next(keys), D_INNER, D_MODEL)
        ln1a, ln1b = _ln(D_MODEL)
        ln2a, ln2b = _ln(D_MODEL)
        ln3a, ln3b = _ln(D_MODEL)
        dec_layers.append((s_qkv_w, s_qkv_b, s_po_w, s_po_b, ln1a, ln1b,
                           c_qkv_w, c_qkv_b, c_po_w, c_po_b, ln2a, ln2b,
                           w1, b1, w2, b2, ln3a, ln3b))
    p["decoder"] = tuple(jnp.stack(a) for a in zip(*dec_layers))

    def head():
        w1, b1 = _dense(next(keys), D_MODEL, D_MODEL)
        lna, lnb = _ln(D_MODEL)
        w2, b2 = _dense(next(keys), D_MODEL, 1)
        return (w1, b1, lna, lnb, w2, b2)

    p["step_one"] = head()
    p["output"] = head()
    p["pos_table"] = position_encoding_table(N_MAX_SEQ + 1, D_MODEL)
    return p


# --------------------------------- main ---------------------------------------
if __name__ == "__main__":
    key = jax.random.PRNGKey(0)
    k_param, k_x, k_xd, k_xi = jax.random.split(key, 4)

    B = 2
    SEQ = TRAIN_PERIODS + STEPS                                    # 71
    params = init_params(k_param)

    x = jax.random.normal(k_x, (B, SEQ, 4), jnp.float32)
    x_d = jax.random.normal(k_xd, (B, 6), jnp.float32)
    # x_i: first 4 cols are numeric features used as floats; cols 4..13 are category ids
    col_max = jnp.array([6, 6, 6, 6, 337, 33, 5, 17, 54, 22, 31, 6, 3, 7], dtype=jnp.int32)
    x_i = jax.random.randint(k_xi, (B, SEQ, 14), 0, 1_000_000, dtype=jnp.int32) % col_max

    out = jax.jit(forward)(params, x, x_d, x_i)
    out = jax.block_until_ready(out)

    assert out.shape == (B, STEPS + 1), out.shape                  # (2, 16)
    assert bool(jnp.all(jnp.isfinite(out)))
    print("KERNEL_OK")
</pallas_src>

<mosaic_0001>
module attributes {stable_mosaic.version = 11 : i64} {
  func.func @_transformer_kernel(%arg0: i32, %arg1: memref<56x64xf32, #tpu.memory_space<vmem>>, %arg2: memref<16x128xf32, #tpu.memory_space<vmem>>, %arg3: memref<56x64xf32, #tpu.memory_space<vmem>>, %arg4: memref<16x64xf32, #tpu.memory_space<vmem>>, %arg5: memref<64x64xf32, #tpu.memory_space<vmem>>, %arg6: memref<128x64xf32, #tpu.memory_space<vmem>>, %arg7: memref<2x64x256xf32, #tpu.memory_space<vmem>>, %arg8: memref<2x1x256xf32, #tpu.memory_space<vmem>>, %arg9: memref<2x64x64xf32, #tpu.memory_space<vmem>>, %arg10: memref<2x1x64xf32, #tpu.memory_space<vmem>>, %arg11: memref<2x1x64xf32, #tpu.memory_space<vmem>>, %arg12: memref<2x1x64xf32, #tpu.memory_space<vmem>>, %arg13: memref<2x64x128xf32, #tpu.memory_space<vmem>>, %arg14: memref<2x1x128xf32, #tpu.memory_space<vmem>>, %arg15: memref<2x128x64xf32, #tpu.memory_space<vmem>>, %arg16: memref<2x1x64xf32, #tpu.memory_space<vmem>>, %arg17: memref<2x1x64xf32, #tpu.memory_space<vmem>>, %arg18: memref<2x1x64xf32, #tpu.memory_space<vmem>>, %arg19: memref<2x64x256xf32, #tpu.memory_space<vmem>>, %arg20: memref<2x1x256xf32, #tpu.memory_space<vmem>>, %arg21: memref<2x64x64xf32, #tpu.memory_space<vmem>>, %arg22: memref<2x1x64xf32, #tpu.memory_space<vmem>>, %arg23: memref<2x1x64xf32, #tpu.memory_space<vmem>>, %arg24: memref<2x1x64xf32, #tpu.memory_space<vmem>>, %arg25: memref<2x64x256xf32, #tpu.memory_space<vmem>>, %arg26: memref<2x1x256xf32, #tpu.memory_space<vmem>>, %arg27: memref<2x64x64xf32, #tpu.memory_space<vmem>>, %arg28: memref<2x1x64xf32, #tpu.memory_space<vmem>>, %arg29: memref<2x1x64xf32, #tpu.memory_space<vmem>>, %arg30: memref<2x1x64xf32, #tpu.memory_space<vmem>>, %arg31: memref<2x64x128xf32, #tpu.memory_space<vmem>>, %arg32: memref<2x1x128xf32, #tpu.memory_space<vmem>>, %arg33: memref<2x128x64xf32, #tpu.memory_space<vmem>>, %arg34: memref<2x1x64xf32, #tpu.memory_space<vmem>>, %arg35: memref<2x1x64xf32, #tpu.memory_space<vmem>>, %arg36: memref<2x1x64xf32, #tpu.memory_space<vmem>>, %arg37: memref<64x64xf32, #tpu.memory_space<vmem>>, %arg38: memref<1x64xf32, #tpu.memory_space<vmem>>, %arg39: memref<1x64xf32, #tpu.memory_space<vmem>>, %arg40: memref<1x64xf32, #tpu.memory_space<vmem>>, %arg41: memref<64x128xf32, #tpu.memory_space<vmem>>, %arg42: memref<1x128xf32, #tpu.memory_space<vmem>>, %arg43: memref<64x64xf32, #tpu.memory_space<vmem>>, %arg44: memref<1x64xf32, #tpu.memory_space<vmem>>, %arg45: memref<1x64xf32, #tpu.memory_space<vmem>>, %arg46: memref<1x64xf32, #tpu.memory_space<vmem>>, %arg47: memref<64x128xf32, #tpu.memory_space<vmem>>, %arg48: memref<1x128xf32, #tpu.memory_space<vmem>>, %arg49: memref<8x128xf32, #tpu.memory_space<vmem>>, %arg50: memref<16x128xf32, #tpu.memory_space<vmem>>, %arg51: memref<56x256xf32, #tpu.memory_space<vmem>>, %arg52: memref<56x128xf32, #tpu.memory_space<vmem>>) attributes {dimension_semantics = [#tpu.dimension_semantics<parallel>], iteration_bounds = array<i64: 2>, scalar_prefetch = 0 : i64, scratch_operands = 2 : i64, tpu.core_type = #tpu.core_type<tc>, window_params = [{transform_indices = @transform_0, window_bounds = array<i64: 56, 64>}, {transform_indices = @transform_1, window_bounds = array<i64: 16, 128>}, {pipeline_mode = #tpu.pipeline_mode<synchronous>, transform_indices = @transform_2, window_bounds = array<i64: 56, 64>}, {pipeline_mode = #tpu.pipeline_mode<synchronous>, transform_indices = @transform_3, window_bounds = array<i64: 16, 64>}, {pipeline_mode = #tpu.pipeline_mode<synchronous>, transform_indices = @transform_4, window_bounds = array<i64: 64, 64>}, {pipeline_mode = #tpu.pipeline_mode<synchronous>, transform_indices = @transform_5, window_bounds = array<i64: 128, 64>}, {pipeline_mode = #tpu.pipeline_mode<synchronous>, transform_indices = @transform_6, window_bounds = array<i64: 2, 64, 256>}, {pipeline_mode = #tpu.pipeline_mode<synchronous>, transform_indices = @transform_7, window_bounds = array<i64: 2, 1, 256>}, {pipeline_mode = #tpu.pipeline_mode<synchronous>, transform_indices = @transform_8, window_bounds = array<i64: 2, 64, 64>}, {pipeline_mode = #tpu.pipeline_mode<synchronous>, transform_indices = @transform_9, window_bounds = array<i64: 2, 1, 64>}, {pipeline_mode = #tpu.pipeline_mode<synchronous>, transform_indices = @transform_10, window_bounds = array<i64: 2, 1, 64>}, {pipeline_mode = #tpu.pipeline_mode<synchronous>, transform_indices = @transform_11, window_bounds = array<i64: 2, 1, 64>}, {pipeline_mode = #tpu.pipeline_mode<synchronous>, transform_indices = @transform_12, window_bounds = array<i64: 2, 64, 128>}, {pipeline_mode = #tpu.pipeline_mode<synchronous>, transform_indices = @transform_13, window_bounds = array<i64: 2, 1, 128>}, {pipeline_mode = #tpu.pipeline_mode<synchronous>, transform_indices = @transform_14, window_bounds = array<i64: 2, 128, 64>}, {pipeline_mode = #tpu.pipeline_mode<synchronous>, transform_indices = @transform_15, window_bounds = array<i64: 2, 1, 64>}, {pipeline_mode = #tpu.pipeline_mode<synchronous>, transform_indices = @transform_16, window_bounds = array<i64: 2, 1, 64>}, {pipeline_mode = #tpu.pipeline_mode<synchronous>, transform_indices = @transform_17, window_bounds = array<i64: 2, 1, 64>}, {pipeline_mode = #tpu.pipeline_mode<synchronous>, transform_indices = @transform_18, window_bounds = array<i64: 2, 64, 256>}, {pipeline_mode = #tpu.pipeline_mode<synchronous>, transform_indices = @transform_19, window_bounds = array<i64: 2, 1, 256>}, {pipeline_mode = #tpu.pipeline_mode<synchronous>, transform_indices = @transform_20, window_bounds = array<i64: 2, 64, 64>}, {pipeline_mode = #tpu.pipeline_mode<synchronous>, transform_indices = @transform_21, window_bounds = array<i64: 2, 1, 64>}, {pipeline_mode = #tpu.pipeline_mode<synchronous>, transform_indices = @transform_22, window_bounds = array<i64: 2, 1, 64>}, {pipeline_mode = #tpu.pipeline_mode<synchronous>, transform_indices = @transform_23, window_bounds = array<i64: 2, 1, 64>}, {pipeline_mode = #tpu.pipeline_mode<synchronous>, transform_indices = @transform_24, window_bounds = array<i64: 2, 64, 256>}, {pipeline_mode = #tpu.pipeline_mode<synchronous>, transform_indices = @transform_25, window_bounds = array<i64: 2, 1, 256>}, {pipeline_mode = #tpu.pipeline_mode<synchronous>, transform_indices = @transform_26, window_bounds = array<i64: 2, 64, 64>}, {pipeline_mode = #tpu.pipeline_mode<synchronous>, transform_indices = @transform_27, window_bounds = array<i64: 2, 1, 64>}, {pipeline_mode = #tpu.pipeline_mode<synchronous>, transform_indices = @transform_28, window_bounds = array<i64: 2, 1, 64>}, {pipeline_mode = #tpu.pipeline_mode<synchronous>, transform_indices = @transform_29, window_bounds = array<i64: 2, 1, 64>}, {pipeline_mode = #tpu.pipeline_mode<synchronous>, transform_indices = @transform_30, window_bounds = array<i64: 2, 64, 128>}, {pipeline_mode = #tpu.pipeline_mode<synchronous>, transform_indices = @transform_31, window_bounds = array<i64: 2, 1, 128>}, {pipeline_mode = #tpu.pipeline_mode<synchronous>, transform_indices = @transform_32, window_bounds = array<i64: 2, 128, 64>}, {pipeline_mode = #tpu.pipeline_mode<synchronous>, transform_indices = @transform_33, window_bounds = array<i64: 2, 1, 64>}, {pipeline_mode = #tpu.pipeline_mode<synchronous>, transform_indices = @transform_34, window_bounds = array<i64: 2, 1, 64>}, {pipeline_mode = #tpu.pipeline_mode<synchronous>, transform_indices = @transform_35, window_bounds = array<i64: 2, 1, 64>}, {pipeline_mode = #tpu.pipeline_mode<synchronous>, transform_indices = @transform_36, window_bounds = array<i64: 64, 64>}, {pipeline_mode = #tpu.pipeline_mode<synchronous>, transform_indices = @transform_37, window_bounds = array<i64: 1, 64>}, {pipeline_mode = #tpu.pipeline_mode<synchronous>, transform_indices = @transform_38, window_bounds = array<i64: 1, 64>}, {pipeline_mode = #tpu.pipeline_mode<synchronous>, transform_indices = @transform_39, window_bounds = array<i64: 1, 64>}, {pipeline_mode = #tpu.pipeline_mode<synchronous>, transform_indices = @transform_40, window_bounds = array<i64: 64, 128>}, {pipeline_mode = #tpu.pipeline_mode<synchronous>, transform_indices = @transform_41, window_bounds = array<i64: 1, 128>}, {pipeline_mode = #tpu.pipeline_mode<synchronous>, transform_indices = @transform_42, window_bounds = array<i64: 64, 64>}, {pipeline_mode = #tpu.pipeline_mode<synchronous>, transform_indices = @transform_43, window_bounds = array<i64: 1, 64>}, {pipeline_mode = #tpu.pipeline_mode<synchronous>, transform_indices = @transform_44, window_bounds = array<i64: 1, 64>}, {pipeline_mode = #tpu.pipeline_mode<synchronous>, transform_indices = @transform_45, window_bounds = array<i64: 1, 64>}, {pipeline_mode = #tpu.pipeline_mode<synchronous>, transform_indices = @transform_46, window_bounds = array<i64: 64, 128>}, {pipeline_mode = #tpu.pipeline_mode<synchronous>, transform_indices = @transform_47, window_bounds = array<i64: 1, 128>}, {transform_indices = @transform_48, window_bounds = array<i64: 8, 128>}, {transform_indices = @transform_49, window_bounds = array<i64: 16, 128>}]} {
    %0 = tpu.iota {dimensions = array<i32: 0>} : vector<16x16xi32>
    %1 = tpu.iota {dimensions = array<i32: 1>} : vector<16x16xi32>
    %2 = arith.cmpi sgt, %1, %0 : vector<16x16xi32>
    %cst = arith.constant -1.000000e+30 : f32
    %cst_0 = arith.constant 0.000000e+00 : f32
    %3 = vector.broadcast %cst : f32 to vector<16x16xf32>
    %4 = vector.broadcast %cst_0 : f32 to vector<16x16xf32>
    %5 = arith.select %2, %3, %4 : vector<16x16xi1>, vector<16x16xf32>
    %c0 = arith.constant 0 : index
    %c0_1 = arith.constant 0 : index
    %6 = vector.load %arg1[%c0, %c0_1] : memref<56x64xf32, #tpu.memory_space<vmem>>, vector<56x64xf32>
    %c0_2 = arith.constant 0 : index
    %c0_3 = arith.constant 0 : index
    %7 = vector.load %arg5[%c0_2, %c0_3] : memref<64x64xf32, #tpu.memory_space<vmem>>, vector<64x64xf32>
    %8 = arith.truncf %6 : vector<56x64xf32> to vector<56x64xbf16>
    %9 = arith.truncf %7 : vector<64x64xf32> to vector<64x64xbf16>
    %cst_4 = arith.constant dense<0.000000e+00> : vector<56x64xf32>
    %10 = tpu.matmul %8, %9, %cst_4 {dimension_numbers = #tpu.dot_dimension_numbers<[1], [0], [0], [1], [0, 0, 1, 1], [], []>} : vector<56x64xbf16>, vector<64x64xbf16>, vector<56x64xf32> -> vector<56x64xf32>
    %c0_5 = arith.constant 0 : index
    %c0_6 = arith.constant 0 : index
    %11 = vector.load %arg3[%c0_5, %c0_6] : memref<56x64xf32, #tpu.memory_space<vmem>>, vector<56x64xf32>
    %12 = arith.addf %10, %11 : vector<56x64xf32>
    %c0_7 = arith.constant 0 : index
    %c0_8 = arith.constant 0 : index
    %c0_9 = arith.constant 0 : index
    %13 = vector.load %arg9[%c0_7, %c0_8, %c0_9] : memref<2x64x64xf32, #tpu.memory_space<vmem>>, vector<1x64x64xf32>
    %14 = vector.shape_cast %13 : vector<1x64x64xf32> to vector<64x64xf32>
    %c0_10 = arith.constant 0 : index
    %c0_11 = arith.constant 0 : index
    %c0_12 = arith.constant 0 : index
    %15 = vector.load %arg10[%c0_10, %c0_11, %c0_12] : memref<2x1x64xf32, #tpu.memory_space<vmem>>, vector<1x1x64xf32>
    %16 = vector.shape_cast %15 : vector<1x1x64xf32> to vector<1x64xf32>
    %c0_13 = arith.constant 0 : index
    %c0_14 = arith.constant 0 : index
    %c0_15 = arith.constant 0 : index
    %17 = vector.load %arg7[%c0_13, %c0_14, %c0_15] : memref<2x64x256xf32, #tpu.memory_space<vmem>>, vector<1x64x256xf32>
    %18 = vector.shape_cast %17 : vector<1x64x256xf32> to vector<64x256xf32>
    %19 = arith.truncf %12 : vector<56x64xf32> to vector<56x64xbf16>
    %20 = arith.truncf %18 : vector<64x256xf32> to vector<64x256xbf16>
    %cst_16 = arith.constant dense<0.000000e+00> : vector<56x256xf32>
    %21 = tpu.matmul %19, %20, %cst_16 {dimension_numbers = #tpu.dot_dimension_numbers<[1], [0], [0], [1], [0, 0, 1, 1], [], []>} : vector<56x64xbf16>, vector<64x256xbf16>, vector<56x256xf32> -> vector<56x256xf32>
    %c0_17 = arith.constant 0 : index
    %c0_18 = arith.constant 0 : index
    %c0_19 = arith.constant 0 : index
    %22 = vector.load %arg8[%c0_17, %c0_18, %c0_19] : memref<2x1x256xf32, #tpu.memory_space<vmem>>, vector<1x1x256xf32>
    %23 = vector.shape_cast %22 : vector<1x1x256xf32> to vector<1x256xf32>
    %24 = vector.broadcast %23 : vector<1x256xf32> to vector<56x256xf32>
    %25 = arith.addf %21, %24 : vector<56x256xf32>
    %c0_20 = arith.constant 0 : index
    %c0_21 = arith.constant 0 : index
    %26 = vector.load %arg51[%c0_20, %c0_21] : memref<56x256xf32, #tpu.memory_space<vmem>>, vector<56x256xf32>
    tpu.vector_store %arg51[%c0_20, %c0_21], %25 {strides = array<i32>} : memref<56x256xf32, #tpu.memory_space<vmem>>, vector<56x256xf32>,
    %c0_22 = arith.constant 0 : index
    %c0_23 = arith.constant 0 : index
    %27 = vector.load %arg51[%c0_22, %c0_23] : memref<56x256xf32, #tpu.memory_space<vmem>>, vector<56x32xf32>
    %c0_24 = arith.constant 0 : index
    %c64 = arith.constant 64 : index
    %28 = vector.load %arg51[%c0_24, %c64] : memref<56x256xf32, #tpu.memory_space<vmem>>, vector<56x32xf32>
    %c0_25 = arith.constant 0 : index
    %c128 = arith.constant 128 : index
    %29 = vector.load %arg51[%c0_25, %c128] : memref<56x256xf32, #tpu.memory_space<vmem>>, vector<56x32xf32>
    %30 = arith.truncf %27 : vector<56x32xf32> to vector<56x32xbf16>
    %31 = arith.truncf %28 : vector<56x32xf32> to vector<56x32xbf16>
    %cst_26 = arith.constant dense<0.000000e+00> : vector<56x56xf32>
    %32 = tpu.matmul %30, %31, %cst_26 {dimension_numbers = #tpu.dot_dimension_numbers<[1], [1], [0], [0], [0, 0, 1, 0], [], []>} : vector<56x32xbf16>, vector<56x32xbf16>, vector<56x56xf32> -> vector<56x56xf32>
    %cst_27 = arith.constant 0.176776692 : f32
    %33 = vector.broadcast %cst_27 : f32 to vector<56x56xf32>
    %34 = arith.mulf %32, %33 : vector<56x56xf32>
    %cst_28 = arith.constant dense<0xFF800000> : vector<56xf32>
    %35 = vector.multi_reduction <maximumf>, %34, %cst_28 [1] : vector<56x56xf32> to vector<56xf32>
    %36 = vector.shape_cast %35 : vector<56xf32> to vector<56x1xf32>
    %37 = vector.broadcast %36 : vector<56x1xf32> to vector<56x56xf32>
    %38 = arith.subf %34, %37 : vector<56x56xf32>
    %39 = math.exp %38 : vector<56x56xf32>
    %cst_29 = arith.constant dense<0.000000e+00> : vector<56xf32>
    %40 = vector.multi_reduction <add>, %39, %cst_29 [1] : vector<56x56xf32> to vector<56xf32>
    %41 = vector.shape_cast %40 : vector<56xf32> to vector<56x1xf32>
    %42 = tpu.reciprocal %41 {approx = true} : vector<56x1xf32> -> vector<56x1xf32>
    %43 = vector.broadcast %42 : vector<56x1xf32> to vector<56x56xf32>
    %44 = arith.mulf %39, %43 : vector<56x56xf32>
    %45 = arith.truncf %44 : vector<56x56xf32> to vector<56x56xbf16>
    %46 = arith.truncf %29 : vector<56x32xf32> to vector<56x32xbf16>
    %cst_30 = arith.constant dense<0.000000e+00> : vector<56x32xf32>
    %47 = tpu.matmul %45, %46, %cst_30 {dimension_numbers = #tpu.dot_dimension_numbers<[1], [0], [0], [1], [0, 0, 1, 1], [], []>} : vector<56x56xbf16>, vector<56x32xbf16>, vector<56x32xf32> -> vector<56x32xf32>
    %c0_31 = arith.constant 0 : index
    %c32 = arith.constant 32 : index
    %48 = vector.load %arg51[%c0_31, %c32] : memref<56x256xf32, #tpu.memory_space<vmem>>, vector<56x32xf32>
    %c0_32 = arith.constant 0 : index
    %c96 = arith.constant 96 : index
    %49 = vector.load %arg51[%c0_32, %c96] : memref<56x256xf32, #tpu.memory_space<vmem>>, vector<56x32xf32>
    %c0_33 = arith.constant 0 : index
    %c160 = arith.constant 160 : index
    %50 = vector.load %arg51[%c0_33, %c160] : memref<56x256xf32, #tpu.memory_space<vmem>>, vector<56x32xf32>
    %51 = arith.truncf %48 : vector<56x32xf32> to vector<56x32xbf16>
    %52 = arith.truncf %49 : vector<56x32xf32> to vector<56x32xbf16>
    %cst_34 = arith.constant dense<0.000000e+00> : vector<56x56xf32>
    %53 = tpu.matmul %51, %52, %cst_34 {dimension_numbers = #tpu.dot_dimension_numbers<[1], [1], [0], [0], [0, 0, 1, 0], [], []>} : vector<56x32xbf16>, vector<56x32xbf16>, vector<56x56xf32> -> vector<56x56xf32>
    %cst_35 = arith.constant 0.176776692 : f32
    %54 = vector.broadcast %cst_35 : f32 to vector<56x56xf32>
    %55 = arith.mulf %53, %54 : vector<56x56xf32>
    %cst_36 = arith.constant dense<0xFF800000> : vector<56xf32>
    %56 = vector.multi_reduction <maximumf>, %55, %cst_36 [1] : vector<56x56xf32> to vector<56xf32>
    %57 = vector.shape_cast %56 : vector<56xf32> to vector<56x1xf32>
    %58 = vector.broadcast %57 : vector<56x1xf32> to vector<56x56xf32>
    %59 = arith.subf %55, %58 : vector<56x56xf32>
    %60 = math.exp %59 : vector<56x56xf32>
    %cst_37 = arith.constant dense<0.000000e+00> : vector<56xf32>
    %61 = vector.multi_reduction <add>, %60, %cst_37 [1] : vector<56x56xf32> to vector<56xf32>
    %62 = vector.shape_cast %61 : vector<56xf32> to vector<56x1xf32>
    %63 = tpu.reciprocal %62 {approx = true} : vector<56x1xf32> -> vector<56x1xf32>
    %64 = vector.broadcast %63 : vector<56x1xf32> to vector<56x56xf32>
    %65 = arith.mulf %60, %64 : vector<56x56xf32>
    %66 = arith.truncf %65 : vector<56x56xf32> to vector<56x56xbf16>
    %67 = arith.truncf %50 : vector<56x32xf32> to vector<56x32xbf16>
    %cst_38 = arith.constant dense<0.000000e+00> : vector<56x32xf32>
    %68 = tpu.matmul %66, %67, %cst_38 {dimension_numbers = #tpu.dot_dimension_numbers<[1], [0], [0], [1], [0, 0, 1, 1], [], []>} : vector<56x56xbf16>, vector<56x32xbf16>, vector<56x32xf32> -> vector<56x32xf32>
    %69 = tpu.concatenate %47, %68 in 1 : vector<56x32xf32>, vector<56x32xf32> -> vector<56x64xf32>
    %70 = arith.truncf %69 : vector<56x64xf32> to vector<56x64xbf16>
    %71 = arith.truncf %14 : vector<64x64xf32> to vector<64x64xbf16>
    %cst_39 = arith.constant dense<0.000000e+00> : vector<56x64xf32>
    %72 = tpu.matmul %70, %71, %cst_39 {dimension_numbers = #tpu.dot_dimension_numbers<[1], [0], [0], [1], [0, 0, 1, 1], [], []>} : vector<56x64xbf16>, vector<64x64xbf16>, vector<56x64xf32> -> vector<56x64xf32>
    %73 = vector.broadcast %16 : vector<1x64xf32> to vector<56x64xf32>
    %74 = arith.addf %72, %73 : vector<56x64xf32>
    %75 = arith.addf %74, %12 : vector<56x64xf32>
    %c0_40 = arith.constant 0 : index
    %c0_41 = arith.constant 0 : index
    %c0_42 = arith.constant 0 : index
    %76 = vector.load %arg11[%c0_40, %c0_41, %c0_42] : memref<2x1x64xf32, #tpu.memory_space<vmem>>, vector<1x1x64xf32>
    %77 = vector.shape_cast %76 : vector<1x1x64xf32> to vector<1x64xf32>
    %c0_43 = arith.constant 0 : index
    %c0_44 = arith.constant 0 : index
    %c0_45 = arith.constant 0 : index
    %78 = vector.load %arg12[%c0_43, %c0_44, %c0_45] : memref<2x1x64xf32, #tpu.memory_space<vmem>>, vector<1x1x64xf32>
    %79 = vector.shape_cast %78 : vector<1x1x64xf32> to vector<1x64xf32>
    %cst_46 = arith.constant dense<0.000000e+00> : vector<56xf32>
    %80 = vector.multi_reduction <add>, %75, %cst_46 [1] : vector<56x64xf32> to vector<56xf32>
    %81 = vector.shape_cast %80 : vector<56xf32> to vector<56x1xf32>
    %cst_47 = arith.constant 6.400000e+01 : f32
    %82 = vector.broadcast %cst_47 : f32 to vector<56x1xf32>
    %83 = arith.divf %81, %82 : vector<56x1xf32>
    %84 = vector.broadcast %83 : vector<56x1xf32> to vector<56x64xf32>
    %85 = arith.subf %75, %84 : vector<56x64xf32>
    %86 = arith.mulf %85, %85 : vector<56x64xf32>
    %cst_48 = arith.constant dense<0.000000e+00> : vector<56xf32>
    %87 = vector.multi_reduction <add>, %86, %cst_48 [1] : vector<56x64xf32> to vector<56xf32>
    %88 = vector.shape_cast %87 : vector<56xf32> to vector<56x1xf32>
    %cst_49 = arith.constant 0.0158730168 : f32
    %89 = vector.broadcast %cst_49 : f32 to vector<56x1xf32>
    %90 = arith.mulf %88, %89 : vector<56x1xf32>
    %91 = math.sqrt %90 : vector<56x1xf32>
    %cst_50 = arith.constant 1.000000e-03 : f32
    %92 = vector.broadcast %cst_50 : f32 to vector<56x1xf32>
    %93 = arith.addf %91, %92 : vector<56x1xf32>
    %94 = vector.broadcast %93 : vector<56x1xf32> to vector<56x64xf32>
    %95 = arith.divf %85, %94 : vector<56x64xf32>
    %96 = vector.broadcast %77 : vector<1x64xf32> to vector<56x64xf32>
    %97 = arith.mulf %95, %96 : vector<56x64xf32>
    %98 = vector.broadcast %79 : vector<1x64xf32> to vector<56x64xf32>
    %99 = arith.addf %97, %98 : vector<56x64xf32>
    %c0_51 = arith.constant 0 : index
    %c0_52 = arith.constant 0 : index
    %c0_53 = arith.constant 0 : index
    %100 = vector.load %arg13[%c0_51, %c0_52, %c0_53] : memref<2x64x128xf32, #tpu.memory_space<vmem>>, vector<1x64x128xf32>
    %101 = vector.shape_cast %100 : vector<1x64x128xf32> to vector<64x128xf32>
    %c0_54 = arith.constant 0 : index
    %c0_55 = arith.constant 0 : index
    %c0_56 = arith.constant 0 : index
    %102 = vector.load %arg14[%c0_54, %c0_55, %c0_56] : memref<2x1x128xf32, #tpu.memory_space<vmem>>, vector<1x1x128xf32>
    %103 = vector.shape_cast %102 : vector<1x1x128xf32> to vector<1x128xf32>
    %c0_57 = arith.constant 0 : index
    %c0_58 = arith.constant 0 : index
    %c0_59 = arith.constant 0 : index
    %104 = vector.load %arg15[%c0_57, %c0_58, %c0_59] : memref<2x128x64xf32, #tpu.memory_space<vmem>>, vector<1x128x64xf32>
    %105 = vector.shape_cast %104 : vector<1x128x64xf32> to vector<128x64xf32>
    %c0_60 = arith.constant 0 : index
    %c0_61 = arith.constant 0 : index
    %c0_62 = arith.constant 0 : index
    %106 = vector.load %arg16[%c0_60, %c0_61, %c0_62] : memref<2x1x64xf32, #tpu.memory_space<vmem>>, vector<1x1x64xf32>
    %107 = vector.shape_cast %106 : vector<1x1x64xf32> to vector<1x64xf32>
    %108 = arith.truncf %99 : vector<56x64xf32> to vector<56x64xbf16>
    %109 = arith.truncf %101 : vector<64x128xf32> to vector<64x128xbf16>
    %cst_63 = arith.constant dense<0.000000e+00> : vector<56x128xf32>
    %110 = tpu.matmul %108, %109, %cst_63 {dimension_numbers = #tpu.dot_dimension_numbers<[1], [0], [0], [1], [0, 0, 1, 1], [], []>} : vector<56x64xbf16>, vector<64x128xbf16>, vector<56x128xf32> -> vector<56x128xf32>
    %111 = vector.broadcast %103 : vector<1x128xf32> to vector<56x128xf32>
    %112 = arith.addf %110, %111 : vector<56x128xf32>
    %cst_64 = arith.constant 0.000000e+00 : f32
    %113 = vector.broadcast %cst_64 : f32 to vector<56x128xf32>
    %114 = arith.maximumf %112, %113 : vector<56x128xf32>
    %115 = arith.truncf %114 : vector<56x128xf32> to vector<56x128xbf16>
    %116 = arith.truncf %105 : vector<128x64xf32> to vector<128x64xbf16>
    %cst_65 = arith.constant dense<0.000000e+00> : vector<56x64xf32>
    %117 = tpu.matmul %115, %116, %cst_65 {dimension_numbers = #tpu.dot_dimension_numbers<[1], [0], [0], [1], [0, 0, 1, 1], [], []>} : vector<56x128xbf16>, vector<128x64xbf16>, vector<56x64xf32> -> vector<56x64xf32>
    %118 = vector.broadcast %107 : vector<1x64xf32> to vector<56x64xf32>
    %119 = arith.addf %117, %118 : vector<56x64xf32>
    %120 = arith.addf %119, %99 : vector<56x64xf32>
    %c0_66 = arith.constant 0 : index
    %c0_67 = arith.constant 0 : index
    %c0_68 = arith.constant 0 : index
    %121 = vector.load %arg17[%c0_66, %c0_67, %c0_68] : memref<2x1x64xf32, #tpu.memory_space<vmem>>, vector<1x1x64xf32>
    %122 = vector.shape_cast %121 : vector<1x1x64xf32> to vector<1x64xf32>
    %c0_69 = arith.constant 0 : index
    %c0_70 = arith.constant 0 : index
    %c0_71 = arith.constant 0 : index
    %123 = vector.load %arg18[%c0_69, %c0_70, %c0_71] : memref<2x1x64xf32, #tpu.memory_space<vmem>>, vector<1x1x64xf32>
    %124 = vector.shape_cast %123 : vector<1x1x64xf32> to vector<1x64xf32>
    %cst_72 = arith.constant dense<0.000000e+00> : vector<56xf32>
    %125 = vector.multi_reduction <add>, %120, %cst_72 [1] : vector<56x64xf32> to vector<56xf32>
    %126 = vector.shape_cast %125 : vector<56xf32> to vector<56x1xf32>
    %cst_73 = arith.constant 6.400000e+01 : f32
    %127 = vector.broadcast %cst_73 : f32 to vector<56x1xf32>
    %128 = arith.divf %126, %127 : vector<56x1xf32>
    %129 = vector.broadcast %128 : vector<56x1xf32> to vector<56x64xf32>
    %130 = arith.subf %120, %129 : vector<56x64xf32>
    %131 = arith.mulf %130, %130 : vector<56x64xf32>
    %cst_74 = arith.constant dense<0.000000e+00> : vector<56xf32>
    %132 = vector.multi_reduction <add>, %131, %cst_74 [1] : vector<56x64xf32> to vector<56xf32>
    %133 = vector.shape_cast %132 : vector<56xf32> to vector<56x1xf32>
    %cst_75 = arith.constant 0.0158730168 : f32
    %134 = vector.broadcast %cst_75 : f32 to vector<56x1xf32>
    %135 = arith.mulf %133, %134 : vector<56x1xf32>
    %136 = math.sqrt %135 : vector<56x1xf32>
    %cst_76 = arith.constant 1.000000e-03 : f32
    %137 = vector.broadcast %cst_76 : f32 to vector<56x1xf32>
    %138 = arith.addf %136, %137 : vector<56x1xf32>
    %139 = vector.broadcast %138 : vector<56x1xf32> to vector<56x64xf32>
    %140 = arith.divf %130, %139 : vector<56x64xf32>
    %141 = vector.broadcast %122 : vector<1x64xf32> to vector<56x64xf32>
    %142 = arith.mulf %140, %141 : vector<56x64xf32>
    %143 = vector.broadcast %124 : vector<1x64xf32> to vector<56x64xf32>
    %144 = arith.addf %142, %143 : vector<56x64xf32>
    %c1 = arith.constant 1 : index
    %c0_77 = arith.constant 0 : index
    %c0_78 = arith.constant 0 : index
    %145 = vector.load %arg9[%c1, %c0_77, %c0_78] : memref<2x64x64xf32, #tpu.memory_space<vmem>>, vector<1x64x64xf32>
    %146 = vector.shape_cast %145 : vector<1x64x64xf32> to vector<64x64xf32>
    %c1_79 = arith.constant 1 : index
    %c0_80 = arith.constant 0 : index
    %c0_81 = arith.constant 0 : index
    %147 = vector.load %arg10[%c1_79, %c0_80, %c0_81] : memref<2x1x64xf32, #tpu.memory_space<vmem>>, vector<1x1x64xf32>
    %148 = vector.shape_cast %147 : vector<1x1x64xf32> to vector<1x64xf32>
    %c1_82 = arith.constant 1 : index
    %c0_83 = arith.constant 0 : index
    %c0_84 = arith.constant 0 : index
    %149 = vector.load %arg7[%c1_82, %c0_83, %c0_84] : memref<2x64x256xf32, #tpu.memory_space<vmem>>, vector<1x64x256xf32>
    %150 = vector.shape_cast %149 : vector<1x64x256xf32> to vector<64x256xf32>
    %151 = arith.truncf %144 : vector<56x64xf32> to vector<56x64xbf16>
    %152 = arith.truncf %150 : vector<64x256xf32> to vector<64x256xbf16>
    %cst_85 = arith.constant dense<0.000000e+00> : vector<56x256xf32>
    %153 = tpu.matmul %151, %152, %cst_85 {dimension_numbers = #tpu.dot_dimension_numbers<[1], [0], [0], [1], [0, 0, 1, 1], [], []>} : vector<56x64xbf16>, vector<64x256xbf16>, vector<56x256xf32> -> vector<56x256xf32>
    %c1_86 = arith.constant 1 : index
    %c0_87 = arith.constant 0 : index
    %c0_88 = arith.constant 0 : index
    %154 = vector.load %arg8[%c1_86, %c0_87, %c0_88] : memref<2x1x256xf32, #tpu.memory_space<vmem>>, vector<1x1x256xf32>
    %155 = vector.shape_cast %154 : vector<1x1x256xf32> to vector<1x256xf32>
    %156 = vector.broadcast %155 : vector<1x256xf32> to vector<56x256xf32>
    %157 = arith.addf %153, %156 : vector<56x256xf32>
    %c0_89 = arith.constant 0 : index
    %c0_90 = arith.constant 0 : index
    %158 = vector.load %arg51[%c0_89, %c0_90] : memref<56x256xf32, #tpu.memory_space<vmem>>, vector<56x256xf32>
    tpu.vector_store %arg51[%c0_89, %c0_90], %157 {strides = array<i32>} : memref<56x256xf32, #tpu.memory_space<vmem>>, vector<56x256xf32>,
    %c0_91 = arith.constant 0 : index
    %c0_92 = arith.constant 0 : index
    %159 = vector.load %arg51[%c0_91, %c0_92] : memref<56x256xf32, #tpu.memory_space<vmem>>, vector<56x32xf32>
    %c0_93 = arith.constant 0 : index
    %c64_94 = arith.constant 64 : index
    %160 = vector.load %arg51[%c0_93, %c64_94] : memref<56x256xf32, #tpu.memory_space<vmem>>, vector<56x32xf32>
    %c0_95 = arith.constant 0 : index
    %c128_96 = arith.constant 128 : index
    %161 = vector.load %arg51[%c0_95, %c128_96] : memref<56x256xf32, #tpu.memory_space<vmem>>, vector<56x32xf32>
    %162 = arith.truncf %159 : vector<56x32xf32> to vector<56x32xbf16>
    %163 = arith.truncf %160 : vector<56x32xf32> to vector<56x32xbf16>
    %cst_97 = arith.constant dense<0.000000e+00> : vector<56x56xf32>
    %164 = tpu.matmul %162, %163, %cst_97 {dimension_numbers = #tpu.dot_dimension_numbers<[1], [1], [0], [0], [0, 0, 1, 0], [], []>} : vector<56x32xbf16>, vector<56x32xbf16>, vector<56x56xf32> -> vector<56x56xf32>
    %cst_98 = arith.constant 0.176776692 : f32
    %165 = vector.broadcast %cst_98 : f32 to vector<56x56xf32>
    %166 = arith.mulf %164, %165 : vector<56x56xf32>
    %cst_99 = arith.constant dense<0xFF800000> : vector<56xf32>
    %167 = vector.multi_reduction <maximumf>, %166, %cst_99 [1] : vector<56x56xf32> to vector<56xf32>
    %168 = vector.shape_cast %167 : vector<56xf32> to vector<56x1xf32>
    %169 = vector.broadcast %168 : vector<56x1xf32> to vector<56x56xf32>
    %170 = arith.subf %166, %169 : vector<56x56xf32>
    %171 = math.exp %170 : vector<56x56xf32>
    %cst_100 = arith.constant dense<0.000000e+00> : vector<56xf32>
    %172 = vector.multi_reduction <add>, %171, %cst_100 [1] : vector<56x56xf32> to vector<56xf32>
    %173 = vector.shape_cast %172 : vector<56xf32> to vector<56x1xf32>
    %174 = tpu.reciprocal %173 {approx = true} : vector<56x1xf32> -> vector<56x1xf32>
    %175 = vector.broadcast %174 : vector<56x1xf32> to vector<56x56xf32>
    %176 = arith.mulf %171, %175 : vector<56x56xf32>
    %177 = arith.truncf %176 : vector<56x56xf32> to vector<56x56xbf16>
    %178 = arith.truncf %161 : vector<56x32xf32> to vector<56x32xbf16>
    %cst_101 = arith.constant dense<0.000000e+00> : vector<56x32xf32>
    %179 = tpu.matmul %177, %178, %cst_101 {dimension_numbers = #tpu.dot_dimension_numbers<[1], [0], [0], [1], [0, 0, 1, 1], [], []>} : vector<56x56xbf16>, vector<56x32xbf16>, vector<56x32xf32> -> vector<56x32xf32>
    %c0_102 = arith.constant 0 : index
    %c32_103 = arith.constant 32 : index
    %180 = vector.load %arg51[%c0_102, %c32_103] : memref<56x256xf32, #tpu.memory_space<vmem>>, vector<56x32xf32>
    %c0_104 = arith.constant 0 : index
    %c96_105 = arith.constant 96 : index
    %181 = vector.load %arg51[%c0_104, %c96_105] : memref<56x256xf32, #tpu.memory_space<vmem>>, vector<56x32xf32>
    %c0_106 = arith.constant 0 : index
    %c160_107 = arith.constant 160 : index
    %182 = vector.load %arg51[%c0_106, %c160_107] : memref<56x256xf32, #tpu.memory_space<vmem>>, vector<56x32xf32>
    %183 = arith.truncf %180 : vector<56x32xf32> to vector<56x32xbf16>
    %184 = arith.truncf %181 : vector<56x32xf32> to vector<56x32xbf16>
    %cst_108 = arith.constant dense<0.000000e+00> : vector<56x56xf32>
    %185 = tpu.matmul %183, %184, %cst_108 {dimension_numbers = #tpu.dot_dimension_numbers<[1], [1], [0], [0], [0, 0, 1, 0], [], []>} : vector<56x32xbf16>, vector<56x32xbf16>, vector<56x56xf32> -> vector<56x56xf32>
    %cst_109 = arith.constant 0.176776692 : f32
    %186 = vector.broadcast %cst_109 : f32 to vector<56x56xf32>
    %187 = arith.mulf %185, %186 : vector<56x56xf32>
    %cst_110 = arith.constant dense<0xFF800000> : vector<56xf32>
    %188 = vector.multi_reduction <maximumf>, %187, %cst_110 [1] : vector<56x56xf32> to vector<56xf32>
    %189 = vector.shape_cast %188 : vector<56xf32> to vector<56x1xf32>
    %190 = vector.broadcast %189 : vector<56x1xf32> to vector<56x56xf32>
    %191 = arith.subf %187, %190 : vector<56x56xf32>
    %192 = math.exp %191 : vector<56x56xf32>
    %cst_111 = arith.constant dense<0.000000e+00> : vector<56xf32>
    %193 = vector.multi_reduction <add>, %192, %cst_111 [1] : vector<56x56xf32> to vector<56xf32>
    %194 = vector.shape_cast %193 : vector<56xf32> to vector<56x1xf32>
    %195 = tpu.reciprocal %194 {approx = true} : vector<56x1xf32> -> vector<56x1xf32>
    %196 = vector.broadcast %195 : vector<56x1xf32> to vector<56x56xf32>
    %197 = arith.mulf %192, %196 : vector<56x56xf32>
    %198 = arith.truncf %197 : vector<56x56xf32> to vector<56x56xbf16>
    %199 = arith.truncf %182 : vector<56x32xf32> to vector<56x32xbf16>
    %cst_112 = arith.constant dense<0.000000e+00> : vector<56x32xf32>
    %200 = tpu.matmul %198, %199, %cst_112 {dimension_numbers = #tpu.dot_dimension_numbers<[1], [0], [0], [1], [0, 0, 1, 1], [], []>} : vector<56x56xbf16>, vector<56x32xbf16>, vector<56x32xf32> -> vector<56x32xf32>
    %201 = tpu.concatenate %179, %200 in 1 : vector<56x32xf32>, vector<56x32xf32> -> vector<56x64xf32>
    %202 = arith.truncf %201 : vector<56x64xf32> to vector<56x64xbf16>
    %203 = arith.truncf %146 : vector<64x64xf32> to vector<64x64xbf16>
    %cst_113 = arith.constant dense<0.000000e+00> : vector<56x64xf32>
    %204 = tpu.matmul %202, %203, %cst_113 {dimension_numbers = #tpu.dot_dimension_numbers<[1], [0], [0], [1], [0, 0, 1, 1], [], []>} : vector<56x64xbf16>, vector<64x64xbf16>, vector<56x64xf32> -> vector<56x64xf32>
    %205 = vector.broadcast %148 : vector<1x64xf32> to vector<56x64xf32>
    %206 = arith.addf %204, %205 : vector<56x64xf32>
    %207 = arith.addf %206, %144 : vector<56x64xf32>
    %c1_114 = arith.constant 1 : index
    %c0_115 = arith.constant 0 : index
    %c0_116 = arith.constant 0 : index
    %208 = vector.load %arg11[%c1_114, %c0_115, %c0_116] : memref<2x1x64xf32, #tpu.memory_space<vmem>>, vector<1x1x64xf32>
    %209 = vector.shape_cast %208 : vector<1x1x64xf32> to vector<1x64xf32>
    %c1_117 = arith.constant 1 : index
    %c0_118 = arith.constant 0 : index
    %c0_119 = arith.constant 0 : index
    %210 = vector.load %arg12[%c1_117, %c0_118, %c0_119] : memref<2x1x64xf32, #tpu.memory_space<vmem>>, vector<1x1x64xf32>
    %211 = vector.shape_cast %210 : vector<1x1x64xf32> to vector<1x64xf32>
    %cst_120 = arith.constant dense<0.000000e+00> : vector<56xf32>
    %212 = vector.multi_reduction <add>, %207, %cst_120 [1] : vector<56x64xf32> to vector<56xf32>
    %213 = vector.shape_cast %212 : vector<56xf32> to vector<56x1xf32>
    %cst_121 = arith.constant 6.400000e+01 : f32
    %214 = vector.broadcast %cst_121 : f32 to vector<56x1xf32>
    %215 = arith.divf %213, %214 : vector<56x1xf32>
    %216 = vector.broadcast %215 : vector<56x1xf32> to vector<56x64xf32>
    %217 = arith.subf %207, %216 : vector<56x64xf32>
    %218 = arith.mulf %217, %217 : vector<56x64xf32>
    %cst_122 = arith.constant dense<0.000000e+00> : vector<56xf32>
    %219 = vector.multi_reduction <add>, %218, %cst_122 [1] : vector<56x64xf32> to vector<56xf32>
    %220 = vector.shape_cast %219 : vector<56xf32> to vector<56x1xf32>
    %cst_123 = arith.constant 0.0158730168 : f32
    %221 = vector.broadcast %cst_123 : f32 to vector<56x1xf32>
    %222 = arith.mulf %220, %221 : vector<56x1xf32>
    %223 = math.sqrt %222 : vector<56x1xf32>
    %cst_124 = arith.constant 1.000000e-03 : f32
    %224 = vector.broadcast %cst_124 : f32 to vector<56x1xf32>
    %225 = arith.addf %223, %224 : vector<56x1xf32>
    %226 = vector.broadcast %225 : vector<56x1xf32> to vector<56x64xf32>
    %227 = arith.divf %217, %226 : vector<56x64xf32>
    %228 = vector.broadcast %209 : vector<1x64xf32> to vector<56x64xf32>
    %229 = arith.mulf %227, %228 : vector<56x64xf32>
    %230 = vector.broadcast %211 : vector<1x64xf32> to vector<56x64xf32>
    %231 = arith.addf %229, %230 : vector<56x64xf32>
    %c1_125 = arith.constant 1 : index
    %c0_126 = arith.constant 0 : index
    %c0_127 = arith.constant 0 : index
    %232 = vector.load %arg13[%c1_125, %c0_126, %c0_127] : memref<2x64x128xf32, #tpu.memory_space<vmem>>, vector<1x64x128xf32>
    %233 = vector.shape_cast %232 : vector<1x64x128xf32> to vector<64x128xf32>
    %c1_128 = arith.constant 1 : index
    %c0_129 = arith.constant 0 : index
    %c0_130 = arith.constant 0 : index
    %234 = vector.load %arg14[%c1_128, %c0_129, %c0_130] : memref<2x1x128xf32, #tpu.memory_space<vmem>>, vector<1x1x128xf32>
    %235 = vector.shape_cast %234 : vector<1x1x128xf32> to vector<1x128xf32>
    %c1_131 = arith.constant 1 : index
    %c0_132 = arith.constant 0 : index
    %c0_133 = arith.constant 0 : index
    %236 = vector.load %arg15[%c1_131, %c0_132, %c0_133] : memref<2x128x64xf32, #tpu.memory_space<vmem>>, vector<1x128x64xf32>
    %237 = vector.shape_cast %236 : vector<1x128x64xf32> to vector<128x64xf32>
    %c1_134 = arith.constant 1 : index
    %c0_135 = arith.constant 0 : index
    %c0_136 = arith.constant 0 : index
    %238 = vector.load %arg16[%c1_134, %c0_135, %c0_136] : memref<2x1x64xf32, #tpu.memory_space<vmem>>, vector<1x1x64xf32>
    %239 = vector.shape_cast %238 : vector<1x1x64xf32> to vector<1x64xf32>
    %240 = arith.truncf %231 : vector<56x64xf32> to vector<56x64xbf16>
    %241 = arith.truncf %233 : vector<64x128xf32> to vector<64x128xbf16>
    %cst_137 = arith.constant dense<0.000000e+00> : vector<56x128xf32>
    %242 = tpu.matmul %240, %241, %cst_137 {dimension_numbers = #tpu.dot_dimension_numbers<[1], [0], [0], [1], [0, 0, 1, 1], [], []>} : vector<56x64xbf16>, vector<64x128xbf16>, vector<56x128xf32> -> vector<56x128xf32>
    %243 = vector.broadcast %235 : vector<1x128xf32> to vector<56x128xf32>
    %244 = arith.addf %242, %243 : vector<56x128xf32>
    %cst_138 = arith.constant 0.000000e+00 : f32
    %245 = vector.broadcast %cst_138 : f32 to vector<56x128xf32>
    %246 = arith.maximumf %244, %245 : vector<56x128xf32>
    %247 = arith.truncf %246 : vector<56x128xf32> to vector<56x128xbf16>
    %248 = arith.truncf %237 : vector<128x64xf32> to vector<128x64xbf16>
    %cst_139 = arith.constant dense<0.000000e+00> : vector<56x64xf32>
    %249 = tpu.matmul %247, %248, %cst_139 {dimension_numbers = #tpu.dot_dimension_numbers<[1], [0], [0], [1], [0, 0, 1, 1], [], []>} : vector<56x128xbf16>, vector<128x64xbf16>, vector<56x64xf32> -> vector<56x64xf32>
    %250 = vector.broadcast %239 : vector<1x64xf32> to vector<56x64xf32>
    %251 = arith.addf %249, %250 : vector<56x64xf32>
    %252 = arith.addf %251, %231 : vector<56x64xf32>
    %c1_140 = arith.constant 1 : index
    %c0_141 = arith.constant 0 : index
    %c0_142 = arith.constant 0 : index
    %253 = vector.load %arg17[%c1_140, %c0_141, %c0_142] : memref<2x1x64xf32, #tpu.memory_space<vmem>>, vector<1x1x64xf32>
    %254 = vector.shape_cast %253 : vector<1x1x64xf32> to vector<1x64xf32>
    %c1_143 = arith.constant 1 : index
    %c0_144 = arith.constant 0 : index
    %c0_145 = arith.constant 0 : index
    %255 = vector.load %arg18[%c1_143, %c0_144, %c0_145] : memref<2x1x64xf32, #tpu.memory_space<vmem>>, vector<1x1x64xf32>
    %256 = vector.shape_cast %255 : vector<1x1x64xf32> to vector<1x64xf32>
    %cst_146 = arith.constant dense<0.000000e+00> : vector<56xf32>
    %257 = vector.multi_reduction <add>, %252, %cst_146 [1] : vector<56x64xf32> to vector<56xf32>
    %258 = vector.shape_cast %257 : vector<56xf32> to vector<56x1xf32>
    %cst_147 = arith.constant 6.400000e+01 : f32
    %259 = vector.broadcast %cst_147 : f32 to vector<56x1xf32>
    %260 = arith.divf %258, %259 : vector<56x1xf32>
    %261 = vector.broadcast %260 : vector<56x1xf32> to vector<56x64xf32>
    %262 = arith.subf %252, %261 : vector<56x64xf32>
    %263 = arith.mulf %262, %262 : vector<56x64xf32>
    %cst_148 = arith.constant dense<0.000000e+00> : vector<56xf32>
    %264 = vector.multi_reduction <add>, %263, %cst_148 [1] : vector<56x64xf32> to vector<56xf32>
    %265 = vector.shape_cast %264 : vector<56xf32> to vector<56x1xf32>
    %cst_149 = arith.constant 0.0158730168 : f32
    %266 = vector.broadcast %cst_149 : f32 to vector<56x1xf32>
    %267 = arith.mulf %265, %266 : vector<56x1xf32>
    %268 = math.sqrt %267 : vector<56x1xf32>
    %cst_150 = arith.constant 1.000000e-03 : f32
    %269 = vector.broadcast %cst_150 : f32 to vector<56x1xf32>
    %270 = arith.addf %268, %269 : vector<56x1xf32>
    %271 = vector.broadcast %270 : vector<56x1xf32> to vector<56x64xf32>
    %272 = arith.divf %262, %271 : vector<56x64xf32>
    %273 = vector.broadcast %254 : vector<1x64xf32> to vector<56x64xf32>
    %274 = arith.mulf %272, %273 : vector<56x64xf32>
    %275 = vector.broadcast %256 : vector<1x64xf32> to vector<56x64xf32>
    %276 = arith.addf %274, %275 : vector<56x64xf32>
    %277 = vector.extract_strided_slice %276 {offsets = [48, 0], sizes = [8, 64], strides = [1, 1]} : vector<56x64xf32> to vector<8x64xf32>
    %c0_151 = arith.constant 0 : index
    %c0_152 = arith.constant 0 : index
    %278 = vector.load %arg37[%c0_151, %c0_152] : memref<64x64xf32, #tpu.memory_space<vmem>>, vector<64x64xf32>
    %c0_153 = arith.constant 0 : index
    %c0_154 = arith.constant 0 : index
    %279 = vector.load %arg38[%c0_153, %c0_154] : memref<1x64xf32, #tpu.memory_space<vmem>>, vector<1x64xf32>
    %c0_155 = arith.constant 0 : index
    %c0_156 = arith.constant 0 : index
    %280 = vector.load %arg39[%c0_155, %c0_156] : memref<1x64xf32, #tpu.memory_space<vmem>>, vector<1x64xf32>
    %c0_157 = arith.constant 0 : index
    %c0_158 = arith.constant 0 : index
    %281 = vector.load %arg40[%c0_157, %c0_158] : memref<1x64xf32, #tpu.memory_space<vmem>>, vector<1x64xf32>
    %c0_159 = arith.constant 0 : index
    %c0_160 = arith.constant 0 : index
    %282 = vector.load %arg41[%c0_159, %c0_160] : memref<64x128xf32, #tpu.memory_space<vmem>>, vector<64x128xf32>
    %c0_161 = arith.constant 0 : index
    %c0_162 = arith.constant 0 : index
    %283 = vector.load %arg42[%c0_161, %c0_162] : memref<1x128xf32, #tpu.memory_space<vmem>>, vector<1x128xf32>
    %284 = arith.truncf %277 : vector<8x64xf32> to vector<8x64xbf16>
    %285 = arith.truncf %278 : vector<64x64xf32> to vector<64x64xbf16>
    %cst_163 = arith.constant dense<0.000000e+00> : vector<8x64xf32>
    %286 = tpu.matmul %284, %285, %cst_163 {dimension_numbers = #tpu.dot_dimension_numbers<[1], [0], [0], [1], [0, 0, 1, 1], [], []>} : vector<8x64xbf16>, vector<64x64xbf16>, vector<8x64xf32> -> vector<8x64xf32>
    %287 = vector.broadcast %279 : vector<1x64xf32> to vector<8x64xf32>
    %288 = arith.addf %286, %287 : vector<8x64xf32>
    %cst_164 = arith.constant 0.000000e+00 : f32
    %289 = vector.broadcast %cst_164 : f32 to vector<8x64xf32>
    %290 = arith.maximumf %288, %289 : vector<8x64xf32>
    %cst_165 = arith.constant dense<0.000000e+00> : vector<8xf32>
    %291 = vector.multi_reduction <add>, %290, %cst_165 [1] : vector<8x64xf32> to vector<8xf32>
    %292 = vector.shape_cast %291 : vector<8xf32> to vector<8x1xf32>
    %cst_166 = arith.constant 6.400000e+01 : f32
    %293 = vector.broadcast %cst_166 : f32 to vector<8x1xf32>
    %294 = arith.divf %292, %293 : vector<8x1xf32>
    %295 = vector.broadcast %294 : vector<8x1xf32> to vector<8x64xf32>
    %296 = arith.subf %290, %295 : vector<8x64xf32>
    %297 = arith.mulf %296, %296 : vector<8x64xf32>
    %cst_167 = arith.constant dense<0.000000e+00> : vector<8xf32>
    %298 = vector.multi_reduction <add>, %297, %cst_167 [1] : vector<8x64xf32> to vector<8xf32>
    %299 = vector.shape_cast %298 : vector<8xf32> to vector<8x1xf32>
    %cst_168 = arith.constant 0.0158730168 : f32
    %300 = vector.broadcast %cst_168 : f32 to vector<8x1xf32>
    %301 = arith.mulf %299, %300 : vector<8x1xf32>
    %302 = math.sqrt %301 : vector<8x1xf32>
    %cst_169 = arith.constant 1.000000e-03 : f32
    %303 = vector.broadcast %cst_169 : f32 to vector<8x1xf32>
    %304 = arith.addf %302, %303 : vector<8x1xf32>
    %305 = vector.broadcast %304 : vector<8x1xf32> to vector<8x64xf32>
    %306 = arith.divf %296, %305 : vector<8x64xf32>
    %307 = vector.broadcast %280 : vector<1x64xf32> to vector<8x64xf32>
    %308 = arith.mulf %306, %307 : vector<8x64xf32>
    %309 = vector.broadcast %281 : vector<1x64xf32> to vector<8x64xf32>
    %310 = arith.addf %308, %309 : vector<8x64xf32>
    %311 = arith.truncf %310 : vector<8x64xf32> to vector<8x64xbf16>
    %312 = arith.truncf %282 : vector<64x128xf32> to vector<64x128xbf16>
    %cst_170 = arith.constant dense<0.000000e+00> : vector<8x128xf32>
    %313 = tpu.matmul %311, %312, %cst_170 {dimension_numbers = #tpu.dot_dimension_numbers<[1], [0], [0], [1], [0, 0, 1, 1], [], []>} : vector<8x64xbf16>, vector<64x128xbf16>, vector<8x128xf32> -> vector<8x128xf32>
    %314 = vector.broadcast %283 : vector<1x128xf32> to vector<8x128xf32>
    %315 = arith.addf %313, %314 : vector<8x128xf32>
    %c0_171 = arith.constant 0 : index
    %c0_172 = arith.constant 0 : index
    %316 = vector.load %arg49[%c0_171, %c0_172] : memref<8x128xf32, #tpu.memory_space<vmem>>, vector<8x128xf32>
    tpu.vector_store %arg49[%c0_171, %c0_172], %315 {strides = array<i32>} : memref<8x128xf32, #tpu.memory_space<vmem>>, vector<8x128xf32>,
    %c0_173 = arith.constant 0 : index
    %c0_174 = arith.constant 0 : index
    %317 = vector.load %arg2[%c0_173, %c0_174] : memref<16x128xf32, #tpu.memory_space<vmem>>, vector<16x128xf32>
    %c0_175 = arith.constant 0 : index
    %c0_176 = arith.constant 0 : index
    %318 = vector.load %arg6[%c0_175, %c0_176] : memref<128x64xf32, #tpu.memory_space<vmem>>, vector<128x64xf32>
    %319 = arith.truncf %317 : vector<16x128xf32> to vector<16x128xbf16>
    %320 = arith.truncf %318 : vector<128x64xf32> to vector<128x64xbf16>
    %cst_177 = arith.constant dense<0.000000e+00> : vector<16x64xf32>
    %321 = tpu.matmul %319, %320, %cst_177 {dimension_numbers = #tpu.dot_dimension_numbers<[1], [0], [0], [1], [0, 0, 1, 1], [], []>} : vector<16x128xbf16>, vector<128x64xbf16>, vector<16x64xf32> -> vector<16x64xf32>
    %c0_178 = arith.constant 0 : index
    %c0_179 = arith.constant 0 : index
    %322 = vector.load %arg4[%c0_178, %c0_179] : memref<16x64xf32, #tpu.memory_space<vmem>>, vector<16x64xf32>
    %323 = arith.addf %321, %322 : vector<16x64xf32>
    %c0_180 = arith.constant 0 : index
    %c0_181 = arith.constant 0 : index
    %c0_182 = arith.constant 0 : index
    %324 = vector.load %arg21[%c0_180, %c0_181, %c0_182] : memref<2x64x64xf32, #tpu.memory_space<vmem>>, vector<1x64x64xf32>
    %325 = vector.shape_cast %324 : vector<1x64x64xf32> to vector<64x64xf32>
    %c0_183 = arith.constant 0 : index
    %c0_184 = arith.constant 0 : index
    %c0_185 = arith.constant 0 : index
    %326 = vector.load %arg22[%c0_183, %c0_184, %c0_185] : memref<2x1x64xf32, #tpu.memory_space<vmem>>, vector<1x1x64xf32>
    %327 = vector.shape_cast %326 : vector<1x1x64xf32> to vector<1x64xf32>
    %c0_186 = arith.constant 0 : index
    %c0_187 = arith.constant 0 : index
    %c0_188 = arith.constant 0 : index
    %328 = vector.load %arg19[%c0_186, %c0_187, %c0_188] : memref<2x64x256xf32, #tpu.memory_space<vmem>>, vector<1x64x256xf32>
    %329 = vector.shape_cast %328 : vector<1x64x256xf32> to vector<64x256xf32>
    %330 = arith.truncf %323 : vector<16x64xf32> to vector<16x64xbf16>
    %331 = arith.truncf %329 : vector<64x256xf32> to vector<64x256xbf16>
    %cst_189 = arith.constant dense<0.000000e+00> : vector<16x256xf32>
    %332 = tpu.matmul %330, %331, %cst_189 {dimension_numbers = #tpu.dot_dimension_numbers<[1], [0], [0], [1], [0, 0, 1, 1], [], []>} : vector<16x64xbf16>, vector<64x256xbf16>, vector<16x256xf32> -> vector<16x256xf32>
    %c0_190 = arith.constant 0 : index
    %c0_191 = arith.constant 0 : index
    %c0_192 = arith.constant 0 : index
    %333 = vector.load %arg20[%c0_190, %c0_191, %c0_192] : memref<2x1x256xf32, #tpu.memory_space<vmem>>, vector<1x1x256xf32>
    %334 = vector.shape_cast %333 : vector<1x1x256xf32> to vector<1x256xf32>
    %335 = vector.broadcast %334 : vector<1x256xf32> to vector<16x256xf32>
    %336 = arith.addf %332, %335 : vector<16x256xf32>
    %c0_193 = arith.constant 0 : index
    %c0_194 = arith.constant 0 : index
    %337 = vector.load %arg51[%c0_193, %c0_194] : memref<56x256xf32, #tpu.memory_space<vmem>>, vector<16x256xf32>
    tpu.vector_store %arg51[%c0_193, %c0_194], %336 {strides = array<i32>} : memref<56x256xf32, #tpu.memory_space<vmem>>, vector<16x256xf32>,
    %c0_195 = arith.constant 0 : index
    %c0_196 = arith.constant 0 : index
    %338 = vector.load %arg51[%c0_195, %c0_196] : memref<56x256xf32, #tpu.memory_space<vmem>>, vector<16x32xf32>
    %c0_197 = arith.constant 0 : index
    %c64_198 = arith.constant 64 : index
    %339 = vector.load %arg51[%c0_197, %c64_198] : memref<56x256xf32, #tpu.memory_space<vmem>>, vector<16x32xf32>
    %c0_199 = arith.constant 0 : index
    %c128_200 = arith.constant 128 : index
    %340 = vector.load %arg51[%c0_199, %c128_200] : memref<56x256xf32, #tpu.memory_space<vmem>>, vector<16x32xf32>
    %341 = arith.truncf %338 : vector<16x32xf32> to vector<16x32xbf16>
    %342 = arith.truncf %339 : vector<16x32xf32> to vector<16x32xbf16>
    %cst_201 = arith.constant dense<0.000000e+00> : vector<16x16xf32>
    %343 = tpu.matmul %341, %342, %cst_201 {dimension_numbers = #tpu.dot_dimension_numbers<[1], [1], [0], [0], [0, 0, 1, 0], [], []>} : vector<16x32xbf16>, vector<16x32xbf16>, vector<16x16xf32> -> vector<16x16xf32>
    %cst_202 = arith.constant 0.176776692 : f32
    %344 = vector.broadcast %cst_202 : f32 to vector<16x16xf32>
    %345 = arith.mulf %343, %344 : vector<16x16xf32>
    %346 = arith.addf %345, %5 : vector<16x16xf32>
    %cst_203 = arith.constant dense<0xFF800000> : vector<16xf32>
    %347 = vector.multi_reduction <maximumf>, %346, %cst_203 [1] : vector<16x16xf32> to vector<16xf32>
    %348 = vector.shape_cast %347 : vector<16xf32> to vector<16x1xf32>
    %349 = vector.broadcast %348 : vector<16x1xf32> to vector<16x16xf32>
    %350 = arith.subf %346, %349 : vector<16x16xf32>
    %351 = math.exp %350 : vector<16x16xf32>
    %cst_204 = arith.constant dense<0.000000e+00> : vector<16xf32>
    %352 = vector.multi_reduction <add>, %351, %cst_204 [1] : vector<16x16xf32> to vector<16xf32>
    %353 = vector.shape_cast %352 : vector<16xf32> to vector<16x1xf32>
    %354 = tpu.reciprocal %353 {approx = true} : vector<16x1xf32> -> vector<16x1xf32>
    %355 = vector.broadcast %354 : vector<16x1xf32> to vector<16x16xf32>
    %356 = arith.mulf %351, %355 : vector<16x16xf32>
    %357 = arith.truncf %356 : vector<16x16xf32> to vector<16x16xbf16>
    %358 = arith.truncf %340 : vector<16x32xf32> to vector<16x32xbf16>
    %cst_205 = arith.constant dense<0.000000e+00> : vector<16x32xf32>
    %359 = tpu.matmul %357, %358, %cst_205 {dimension_numbers = #tpu.dot_dimension_numbers<[1], [0], [0], [1], [0, 0, 1, 1], [], []>} : vector<16x16xbf16>, vector<16x32xbf16>, vector<16x32xf32> -> vector<16x32xf32>
    %c0_206 = arith.constant 0 : index
    %c32_207 = arith.constant 32 : index
    %360 = vector.load %arg51[%c0_206, %c32_207] : memref<56x256xf32, #tpu.memory_space<vmem>>, vector<16x32xf32>
    %c0_208 = arith.constant 0 : index
    %c96_209 = arith.constant 96 : index
    %361 = vector.load %arg51[%c0_208, %c96_209] : memref<56x256xf32, #tpu.memory_space<vmem>>, vector<16x32xf32>
    %c0_210 = arith.constant 0 : index
    %c160_211 = arith.constant 160 : index
    %362 = vector.load %arg51[%c0_210, %c160_211] : memref<56x256xf32, #tpu.memory_space<vmem>>, vector<16x32xf32>
    %363 = arith.truncf %360 : vector<16x32xf32> to vector<16x32xbf16>
    %364 = arith.truncf %361 : vector<16x32xf32> to vector<16x32xbf16>
    %cst_212 = arith.constant dense<0.000000e+00> : vector<16x16xf32>
    %365 = tpu.matmul %363, %364, %cst_212 {dimension_numbers = #tpu.dot_dimension_numbers<[1], [1], [0], [0], [0, 0, 1, 0], [], []>} : vector<16x32xbf16>, vector<16x32xbf16>, vector<16x16xf32> -> vector<16x16xf32>
    %cst_213 = arith.constant 0.176776692 : f32
    %366 = vector.broadcast %cst_213 : f32 to vector<16x16xf32>
    %367 = arith.mulf %365, %366 : vector<16x16xf32>
    %368 = arith.addf %367, %5 : vector<16x16xf32>
    %cst_214 = arith.constant dense<0xFF800000> : vector<16xf32>
    %369 = vector.multi_reduction <maximumf>, %368, %cst_214 [1] : vector<16x16xf32> to vector<16xf32>
    %370 = vector.shape_cast %369 : vector<16xf32> to vector<16x1xf32>
    %371 = vector.broadcast %370 : vector<16x1xf32> to vector<16x16xf32>
    %372 = arith.subf %368, %371 : vector<16x16xf32>
    %373 = math.exp %372 : vector<16x16xf32>
    %cst_215 = arith.constant dense<0.000000e+00> : vector<16xf32>
    %374 = vector.multi_reduction <add>, %373, %cst_215 [1] : vector<16x16xf32> to vector<16xf32>
    %375 = vector.shape_cast %374 : vector<16xf32> to vector<16x1xf32>
    %376 = tpu.reciprocal %375 {approx = true} : vector<16x1xf32> -> vector<16x1xf32>
    %377 = vector.broadcast %376 : vector<16x1xf32> to vector<16x16xf32>
    %378 = arith.mulf %373, %377 : vector<16x16xf32>
    %379 = arith.truncf %378 : vector<16x16xf32> to vector<16x16xbf16>
    %380 = arith.truncf %362 : vector<16x32xf32> to vector<16x32xbf16>
    %cst_216 = arith.constant dense<0.000000e+00> : vector<16x32xf32>
    %381 = tpu.matmul %379, %380, %cst_216 {dimension_numbers = #tpu.dot_dimension_numbers<[1], [0], [0], [1], [0, 0, 1, 1], [], []>} : vector<16x16xbf16>, vector<16x32xbf16>, vector<16x32xf32> -> vector<16x32xf32>
    %382 = tpu.concatenate %359, %381 in 1 : vector<16x32xf32>, vector<16x32xf32> -> vector<16x64xf32>
    %383 = arith.truncf %382 : vector<16x64xf32> to vector<16x64xbf16>
    %384 = arith.truncf %325 : vector<64x64xf32> to vector<64x64xbf16>
    %cst_217 = arith.constant dense<0.000000e+00> : vector<16x64xf32>
    %385 = tpu.matmul %383, %384, %cst_217 {dimension_numbers = #tpu.dot_dimension_numbers<[1], [0], [0], [1], [0, 0, 1, 1], [], []>} : vector<16x64xbf16>, vector<64x64xbf16>, vector<16x64xf32> -> vector<16x64xf32>
    %386 = vector.broadcast %327 : vector<1x64xf32> to vector<16x64xf32>
    %387 = arith.addf %385, %386 : vector<16x64xf32>
    %388 = arith.addf %387, %323 : vector<16x64xf32>
    %c0_218 = arith.constant 0 : index
    %c0_219 = arith.constant 0 : index
    %c0_220 = arith.constant 0 : index
    %389 = vector.load %arg23[%c0_218, %c0_219, %c0_220] : memref<2x1x64xf32, #tpu.memory_space<vmem>>, vector<1x1x64xf32>
    %390 = vector.shape_cast %389 : vector<1x1x64xf32> to vector<1x64xf32>
    %c0_221 = arith.constant 0 : index
    %c0_222 = arith.constant 0 : index
    %c0_223 = arith.constant 0 : index
    %391 = vector.load %arg24[%c0_221, %c0_222, %c0_223] : memref<2x1x64xf32, #tpu.memory_space<vmem>>, vector<1x1x64xf32>
    %392 = vector.shape_cast %391 : vector<1x1x64xf32> to vector<1x64xf32>
    %cst_224 = arith.constant dense<0.000000e+00> : vector<16xf32>
    %393 = vector.multi_reduction <add>, %388, %cst_224 [1] : vector<16x64xf32> to vector<16xf32>
    %394 = vector.shape_cast %393 : vector<16xf32> to vector<16x1xf32>
    %cst_225 = arith.constant 6.400000e+01 : f32
    %395 = vector.broadcast %cst_225 : f32 to vector<16x1xf32>
    %396 = arith.divf %394, %395 : vector<16x1xf32>
    %397 = vector.broadcast %396 : vector<16x1xf32> to vector<16x64xf32>
    %398 = arith.subf %388, %397 : vector<16x64xf32>
    %399 = arith.mulf %398, %398 : vector<16x64xf32>
    %cst_226 = arith.constant dense<0.000000e+00> : vector<16xf32>
    %400 = vector.multi_reduction <add>, %399, %cst_226 [1] : vector<16x64xf32> to vector<16xf32>
    %401 = vector.shape_cast %400 : vector<16xf32> to vector<16x1xf32>
    %cst_227 = arith.constant 0.0158730168 : f32
    %402 = vector.broadcast %cst_227 : f32 to vector<16x1xf32>
    %403 = arith.mulf %401, %402 : vector<16x1xf32>
    %404 = math.sqrt %403 : vector<16x1xf32>
    %cst_228 = arith.constant 1.000000e-03 : f32
    %405 = vector.broadcast %cst_228 : f32 to vector<16x1xf32>
    %406 = arith.addf %404, %405 : vector<16x1xf32>
    %407 = vector.broadcast %406 : vector<16x1xf32> to vector<16x64xf32>
    %408 = arith.divf %398, %407 : vector<16x64xf32>
    %409 = vector.broadcast %390 : vector<1x64xf32> to vector<16x64xf32>
    %410 = arith.mulf %408, %409 : vector<16x64xf32>
    %411 = vector.broadcast %392 : vector<1x64xf32> to vector<16x64xf32>
    %412 = arith.addf %410, %411 : vector<16x64xf32>
    %c0_229 = arith.constant 0 : index
    %c0_230 = arith.constant 0 : index
    %c0_231 = arith.constant 0 : index
    %413 = vector.load %arg27[%c0_229, %c0_230, %c0_231] : memref<2x64x64xf32, #tpu.memory_space<vmem>>, vector<1x64x64xf32>
    %414 = vector.shape_cast %413 : vector<1x64x64xf32> to vector<64x64xf32>
    %c0_232 = arith.constant 0 : index
    %c0_233 = arith.constant 0 : index
    %c0_234 = arith.constant 0 : index
    %415 = vector.load %arg28[%c0_232, %c0_233, %c0_234] : memref<2x1x64xf32, #tpu.memory_space<vmem>>, vector<1x1x64xf32>
    %416 = vector.shape_cast %415 : vector<1x1x64xf32> to vector<1x64xf32>
    %c0_235 = arith.constant 0 : index
    %c0_236 = arith.constant 0 : index
    %c0_237 = arith.constant 0 : index
    %417 = vector.load %arg25[%c0_235, %c0_236, %c0_237] : memref<2x64x256xf32, #tpu.memory_space<vmem>>, vector<1x64x256xf32>
    %418 = vector.shape_cast %417 : vector<1x64x256xf32> to vector<64x256xf32>
    %c0_238 = arith.constant 0 : index
    %c0_239 = arith.constant 0 : index
    %c0_240 = arith.constant 0 : index
    %419 = vector.load %arg26[%c0_238, %c0_239, %c0_240] : memref<2x1x256xf32, #tpu.memory_space<vmem>>, vector<1x1x256xf32>
    %420 = vector.shape_cast %419 : vector<1x1x256xf32> to vector<1x256xf32>
    %421 = vector.extract_strided_slice %418 {offsets = [0, 0], sizes = [64, 64], strides = [1, 1]} : vector<64x256xf32> to vector<64x64xf32>
    %422 = arith.truncf %412 : vector<16x64xf32> to vector<16x64xbf16>
    %423 = arith.truncf %421 : vector<64x64xf32> to vector<64x64xbf16>
    %cst_241 = arith.constant dense<0.000000e+00> : vector<16x64xf32>
    %424 = tpu.matmul %422, %423, %cst_241 {dimension_numbers = #tpu.dot_dimension_numbers<[1], [0], [0], [1], [0, 0, 1, 1], [], []>} : vector<16x64xbf16>, vector<64x64xbf16>, vector<16x64xf32> -> vector<16x64xf32>
    %425 = vector.extract_strided_slice %420 {offsets = [0, 0], sizes = [1, 64], strides = [1, 1]} : vector<1x256xf32> to vector<1x64xf32>
    %426 = vector.broadcast %425 : vector<1x64xf32> to vector<16x64xf32>
    %427 = arith.addf %424, %426 : vector<16x64xf32>
    %c0_242 = arith.constant 0 : index
    %c0_243 = arith.constant 0 : index
    %428 = vector.load %arg51[%c0_242, %c0_243] : memref<56x256xf32, #tpu.memory_space<vmem>>, vector<16x64xf32>
    tpu.vector_store %arg51[%c0_242, %c0_243], %427 {strides = array<i32>} : memref<56x256xf32, #tpu.memory_space<vmem>>, vector<16x64xf32>,
    %429 = vector.extract_strided_slice %418 {offsets = [0, 64], sizes = [64, 128], strides = [1, 1]} : vector<64x256xf32> to vector<64x128xf32>
    %430 = arith.truncf %276 : vector<56x64xf32> to vector<56x64xbf16>
    %431 = arith.truncf %429 : vector<64x128xf32> to vector<64x128xbf16>
    %cst_244 = arith.constant dense<0.000000e+00> : vector<56x128xf32>
    %432 = tpu.matmul %430, %431, %cst_244 {dimension_numbers = #tpu.dot_dimension_numbers<[1], [0], [0], [1], [0, 0, 1, 1], [], []>} : vector<56x64xbf16>, vector<64x128xbf16>, vector<56x128xf32> -> vector<56x128xf32>
    %433 = vector.extract_strided_slice %420 {offsets = [0, 64], sizes = [1, 128], strides = [1, 1]} : vector<1x256xf32> to vector<1x128xf32>
    %434 = vector.broadcast %433 : vector<1x128xf32> to vector<56x128xf32>
    %435 = arith.addf %432, %434 : vector<56x128xf32>
    %c0_245 = arith.constant 0 : index
    %c0_246 = arith.constant 0 : index
    %436 = vector.load %arg52[%c0_245, %c0_246] : memref<56x128xf32, #tpu.memory_space<vmem>>, vector<56x128xf32>
    tpu.vector_store %arg52[%c0_245, %c0_246], %435 {strides = array<i32>} : memref<56x128xf32, #tpu.memory_space<vmem>>, vector<56x128xf32>,
    %c0_247 = arith.constant 0 : index
    %c0_248 = arith.constant 0 : index
    %437 = vector.load %arg51[%c0_247, %c0_248] : memref<56x256xf32, #tpu.memory_space<vmem>>, vector<16x32xf32>
    %c0_249 = arith.constant 0 : index
    %c0_250 = arith.constant 0 : index
    %438 = vector.load %arg52[%c0_249, %c0_250] : memref<56x128xf32, #tpu.memory_space<vmem>>, vector<56x32xf32>
    %c0_251 = arith.constant 0 : index
    %c64_252 = arith.constant 64 : index
    %439 = vector.load %arg52[%c0_251, %c64_252] : memref<56x128xf32, #tpu.memory_space<vmem>>, vector<56x32xf32>
    %440 = arith.truncf %437 : vector<16x32xf32> to vector<16x32xbf16>
    %441 = arith.truncf %438 : vector<56x32xf32> to vector<56x32xbf16>
    %cst_253 = arith.constant dense<0.000000e+00> : vector<16x56xf32>
    %442 = tpu.matmul %440, %441, %cst_253 {dimension_numbers = #tpu.dot_dimension_numbers<[1], [1], [0], [0], [0, 0, 1, 0], [], []>} : vector<16x32xbf16>, vector<56x32xbf16>, vector<16x56xf32> -> vector<16x56xf32>
    %cst_254 = arith.constant 0.176776692 : f32
    %443 = vector.broadcast %cst_254 : f32 to vector<16x56xf32>
    %444 = arith.mulf %442, %443 : vector<16x56xf32>
    %cst_255 = arith.constant dense<0xFF800000> : vector<16xf32>
    %445 = vector.multi_reduction <maximumf>, %444, %cst_255 [1] : vector<16x56xf32> to vector<16xf32>
    %446 = vector.shape_cast %445 : vector<16xf32> to vector<16x1xf32>
    %447 = vector.broadcast %446 : vector<16x1xf32> to vector<16x56xf32>
    %448 = arith.subf %444, %447 : vector<16x56xf32>
    %449 = math.exp %448 : vector<16x56xf32>
    %cst_256 = arith.constant dense<0.000000e+00> : vector<16xf32>
    %450 = vector.multi_reduction <add>, %449, %cst_256 [1] : vector<16x56xf32> to vector<16xf32>
    %451 = vector.shape_cast %450 : vector<16xf32> to vector<16x1xf32>
    %452 = tpu.reciprocal %451 {approx = true} : vector<16x1xf32> -> vector<16x1xf32>
    %453 = vector.broadcast %452 : vector<16x1xf32> to vector<16x56xf32>
    %454 = arith.mulf %449, %453 : vector<16x56xf32>
    %455 = arith.truncf %454 : vector<16x56xf32> to vector<16x56xbf16>
    %456 = arith.truncf %439 : vector<56x32xf32> to vector<56x32xbf16>
    %cst_257 = arith.constant dense<0.000000e+00> : vector<16x32xf32>
    %457 = tpu.matmul %455, %456, %cst_257 {dimension_numbers = #tpu.dot_dimension_numbers<[1], [0], [0], [1], [0, 0, 1, 1], [], []>} : vector<16x56xbf16>, vector<56x32xbf16>, vector<16x32xf32> -> vector<16x32xf32>
    %c0_258 = arith.constant 0 : index
    %c32_259 = arith.constant 32 : index
    %458 = vector.load %arg51[%c0_258, %c32_259] : memref<56x256xf32, #tpu.memory_space<vmem>>, vector<16x32xf32>
    %c0_260 = arith.constant 0 : index
    %c32_261 = arith.constant 32 : index
    %459 = vector.load %arg52[%c0_260, %c32_261] : memref<56x128xf32, #tpu.memory_space<vmem>>, vector<56x32xf32>
    %c0_262 = arith.constant 0 : index
    %c96_263 = arith.constant 96 : index
    %460 = vector.load %arg52[%c0_262, %c96_263] : memref<56x128xf32, #tpu.memory_space<vmem>>, vector<56x32xf32>
    %461 = arith.truncf %458 : vector<16x32xf32> to vector<16x32xbf16>
    %462 = arith.truncf %459 : vector<56x32xf32> to vector<56x32xbf16>
    %cst_264 = arith.constant dense<0.000000e+00> : vector<16x56xf32>
    %463 = tpu.matmul %461, %462, %cst_264 {dimension_numbers = #tpu.dot_dimension_numbers<[1], [1], [0], [0], [0, 0, 1, 0], [], []>} : vector<16x32xbf16>, vector<56x32xbf16>, vector<16x56xf32> -> vector<16x56xf32>
    %cst_265 = arith.constant 0.176776692 : f32
    %464 = vector.broadcast %cst_265 : f32 to vector<16x56xf32>
    %465 = arith.mulf %463, %464 : vector<16x56xf32>
    %cst_266 = arith.constant dense<0xFF800000> : vector<16xf32>
    %466 = vector.multi_reduction <maximumf>, %465, %cst_266 [1] : vector<16x56xf32> to vector<16xf32>
    %467 = vector.shape_cast %466 : vector<16xf32> to vector<16x1xf32>
    %468 = vector.broadcast %467 : vector<16x1xf32> to vector<16x56xf32>
    %469 = arith.subf %465, %468 : vector<16x56xf32>
    %470 = math.exp %469 : vector<16x56xf32>
    %cst_267 = arith.constant dense<0.000000e+00> : vector<16xf32>
    %471 = vector.multi_reduction <add>, %470, %cst_267 [1] : vector<16x56xf32> to vector<16xf32>
    %472 = vector.shape_cast %471 : vector<16xf32> to vector<16x1xf32>
    %473 = tpu.reciprocal %472 {approx = true} : vector<16x1xf32> -> vector<16x1xf32>
    %474 = vector.broadcast %473 : vector<16x1xf32> to vector<16x56xf32>
    %475 = arith.mulf %470, %474 : vector<16x56xf32>
    %476 = arith.truncf %475 : vector<16x56xf32> to vector<16x56xbf16>
    %477 = arith.truncf %460 : vector<56x32xf32> to vector<56x32xbf16>
    %cst_268 = arith.constant dense<0.000000e+00> : vector<16x32xf32>
    %478 = tpu.matmul %476, %477, %cst_268 {dimension_numbers = #tpu.dot_dimension_numbers<[1], [0], [0], [1], [0, 0, 1, 1], [], []>} : vector<16x56xbf16>, vector<56x32xbf16>, vector<16x32xf32> -> vector<16x32xf32>
    %479 = tpu.concatenate %457, %478 in 1 : vector<16x32xf32>, vector<16x32xf32> -> vector<16x64xf32>
    %480 = arith.truncf %479 : vector<16x64xf32> to vector<16x64xbf16>
    %481 = arith.truncf %414 : vector<64x64xf32> to vector<64x64xbf16>
    %cst_269 = arith.constant dense<0.000000e+00> : vector<16x64xf32>
    %482 = tpu.matmul %480, %481, %cst_269 {dimension_numbers = #tpu.dot_dimension_numbers<[1], [0], [0], [1], [0, 0, 1, 1], [], []>} : vector<16x64xbf16>, vector<64x64xbf16>, vector<16x64xf32> -> vector<16x64xf32>
    %483 = vector.broadcast %416 : vector<1x64xf32> to vector<16x64xf32>
    %484 = arith.addf %482, %483 : vector<16x64xf32>
    %485 = arith.addf %484, %412 : vector<16x64xf32>
    %c0_270 = arith.constant 0 : index
    %c0_271 = arith.constant 0 : index
    %c0_272 = arith.constant 0 : index
    %486 = vector.load %arg29[%c0_270, %c0_271, %c0_272] : memref<2x1x64xf32, #tpu.memory_space<vmem>>, vector<1x1x64xf32>
    %487 = vector.shape_cast %486 : vector<1x1x64xf32> to vector<1x64xf32>
    %c0_273 = arith.constant 0 : index
    %c0_274 = arith.constant 0 : index
    %c0_275 = arith.constant 0 : index
    %488 = vector.load %arg30[%c0_273, %c0_274, %c0_275] : memref<2x1x64xf32, #tpu.memory_space<vmem>>, vector<1x1x64xf32>
    %489 = vector.shape_cast %488 : vector<1x1x64xf32> to vector<1x64xf32>
    %cst_276 = arith.constant dense<0.000000e+00> : vector<16xf32>
    %490 = vector.multi_reduction <add>, %485, %cst_276 [1] : vector<16x64xf32> to vector<16xf32>
    %491 = vector.shape_cast %490 : vector<16xf32> to vector<16x1xf32>
    %cst_277 = arith.constant 6.400000e+01 : f32
    %492 = vector.broadcast %cst_277 : f32 to vector<16x1xf32>
    %493 = arith.divf %491, %492 : vector<16x1xf32>
    %494 = vector.broadcast %493 : vector<16x1xf32> to vector<16x64xf32>
    %495 = arith.subf %485, %494 : vector<16x64xf32>
    %496 = arith.mulf %495, %495 : vector<16x64xf32>
    %cst_278 = arith.constant dense<0.000000e+00> : vector<16xf32>
    %497 = vector.multi_reduction <add>, %496, %cst_278 [1] : vector<16x64xf32> to vector<16xf32>
    %498 = vector.shape_cast %497 : vector<16xf32> to vector<16x1xf32>
    %cst_279 = arith.constant 0.0158730168 : f32
    %499 = vector.broadcast %cst_279 : f32 to vector<16x1xf32>
    %500 = arith.mulf %498, %499 : vector<16x1xf32>
    %501 = math.sqrt %500 : vector<16x1xf32>
    %cst_280 = arith.constant 1.000000e-03 : f32
    %502 = vector.broadcast %cst_280 : f32 to vector<16x1xf32>
    %503 = arith.addf %501, %502 : vector<16x1xf32>
    %504 = vector.broadcast %503 : vector<16x1xf32> to vector<16x64xf32>
    %505 = arith.divf %495, %504 : vector<16x64xf32>
    %506 = vector.broadcast %487 : vector<1x64xf32> to vector<16x64xf32>
    %507 = arith.mulf %505, %506 : vector<16x64xf32>
    %508 = vector.broadcast %489 : vector<1x64xf32> to vector<16x64xf32>
    %509 = arith.addf %507, %508 : vector<16x64xf32>
    %c0_281 = arith.constant 0 : index
    %c0_282 = arith.constant 0 : index
    %c0_283 = arith.constant 0 : index
    %510 = vector.load %arg31[%c0_281, %c0_282, %c0_283] : memref<2x64x128xf32, #tpu.memory_space<vmem>>, vector<1x64x128xf32>
    %511 = vector.shape_cast %510 : vector<1x64x128xf32> to vector<64x128xf32>
    %c0_284 = arith.constant 0 : index
    %c0_285 = arith.constant 0 : index
    %c0_286 = arith.constant 0 : index
    %512 = vector.load %arg32[%c0_284, %c0_285, %c0_286] : memref<2x1x128xf32, #tpu.memory_space<vmem>>, vector<1x1x128xf32>
    %513 = vector.shape_cast %512 : vector<1x1x128xf32> to vector<1x128xf32>
    %c0_287 = arith.constant 0 : index
    %c0_288 = arith.constant 0 : index
    %c0_289 = arith.constant 0 : index
    %514 = vector.load %arg33[%c0_287, %c0_288, %c0_289] : memref<2x128x64xf32, #tpu.memory_space<vmem>>, vector<1x128x64xf32>
    %515 = vector.shape_cast %514 : vector<1x128x64xf32> to vector<128x64xf32>
    %c0_290 = arith.constant 0 : index
    %c0_291 = arith.constant 0 : index
    %c0_292 = arith.constant 0 : index
    %516 = vector.load %arg34[%c0_290, %c0_291, %c0_292] : memref<2x1x64xf32, #tpu.memory_space<vmem>>, vector<1x1x64xf32>
    %517 = vector.shape_cast %516 : vector<1x1x64xf32> to vector<1x64xf32>
    %518 = arith.truncf %509 : vector<16x64xf32> to vector<16x64xbf16>
    %519 = arith.truncf %511 : vector<64x128xf32> to vector<64x128xbf16>
    %cst_293 = arith.constant dense<0.000000e+00> : vector<16x128xf32>
    %520 = tpu.matmul %518, %519, %cst_293 {dimension_numbers = #tpu.dot_dimension_numbers<[1], [0], [0], [1], [0, 0, 1, 1], [], []>} : vector<16x64xbf16>, vector<64x128xbf16>, vector<16x128xf32> -> vector<16x128xf32>
    %521 = vector.broadcast %513 : vector<1x128xf32> to vector<16x128xf32>
    %522 = arith.addf %520, %521 : vector<16x128xf32>
    %cst_294 = arith.constant 0.000000e+00 : f32
    %523 = vector.broadcast %cst_294 : f32 to vector<16x128xf32>
    %524 = arith.maximumf %522, %523 : vector<16x128xf32>
    %525 = arith.truncf %524 : vector<16x128xf32> to vector<16x128xbf16>
    %526 = arith.truncf %515 : vector<128x64xf32> to vector<128x64xbf16>
    %cst_295 = arith.constant dense<0.000000e+00> : vector<16x64xf32>
    %527 = tpu.matmul %525, %526, %cst_295 {dimension_numbers = #tpu.dot_dimension_numbers<[1], [0], [0], [1], [0, 0, 1, 1], [], []>} : vector<16x128xbf16>, vector<128x64xbf16>, vector<16x64xf32> -> vector<16x64xf32>
    %528 = vector.broadcast %517 : vector<1x64xf32> to vector<16x64xf32>
    %529 = arith.addf %527, %528 : vector<16x64xf32>
    %530 = arith.addf %529, %509 : vector<16x64xf32>
    %c0_296 = arith.constant 0 : index
    %c0_297 = arith.constant 0 : index
    %c0_298 = arith.constant 0 : index
    %531 = vector.load %arg35[%c0_296, %c0_297, %c0_298] : memref<2x1x64xf32, #tpu.memory_space<vmem>>, vector<1x1x64xf32>
    %532 = vector.shape_cast %531 : vector<1x1x64xf32> to vector<1x64xf32>
    %c0_299 = arith.constant 0 : index
    %c0_300 = arith.constant 0 : index
    %c0_301 = arith.constant 0 : index
    %533 = vector.load %arg36[%c0_299, %c0_300, %c0_301] : memref<2x1x64xf32, #tpu.memory_space<vmem>>, vector<1x1x64xf32>
    %534 = vector.shape_cast %533 : vector<1x1x64xf32> to vector<1x64xf32>
    %cst_302 = arith.constant dense<0.000000e+00> : vector<16xf32>
    %535 = vector.multi_reduction <add>, %530, %cst_302 [1] : vector<16x64xf32> to vector<16xf32>
    %536 = vector.shape_cast %535 : vector<16xf32> to vector<16x1xf32>
    %cst_303 = arith.constant 6.400000e+01 : f32
    %537 = vector.broadcast %cst_303 : f32 to vector<16x1xf32>
    %538 = arith.divf %536, %537 : vector<16x1xf32>
    %539 = vector.broadcast %538 : vector<16x1xf32> to vector<16x64xf32>
    %540 = arith.subf %530, %539 : vector<16x64xf32>
    %541 = arith.mulf %540, %540 : vector<16x64xf32>
    %cst_304 = arith.constant dense<0.000000e+00> : vector<16xf32>
    %542 = vector.multi_reduction <add>, %541, %cst_304 [1] : vector<16x64xf32> to vector<16xf32>
    %543 = vector.shape_cast %542 : vector<16xf32> to vector<16x1xf32>
    %cst_305 = arith.constant 0.0158730168 : f32
    %544 = vector.broadcast %cst_305 : f32 to vector<16x1xf32>
    %545 = arith.mulf %543, %544 : vector<16x1xf32>
    %546 = math.sqrt %545 : vector<16x1xf32>
    %cst_306 = arith.constant 1.000000e-03 : f32
    %547 = vector.broadcast %cst_306 : f32 to vector<16x1xf32>
    %548 = arith.addf %546, %547 : vector<16x1xf32>
    %549 = vector.broadcast %548 : vector<16x1xf32> to vector<16x64xf32>
    %550 = arith.divf %540, %549 : vector<16x64xf32>
    %551 = vector.broadcast %532 : vector<1x64xf32> to vector<16x64xf32>
    %552 = arith.mulf %550, %551 : vector<16x64xf32>
    %553 = vector.broadcast %534 : vector<1x64xf32> to vector<16x64xf32>
    %554 = arith.addf %552, %553 : vector<16x64xf32>
    %c1_307 = arith.constant 1 : index
    %c0_308 = arith.constant 0 : index
    %c0_309 = arith.constant 0 : index
    %555 = vector.load %arg21[%c1_307, %c0_308, %c0_309] : memref<2x64x64xf32, #tpu.memory_space<vmem>>, vector<1x64x64xf32>
    %556 = vector.shape_cast %555 : vector<1x64x64xf32> to vector<64x64xf32>
    %c1_310 = arith.constant 1 : index
    %c0_311 = arith.constant 0 : index
    %c0_312 = arith.constant 0 : index
    %557 = vector.load %arg22[%c1_310, %c0_311, %c0_312] : memref<2x1x64xf32, #tpu.memory_space<vmem>>, vector<1x1x64xf32>
    %558 = vector.shape_cast %557 : vector<1x1x64xf32> to vector<1x64xf32>
    %c1_313 = arith.constant 1 : index
    %c0_314 = arith.constant 0 : index
    %c0_315 = arith.constant 0 : index
    %559 = vector.load %arg19[%c1_313, %c0_314, %c0_315] : memref<2x64x256xf32, #tpu.memory_space<vmem>>, vector<1x64x256xf32>
    %560 = vector.shape_cast %559 : vector<1x64x256xf32> to vector<64x256xf32>
    %561 = arith.truncf %554 : vector<16x64xf32> to vector<16x64xbf16>
    %562 = arith.truncf %560 : vector<64x256xf32> to vector<64x256xbf16>
    %cst_316 = arith.constant dense<0.000000e+00> : vector<16x256xf32>
    %563 = tpu.matmul %561, %562, %cst_316 {dimension_numbers = #tpu.dot_dimension_numbers<[1], [0], [0], [1], [0, 0, 1, 1], [], []>} : vector<16x64xbf16>, vector<64x256xbf16>, vector<16x256xf32> -> vector<16x256xf32>
    %c1_317 = arith.constant 1 : index
    %c0_318 = arith.constant 0 : index
    %c0_319 = arith.constant 0 : index
    %564 = vector.load %arg20[%c1_317, %c0_318, %c0_319] : memref<2x1x256xf32, #tpu.memory_space<vmem>>, vector<1x1x256xf32>
    %565 = vector.shape_cast %564 : vector<1x1x256xf32> to vector<1x256xf32>
    %566 = vector.broadcast %565 : vector<1x256xf32> to vector<16x256xf32>
    %567 = arith.addf %563, %566 : vector<16x256xf32>
    %c0_320 = arith.constant 0 : index
    %c0_321 = arith.constant 0 : index
    %568 = vector.load %arg51[%c0_320, %c0_321] : memref<56x256xf32, #tpu.memory_space<vmem>>, vector<16x256xf32>
    tpu.vector_store %arg51[%c0_320, %c0_321], %567 {strides = array<i32>} : memref<56x256xf32, #tpu.memory_space<vmem>>, vector<16x256xf32>,
    %c0_322 = arith.constant 0 : index
    %c0_323 = arith.constant 0 : index
    %569 = vector.load %arg51[%c0_322, %c0_323] : memref<56x256xf32, #tpu.memory_space<vmem>>, vector<16x32xf32>
    %c0_324 = arith.constant 0 : index
    %c64_325 = arith.constant 64 : index
    %570 = vector.load %arg51[%c0_324, %c64_325] : memref<56x256xf32, #tpu.memory_space<vmem>>, vector<16x32xf32>
    %c0_326 = arith.constant 0 : index
    %c128_327 = arith.constant 128 : index
    %571 = vector.load %arg51[%c0_326, %c128_327] : memref<56x256xf32, #tpu.memory_space<vmem>>, vector<16x32xf32>
    %572 = arith.truncf %569 : vector<16x32xf32> to vector<16x32xbf16>
    %573 = arith.truncf %570 : vector<16x32xf32> to vector<16x32xbf16>
    %cst_328 = arith.constant dense<0.000000e+00> : vector<16x16xf32>
    %574 = tpu.matmul %572, %573, %cst_328 {dimension_numbers = #tpu.dot_dimension_numbers<[1], [1], [0], [0], [0, 0, 1, 0], [], []>} : vector<16x32xbf16>, vector<16x32xbf16>, vector<16x16xf32> -> vector<16x16xf32>
    %cst_329 = arith.constant 0.176776692 : f32
    %575 = vector.broadcast %cst_329 : f32 to vector<16x16xf32>
    %576 = arith.mulf %574, %575 : vector<16x16xf32>
    %577 = arith.addf %576, %5 : vector<16x16xf32>
    %cst_330 = arith.constant dense<0xFF800000> : vector<16xf32>
    %578 = vector.multi_reduction <maximumf>, %577, %cst_330 [1] : vector<16x16xf32> to vector<16xf32>
    %579 = vector.shape_cast %578 : vector<16xf32> to vector<16x1xf32>
    %580 = vector.broadcast %579 : vector<16x1xf32> to vector<16x16xf32>
    %581 = arith.subf %577, %580 : vector<16x16xf32>
    %582 = math.exp %581 : vector<16x16xf32>
    %cst_331 = arith.constant dense<0.000000e+00> : vector<16xf32>
    %583 = vector.multi_reduction <add>, %582, %cst_331 [1] : vector<16x16xf32> to vector<16xf32>
    %584 = vector.shape_cast %583 : vector<16xf32> to vector<16x1xf32>
    %585 = tpu.reciprocal %584 {approx = true} : vector<16x1xf32> -> vector<16x1xf32>
    %586 = vector.broadcast %585 : vector<16x1xf32> to vector<16x16xf32>
    %587 = arith.mulf %582, %586 : vector<16x16xf32>
    %588 = arith.truncf %587 : vector<16x16xf32> to vector<16x16xbf16>
    %589 = arith.truncf %571 : vector<16x32xf32> to vector<16x32xbf16>
    %cst_332 = arith.constant dense<0.000000e+00> : vector<16x32xf32>
    %590 = tpu.matmul %588, %589, %cst_332 {dimension_numbers = #tpu.dot_dimension_numbers<[1], [0], [0], [1], [0, 0, 1, 1], [], []>} : vector<16x16xbf16>, vector<16x32xbf16>, vector<16x32xf32> -> vector<16x32xf32>
    %c0_333 = arith.constant 0 : index
    %c32_334 = arith.constant 32 : index
    %591 = vector.load %arg51[%c0_333, %c32_334] : memref<56x256xf32, #tpu.memory_space<vmem>>, vector<16x32xf32>
    %c0_335 = arith.constant 0 : index
    %c96_336 = arith.constant 96 : index
    %592 = vector.load %arg51[%c0_335, %c96_336] : memref<56x256xf32, #tpu.memory_space<vmem>>, vector<16x32xf32>
    %c0_337 = arith.constant 0 : index
    %c160_338 = arith.constant 160 : index
    %593 = vector.load %arg51[%c0_337, %c160_338] : memref<56x256xf32, #tpu.memory_space<vmem>>, vector<16x32xf32>
    %594 = arith.truncf %591 : vector<16x32xf32> to vector<16x32xbf16>
    %595 = arith.truncf %592 : vector<16x32xf32> to vector<16x32xbf16>
    %cst_339 = arith.constant dense<0.000000e+00> : vector<16x16xf32>
    %596 = tpu.matmul %594, %595, %cst_339 {dimension_numbers = #tpu.dot_dimension_numbers<[1], [1], [0], [0], [0, 0, 1, 0], [], []>} : vector<16x32xbf16>, vector<16x32xbf16>, vector<16x16xf32> -> vector<16x16xf32>
    %cst_340 = arith.constant 0.176776692 : f32
    %597 = vector.broadcast %cst_340 : f32 to vector<16x16xf32>
    %598 = arith.mulf %596, %597 : vector<16x16xf32>
    %599 = arith.addf %598, %5 : vector<16x16xf32>
    %cst_341 = arith.constant dense<0xFF800000> : vector<16xf32>
    %600 = vector.multi_reduction <maximumf>, %599, %cst_341 [1] : vector<16x16xf32> to vector<16xf32>
    %601 = vector.shape_cast %600 : vector<16xf32> to vector<16x1xf32>
    %602 = vector.broadcast %601 : vector<16x1xf32> to vector<16x16xf32>
    %603 = arith.subf %599, %602 : vector<16x16xf32>
    %604 = math.exp %603 : vector<16x16xf32>
    %cst_342 = arith.constant dense<0.000000e+00> : vector<16xf32>
    %605 = vector.multi_reduction <add>, %604, %cst_342 [1] : vector<16x16xf32> to vector<16xf32>
    %606 = vector.shape_cast %605 : vector<16xf32> to vector<16x1xf32>
    %607 = tpu.reciprocal %606 {approx = true} : vector<16x1xf32> -> vector<16x1xf32>
    %608 = vector.broadcast %607 : vector<16x1xf32> to vector<16x16xf32>
    %609 = arith.mulf %604, %608 : vector<16x16xf32>
    %610 = arith.truncf %609 : vector<16x16xf32> to vector<16x16xbf16>
    %611 = arith.truncf %593 : vector<16x32xf32> to vector<16x32xbf16>
    %cst_343 = arith.constant dense<0.000000e+00> : vector<16x32xf32>
    %612 = tpu.matmul %610, %611, %cst_343 {dimension_numbers = #tpu.dot_dimension_numbers<[1], [0], [0], [1], [0, 0, 1, 1], [], []>} : vector<16x16xbf16>, vector<16x32xbf16>, vector<16x32xf32> -> vector<16x32xf32>
    %613 = tpu.concatenate %590, %612 in 1 : vector<16x32xf32>, vector<16x32xf32> -> vector<16x64xf32>
    %614 = arith.truncf %613 : vector<16x64xf32> to vector<16x64xbf16>
    %615 = arith.truncf %556 : vector<64x64xf32> to vector<64x64xbf16>
    %cst_344 = arith.constant dense<0.000000e+00> : vector<16x64xf32>
    %616 = tpu.matmul %614, %615, %cst_344 {dimension_numbers = #tpu.dot_dimension_numbers<[1], [0], [0], [1], [0, 0, 1, 1], [], []>} : vector<16x64xbf16>, vector<64x64xbf16>, vector<16x64xf32> -> vector<16x64xf32>
    %617 = vector.broadcast %558 : vector<1x64xf32> to vector<16x64xf32>
    %618 = arith.addf %616, %617 : vector<16x64xf32>
    %619 = arith.addf %618, %554 : vector<16x64xf32>
    %c1_345 = arith.constant 1 : index
    %c0_346 = arith.constant 0 : index
    %c0_347 = arith.constant 0 : index
    %620 = vector.load %arg23[%c1_345, %c0_346, %c0_347] : memref<2x1x64xf32, #tpu.memory_space<vmem>>, vector<1x1x64xf32>
    %621 = vector.shape_cast %620 : vector<1x1x64xf32> to vector<1x64xf32>
    %c1_348 = arith.constant 1 : index
    %c0_349 = arith.constant 0 : index
    %c0_350 = arith.constant 0 : index
    %622 = vector.load %arg24[%c1_348, %c0_349, %c0_350] : memref<2x1x64xf32, #tpu.memory_space<vmem>>, vector<1x1x64xf32>
    %623 = vector.shape_cast %622 : vector<1x1x64xf32> to vector<1x64xf32>
    %cst_351 = arith.constant dense<0.000000e+00> : vector<16xf32>
    %624 = vector.multi_reduction <add>, %619, %cst_351 [1] : vector<16x64xf32> to vector<16xf32>
    %625 = vector.shape_cast %624 : vector<16xf32> to vector<16x1xf32>
    %cst_352 = arith.constant 6.400000e+01 : f32
    %626 = vector.broadcast %cst_352 : f32 to vector<16x1xf32>
    %627 = arith.divf %625, %626 : vector<16x1xf32>
    %628 = vector.broadcast %627 : vector<16x1xf32> to vector<16x64xf32>
    %629 = arith.subf %619, %628 : vector<16x64xf32>
    %630 = arith.mulf %629, %629 : vector<16x64xf32>
    %cst_353 = arith.constant dense<0.000000e+00> : vector<16xf32>
    %631 = vector.multi_reduction <add>, %630, %cst_353 [1] : vector<16x64xf32> to vector<16xf32>
    %632 = vector.shape_cast %631 : vector<16xf32> to vector<16x1xf32>
    %cst_354 = arith.constant 0.0158730168 : f32
    %633 = vector.broadcast %cst_354 : f32 to vector<16x1xf32>
    %634 = arith.mulf %632, %633 : vector<16x1xf32>
    %635 = math.sqrt %634 : vector<16x1xf32>
    %cst_355 = arith.constant 1.000000e-03 : f32
    %636 = vector.broadcast %cst_355 : f32 to vector<16x1xf32>
    %637 = arith.addf %635, %636 : vector<16x1xf32>
    %638 = vector.broadcast %637 : vector<16x1xf32> to vector<16x64xf32>
    %639 = arith.divf %629, %638 : vector<16x64xf32>
    %640 = vector.broadcast %621 : vector<1x64xf32> to vector<16x64xf32>
    %641 = arith.mulf %639, %640 : vector<16x64xf32>
    %642 = vector.broadcast %623 : vector<1x64xf32> to vector<16x64xf32>
    %643 = arith.addf %641, %642 : vector<16x64xf32>
    %c1_356 = arith.constant 1 : index
    %c0_357 = arith.constant 0 : index
    %c0_358 = arith.constant 0 : index
    %644 = vector.load %arg27[%c1_356, %c0_357, %c0_358] : memref<2x64x64xf32, #tpu.memory_space<vmem>>, vector<1x64x64xf32>
    %645 = vector.shape_cast %644 : vector<1x64x64xf32> to vector<64x64xf32>
    %c1_359 = arith.constant 1 : index
    %c0_360 = arith.constant 0 : index
    %c0_361 = arith.constant 0 : index
    %646 = vector.load %arg28[%c1_359, %c0_360, %c0_361] : memref<2x1x64xf32, #tpu.memory_space<vmem>>, vector<1x1x64xf32>
    %647 = vector.shape_cast %646 : vector<1x1x64xf32> to vector<1x64xf32>
    %c1_362 = arith.constant 1 : index
    %c0_363 = arith.constant 0 : index
    %c0_364 = arith.constant 0 : index
    %648 = vector.load %arg25[%c1_362, %c0_363, %c0_364] : memref<2x64x256xf32, #tpu.memory_space<vmem>>, vector<1x64x256xf32>
    %649 = vector.shape_cast %648 : vector<1x64x256xf32> to vector<64x256xf32>
    %c1_365 = arith.constant 1 : index
    %c0_366 = arith.constant 0 : index
    %c0_367 = arith.constant 0 : index
    %650 = vector.load %arg26[%c1_365, %c0_366, %c0_367] : memref<2x1x256xf32, #tpu.memory_space<vmem>>, vector<1x1x256xf32>
    %651 = vector.shape_cast %650 : vector<1x1x256xf32> to vector<1x256xf32>
    %652 = vector.extract_strided_slice %649 {offsets = [0, 0], sizes = [64, 64], strides = [1, 1]} : vector<64x256xf32> to vector<64x64xf32>
    %653 = arith.truncf %643 : vector<16x64xf32> to vector<16x64xbf16>
    %654 = arith.truncf %652 : vector<64x64xf32> to vector<64x64xbf16>
    %cst_368 = arith.constant dense<0.000000e+00> : vector<16x64xf32>
    %655 = tpu.matmul %653, %654, %cst_368 {dimension_numbers = #tpu.dot_dimension_numbers<[1], [0], [0], [1], [0, 0, 1, 1], [], []>} : vector<16x64xbf16>, vector<64x64xbf16>, vector<16x64xf32> -> vector<16x64xf32>
    %656 = vector.extract_strided_slice %651 {offsets = [0, 0], sizes = [1, 64], strides = [1, 1]} : vector<1x256xf32> to vector<1x64xf32>
    %657 = vector.broadcast %656 : vector<1x64xf32> to vector<16x64xf32>
    %658 = arith.addf %655, %657 : vector<16x64xf32>
    %c0_369 = arith.constant 0 : index
    %c0_370 = arith.constant 0 : index
    %659 = vector.load %arg51[%c0_369, %c0_370] : memref<56x256xf32, #tpu.memory_space<vmem>>, vector<16x64xf32>
    tpu.vector_store %arg51[%c0_369, %c0_370], %658 {strides = array<i32>} : memref<56x256xf32, #tpu.memory_space<vmem>>, vector<16x64xf32>,
    %660 = vector.extract_strided_slice %649 {offsets = [0, 64], sizes = [64, 128], strides = [1, 1]} : vector<64x256xf32> to vector<64x128xf32>
    %661 = arith.truncf %276 : vector<56x64xf32> to vector<56x64xbf16>
    %662 = arith.truncf %660 : vector<64x128xf32> to vector<64x128xbf16>
    %cst_371 = arith.constant dense<0.000000e+00> : vector<56x128xf32>
    %663 = tpu.matmul %661, %662, %cst_371 {dimension_numbers = #tpu.dot_dimension_numbers<[1], [0], [0], [1], [0, 0, 1, 1], [], []>} : vector<56x64xbf16>, vector<64x128xbf16>, vector<56x128xf32> -> vector<56x128xf32>
    %664 = vector.extract_strided_slice %651 {offsets = [0, 64], sizes = [1, 128], strides = [1, 1]} : vector<1x256xf32> to vector<1x128xf32>
    %665 = vector.broadcast %664 : vector<1x128xf32> to vector<56x128xf32>
    %666 = arith.addf %663, %665 : vector<56x128xf32>
    %c0_372 = arith.constant 0 : index
    %c0_373 = arith.constant 0 : index
    %667 = vector.load %arg52[%c0_372, %c0_373] : memref<56x128xf32, #tpu.memory_space<vmem>>, vector<56x128xf32>
    tpu.vector_store %arg52[%c0_372, %c0_373], %666 {strides = array<i32>} : memref<56x128xf32, #tpu.memory_space<vmem>>, vector<56x128xf32>,
    %c0_374 = arith.constant 0 : index
    %c0_375 = arith.constant 0 : index
    %668 = vector.load %arg51[%c0_374, %c0_375] : memref<56x256xf32, #tpu.memory_space<vmem>>, vector<16x32xf32>
    %c0_376 = arith.constant 0 : index
    %c0_377 = arith.constant 0 : index
    %669 = vector.load %arg52[%c0_376, %c0_377] : memref<56x128xf32, #tpu.memory_space<vmem>>, vector<56x32xf32>
    %c0_378 = arith.constant 0 : index
    %c64_379 = arith.constant 64 : index
    %670 = vector.load %arg52[%c0_378, %c64_379] : memref<56x128xf32, #tpu.memory_space<vmem>>, vector<56x32xf32>
    %671 = arith.truncf %668 : vector<16x32xf32> to vector<16x32xbf16>
    %672 = arith.truncf %669 : vector<56x32xf32> to vector<56x32xbf16>
    %cst_380 = arith.constant dense<0.000000e+00> : vector<16x56xf32>
    %673 = tpu.matmul %671, %672, %cst_380 {dimension_numbers = #tpu.dot_dimension_numbers<[1], [1], [0], [0], [0, 0, 1, 0], [], []>} : vector<16x32xbf16>, vector<56x32xbf16>, vector<16x56xf32> -> vector<16x56xf32>
    %cst_381 = arith.constant 0.176776692 : f32
    %674 = vector.broadcast %cst_381 : f32 to vector<16x56xf32>
    %675 = arith.mulf %673, %674 : vector<16x56xf32>
    %cst_382 = arith.constant dense<0xFF800000> : vector<16xf32>
    %676 = vector.multi_reduction <maximumf>, %675, %cst_382 [1] : vector<16x56xf32> to vector<16xf32>
    %677 = vector.shape_cast %676 : vector<16xf32> to vector<16x1xf32>
    %678 = vector.broadcast %677 : vector<16x1xf32> to vector<16x56xf32>
    %679 = arith.subf %675, %678 : vector<16x56xf32>
    %680 = math.exp %679 : vector<16x56xf32>
    %cst_383 = arith.constant dense<0.000000e+00> : vector<16xf32>
    %681 = vector.multi_reduction <add>, %680, %cst_383 [1] : vector<16x56xf32> to vector<16xf32>
    %682 = vector.shape_cast %681 : vector<16xf32> to vector<16x1xf32>
    %683 = tpu.reciprocal %682 {approx = true} : vector<16x1xf32> -> vector<16x1xf32>
    %684 = vector.broadcast %683 : vector<16x1xf32> to vector<16x56xf32>
    %685 = arith.mulf %680, %684 : vector<16x56xf32>
    %686 = arith.truncf %685 : vector<16x56xf32> to vector<16x56xbf16>
    %687 = arith.truncf %670 : vector<56x32xf32> to vector<56x32xbf16>
    %cst_384 = arith.constant dense<0.000000e+00> : vector<16x32xf32>
    %688 = tpu.matmul %686, %687, %cst_384 {dimension_numbers = #tpu.dot_dimension_numbers<[1], [0], [0], [1], [0, 0, 1, 1], [], []>} : vector<16x56xbf16>, vector<56x32xbf16>, vector<16x32xf32> -> vector<16x32xf32>
    %c0_385 = arith.constant 0 : index
    %c32_386 = arith.constant 32 : index
    %689 = vector.load %arg51[%c0_385, %c32_386] : memref<56x256xf32, #tpu.memory_space<vmem>>, vector<16x32xf32>
    %c0_387 = arith.constant 0 : index
    %c32_388 = arith.constant 32 : index
    %690 = vector.load %arg52[%c0_387, %c32_388] : memref<56x128xf32, #tpu.memory_space<vmem>>, vector<56x32xf32>
    %c0_389 = arith.constant 0 : index
    %c96_390 = arith.constant 96 : index
    %691 = vector.load %arg52[%c0_389, %c96_390] : memref<56x128xf32, #tpu.memory_space<vmem>>, vector<56x32xf32>
    %692 = arith.truncf %689 : vector<16x32xf32> to vector<16x32xbf16>
    %693 = arith.truncf %690 : vector<56x32xf32> to vector<56x32xbf16>
    %cst_391 = arith.constant dense<0.000000e+00> : vector<16x56xf32>
    %694 = tpu.matmul %692, %693, %cst_391 {dimension_numbers = #tpu.dot_dimension_numbers<[1], [1], [0], [0], [0, 0, 1, 0], [], []>} : vector<16x32xbf16>, vector<56x32xbf16>, vector<16x56xf32> -> vector<16x56xf32>
    %cst_392 = arith.constant 0.176776692 : f32
    %695 = vector.broadcast %cst_392 : f32 to vector<16x56xf32>
    %696 = arith.mulf %694, %695 : vector<16x56xf32>
    %cst_393 = arith.constant dense<0xFF800000> : vector<16xf32>
    %697 = vector.multi_reduction <maximumf>, %696, %cst_393 [1] : vector<16x56xf32> to vector<16xf32>
    %698 = vector.shape_cast %697 : vector<16xf32> to vector<16x1xf32>
    %699 = vector.broadcast %698 : vector<16x1xf32> to vector<16x56xf32>
    %700 = arith.subf %696, %699 : vector<16x56xf32>
    %701 = math.exp %700 : vector<16x56xf32>
    %cst_394 = arith.constant dense<0.000000e+00> : vector<16xf32>
    %702 = vector.multi_reduction <add>, %701, %cst_394 [1] : vector<16x56xf32> to vector<16xf32>
    %703 = vector.shape_cast %702 : vector<16xf32> to vector<16x1xf32>
    %704 = tpu.reciprocal %703 {approx = true} : vector<16x1xf32> -> vector<16x1xf32>
    %705 = vector.broadcast %704 : vector<16x1xf32> to vector<16x56xf32>
    %706 = arith.mulf %701, %705 : vector<16x56xf32>
    %707 = arith.truncf %706 : vector<16x56xf32> to vector<16x56xbf16>
    %708 = arith.truncf %691 : vector<56x32xf32> to vector<56x32xbf16>
    %cst_395 = arith.constant dense<0.000000e+00> : vector<16x32xf32>
    %709 = tpu.matmul %707, %708, %cst_395 {dimension_numbers = #tpu.dot_dimension_numbers<[1], [0], [0], [1], [0, 0, 1, 1], [], []>} : vector<16x56xbf16>, vector<56x32xbf16>, vector<16x32xf32> -> vector<16x32xf32>
    %710 = tpu.concatenate %688, %709 in 1 : vector<16x32xf32>, vector<16x32xf32> -> vector<16x64xf32>
    %711 = arith.truncf %710 : vector<16x64xf32> to vector<16x64xbf16>
    %712 = arith.truncf %645 : vector<64x64xf32> to vector<64x64xbf16>
    %cst_396 = arith.constant dense<0.000000e+00> : vector<16x64xf32>
    %713 = tpu.matmul %711, %712, %cst_396 {dimension_numbers = #tpu.dot_dimension_numbers<[1], [0], [0], [1], [0, 0, 1, 1], [], []>} : vector<16x64xbf16>, vector<64x64xbf16>, vector<16x64xf32> -> vector<16x64xf32>
    %714 = vector.broadcast %647 : vector<1x64xf32> to vector<16x64xf32>
    %715 = arith.addf %713, %714 : vector<16x64xf32>
    %716 = arith.addf %715, %643 : vector<16x64xf32>
    %c1_397 = arith.constant 1 : index
    %c0_398 = arith.constant 0 : index
    %c0_399 = arith.constant 0 : index
    %717 = vector.load %arg29[%c1_397, %c0_398, %c0_399] : memref<2x1x64xf32, #tpu.memory_space<vmem>>, vector<1x1x64xf32>
    %718 = vector.shape_cast %717 : vector<1x1x64xf32> to vector<1x64xf32>
    %c1_400 = arith.constant 1 : index
    %c0_401 = arith.constant 0 : index
    %c0_402 = arith.constant 0 : index
    %719 = vector.load %arg30[%c1_400, %c0_401, %c0_402] : memref<2x1x64xf32, #tpu.memory_space<vmem>>, vector<1x1x64xf32>
    %720 = vector.shape_cast %719 : vector<1x1x64xf32> to vector<1x64xf32>
    %cst_403 = arith.constant dense<0.000000e+00> : vector<16xf32>
    %721 = vector.multi_reduction <add>, %716, %cst_403 [1] : vector<16x64xf32> to vector<16xf32>
    %722 = vector.shape_cast %721 : vector<16xf32> to vector<16x1xf32>
    %cst_404 = arith.constant 6.400000e+01 : f32
    %723 = vector.broadcast %cst_404 : f32 to vector<16x1xf32>
    %724 = arith.divf %722, %723 : vector<16x1xf32>
    %725 = vector.broadcast %724 : vector<16x1xf32> to vector<16x64xf32>
    %726 = arith.subf %716, %725 : vector<16x64xf32>
    %727 = arith.mulf %726, %726 : vector<16x64xf32>
    %cst_405 = arith.constant dense<0.000000e+00> : vector<16xf32>
    %728 = vector.multi_reduction <add>, %727, %cst_405 [1] : vector<16x64xf32> to vector<16xf32>
    %729 = vector.shape_cast %728 : vector<16xf32> to vector<16x1xf32>
    %cst_406 = arith.constant 0.0158730168 : f32
    %730 = vector.broadcast %cst_406 : f32 to vector<16x1xf32>
    %731 = arith.mulf %729, %730 : vector<16x1xf32>
    %732 = math.sqrt %731 : vector<16x1xf32>
    %cst_407 = arith.constant 1.000000e-03 : f32
    %733 = vector.broadcast %cst_407 : f32 to vector<16x1xf32>
    %734 = arith.addf %732, %733 : vector<16x1xf32>
    %735 = vector.broadcast %734 : vector<16x1xf32> to vector<16x64xf32>
    %736 = arith.divf %726, %735 : vector<16x64xf32>
    %737 = vector.broadcast %718 : vector<1x64xf32> to vector<16x64xf32>
    %738 = arith.mulf %736, %737 : vector<16x64xf32>
    %739 = vector.broadcast %720 : vector<1x64xf32> to vector<16x64xf32>
    %740 = arith.addf %738, %739 : vector<16x64xf32>
    %c1_408 = arith.constant 1 : index
    %c0_409 = arith.constant 0 : index
    %c0_410 = arith.constant 0 : index
    %741 = vector.load %arg31[%c1_408, %c0_409, %c0_410] : memref<2x64x128xf32, #tpu.memory_space<vmem>>, vector<1x64x128xf32>
    %742 = vector.shape_cast %741 : vector<1x64x128xf32> to vector<64x128xf32>
    %c1_411 = arith.constant 1 : index
    %c0_412 = arith.constant 0 : index
    %c0_413 = arith.constant 0 : index
    %743 = vector.load %arg32[%c1_411, %c0_412, %c0_413] : memref<2x1x128xf32, #tpu.memory_space<vmem>>, vector<1x1x128xf32>
    %744 = vector.shape_cast %743 : vector<1x1x128xf32> to vector<1x128xf32>
    %c1_414 = arith.constant 1 : index
    %c0_415 = arith.constant 0 : index
    %c0_416 = arith.constant 0 : index
    %745 = vector.load %arg33[%c1_414, %c0_415, %c0_416] : memref<2x128x64xf32, #tpu.memory_space<vmem>>, vector<1x128x64xf32>
    %746 = vector.shape_cast %745 : vector<1x128x64xf32> to vector<128x64xf32>
    %c1_417 = arith.constant 1 : index
    %c0_418 = arith.constant 0 : index
    %c0_419 = arith.constant 0 : index
    %747 = vector.load %arg34[%c1_417, %c0_418, %c0_419] : memref<2x1x64xf32, #tpu.memory_space<vmem>>, vector<1x1x64xf32>
    %748 = vector.shape_cast %747 : vector<1x1x64xf32> to vector<1x64xf32>
    %749 = arith.truncf %740 : vector<16x64xf32> to vector<16x64xbf16>
    %750 = arith.truncf %742 : vector<64x128xf32> to vector<64x128xbf16>
    %cst_420 = arith.constant dense<0.000000e+00> : vector<16x128xf32>
    %751 = tpu.matmul %749, %750, %cst_420 {dimension_numbers = #tpu.dot_dimension_numbers<[1], [0], [0], [1], [0, 0, 1, 1], [], []>} : vector<16x64xbf16>, vector<64x128xbf16>, vector<16x128xf32> -> vector<16x128xf32>
    %752 = vector.broadcast %744 : vector<1x128xf32> to vector<16x128xf32>
    %753 = arith.addf %751, %752 : vector<16x128xf32>
    %cst_421 = arith.constant 0.000000e+00 : f32
    %754 = vector.broadcast %cst_421 : f32 to vector<16x128xf32>
    %755 = arith.maximumf %753, %754 : vector<16x128xf32>
    %756 = arith.truncf %755 : vector<16x128xf32> to vector<16x128xbf16>
    %757 = arith.truncf %746 : vector<128x64xf32> to vector<128x64xbf16>
    %cst_422 = arith.constant dense<0.000000e+00> : vector<16x64xf32>
    %758 = tpu.matmul %756, %757, %cst_422 {dimension_numbers = #tpu.dot_dimension_numbers<[1], [0], [0], [1], [0, 0, 1, 1], [], []>} : vector<16x128xbf16>, vector<128x64xbf16>, vector<16x64xf32> -> vector<16x64xf32>
    %759 = vector.broadcast %748 : vector<1x64xf32> to vector<16x64xf32>
    %760 = arith.addf %758, %759 : vector<16x64xf32>
    %761 = arith.addf %760, %740 : vector<16x64xf32>
    %c1_423 = arith.constant 1 : index
    %c0_424 = arith.constant 0 : index
    %c0_425 = arith.constant 0 : index
    %762 = vector.load %arg35[%c1_423, %c0_424, %c0_425] : memref<2x1x64xf32, #tpu.memory_space<vmem>>, vector<1x1x64xf32>
    %763 = vector.shape_cast %762 : vector<1x1x64xf32> to vector<1x64xf32>
    %c1_426 = arith.constant 1 : index
    %c0_427 = arith.constant 0 : index
    %c0_428 = arith.constant 0 : index
    %764 = vector.load %arg36[%c1_426, %c0_427, %c0_428] : memref<2x1x64xf32, #tpu.memory_space<vmem>>, vector<1x1x64xf32>
    %765 = vector.shape_cast %764 : vector<1x1x64xf32> to vector<1x64xf32>
    %cst_429 = arith.constant dense<0.000000e+00> : vector<16xf32>
    %766 = vector.multi_reduction <add>, %761, %cst_429 [1] : vector<16x64xf32> to vector<16xf32>
    %767 = vector.shape_cast %766 : vector<16xf32> to vector<16x1xf32>
    %cst_430 = arith.constant 6.400000e+01 : f32
    %768 = vector.broadcast %cst_430 : f32 to vector<16x1xf32>
    %769 = arith.divf %767, %768 : vector<16x1xf32>
    %770 = vector.broadcast %769 : vector<16x1xf32> to vector<16x64xf32>
    %771 = arith.subf %761, %770 : vector<16x64xf32>
    %772 = arith.mulf %771, %771 : vector<16x64xf32>
    %cst_431 = arith.constant dense<0.000000e+00> : vector<16xf32>
    %773 = vector.multi_reduction <add>, %772, %cst_431 [1] : vector<16x64xf32> to vector<16xf32>
    %774 = vector.shape_cast %773 : vector<16xf32> to vector<16x1xf32>
    %cst_432 = arith.constant 0.0158730168 : f32
    %775 = vector.broadcast %cst_432 : f32 to vector<16x1xf32>
    %776 = arith.mulf %774, %775 : vector<16x1xf32>
    %777 = math.sqrt %776 : vector<16x1xf32>
    %cst_433 = arith.constant 1.000000e-03 : f32
    %778 = vector.broadcast %cst_433 : f32 to vector<16x1xf32>
    %779 = arith.addf %777, %778 : vector<16x1xf32>
    %780 = vector.broadcast %779 : vector<16x1xf32> to vector<16x64xf32>
    %781 = arith.divf %771, %780 : vector<16x64xf32>
    %782 = vector.broadcast %763 : vector<1x64xf32> to vector<16x64xf32>
    %783 = arith.mulf %781, %782 : vector<16x64xf32>
    %784 = vector.broadcast %765 : vector<1x64xf32> to vector<16x64xf32>
    %785 = arith.addf %783, %784 : vector<16x64xf32>
    %c0_434 = arith.constant 0 : index
    %c0_435 = arith.constant 0 : index
    %786 = vector.load %arg43[%c0_434, %c0_435] : memref<64x64xf32, #tpu.memory_space<vmem>>, vector<64x64xf32>
    %c0_436 = arith.constant 0 : index
    %c0_437 = arith.constant 0 : index
    %787 = vector.load %arg44[%c0_436, %c0_437] : memref<1x64xf32, #tpu.memory_space<vmem>>, vector<1x64xf32>
    %c0_438 = arith.constant 0 : index
    %c0_439 = arith.constant 0 : index
    %788 = vector.load %arg45[%c0_438, %c0_439] : memref<1x64xf32, #tpu.memory_space<vmem>>, vector<1x64xf32>
    %c0_440 = arith.constant 0 : index
    %c0_441 = arith.constant 0 : index
    %789 = vector.load %arg46[%c0_440, %c0_441] : memref<1x64xf32, #tpu.memory_space<vmem>>, vector<1x64xf32>
    %c0_442 = arith.constant 0 : index
    %c0_443 = arith.constant 0 : index
    %790 = vector.load %arg47[%c0_442, %c0_443] : memref<64x128xf32, #tpu.memory_space<vmem>>, vector<64x128xf32>
    %c0_444 = arith.constant 0 : index
    %c0_445 = arith.constant 0 : index
    %791 = vector.load %arg48[%c0_444, %c0_445] : memref<1x128xf32, #tpu.memory_space<vmem>>, vector<1x128xf32>
    %792 = arith.truncf %785 : vector<16x64xf32> to vector<16x64xbf16>
    %793 = arith.truncf %786 : vector<64x64xf32> to vector<64x64xbf16>
    %cst_446 = arith.constant dense<0.000000e+00> : vector<16x64xf32>
    %794 = tpu.matmul %792, %793, %cst_446 {dimension_numbers = #tpu.dot_dimension_numbers<[1], [0], [0], [1], [0, 0, 1, 1], [], []>} : vector<16x64xbf16>, vector<64x64xbf16>, vector<16x64xf32> -> vector<16x64xf32>
    %795 = vector.broadcast %787 : vector<1x64xf32> to vector<16x64xf32>
    %796 = arith.addf %794, %795 : vector<16x64xf32>
    %cst_447 = arith.constant 0.000000e+00 : f32
    %797 = vector.broadcast %cst_447 : f32 to vector<16x64xf32>
    %798 = arith.maximumf %796, %797 : vector<16x64xf32>
    %cst_448 = arith.constant dense<0.000000e+00> : vector<16xf32>
    %799 = vector.multi_reduction <add>, %798, %cst_448 [1] : vector<16x64xf32> to vector<16xf32>
    %800 = vector.shape_cast %799 : vector<16xf32> to vector<16x1xf32>
    %cst_449 = arith.constant 6.400000e+01 : f32
    %801 = vector.broadcast %cst_449 : f32 to vector<16x1xf32>
    %802 = arith.divf %800, %801 : vector<16x1xf32>
    %803 = vector.broadcast %802 : vector<16x1xf32> to vector<16x64xf32>
    %804 = arith.subf %798, %803 : vector<16x64xf32>
    %805 = arith.mulf %804, %804 : vector<16x64xf32>
    %cst_450 = arith.constant dense<0.000000e+00> : vector<16xf32>
    %806 = vector.multi_reduction <add>, %805, %cst_450 [1] : vector<16x64xf32> to vector<16xf32>
    %807 = vector.shape_cast %806 : vector<16xf32> to vector<16x1xf32>
    %cst_451 = arith.constant 0.0158730168 : f32
    %808 = vector.broadcast %cst_451 : f32 to vector<16x1xf32>
    %809 = arith.mulf %807, %808 : vector<16x1xf32>
    %810 = math.sqrt %809 : vector<16x1xf32>
    %cst_452 = arith.constant 1.000000e-03 : f32
    %811 = vector.broadcast %cst_452 : f32 to vector<16x1xf32>
    %812 = arith.addf %810, %811 : vector<16x1xf32>
    %813 = vector.broadcast %812 : vector<16x1xf32> to vector<16x64xf32>
    %814 = arith.divf %804, %813 : vector<16x64xf32>
    %815 = vector.broadcast %788 : vector<1x64xf32> to vector<16x64xf32>
    %816 = arith.mulf %814, %815 : vector<16x64xf32>
    %817 = vector.broadcast %789 : vector<1x64xf32> to vector<16x64xf32>
    %818 = arith.addf %816, %817 : vector<16x64xf32>
    %819 = arith.truncf %818 : vector<16x64xf32> to vector<16x64xbf16>
    %820 = arith.truncf %790 : vector<64x128xf32> to vector<64x128xbf16>
    %cst_453 = arith.constant dense<0.000000e+00> : vector<16x128xf32>
    %821 = tpu.matmul %819, %820, %cst_453 {dimension_numbers = #tpu.dot_dimension_numbers<[1], [0], [0], [1], [0, 0, 1, 1], [], []>} : vector<16x64xbf16>, vector<64x128xbf16>, vector<16x128xf32> -> vector<16x128xf32>
    %822 = vector.broadcast %791 : vector<1x128xf32> to vector<16x128xf32>
    %823 = arith.addf %821, %822 : vector<16x128xf32>
    %c0_454 = arith.constant 0 : index
    %c0_455 = arith.constant 0 : index
    %824 = vector.load %arg50[%c0_454, %c0_455] : memref<16x128xf32, #tpu.memory_space<vmem>>, vector<16x128xf32>
    tpu.vector_store %arg50[%c0_454, %c0_455], %823 {strides = array<i32>} : memref<16x128xf32, #tpu.memory_space<vmem>>, vector<16x128xf32>,
    return
  }
  func.func @transform_0(%arg0: i32) -> (i32, i32) {
    %c0_i32 = arith.constant 0 : i32
    %c0_i32_0 = arith.constant 0 : i32
    return %arg0, %c0_i32 : i32, i32
  }
  func.func @transform_1(%arg0: i32) -> (i32, i32) {
    %c0_i32 = arith.constant 0 : i32
    %c0_i32_0 = arith.constant 0 : i32
    return %arg0, %c0_i32 : i32, i32
  }
  func.func @transform_2(%arg0: i32) -> (i32, i32) {
    %c0_i32 = arith.constant 0 : i32
    %c0_i32_0 = arith.constant 0 : i32
    %c0_i32_1 = arith.constant 0 : i32
    return %c0_i32, %c0_i32_0 : i32, i32
  }
  func.func @transform_3(%arg0: i32) -> (i32, i32) {
    %c0_i32 = arith.constant 0 : i32
    %c0_i32_0 = arith.constant 0 : i32
    %c0_i32_1 = arith.constant 0 : i32
    return %c0_i32, %c0_i32_0 : i32, i32
  }
  func.func @transform_4(%arg0: i32) -> (i32, i32) {
    %c0_i32 = arith.constant 0 : i32
    %c0_i32_0 = arith.constant 0 : i32
    %c0_i32_1 = arith.constant 0 : i32
    return %c0_i32, %c0_i32_0 : i32, i32
  }
  func.func @transform_5(%arg0: i32) -> (i32, i32) {
    %c0_i32 = arith.constant 0 : i32
    %c0_i32_0 = arith.constant 0 : i32
    %c0_i32_1 = arith.constant 0 : i32
    return %c0_i32, %c0_i32_0 : i32, i32
  }
  func.func @transform_6(%arg0: i32) -> (i32, i32, i32) {
    %c0_i32 = arith.constant 0 : i32
    %c0_i32_0 = arith.constant 0 : i32
    %c0_i32_1 = arith.constant 0 : i32
    %c0_i32_2 = arith.constant 0 : i32
    return %c0_i32, %c0_i32_0, %c0_i32_1 : i32, i32, i32
  }
  func.func @transform_7(%arg0: i32) -> (i32, i32, i32) {
    %c0_i32 = arith.constant 0 : i32
    %c0_i32_0 = arith.constant 0 : i32
    %c0_i32_1 = arith.constant 0 : i32
    %c0_i32_2 = arith.constant 0 : i32
    return %c0_i32, %c0_i32_0, %c0_i32_1 : i32, i32, i32
  }
  func.func @transform_8(%arg0: i32) -> (i32, i32, i32) {
    %c0_i32 = arith.constant 0 : i32
    %c0_i32_0 = arith.constant 0 : i32
    %c0_i32_1 = arith.constant 0 : i32
    %c0_i32_2 = arith.constant 0 : i32
    return %c0_i32, %c0_i32_0, %c0_i32_1 : i32, i32, i32
  }
  func.func @transform_9(%arg0: i32) -> (i32, i32, i32) {
    %c0_i32 = arith.constant 0 : i32
    %c0_i32_0 = arith.constant 0 : i32
    %c0_i32_1 = arith.constant 0 : i32
    %c0_i32_2 = arith.constant 0 : i32
    return %c0_i32, %c0_i32_0, %c0_i32_1 : i32, i32, i32
  }
  func.func @transform_10(%arg0: i32) -> (i32, i32, i32) {
    %c0_i32 = arith.constant 0 : i32
    %c0_i32_0 = arith.constant 0 : i32
    %c0_i32_1 = arith.constant 0 : i32
    %c0_i32_2 = arith.constant 0 : i32
    return %c0_i32, %c0_i32_0, %c0_i32_1 : i32, i32, i32
  }
  func.func @transform_11(%arg0: i32) -> (i32, i32, i32) {
    %c0_i32 = arith.constant 0 : i32
    %c0_i32_0 = arith.constant 0 : i32
    %c0_i32_1 = arith.constant 0 : i32
    %c0_i32_2 = arith.constant 0 : i32
    return %c0_i32, %c0_i32_0, %c0_i32_1 : i32, i32, i32
  }
  func.func @transform_12(%arg0: i32) -> (i32, i32, i32) {
    %c0_i32 = arith.constant 0 : i32
    %c0_i32_0 = arith.constant 0 : i32
    %c0_i32_1 = arith.constant 0 : i32
    %c0_i32_2 = arith.constant 0 : i32
    return %c0_i32, %c0_i32_0, %c0_i32_1 : i32, i32, i32
  }
  func.func @transform_13(%arg0: i32) -> (i32, i32, i32) {
    %c0_i32 = arith.constant 0 : i32
    %c0_i32_0 = arith.constant 0 : i32
    %c0_i32_1 = arith.constant 0 : i32
    %c0_i32_2 = arith.constant 0 : i32
    return %c0_i32, %c0_i32_0, %c0_i32_1 : i32, i32, i32
  }
  func.func @transform_14(%arg0: i32) -> (i32, i32, i32) {
    %c0_i32 = arith.constant 0 : i32
    %c0_i32_0 = arith.constant 0 : i32
    %c0_i32_1 = arith.constant 0 : i32
    %c0_i32_2 = arith.constant 0 : i32
    return %c0_i32, %c0_i32_0, %c0_i32_1 : i32, i32, i32
  }
  func.func @transform_15(%arg0: i32) -> (i32, i32, i32) {
    %c0_i32 = arith.constant 0 : i32
    %c0_i32_0 = arith.constant 0 : i32
    %c0_i32_1 = arith.constant 0 : i32
    %c0_i32_2 = arith.constant 0 : i32
    return %c0_i32, %c0_i32_0, %c0_i32_1 : i32, i32, i32
  }
  func.func @transform_16(%arg0: i32) -> (i32, i32, i32) {
    %c0_i32 = arith.constant 0 : i32
    %c0_i32_0 = arith.constant 0 : i32
    %c0_i32_1 = arith.constant 0 : i32
    %c0_i32_2 = arith.constant 0 : i32
    return %c0_i32, %c0_i32_0, %c0_i32_1 : i32, i32, i32
  }
  func.func @transform_17(%arg0: i32) -> (i32, i32, i32) {
    %c0_i32 = arith.constant 0 : i32
    %c0_i32_0 = arith.constant 0 : i32
    %c0_i32_1 = arith.constant 0 : i32
    %c0_i32_2 = arith.constant 0 : i32
    return %c0_i32, %c0_i32_0, %c0_i32_1 : i32, i32, i32
  }
  func.func @transform_18(%arg0: i32) -> (i32, i32, i32) {
    %c0_i32 = arith.constant 0 : i32
    %c0_i32_0 = arith.constant 0 : i32
    %c0_i32_1 = arith.constant 0 : i32
    %c0_i32_2 = arith.constant 0 : i32
    return %c0_i32, %c0_i32_0, %c0_i32_1 : i32, i32, i32
  }
  func.func @transform_19(%arg0: i32) -> (i32, i32, i32) {
    %c0_i32 = arith.constant 0 : i32
    %c0_i32_0 = arith.constant 0 : i32
    %c0_i32_1 = arith.constant 0 : i32
    %c0_i32_2 = arith.constant 0 : i32
    return %c0_i32, %c0_i32_0, %c0_i32_1 : i32, i32, i32
  }
  func.func @transform_20(%arg0: i32) -> (i32, i32, i32) {
    %c0_i32 = arith.constant 0 : i32
    %c0_i32_0 = arith.constant 0 : i32
    %c0_i32_1 = arith.constant 0 : i32
    %c0_i32_2 = arith.constant 0 : i32
    return %c0_i32, %c0_i32_0, %c0_i32_1 : i32, i32, i32
  }
  func.func @transform_21(%arg0: i32) -> (i32, i32, i32) {
    %c0_i32 = arith.constant 0 : i32
    %c0_i32_0 = arith.constant 0 : i32
    %c0_i32_1 = arith.constant 0 : i32
    %c0_i32_2 = arith.constant 0 : i32
    return %c0_i32, %c0_i32_0, %c0_i32_1 : i32, i32, i32
  }
  func.func @transform_22(%arg0: i32) -> (i32, i32, i32) {
    %c0_i32 = arith.constant 0 : i32
    %c0_i32_0 = arith.constant 0 : i32
    %c0_i32_1 = arith.constant 0 : i32
    %c0_i32_2 = arith.constant 0 : i32
    return %c0_i32, %c0_i32_0, %c0_i32_1 : i32, i32, i32
  }
  func.func @transform_23(%arg0: i32) -> (i32, i32, i32) {
    %c0_i32 = arith.constant 0 : i32
    %c0_i32_0 = arith.constant 0 : i32
    %c0_i32_1 = arith.constant 0 : i32
    %c0_i32_2 = arith.constant 0 : i32
    return %c0_i32, %c0_i32_0, %c0_i32_1 : i32, i32, i32
  }
  func.func @transform_24(%arg0: i32) -> (i32, i32, i32) {
    %c0_i32 = arith.constant 0 : i32
    %c0_i32_0 = arith.constant 0 : i32
    %c0_i32_1 = arith.constant 0 : i32
    %c0_i32_2 = arith.constant 0 : i32
    return %c0_i32, %c0_i32_0, %c0_i32_1 : i32, i32, i32
  }
  func.func @transform_25(%arg0: i32) -> (i32, i32, i32) {
    %c0_i32 = arith.constant 0 : i32
    %c0_i32_0 = arith.constant 0 : i32
    %c0_i32_1 = arith.constant 0 : i32
    %c0_i32_2 = arith.constant 0 : i32
    return %c0_i32, %c0_i32_0, %c0_i32_1 : i32, i32, i32
  }
  func.func @transform_26(%arg0: i32) -> (i32, i32, i32) {
    %c0_i32 = arith.constant 0 : i32
    %c0_i32_0 = arith.constant 0 : i32
    %c0_i32_1 = arith.constant 0 : i32
    %c0_i32_2 = arith.constant 0 : i32
    return %c0_i32, %c0_i32_0, %c0_i32_1 : i32, i32, i32
  }
  func.func @transform_27(%arg0: i32) -> (i32, i32, i32) {
    %c0_i32 = arith.constant 0 : i32
    %c0_i32_0 = arith.constant 0 : i32
    %c0_i32_1 = arith.constant 0 : i32
    %c0_i32_2 = arith.constant 0 : i32
    return %c0_i32, %c0_i32_0, %c0_i32_1 : i32, i32, i32
  }
  func.func @transform_28(%arg0: i32) -> (i32, i32, i32) {
    %c0_i32 = arith.constant 0 : i32
    %c0_i32_0 = arith.constant 0 : i32
    %c0_i32_1 = arith.constant 0 : i32
    %c0_i32_2 = arith.constant 0 : i32
    return %c0_i32, %c0_i32_0, %c0_i32_1 : i32, i32, i32
  }
  func.func @transform_29(%arg0: i32) -> (i32, i32, i32) {
    %c0_i32 = arith.constant 0 : i32
    %c0_i32_0 = arith.constant 0 : i32
    %c0_i32_1 = arith.constant 0 : i32
    %c0_i32_2 = arith.constant 0 : i32
    return %c0_i32, %c0_i32_0, %c0_i32_1 : i32, i32, i32
  }
  func.func @transform_30(%arg0: i32) -> (i32, i32, i32) {
    %c0_i32 = arith.constant 0 : i32
    %c0_i32_0 = arith.constant 0 : i32
    %c0_i32_1 = arith.constant 0 : i32
    %c0_i32_2 = arith.constant 0 : i32
    return %c0_i32, %c0_i32_0, %c0_i32_1 : i32, i32, i32
  }
  func.func @transform_31(%arg0: i32) -> (i32, i32, i32) {
    %c0_i32 = arith.constant 0 : i32
    %c0_i32_0 = arith.constant 0 : i32
    %c0_i32_1 = arith.constant 0 : i32
    %c0_i32_2 = arith.constant 0 : i32
    return %c0_i32, %c0_i32_0, %c0_i32_1 : i32, i32, i32
  }
  func.func @transform_32(%arg0: i32) -> (i32, i32, i32) {
    %c0_i32 = arith.constant 0 : i32
    %c0_i32_0 = arith.constant 0 : i32
    %c0_i32_1 = arith.constant 0 : i32
    %c0_i32_2 = arith.constant 0 : i32
    return %c0_i32, %c0_i32_0, %c0_i32_1 : i32, i32, i32
  }
  func.func @transform_33(%arg0: i32) -> (i32, i32, i32) {
    %c0_i32 = arith.constant 0 : i32
    %c0_i32_0 = arith.constant 0 : i32
    %c0_i32_1 = arith.constant 0 : i32
    %c0_i32_2 = arith.constant 0 : i32
    return %c0_i32, %c0_i32_0, %c0_i32_1 : i32, i32, i32
  }
  func.func @transform_34(%arg0: i32) -> (i32, i32, i32) {
    %c0_i32 = arith.constant 0 : i32
    %c0_i32_0 = arith.constant 0 : i32
    %c0_i32_1 = arith.constant 0 : i32
    %c0_i32_2 = arith.constant 0 : i32
    return %c0_i32, %c0_i32_0, %c0_i32_1 : i32, i32, i32
  }
  func.func @transform_35(%arg0: i32) -> (i32, i32, i32) {
    %c0_i32 = arith.constant 0 : i32
    %c0_i32_0 = arith.constant 0 : i32
    %c0_i32_1 = arith.constant 0 : i32
    %c0_i32_2 = arith.constant 0 : i32
    return %c0_i32, %c0_i32_0, %c0_i32_1 : i32, i32, i32
  }
  func.func @transform_36(%arg0: i32) -> (i32, i32) {
    %c0_i32 = arith.constant 0 : i32
    %c0_i32_0 = arith.constant 0 : i32
    %c0_i32_1 = arith.constant 0 : i32
    return %c0_i32, %c0_i32_0 : i32, i32
  }
  func.func @transform_37(%arg0: i32) -> (i32, i32) {
    %c0_i32 = arith.constant 0 : i32
    %c0_i32_0 = arith.constant 0 : i32
    %c0_i32_1 = arith.constant 0 : i32
    return %c0_i32, %c0_i32_0 : i32, i32
  }
  func.func @transform_38(%arg0: i32) -> (i32, i32) {
    %c0_i32 = arith.constant 0 : i32
    %c0_i32_0 = arith.constant 0 : i32
    %c0_i32_1 = arith.constant 0 : i32
    return %c0_i32, %c0_i32_0 : i32, i32
  }
  func.func @transform_39(%arg0: i32) -> (i32, i32) {
    %c0_i32 = arith.constant 0 : i32
    %c0_i32_0 = arith.constant 0 : i32
    %c0_i32_1 = arith.constant 0 : i32
    return %c0_i32, %c0_i32_0 : i32, i32
  }
  func.func @transform_40(%arg0: i32) -> (i32, i32) {
    %c0_i32 = arith.constant 0 : i32
    %c0_i32_0 = arith.constant 0 : i32
    %c0_i32_1 = arith.constant 0 : i32
    return %c0_i32, %c0_i32_0 : i32, i32
  }
  func.func @transform_41(%arg0: i32) -> (i32, i32) {
    %c0_i32 = arith.constant 0 : i32
    %c0_i32_0 = arith.constant 0 : i32
    %c0_i32_1 = arith.constant 0 : i32
    return %c0_i32, %c0_i32_0 : i32, i32
  }
  func.func @transform_42(%arg0: i32) -> (i32, i32) {
    %c0_i32 = arith.constant 0 : i32
    %c0_i32_0 = arith.constant 0 : i32
    %c0_i32_1 = arith.constant 0 : i32
    return %c0_i32, %c0_i32_0 : i32, i32
  }
  func.func @transform_43(%arg0: i32) -> (i32, i32) {
    %c0_i32 = arith.constant 0 : i32
    %c0_i32_0 = arith.constant 0 : i32
    %c0_i32_1 = arith.constant 0 : i32
    return %c0_i32, %c0_i32_0 : i32, i32
  }
  func.func @transform_44(%arg0: i32) -> (i32, i32) {
    %c0_i32 = arith.constant 0 : i32
    %c0_i32_0 = arith.constant 0 : i32
    %c0_i32_1 = arith.constant 0 : i32
    return %c0_i32, %c0_i32_0 : i32, i32
  }
  func.func @transform_45(%arg0: i32) -> (i32, i32) {
    %c0_i32 = arith.constant 0 : i32
    %c0_i32_0 = arith.constant 0 : i32
    %c0_i32_1 = arith.constant 0 : i32
    return %c0_i32, %c0_i32_0 : i32, i32
  }
  func.func @transform_46(%arg0: i32) -> (i32, i32) {
    %c0_i32 = arith.constant 0 : i32
    %c0_i32_0 = arith.constant 0 : i32
    %c0_i32_1 = arith.constant 0 : i32
    return %c0_i32, %c0_i32_0 : i32, i32
  }
  func.func @transform_47(%arg0: i32) -> (i32, i32) {
    %c0_i32 = arith.constant 0 : i32
    %c0_i32_0 = arith.constant 0 : i32
    %c0_i32_1 = arith.constant 0 : i32
    return %c0_i32, %c0_i32_0 : i32, i32
  }
  func.func @transform_48(%arg0: i32) -> (i32, i32) {
    %c0_i32 = arith.constant 0 : i32
    %c0_i32_0 = arith.constant 0 : i32
    return %arg0, %c0_i32 : i32, i32
  }
  func.func @transform_49(%arg0: i32) -> (i32, i32) {
    %c0_i32 = arith.constant 0 : i32
    %c0_i32_0 = arith.constant 0 : i32
    return %arg0, %c0_i32 : i32, i32
  }
}

</mosaic_0001>

<llo_original>
// kernel: forward.1
$region0: #{forward.1}
  #allocation0 [shape = 'u32[]', space=smem, size = 0x4, offset = 0x4, fixed_abs, tag = 'smem constant byte address 0x4 - core index']
  #allocation1 [shape = 'u32[144,128]{1,0:T(1,128)}', space=vmem, size = 0x12000, scoped, tag = 'internal scratch']
  #allocation2 [shape = 'f32[56,256]{1,0:T(8,128)}', space=vmem, size = 0xe000, scoped, tag = 'scratch operand']
  #allocation3 [shape = 'f32[56,128]{1,0:T(8,128)}', space=vmem, size = 0x7000, scoped, tag = 'scratch operand']
  %s0 = inlined_call_operand.smem [shape: u32[50], index: -1, kind: input, shape index: {}]
  %s1 = sld [smem:[%s0]]
  %s2 = scalar_lea.smem %s0, 1
  %s3 = sld [smem:[%s2]]
  %s4 = scalar_lea.smem %s0, 2
  %s5 = sld [smem:[%s4]]
  %s6 = scalar_lea.smem %s0, 3
  %s7 = sld [smem:[%s6]]
  %s8 = scalar_lea.smem %s0, 4
  %s9 = sld [smem:[%s8]]
  %s10 = scalar_lea.smem %s0, 5
  %s11 = sld [smem:[%s10]]
  %s12 = scalar_lea.smem %s0, 6
  %s13 = sld [smem:[%s12]]
  %s14 = scalar_lea.smem %s0, 7
  %s15 = sld [smem:[%s14]]
  %s16 = scalar_lea.smem %s0, 8
  %s17 = sld [smem:[%s16]]
  %s18 = scalar_lea.smem %s0, 9
  %s19 = sld [smem:[%s18]]
  %s20 = scalar_lea.smem %s0, 10
  %s21 = sld [smem:[%s20]]
  %s22 = scalar_lea.smem %s0, 11
  %s23 = sld [smem:[%s22]]
  %s24 = scalar_lea.smem %s0, 12
  %s25 = sld [smem:[%s24]]
  %s26 = scalar_lea.smem %s0, 13
  %s27 = sld [smem:[%s26]]
  %s28 = scalar_lea.smem %s0, 14
  %s29 = sld [smem:[%s28]]
  %s30 = scalar_lea.smem %s0, 15
  %s31 = sld [smem:[%s30]]
  %s32 = scalar_lea.smem %s0, 16
  %s33 = sld [smem:[%s32]]
  %s34 = scalar_lea.smem %s0, 17
  %s35 = sld [smem:[%s34]]
  %s36 = scalar_lea.smem %s0, 18
  %s37 = sld [smem:[%s36]]
  %s38 = scalar_lea.smem %s0, 19
  %s39 = sld [smem:[%s38]]
  %s40 = scalar_lea.smem %s0, 20
  %s41 = sld [smem:[%s40]]
  %s42 = scalar_lea.smem %s0, 21
  %s43 = sld [smem:[%s42]]
  %s44 = scalar_lea.smem %s0, 22
  %s45 = sld [smem:[%s44]]
  %s46 = scalar_lea.smem %s0, 23
  %s47 = sld [smem:[%s46]]
  %s48 = scalar_lea.smem %s0, 24
  %s49 = sld [smem:[%s48]]
  %s50 = scalar_lea.smem %s0, 25
  %s51 = sld [smem:[%s50]]
  %s52 = scalar_lea.smem %s0, 26
  %s53 = sld [smem:[%s52]]
  %s54 = scalar_lea.smem %s0, 27
  %s55 = sld [smem:[%s54]]
  %s56 = scalar_lea.smem %s0, 28
  %s57 = sld [smem:[%s56]]
  %s58 = scalar_lea.smem %s0, 29
  %s59 = sld [smem:[%s58]]
  %s60 = scalar_lea.smem %s0, 30
  %s61 = sld [smem:[%s60]]
  %s62 = scalar_lea.smem %s0, 31
  %s63 = sld [smem:[%s62]]
  %s64 = scalar_lea.smem %s0, 32
  %s65 = sld [smem:[%s64]]
  %s66 = scalar_lea.smem %s0, 33
  %s67 = sld [smem:[%s66]]
  %s68 = scalar_lea.smem %s0, 34
  %s69 = sld [smem:[%s68]]
  %s70 = scalar_lea.smem %s0, 35
  %s71 = sld [smem:[%s70]]
  %s72 = scalar_lea.smem %s0, 36
  %s73 = sld [smem:[%s72]]
  %s74 = scalar_lea.smem %s0, 37
  %s75 = sld [smem:[%s74]]
  %s76 = scalar_lea.smem %s0, 38
  %s77 = sld [smem:[%s76]]
  %s78 = scalar_lea.smem %s0, 39
  %s79 = sld [smem:[%s78]]
  %s80 = scalar_lea.smem %s0, 40
  %s81 = sld [smem:[%s80]]
  %s82 = scalar_lea.smem %s0, 41
  %s83 = sld [smem:[%s82]]
  %s84 = scalar_lea.smem %s0, 42
  %s85 = sld [smem:[%s84]]
  %s86 = scalar_lea.smem %s0, 43
  %s87 = sld [smem:[%s86]]
  %s88 = scalar_lea.smem %s0, 44
  %s89 = sld [smem:[%s88]]
  %s90 = scalar_lea.smem %s0, 45
  %s91 = sld [smem:[%s90]]
  %s92 = scalar_lea.smem %s0, 46
  %s93 = sld [smem:[%s92]]
  %s94 = scalar_lea.smem %s0, 47
  %s95 = sld [smem:[%s94]]
  %s96 = scalar_lea.smem %s0, 48
  %s97 = sld [smem:[%s96]]
  %s98 = scalar_lea.smem %s0, 49
  %s99 = sld [smem:[%s98]]
  %100 = xla_tuple %s97, %s99
  %s101 = sld [smem:[#allocation0]]
  $region233: #{forward.1} parent=0
    _
  %s103 = ssub.s32 1, %s101
  %s104 = scalar_select 0, %s103, %s101
  loop: start=0, step=1, limit=4
  $region2: #{forward.1} parent=0 // loop_pre_header
    _
  $region3: #{forward.1} parent=0 // loop_header
    %s106 = sphi 0, %s110
    %p107 = scmp.ge.s32.totalorder %s106, 4
    %s116 = sphi 0, %s118
    %s119 = sphi 0, %s116
    %s120 = sphi 0, %s119
    %s136 = sphi 0, %s120
    %s142 = sphi 0, %s144
    %s145 = sphi 0, %s142
    %s146 = sphi 0, %s145
    %s162 = sphi 0, %s146
    %s166 = sphi 0, %s166
    %s168 = sphi 0, %s166
    %s169 = sphi 0, %s168
    %s183 = sphi 0, %s169
    %s187 = sphi 0, %s187
    %s189 = sphi 0, %s187
    %s190 = sphi 0, %s189
    %s204 = sphi 0, %s190
    %s208 = sphi 0, %s208
    %s210 = sphi 0, %s208
    %s211 = sphi 0, %s210
    %s225 = sphi 0, %s211
    %s229 = sphi 0, %s229
    %s231 = sphi 0, %s229
    %s232 = sphi 0, %s231
    %s246 = sphi 0, %s232
    %s250 = sphi 0, %s250
    %s252 = sphi 0, %s250
    %s253 = sphi 0, %s252
    %s267 = sphi 0, %s253
    %s271 = sphi 0, %s271
    %s273 = sphi 0, %s271
    %s274 = sphi 0, %s273
    %s288 = sphi 0, %s274
    %s292 = sphi 0, %s292
    %s294 = sphi 0, %s292
    %s295 = sphi 0, %s294
    %s309 = sphi 0, %s295
    %s313 = sphi 0, %s313
    %s315 = sphi 0, %s313
    %s316 = sphi 0, %s315
    %s330 = sphi 0, %s316
    %s334 = sphi 0, %s334
    %s336 = sphi 0, %s334
    %s337 = sphi 0, %s336
    %s351 = sphi 0, %s337
    %s355 = sphi 0, %s355
    %s357 = sphi 0, %s355
    %s358 = sphi 0, %s357
    %s372 = sphi 0, %s358
    %s376 = sphi 0, %s376
    %s378 = sphi 0, %s376
    %s379 = sphi 0, %s378
    %s393 = sphi 0, %s379
    %s397 = sphi 0, %s397
    %s399 = sphi 0, %s397
    %s400 = sphi 0, %s399
    %s414 = sphi 0, %s400
    %s418 = sphi 0, %s418
    %s420 = sphi 0, %s418
    %s421 = sphi 0, %s420
    %s435 = sphi 0, %s421
    %s439 = sphi 0, %s439
    %s441 = sphi 0, %s439
    %s442 = sphi 0, %s441
    %s456 = sphi 0, %s442
    %s460 = sphi 0, %s460
    %s462 = sphi 0, %s460
    %s463 = sphi 0, %s462
    %s477 = sphi 0, %s463
    %s481 = sphi 0, %s481
    %s483 = sphi 0, %s481
    %s484 = sphi 0, %s483
    %s498 = sphi 0, %s484
    %s502 = sphi 0, %s502
    %s504 = sphi 0, %s502
    %s505 = sphi 0, %s504
    %s519 = sphi 0, %s505
    %s523 = sphi 0, %s523
    %s525 = sphi 0, %s523
    %s526 = sphi 0, %s525
    %s540 = sphi 0, %s526
    %s544 = sphi 0, %s544
    %s546 = sphi 0, %s544
    %s547 = sphi 0, %s546
    %s561 = sphi 0, %s547
    %s565 = sphi 0, %s565
    %s567 = sphi 0, %s565
    %s568 = sphi 0, %s567
    %s582 = sphi 0, %s568
    %s586 = sphi 0, %s586
    %s588 = sphi 0, %s586
    %s589 = sphi 0, %s588
    %s603 = sphi 0, %s589
    %s607 = sphi 0, %s607
    %s609 = sphi 0, %s607
    %s610 = sphi 0, %s609
    %s624 = sphi 0, %s610
    %s628 = sphi 0, %s628
    %s630 = sphi 0, %s628
    %s631 = sphi 0, %s630
    %s645 = sphi 0, %s631
    %s649 = sphi 0, %s649
    %s651 = sphi 0, %s649
    %s652 = sphi 0, %s651
    %s666 = sphi 0, %s652
    %s670 = sphi 0, %s670
    %s672 = sphi 0, %s670
    %s673 = sphi 0, %s672
    %s687 = sphi 0, %s673
    %s691 = sphi 0, %s691
    %s693 = sphi 0, %s691
    %s694 = sphi 0, %s693
    %s708 = sphi 0, %s694
    %s712 = sphi 0, %s712
    %s714 = sphi 0, %s712
    %s715 = sphi 0, %s714
    %s729 = sphi 0, %s715
    %s733 = sphi 0, %s733
    %s735 = sphi 0, %s733
    %s736 = sphi 0, %s735
    %s750 = sphi 0, %s736
    %s754 = sphi 0, %s754
    %s756 = sphi 0, %s754
    %s757 = sphi 0, %s756
    %s771 = sphi 0, %s757
    %s775 = sphi 0, %s775
    %s777 = sphi 0, %s775
    %s778 = sphi 0, %s777
    %s792 = sphi 0, %s778
    %s796 = sphi 0, %s796
    %s798 = sphi 0, %s796
    %s799 = sphi 0, %s798
    %s813 = sphi 0, %s799
    %s817 = sphi 0, %s817
    %s819 = sphi 0, %s817
    %s820 = sphi 0, %s819
    %s834 = sphi 0, %s820
    %s838 = sphi 0, %s838
    %s840 = sphi 0, %s838
    %s841 = sphi 0, %s840
    %s855 = sphi 0, %s841
    %s859 = sphi 0, %s859
    %s861 = sphi 0, %s859
    %s862 = sphi 0, %s861
    %s876 = sphi 0, %s862
    %s880 = sphi 0, %s880
    %s882 = sphi 0, %s880
    %s883 = sphi 0, %s882
    %s897 = sphi 0, %s883
    %s901 = sphi 0, %s901
    %s903 = sphi 0, %s901
    %s904 = sphi 0, %s903
    %s918 = sphi 0, %s904
    %s922 = sphi 0, %s922
    %s924 = sphi 0, %s922
    %s925 = sphi 0, %s924
    %s939 = sphi 0, %s925
    %s943 = sphi 0, %s943
    %s945 = sphi 0, %s943
    %s946 = sphi 0, %s945
    %s960 = sphi 0, %s946
    %s964 = sphi 0, %s964
    %s966 = sphi 0, %s964
    %s967 = sphi 0, %s966
    %s981 = sphi 0, %s967
    %s985 = sphi 0, %s985
    %s987 = sphi 0, %s985
    %s988 = sphi 0, %s987
    %s1002 = sphi 0, %s988
    %s1006 = sphi 0, %s1006
    %s1008 = sphi 0, %s1006
    %s1009 = sphi 0, %s1008
    %s1023 = sphi 0, %s1009
    %s1027 = sphi 0, %s1027
    %s1029 = sphi 0, %s1027
    %s1030 = sphi 0, %s1029
    %s1044 = sphi 0, %s1030
    %s1048 = sphi 0, %s1048
    %s1050 = sphi 0, %s1048
    %s1051 = sphi 0, %s1050
    %s1065 = sphi 0, %s1051
    %s1069 = sphi 0, %s1069
    %s1071 = sphi 0, %s1069
    %s1072 = sphi 0, %s1071
    %s1086 = sphi 0, %s1072
    %s1090 = sphi 0, %s1090
    %s1092 = sphi 0, %s1090
    %s1093 = sphi 0, %s1092
    %s1107 = sphi 0, %s1093
    %s1111 = sphi 0, %s1111
    %s1113 = sphi 0, %s1111
    %s1114 = sphi 0, %s1113
    %s1128 = sphi 0, %s1114
    %s1134 = sphi 0, %s1136
    %s1137 = sphi 0, %s1134
    %s1138 = sphi 0, %s1137
    %s1154 = sphi 0, %s1138
    %s1160 = sphi 0, %s1162
    %s1163 = sphi 0, %s1160
    %s1164 = sphi 0, %s1163
    %s1180 = sphi 0, %s1164
  $region4: #{forward.1} parent=0 // loop_header_branch
    %109 = sbr.rel (%p107) target = $region8
  $region5: #{forward.1} parent=0 // loop_body
    %s111 = ssub.s32 %s106, 1
    %s112 = ssub.s32 %s106, 2
    %s113 = sadd.s32 %s106, 1
    %s114 = ssub.s32 %s106, %s113
    %p115 = scmp.eq.s32.totalorder %s114, 0
    %s117 = sadd.s32 %s116, 1
    %s118 = scalar_select %p115, %s116, %s117
    %p121 = pneg %p115
    %p122 = scmp.eq.s32.totalorder %s106, 1
    %p123 = por %p121, %p122
    %p124 = scmp.ne.s32.totalorder %s116, %s119
    %p125 = scmp.eq.s32.totalorder %s106, 0
    %p126 = por %p124, %p125
    %p127 = scmp.ne.s32.totalorder %s116, %s119
    %p128 = scmp.eq.s32.totalorder %s111, 1
    %p129 = por %p127, %p128
    %p130 = scmp.ne.s32.totalorder %s119, %s120
    %p131 = scmp.eq.s32.totalorder %s111, 0
    %p132 = por %p130, %p131
    %p133 = scmp.ne.s32.totalorder %s119, %s120
    %p134 = scmp.eq.s32.totalorder %s112, 1
    %p135 = por %p133, %p134
    %p137 = scmp.ne.s32.totalorder %s120, %s136
    %p138 = scmp.eq.s32.totalorder %s112, 0
    %p139 = por %p137, %p138
    %s140 = ssub.s32 %s106, %s113
    %p141 = scmp.eq.s32.totalorder %s140, 0
    %s143 = sadd.s32 %s142, 1
    %s144 = scalar_select %p141, %s142, %s143
    %p147 = pneg %p141
    %p148 = scmp.eq.s32.totalorder %s106, 1
    %p149 = por %p147, %p148
    %p150 = scmp.ne.s32.totalorder %s142, %s145
    %p151 = scmp.eq.s32.totalorder %s106, 0
    %p152 = por %p150, %p151
    %p153 = scmp.ne.s32.totalorder %s142, %s145
    %p154 = scmp.eq.s32.totalorder %s111, 1
    %p155 = por %p153, %p154
    %p156 = scmp.ne.s32.totalorder %s145, %s146
    %p157 = scmp.eq.s32.totalorder %s111, 0
    %p158 = por %p156, %p157
    %p159 = scmp.ne.s32.totalorder %s145, %s146
    %p160 = scmp.eq.s32.totalorder %s112, 1
    %p161 = por %p159, %p160
    %p163 = scmp.ne.s32.totalorder %s146, %s162
    %p164 = scmp.eq.s32.totalorder %s112, 0
    %p165 = por %p163, %p164
    %s167 = sadd.s32 %s166, 1
    %p170 = scmp.eq.s32.totalorder %s106, 1
    %p171 = scmp.ne.s32.totalorder %s166, %s168
    %p172 = scmp.eq.s32.totalorder %s106, 0
    %p173 = por %p171, %p172
    %p174 = scmp.ne.s32.totalorder %s166, %s168
    %p175 = scmp.eq.s32.totalorder %s111, 1
    %p176 = por %p174, %p175
    %p177 = scmp.ne.s32.totalorder %s168, %s169
    %p178 = scmp.eq.s32.totalorder %s111, 0
    %p179 = por %p177, %p178
    %p180 = scmp.ne.s32.totalorder %s168, %s169
    %p181 = scmp.eq.s32.totalorder %s112, 1
    %p182 = por %p180, %p181
    %p184 = scmp.ne.s32.totalorder %s169, %s183
    %p185 = scmp.eq.s32.totalorder %s112, 0
    %p186 = por %p184, %p185
    %s188 = sadd.s32 %s187, 1
    %p191 = scmp.eq.s32.totalorder %s106, 1
    %p192 = scmp.ne.s32.totalorder %s187, %s189
    %p193 = scmp.eq.s32.totalorder %s106, 0
    %p194 = por %p192, %p193
    %p195 = scmp.ne.s32.totalorder %s187, %s189
    %p196 = scmp.eq.s32.totalorder %s111, 1
    %p197 = por %p195, %p196
    %p198 = scmp.ne.s32.totalorder %s189, %s190
    %p199 = scmp.eq.s32.totalorder %s111, 0
    %p200 = por %p198, %p199
    %p201 = scmp.ne.s32.totalorder %s189, %s190
    %p202 = scmp.eq.s32.totalorder %s112, 1
    %p203 = por %p201, %p202
    %p205 = scmp.ne.s32.totalorder %s190, %s204
    %p206 = scmp.eq.s32.totalorder %s112, 0
    %p207 = por %p205, %p206
    %s209 = sadd.s32 %s208, 1
    %p212 = scmp.eq.s32.totalorder %s106, 1
    %p213 = scmp.ne.s32.totalorder %s208, %s210
    %p214 = scmp.eq.s32.totalorder %s106, 0
    %p215 = por %p213, %p214
    %p216 = scmp.ne.s32.totalorder %s208, %s210
    %p217 = scmp.eq.s32.totalorder %s111, 1
    %p218 = por %p216, %p217
    %p219 = scmp.ne.s32.totalorder %s210, %s211
    %p220 = scmp.eq.s32.totalorder %s111, 0
    %p221 = por %p219, %p220
    %p222 = scmp.ne.s32.totalorder %s210, %s211
    %p223 = scmp.eq.s32.totalorder %s112, 1
    %p224 = por %p222, %p223
    %p226 = scmp.ne.s32.totalorder %s211, %s225
    %p227 = scmp.eq.s32.totalorder %s112, 0
    %p228 = por %p226, %p227
    %s230 = sadd.s32 %s229, 1
    %p233 = scmp.eq.s32.totalorder %s106, 1
    %p234 = scmp.ne.s32.totalorder %s229, %s231
    %p235 = scmp.eq.s32.totalorder %s106, 0
    %p236 = por %p234, %p235
    %p237 = scmp.ne.s32.totalorder %s229, %s231
    %p238 = scmp.eq.s32.totalorder %s111, 1
    %p239 = por %p237, %p238
    %p240 = scmp.ne.s32.totalorder %s231, %s232
    %p241 = scmp.eq.s32.totalorder %s111, 0
    %p242 = por %p240, %p241
    %p243 = scmp.ne.s32.totalorder %s231, %s232
    %p244 = scmp.eq.s32.totalorder %s112, 1
    %p245 = por %p243, %p244
    %p247 = scmp.ne.s32.totalorder %s232, %s246
    %p248 = scmp.eq.s32.totalorder %s112, 0
    %p249 = por %p247, %p248
    %s251 = sadd.s32 %s250, 1
    %p254 = scmp.eq.s32.totalorder %s106, 1
    %p255 = scmp.ne.s32.totalorder %s250, %s252
    %p256 = scmp.eq.s32.totalorder %s106, 0
    %p257 = por %p255, %p256
    %p258 = scmp.ne.s32.totalorder %s250, %s252
    %p259 = scmp.eq.s32.totalorder %s111, 1
    %p260 = por %p258, %p259
    %p261 = scmp.ne.s32.totalorder %s252, %s253
    %p262 = scmp.eq.s32.totalorder %s111, 0
    %p263 = por %p261, %p262
    %p264 = scmp.ne.s32.totalorder %s252, %s253
    %p265 = scmp.eq.s32.totalorder %s112, 1
    %p266 = por %p264, %p265
    %p268 = scmp.ne.s32.totalorder %s253, %s267
    %p269 = scmp.eq.s32.totalorder %s112, 0
    %p270 = por %p268, %p269
    %s272 = sadd.s32 %s271, 1
    %p275 = scmp.eq.s32.totalorder %s106, 1
    %p276 = scmp.ne.s32.totalorder %s271, %s273
    %p277 = scmp.eq.s32.totalorder %s106, 0
    %p278 = por %p276, %p277
    %p279 = scmp.ne.s32.totalorder %s271, %s273
    %p280 = scmp.eq.s32.totalorder %s111, 1
    %p281 = por %p279, %p280
    %p282 = scmp.ne.s32.totalorder %s273, %s274
    %p283 = scmp.eq.s32.totalorder %s111, 0
    %p284 = por %p282, %p283
    %p285 = scmp.ne.s32.totalorder %s273, %s274
    %p286 = scmp.eq.s32.totalorder %s112, 1
    %p287 = por %p285, %p286
    %p289 = scmp.ne.s32.totalorder %s274, %s288
    %p290 = scmp.eq.s32.totalorder %s112, 0
    %p291 = por %p289, %p290
    %s293 = sadd.s32 %s292, 1
    %p296 = scmp.eq.s32.totalorder %s106, 1
    %p297 = scmp.ne.s32.totalorder %s292, %s294
    %p298 = scmp.eq.s32.totalorder %s106, 0
    %p299 = por %p297, %p298
    %p300 = scmp.ne.s32.totalorder %s292, %s294
    %p301 = scmp.eq.s32.totalorder %s111, 1
    %p302 = por %p300, %p301
    %p303 = scmp.ne.s32.totalorder %s294, %s295
    %p304 = scmp.eq.s32.totalorder %s111, 0
    %p305 = por %p303, %p304
    %p306 = scmp.ne.s32.totalorder %s294, %s295
    %p307 = scmp.eq.s32.totalorder %s112, 1
    %p308 = por %p306, %p307
    %p310 = scmp.ne.s32.totalorder %s295, %s309
    %p311 = scmp.eq.s32.totalorder %s112, 0
    %p312 = por %p310, %p311
    %s314 = sadd.s32 %s313, 1
    %p317 = scmp.eq.s32.totalorder %s106, 1
    %p318 = scmp.ne.s32.totalorder %s313, %s315
    %p319 = scmp.eq.s32.totalorder %s106, 0
    %p320 = por %p318, %p319
    %p321 = scmp.ne.s32.totalorder %s313, %s315
    %p322 = scmp.eq.s32.totalorder %s111, 1
    %p323 = por %p321, %p322
    %p324 = scmp.ne.s32.totalorder %s315, %s316
    %p325 = scmp.eq.s32.totalorder %s111, 0
    %p326 = por %p324, %p325
    %p327 = scmp.ne.s32.totalorder %s315, %s316
    %p328 = scmp.eq.s32.totalorder %s112, 1
    %p329 = por %p327, %p328
    %p331 = scmp.ne.s32.totalorder %s316, %s330
    %p332 = scmp.eq.s32.totalorder %s112, 0
    %p333 = por %p331, %p332
    %s335 = sadd.s32 %s334, 1
    %p338 = scmp.eq.s32.totalorder %s106, 1
    %p339 = scmp.ne.s32.totalorder %s334, %s336
    %p340 = scmp.eq.s32.totalorder %s106, 0
    %p341 = por %p339, %p340
    %p342 = scmp.ne.s32.totalorder %s334, %s336
    %p343 = scmp.eq.s32.totalorder %s111, 1
    %p344 = por %p342, %p343
    %p345 = scmp.ne.s32.totalorder %s336, %s337
    %p346 = scmp.eq.s32.totalorder %s111, 0
    %p347 = por %p345, %p346
    %p348 = scmp.ne.s32.totalorder %s336, %s337
    %p349 = scmp.eq.s32.totalorder %s112, 1
    %p350 = por %p348, %p349
    %p352 = scmp.ne.s32.totalorder %s337, %s351
    %p353 = scmp.eq.s32.totalorder %s112, 0
    %p354 = por %p352, %p353
    %s356 = sadd.s32 %s355, 1
    %p359 = scmp.eq.s32.totalorder %s106, 1
    %p360 = scmp.ne.s32.totalorder %s355, %s357
    %p361 = scmp.eq.s32.totalorder %s106, 0
    %p362 = por %p360, %p361
    %p363 = scmp.ne.s32.totalorder %s355, %s357
    %p364 = scmp.eq.s32.totalorder %s111, 1
    %p365 = por %p363, %p364
    %p366 = scmp.ne.s32.totalorder %s357, %s358
    %p367 = scmp.eq.s32.totalorder %s111, 0
    %p368 = por %p366, %p367
    %p369 = scmp.ne.s32.totalorder %s357, %s358
    %p370 = scmp.eq.s32.totalorder %s112, 1
    %p371 = por %p369, %p370
    %p373 = scmp.ne.s32.totalorder %s358, %s372
    %p374 = scmp.eq.s32.totalorder %s112, 0
    %p375 = por %p373, %p374
    %s377 = sadd.s32 %s376, 1
    %p380 = scmp.eq.s32.totalorder %s106, 1
    %p381 = scmp.ne.s32.totalorder %s376, %s378
    %p382 = scmp.eq.s32.totalorder %s106, 0
    %p383 = por %p381, %p382
    %p384 = scmp.ne.s32.totalorder %s376, %s378
    %p385 = scmp.eq.s32.totalorder %s111, 1
    %p386 = por %p384, %p385
    %p387 = scmp.ne.s32.totalorder %s378, %s379
    %p388 = scmp.eq.s32.totalorder %s111, 0
    %p389 = por %p387, %p388
    %p390 = scmp.ne.s32.totalorder %s378, %s379
    %p391 = scmp.eq.s32.totalorder %s112, 1
    %p392 = por %p390, %p391
    %p394 = scmp.ne.s32.totalorder %s379, %s393
    %p395 = scmp.eq.s32.totalorder %s112, 0
    %p396 = por %p394, %p395
    %s398 = sadd.s32 %s397, 1
    %p401 = scmp.eq.s32.totalorder %s106, 1
    %p402 = scmp.ne.s32.totalorder %s397, %s399
    %p403 = scmp.eq.s32.totalorder %s106, 0
    %p404 = por %p402, %p403
    %p405 = scmp.ne.s32.totalorder %s397, %s399
    %p406 = scmp.eq.s32.totalorder %s111, 1
    %p407 = por %p405, %p406
    %p408 = scmp.ne.s32.totalorder %s399, %s400
    %p409 = scmp.eq.s32.totalorder %s111, 0
    %p410 = por %p408, %p409
    %p411 = scmp.ne.s32.totalorder %s399, %s400
    %p412 = scmp.eq.s32.totalorder %s112, 1
    %p413 = por %p411, %p412
    %p415 = scmp.ne.s32.totalorder %s400, %s414
    %p416 = scmp.eq.s32.totalorder %s112, 0
    %p417 = por %p415, %p416
    %s419 = sadd.s32 %s418, 1
    %p422 = scmp.eq.s32.totalorder %s106, 1
    %p423 = scmp.ne.s32.totalorder %s418, %s420
    %p424 = scmp.eq.s32.totalorder %s106, 0
    %p425 = por %p423, %p424
    %p426 = scmp.ne.s32.totalorder %s418, %s420
    %p427 = scmp.eq.s32.totalorder %s111, 1
    %p428 = por %p426, %p427
    %p429 = scmp.ne.s32.totalorder %s420, %s421
    %p430 = scmp.eq.s32.totalorder %s111, 0
    %p431 = por %p429, %p430
    %p432 = scmp.ne.s32.totalorder %s420, %s421
    %p433 = scmp.eq.s32.totalorder %s112, 1
    %p434 = por %p432, %p433
    %p436 = scmp.ne.s32.totalorder %s421, %s435
    %p437 = scmp.eq.s32.totalorder %s112, 0
    %p438 = por %p436, %p437
    %s440 = sadd.s32 %s439, 1
    %p443 = scmp.eq.s32.totalorder %s106, 1
    %p444 = scmp.ne.s32.totalorder %s439, %s441
    %p445 = scmp.eq.s32.totalorder %s106, 0
    %p446 = por %p444, %p445
    %p447 = scmp.ne.s32.totalorder %s439, %s441
    %p448 = scmp.eq.s32.totalorder %s111, 1
    %p449 = por %p447, %p448
    %p450 = scmp.ne.s32.totalorder %s441, %s442
    %p451 = scmp.eq.s32.totalorder %s111, 0
    %p452 = por %p450, %p451
    %p453 = scmp.ne.s32.totalorder %s441, %s442
    %p454 = scmp.eq.s32.totalorder %s112, 1
    %p455 = por %p453, %p454
    %p457 = scmp.ne.s32.totalorder %s442, %s456
    %p458 = scmp.eq.s32.totalorder %s112, 0
    %p459 = por %p457, %p458
    %s461 = sadd.s32 %s460, 1
    %p464 = scmp.eq.s32.totalorder %s106, 1
    %p465 = scmp.ne.s32.totalorder %s460, %s462
    %p466 = scmp.eq.s32.totalorder %s106, 0
    %p467 = por %p465, %p466
    %p468 = scmp.ne.s32.totalorder %s460, %s462
    %p469 = scmp.eq.s32.totalorder %s111, 1
    %p470 = por %p468, %p469
    %p471 = scmp.ne.s32.totalorder %s462, %s463
    %p472 = scmp.eq.s32.totalorder %s111, 0
    %p473 = por %p471, %p472
    %p474 = scmp.ne.s32.totalorder %s462, %s463
    %p475 = scmp.eq.s32.totalorder %s112, 1
    %p476 = por %p474, %p475
    %p478 = scmp.ne.s32.totalorder %s463, %s477
    %p479 = scmp.eq.s32.totalorder %s112, 0
    %p480 = por %p478, %p479
    %s482 = sadd.s32 %s481, 1
    %p485 = scmp.eq.s32.totalorder %s106, 1
    %p486 = scmp.ne.s32.totalorder %s481, %s483
    %p487 = scmp.eq.s32.totalorder %s106, 0
    %p488 = por %p486, %p487
    %p489 = scmp.ne.s32.totalorder %s481, %s483
    %p490 = scmp.eq.s32.totalorder %s111, 1
    %p491 = por %p489, %p490
    %p492 = scmp.ne.s32.totalorder %s483, %s484
    %p493 = scmp.eq.s32.totalorder %s111, 0
    %p494 = por %p492, %p493
    %p495 = scmp.ne.s32.totalorder %s483, %s484
    %p496 = scmp.eq.s32.totalorder %s112, 1
    %p497 = por %p495, %p496
    %p499 = scmp.ne.s32.totalorder %s484, %s498
    %p500 = scmp.eq.s32.totalorder %s112, 0
    %p501 = por %p499, %p500
    %s503 = sadd.s32 %s502, 1
    %p506 = scmp.eq.s32.totalorder %s106, 1
    %p507 = scmp.ne.s32.totalorder %s502, %s504
    %p508 = scmp.eq.s32.totalorder %s106, 0
    %p509 = por %p507, %p508
    %p510 = scmp.ne.s32.totalorder %s502, %s504
    %p511 = scmp.eq.s32.totalorder %s111, 1
    %p512 = por %p510, %p511
    %p513 = scmp.ne.s32.totalorder %s504, %s505
    %p514 = scmp.eq.s32.totalorder %s111, 0
    %p515 = por %p513, %p514
    %p516 = scmp.ne.s32.totalorder %s504, %s505
    %p517 = scmp.eq.s32.totalorder %s112, 1
    %p518 = por %p516, %p517
    %p520 = scmp.ne.s32.totalorder %s505, %s519
    %p521 = scmp.eq.s32.totalorder %s112, 0
    %p522 = por %p520, %p521
    %s524 = sadd.s32 %s523, 1
    %p527 = scmp.eq.s32.totalorder %s106, 1
    %p528 = scmp.ne.s32.totalorder %s523, %s525
    %p529 = scmp.eq.s32.totalorder %s106, 0
    %p530 = por %p528, %p529
    %p531 = scmp.ne.s32.totalorder %s523, %s525
    %p532 = scmp.eq.s32.totalorder %s111, 1
    %p533 = por %p531, %p532
    %p534 = scmp.ne.s32.totalorder %s525, %s526
    %p535 = scmp.eq.s32.totalorder %s111, 0
    %p536 = por %p534, %p535
    %p537 = scmp.ne.s32.totalorder %s525, %s526
    %p538 = scmp.eq.s32.totalorder %s112, 1
    %p539 = por %p537, %p538
    %p541 = scmp.ne.s32.totalorder %s526, %s540
    %p542 = scmp.eq.s32.totalorder %s112, 0
    %p543 = por %p541, %p542
    %s545 = sadd.s32 %s544, 1
    %p548 = scmp.eq.s32.totalorder %s106, 1
    %p549 = scmp.ne.s32.totalorder %s544, %s546
    %p550 = scmp.eq.s32.totalorder %s106, 0
    %p551 = por %p549, %p550
    %p552 = scmp.ne.s32.totalorder %s544, %s546
    %p553 = scmp.eq.s32.totalorder %s111, 1
    %p554 = por %p552, %p553
    %p555 = scmp.ne.s32.totalorder %s546, %s547
    %p556 = scmp.eq.s32.totalorder %s111, 0
    %p557 = por %p555, %p556
    %p558 = scmp.ne.s32.totalorder %s546, %s547
    %p559 = scmp.eq.s32.totalorder %s112, 1
    %p560 = por %p558, %p559
    %p562 = scmp.ne.s32.totalorder %s547, %s561
    %p563 = scmp.eq.s32.totalorder %s112, 0
    %p564 = por %p562, %p563
    %s566 = sadd.s32 %s565, 1
    %p569 = scmp.eq.s32.totalorder %s106, 1
    %p570 = scmp.ne.s32.totalorder %s565, %s567
    %p571 = scmp.eq.s32.totalorder %s106, 0
    %p572 = por %p570, %p571
    %p573 = scmp.ne.s32.totalorder %s565, %s567
    %p574 = scmp.eq.s32.totalorder %s111, 1
    %p575 = por %p573, %p574
    %p576 = scmp.ne.s32.totalorder %s567, %s568
    %p577 = scmp.eq.s32.totalorder %s111, 0
    %p578 = por %p576, %p577
    %p579 = scmp.ne.s32.totalorder %s567, %s568
    %p580 = scmp.eq.s32.totalorder %s112, 1
    %p581 = por %p579, %p580
    %p583 = scmp.ne.s32.totalorder %s568, %s582
    %p584 = scmp.eq.s32.totalorder %s112, 0
    %p585 = por %p583, %p584
    %s587 = sadd.s32 %s586, 1
    %p590 = scmp.eq.s32.totalorder %s106, 1
    %p591 = scmp.ne.s32.totalorder %s586, %s588
    %p592 = scmp.eq.s32.totalorder %s106, 0
    %p593 = por %p591, %p592
    %p594 = scmp.ne.s32.totalorder %s586, %s588
    %p595 = scmp.eq.s32.totalorder %s111, 1
    %p596 = por %p594, %p595
    %p597 = scmp.ne.s32.totalorder %s588, %s589
    %p598 = scmp.eq.s32.totalorder %s111, 0
    %p599 = por %p597, %p598
    %p600 = scmp.ne.s32.totalorder %s588, %s589
    %p601 = scmp.eq.s32.totalorder %s112, 1
    %p602 = por %p600, %p601
    %p604 = scmp.ne.s32.totalorder %s589, %s603
    %p605 = scmp.eq.s32.totalorder %s112, 0
    %p606 = por %p604, %p605
    %s608 = sadd.s32 %s607, 1
    %p611 = scmp.eq.s32.totalorder %s106, 1
    %p612 = scmp.ne.s32.totalorder %s607, %s609
    %p613 = scmp.eq.s32.totalorder %s106, 0
    %p614 = por %p612, %p613
    %p615 = scmp.ne.s32.totalorder %s607, %s609
    %p616 = scmp.eq.s32.totalorder %s111, 1
    %p617 = por %p615, %p616
    %p618 = scmp.ne.s32.totalorder %s609, %s610
    %p619 = scmp.eq.s32.totalorder %s111, 0
    %p620 = por %p618, %p619
    %p621 = scmp.ne.s32.totalorder %s609, %s610
    %p622 = scmp.eq.s32.totalorder %s112, 1
    %p623 = por %p621, %p622
    %p625 = scmp.ne.s32.totalorder %s610, %s624
    %p626 = scmp.eq.s32.totalorder %s112, 0
    %p627 = por %p625, %p626
    %s629 = sadd.s32 %s628, 1
    %p632 = scmp.eq.s32.totalorder %s106, 1
    %p633 = scmp.ne.s32.totalorder %s628, %s630
    %p634 = scmp.eq.s32.totalorder %s106, 0
    %p635 = por %p633, %p634
    %p636 = scmp.ne.s32.totalorder %s628, %s630
    %p637 = scmp.eq.s32.totalorder %s111, 1
    %p638 = por %p636, %p637
    %p639 = scmp.ne.s32.totalorder %s630, %s631
    %p640 = scmp.eq.s32.totalorder %s111, 0
    %p641 = por %p639, %p640
    %p642 = scmp.ne.s32.totalorder %s630, %s631
    %p643 = scmp.eq.s32.totalorder %s112, 1
    %p644 = por %p642, %p643
    %p646 = scmp.ne.s32.totalorder %s631, %s645
    %p647 = scmp.eq.s32.totalorder %s112, 0
    %p648 = por %p646, %p647
    %s650 = sadd.s32 %s649, 1
    %p653 = scmp.eq.s32.totalorder %s106, 1
    %p654 = scmp.ne.s32.totalorder %s649, %s651
    %p655 = scmp.eq.s32.totalorder %s106, 0
    %p656 = por %p654, %p655
    %p657 = scmp.ne.s32.totalorder %s649, %s651
    %p658 = scmp.eq.s32.totalorder %s111, 1
    %p659 = por %p657, %p658
    %p660 = scmp.ne.s32.totalorder %s651, %s652
    %p661 = scmp.eq.s32.totalorder %s111, 0
    %p662 = por %p660, %p661
    %p663 = scmp.ne.s32.totalorder %s651, %s652
    %p664 = scmp.eq.s32.totalorder %s112, 1
    %p665 = por %p663, %p664
    %p667 = scmp.ne.s32.totalorder %s652, %s666
    %p668 = scmp.eq.s32.totalorder %s112, 0
    %p669 = por %p667, %p668
    %s671 = sadd.s32 %s670, 1
    %p674 = scmp.eq.s32.totalorder %s106, 1
    %p675 = scmp.ne.s32.totalorder %s670, %s672
    %p676 = scmp.eq.s32.totalorder %s106, 0
    %p677 = por %p675, %p676
    %p678 = scmp.ne.s32.totalorder %s670, %s672
    %p679 = scmp.eq.s32.totalorder %s111, 1
    %p680 = por %p678, %p679
    %p681 = scmp.ne.s32.totalorder %s672, %s673
    %p682 = scmp.eq.s32.totalorder %s111, 0
    %p683 = por %p681, %p682
    %p684 = scmp.ne.s32.totalorder %s672, %s673
    %p685 = scmp.eq.s32.totalorder %s112, 1
    %p686 = por %p684, %p685
    %p688 = scmp.ne.s32.totalorder %s673, %s687
    %p689 = scmp.eq.s32.totalorder %s112, 0
    %p690 = por %p688, %p689
    %s692 = sadd.s32 %s691, 1
    %p695 = scmp.eq.s32.totalorder %s106, 1
    %p696 = scmp.ne.s32.totalorder %s691, %s693
    %p697 = scmp.eq.s32.totalorder %s106, 0
    %p698 = por %p696, %p697
    %p699 = scmp.ne.s32.totalorder %s691, %s693
    %p700 = scmp.eq.s32.totalorder %s111, 1
    %p701 = por %p699, %p700
    %p702 = scmp.ne.s32.totalorder %s693, %s694
    %p703 = scmp.eq.s32.totalorder %s111, 0
    %p704 = por %p702, %p703
    %p705 = scmp.ne.s32.totalorder %s693, %s694
    %p706 = scmp.eq.s32.totalorder %s112, 1
    %p707 = por %p705, %p706
    %p709 = scmp.ne.s32.totalorder %s694, %s708
    %p710 = scmp.eq.s32.totalorder %s112, 0
    %p711 = por %p709, %p710
    %s713 = sadd.s32 %s712, 1
    %p716 = scmp.eq.s32.totalorder %s106, 1
    %p717 = scmp.ne.s32.totalorder %s712, %s714
    %p718 = scmp.eq.s32.totalorder %s106, 0
    %p719 = por %p717, %p718
    %p720 = scmp.ne.s32.totalorder %s712, %s714
    %p721 = scmp.eq.s32.totalorder %s111, 1
    %p722 = por %p720, %p721
    %p723 = scmp.ne.s32.totalorder %s714, %s715
    %p724 = scmp.eq.s32.totalorder %s111, 0
    %p725 = por %p723, %p724
    %p726 = scmp.ne.s32.totalorder %s714, %s715
    %p727 = scmp.eq.s32.totalorder %s112, 1
    %p728 = por %p726, %p727
    %p730 = scmp.ne.s32.totalorder %s715, %s729
    %p731 = scmp.eq.s32.totalorder %s112, 0
    %p732 = por %p730, %p731
    %s734 = sadd.s32 %s733, 1
    %p737 = scmp.eq.s32.totalorder %s106, 1
    %p738 = scmp.ne.s32.totalorder %s733, %s735
    %p739 = scmp.eq.s32.totalorder %s106, 0
    %p740 = por %p738, %p739
    %p741 = scmp.ne.s32.totalorder %s733, %s735
    %p742 = scmp.eq.s32.totalorder %s111, 1
    %p743 = por %p741, %p742
    %p744 = scmp.ne.s32.totalorder %s735, %s736
    %p745 = scmp.eq.s32.totalorder %s111, 0
    %p746 = por %p744, %p745
    %p747 = scmp.ne.s32.totalorder %s735, %s736
    %p748 = scmp.eq.s32.totalorder %s112, 1
    %p749 = por %p747, %p748
    %p751 = scmp.ne.s32.totalorder %s736, %s750
    %p752 = scmp.eq.s32.totalorder %s112, 0
    %p753 = por %p751, %p752
    %s755 = sadd.s32 %s754, 1
    %p758 = scmp.eq.s32.totalorder %s106, 1
    %p759 = scmp.ne.s32.totalorder %s754, %s756
    %p760 = scmp.eq.s32.totalorder %s106, 0
    %p761 = por %p759, %p760
    %p762 = scmp.ne.s32.totalorder %s754, %s756
    %p763 = scmp.eq.s32.totalorder %s111, 1
    %p764 = por %p762, %p763
    %p765 = scmp.ne.s32.totalorder %s756, %s757
    %p766 = scmp.eq.s32.totalorder %s111, 0
    %p767 = por %p765, %p766
    %p768 = scmp.ne.s32.totalorder %s756, %s757
    %p769 = scmp.eq.s32.totalorder %s112, 1
    %p770 = por %p768, %p769
    %p772 = scmp.ne.s32.totalorder %s757, %s771
    %p773 = scmp.eq.s32.totalorder %s112, 0
    %p774 = por %p772, %p773
    %s776 = sadd.s32 %s775, 1
    %p779 = scmp.eq.s32.totalorder %s106, 1
    %p780 = scmp.ne.s32.totalorder %s775, %s777
    %p781 = scmp.eq.s32.totalorder %s106, 0
    %p782 = por %p780, %p781
    %p783 = scmp.ne.s32.totalorder %s775, %s777
    %p784 = scmp.eq.s32.totalorder %s111, 1
    %p785 = por %p783, %p784
    %p786 = scmp.ne.s32.totalorder %s777, %s778
    %p787 = scmp.eq.s32.totalorder %s111, 0
    %p788 = por %p786, %p787
    %p789 = scmp.ne.s32.totalorder %s777, %s778
    %p790 = scmp.eq.s32.totalorder %s112, 1
    %p791 = por %p789, %p790
    %p793 = scmp.ne.s32.totalorder %s778, %s792
    %p794 = scmp.eq.s32.totalorder %s112, 0
    %p795 = por %p793, %p794
    %s797 = sadd.s32 %s796, 1
    %p800 = scmp.eq.s32.totalorder %s106, 1
    %p801 = scmp.ne.s32.totalorder %s796, %s798
    %p802 = scmp.eq.s32.totalorder %s106, 0
    %p803 = por %p801, %p802
    %p804 = scmp.ne.s32.totalorder %s796, %s798
    %p805 = scmp.eq.s32.totalorder %s111, 1
    %p806 = por %p804, %p805
    %p807 = scmp.ne.s32.totalorder %s798, %s799
    %p808 = scmp.eq.s32.totalorder %s111, 0
    %p809 = por %p807, %p808
    %p810 = scmp.ne.s32.totalorder %s798, %s799
    %p811 = scmp.eq.s32.totalorder %s112, 1
    %p812 = por %p810, %p811
    %p814 = scmp.ne.s32.totalorder %s799, %s813
    %p815 = scmp.eq.s32.totalorder %s112, 0
    %p816 = por %p814, %p815
    %s818 = sadd.s32 %s817, 1
    %p821 = scmp.eq.s32.totalorder %s106, 1
    %p822 = scmp.ne.s32.totalorder %s817, %s819
    %p823 = scmp.eq.s32.totalorder %s106, 0
    %p824 = por %p822, %p823
    %p825 = scmp.ne.s32.totalorder %s817, %s819
    %p826 = scmp.eq.s32.totalorder %s111, 1
    %p827 = por %p825, %p826
    %p828 = scmp.ne.s32.totalorder %s819, %s820
    %p829 = scmp.eq.s32.totalorder %s111, 0
    %p830 = por %p828, %p829
    %p831 = scmp.ne.s32.totalorder %s819, %s820
    %p832 = scmp.eq.s32.totalorder %s112, 1
    %p833 = por %p831, %p832
    %p835 = scmp.ne.s32.totalorder %s820, %s834
    %p836 = scmp.eq.s32.totalorder %s112, 0
    %p837 = por %p835, %p836
    %s839 = sadd.s32 %s838, 1
    %p842 = scmp.eq.s32.totalorder %s106, 1
    %p843 = scmp.ne.s32.totalorder %s838, %s840
    %p844 = scmp.eq.s32.totalorder %s106, 0
    %p845 = por %p843, %p844
    %p846 = scmp.ne.s32.totalorder %s838, %s840
    %p847 = scmp.eq.s32.totalorder %s111, 1
    %p848 = por %p846, %p847
    %p849 = scmp.ne.s32.totalorder %s840, %s841
    %p850 = scmp.eq.s32.totalorder %s111, 0
    %p851 = por %p849, %p850
    %p852 = scmp.ne.s32.totalorder %s840, %s841
    %p853 = scmp.eq.s32.totalorder %s112, 1
    %p854 = por %p852, %p853
    %p856 = scmp.ne.s32.totalorder %s841, %s855
    %p857 = scmp.eq.s32.totalorder %s112, 0
    %p858 = por %p856, %p857
    %s860 = sadd.s32 %s859, 1
    %p863 = scmp.eq.s32.totalorder %s106, 1
    %p864 = scmp.ne.s32.totalorder %s859, %s861
    %p865 = scmp.eq.s32.totalorder %s106, 0
    %p866 = por %p864, %p865
    %p867 = scmp.ne.s32.totalorder %s859, %s861
    %p868 = scmp.eq.s32.totalorder %s111, 1
    %p869 = por %p867, %p868
    %p870 = scmp.ne.s32.totalorder %s861, %s862
    %p871 = scmp.eq.s32.totalorder %s111, 0
    %p872 = por %p870, %p871
    %p873 = scmp.ne.s32.totalorder %s861, %s862
    %p874 = scmp.eq.s32.totalorder %s112, 1
    %p875 = por %p873, %p874
    %p877 = scmp.ne.s32.totalorder %s862, %s876
    %p878 = scmp.eq.s32.totalorder %s112, 0
    %p879 = por %p877, %p878
    %s881 = sadd.s32 %s880, 1
    %p884 = scmp.eq.s32.totalorder %s106, 1
    %p885 = scmp.ne.s32.totalorder %s880, %s882
    %p886 = scmp.eq.s32.totalorder %s106, 0
    %p887 = por %p885, %p886
    %p888 = scmp.ne.s32.totalorder %s880, %s882
    %p889 = scmp.eq.s32.totalorder %s111, 1
    %p890 = por %p888, %p889
    %p891 = scmp.ne.s32.totalorder %s882, %s883
    %p892 = scmp.eq.s32.totalorder %s111, 0
    %p893 = por %p891, %p892
    %p894 = scmp.ne.s32.totalorder %s882, %s883
    %p895 = scmp.eq.s32.totalorder %s112, 1
    %p896 = por %p894, %p895
    %p898 = scmp.ne.s32.totalorder %s883, %s897
    %p899 = scmp.eq.s32.totalorder %s112, 0
    %p900 = por %p898, %p899
    %s902 = sadd.s32 %s901, 1
    %p905 = scmp.eq.s32.totalorder %s106, 1
    %p906 = scmp.ne.s32.totalorder %s901, %s903
    %p907 = scmp.eq.s32.totalorder %s106, 0
    %p908 = por %p906, %p907
    %p909 = scmp.ne.s32.totalorder %s901, %s903
    %p910 = scmp.eq.s32.totalorder %s111, 1
    %p911 = por %p909, %p910
    %p912 = scmp.ne.s32.totalorder %s903, %s904
    %p913 = scmp.eq.s32.totalorder %s111, 0
    %p914 = por %p912, %p913
    %p915 = scmp.ne.s32.totalorder %s903, %s904
    %p916 = scmp.eq.s32.totalorder %s112, 1
    %p917 = por %p915, %p916
    %p919 = scmp.ne.s32.totalorder %s904, %s918
    %p920 = scmp.eq.s32.totalorder %s112, 0
    %p921 = por %p919, %p920
    %s923 = sadd.s32 %s922, 1
    %p926 = scmp.eq.s32.totalorder %s106, 1
    %p927 = scmp.ne.s32.totalorder %s922, %s924
    %p928 = scmp.eq.s32.totalorder %s106, 0
    %p929 = por %p927, %p928
    %p930 = scmp.ne.s32.totalorder %s922, %s924
    %p931 = scmp.eq.s32.totalorder %s111, 1
    %p932 = por %p930, %p931
    %p933 = scmp.ne.s32.totalorder %s924, %s925
    %p934 = scmp.eq.s32.totalorder %s111, 0
    %p935 = por %p933, %p934
    %p936 = scmp.ne.s32.totalorder %s924, %s925
    %p937 = scmp.eq.s32.totalorder %s112, 1
    %p938 = por %p936, %p937
    %p940 = scmp.ne.s32.totalorder %s925, %s939
    %p941 = scmp.eq.s32.totalorder %s112, 0
    %p942 = por %p940, %p941
    %s944 = sadd.s32 %s943, 1
    %p947 = scmp.eq.s32.totalorder %s106, 1
    %p948 = scmp.ne.s32.totalorder %s943, %s945
    %p949 = scmp.eq.s32.totalorder %s106, 0
    %p950 = por %p948, %p949
    %p951 = scmp.ne.s32.totalorder %s943, %s945
    %p952 = scmp.eq.s32.totalorder %s111, 1
    %p953 = por %p951, %p952
    %p954 = scmp.ne.s32.totalorder %s945, %s946
    %p955 = scmp.eq.s32.totalorder %s111, 0
    %p956 = por %p954, %p955
    %p957 = scmp.ne.s32.totalorder %s945, %s946
    %p958 = scmp.eq.s32.totalorder %s112, 1
    %p959 = por %p957, %p958
    %p961 = scmp.ne.s32.totalorder %s946, %s960
    %p962 = scmp.eq.s32.totalorder %s112, 0
    %p963 = por %p961, %p962
    %s965 = sadd.s32 %s964, 1
    %p968 = scmp.eq.s32.totalorder %s106, 1
    %p969 = scmp.ne.s32.totalorder %s964, %s966
    %p970 = scmp.eq.s32.totalorder %s106, 0
    %p971 = por %p969, %p970
    %p972 = scmp.ne.s32.totalorder %s964, %s966
    %p973 = scmp.eq.s32.totalorder %s111, 1
    %p974 = por %p972, %p973
    %p975 = scmp.ne.s32.totalorder %s966, %s967
    %p976 = scmp.eq.s32.totalorder %s111, 0
    %p977 = por %p975, %p976
    %p978 = scmp.ne.s32.totalorder %s966, %s967
    %p979 = scmp.eq.s32.totalorder %s112, 1
    %p980 = por %p978, %p979
    %p982 = scmp.ne.s32.totalorder %s967, %s981
    %p983 = scmp.eq.s32.totalorder %s112, 0
    %p984 = por %p982, %p983
    %s986 = sadd.s32 %s985, 1
    %p989 = scmp.eq.s32.totalorder %s106, 1
    %p990 = scmp.ne.s32.totalorder %s985, %s987
    %p991 = scmp.eq.s32.totalorder %s106, 0
    %p992 = por %p990, %p991
    %p993 = scmp.ne.s32.totalorder %s985, %s987
    %p994 = scmp.eq.s32.totalorder %s111, 1
    %p995 = por %p993, %p994
    %p996 = scmp.ne.s32.totalorder %s987, %s988
    %p997 = scmp.eq.s32.totalorder %s111, 0
    %p998 = por %p996, %p997
    %p999 = scmp.ne.s32.totalorder %s987, %s988
    %p1000 = scmp.eq.s32.totalorder %s112, 1
    %p1001 = por %p999, %p1000
    %p1003 = scmp.ne.s32.totalorder %s988, %s1002
    %p1004 = scmp.eq.s32.totalorder %s112, 0
    %p1005 = por %p1003, %p1004
    %s1007 = sadd.s32 %s1006, 1
    %p1010 = scmp.eq.s32.totalorder %s106, 1
    %p1011 = scmp.ne.s32.totalorder %s1006, %s1008
    %p1012 = scmp.eq.s32.totalorder %s106, 0
    %p1013 = por %p1011, %p1012
    %p1014 = scmp.ne.s32.totalorder %s1006, %s1008
    %p1015 = scmp.eq.s32.totalorder %s111, 1
    %p1016 = por %p1014, %p1015
    %p1017 = scmp.ne.s32.totalorder %s1008, %s1009
    %p1018 = scmp.eq.s32.totalorder %s111, 0
    %p1019 = por %p1017, %p1018
    %p1020 = scmp.ne.s32.totalorder %s1008, %s1009
    %p1021 = scmp.eq.s32.totalorder %s112, 1
    %p1022 = por %p1020, %p1021
    %p1024 = scmp.ne.s32.totalorder %s1009, %s1023
    %p1025 = scmp.eq.s32.totalorder %s112, 0
    %p1026 = por %p1024, %p1025
    %s1028 = sadd.s32 %s1027, 1
    %p1031 = scmp.eq.s32.totalorder %s106, 1
    %p1032 = scmp.ne.s32.totalorder %s1027, %s1029
    %p1033 = scmp.eq.s32.totalorder %s106, 0
    %p1034 = por %p1032, %p1033
    %p1035 = scmp.ne.s32.totalorder %s1027, %s1029
    %p1036 = scmp.eq.s32.totalorder %s111, 1
    %p1037 = por %p1035, %p1036
    %p1038 = scmp.ne.s32.totalorder %s1029, %s1030
    %p1039 = scmp.eq.s32.totalorder %s111, 0
    %p1040 = por %p1038, %p1039
    %p1041 = scmp.ne.s32.totalorder %s1029, %s1030
    %p1042 = scmp.eq.s32.totalorder %s112, 1
    %p1043 = por %p1041, %p1042
    %p1045 = scmp.ne.s32.totalorder %s1030, %s1044
    %p1046 = scmp.eq.s32.totalorder %s112, 0
    %p1047 = por %p1045, %p1046
    %s1049 = sadd.s32 %s1048, 1
    %p1052 = scmp.eq.s32.totalorder %s106, 1
    %p1053 = scmp.ne.s32.totalorder %s1048, %s1050
    %p1054 = scmp.eq.s32.totalorder %s106, 0
    %p1055 = por %p1053, %p1054
    %p1056 = scmp.ne.s32.totalorder %s1048, %s1050
    %p1057 = scmp.eq.s32.totalorder %s111, 1
    %p1058 = por %p1056, %p1057
    %p1059 = scmp.ne.s32.totalorder %s1050, %s1051
    %p1060 = scmp.eq.s32.totalorder %s111, 0
    %p1061 = por %p1059, %p1060
    %p1062 = scmp.ne.s32.totalorder %s1050, %s1051
    %p1063 = scmp.eq.s32.totalorder %s112, 1
    %p1064 = por %p1062, %p1063
    %p1066 = scmp.ne.s32.totalorder %s1051, %s1065
    %p1067 = scmp.eq.s32.totalorder %s112, 0
    %p1068 = por %p1066, %p1067
    %s1070 = sadd.s32 %s1069, 1
    %p1073 = scmp.eq.s32.totalorder %s106, 1
    %p1074 = scmp.ne.s32.totalorder %s1069, %s1071
    %p1075 = scmp.eq.s32.totalorder %s106, 0
    %p1076 = por %p1074, %p1075
    %p1077 = scmp.ne.s32.totalorder %s1069, %s1071
    %p1078 = scmp.eq.s32.totalorder %s111, 1
    %p1079 = por %p1077, %p1078
    %p1080 = scmp.ne.s32.totalorder %s1071, %s1072
    %p1081 = scmp.eq.s32.totalorder %s111, 0
    %p1082 = por %p1080, %p1081
    %p1083 = scmp.ne.s32.totalorder %s1071, %s1072
    %p1084 = scmp.eq.s32.totalorder %s112, 1
    %p1085 = por %p1083, %p1084
    %p1087 = scmp.ne.s32.totalorder %s1072, %s1086
    %p1088 = scmp.eq.s32.totalorder %s112, 0
    %p1089 = por %p1087, %p1088
    %s1091 = sadd.s32 %s1090, 1
    %p1094 = scmp.eq.s32.totalorder %s106, 1
    %p1095 = scmp.ne.s32.totalorder %s1090, %s1092
    %p1096 = scmp.eq.s32.totalorder %s106, 0
    %p1097 = por %p1095, %p1096
    %p1098 = scmp.ne.s32.totalorder %s1090, %s1092
    %p1099 = scmp.eq.s32.totalorder %s111, 1
    %p1100 = por %p1098, %p1099
    %p1101 = scmp.ne.s32.totalorder %s1092, %s1093
    %p1102 = scmp.eq.s32.totalorder %s111, 0
    %p1103 = por %p1101, %p1102
    %p1104 = scmp.ne.s32.totalorder %s1092, %s1093
    %p1105 = scmp.eq.s32.totalorder %s112, 1
    %p1106 = por %p1104, %p1105
    %p1108 = scmp.ne.s32.totalorder %s1093, %s1107
    %p1109 = scmp.eq.s32.totalorder %s112, 0
    %p1110 = por %p1108, %p1109
    %s1112 = sadd.s32 %s1111, 1
    %p1115 = scmp.eq.s32.totalorder %s106, 1
    %p1116 = scmp.ne.s32.totalorder %s1111, %s1113
    %p1117 = scmp.eq.s32.totalorder %s106, 0
    %p1118 = por %p1116, %p1117
    %p1119 = scmp.ne.s32.totalorder %s1111, %s1113
    %p1120 = scmp.eq.s32.totalorder %s111, 1
    %p1121 = por %p1119, %p1120
    %p1122 = scmp.ne.s32.totalorder %s1113, %s1114
    %p1123 = scmp.eq.s32.totalorder %s111, 0
    %p1124 = por %p1122, %p1123
    %p1125 = scmp.ne.s32.totalorder %s1113, %s1114
    %p1126 = scmp.eq.s32.totalorder %s112, 1
    %p1127 = por %p1125, %p1126
    %p1129 = scmp.ne.s32.totalorder %s1114, %s1128
    %p1130 = scmp.eq.s32.totalorder %s112, 0
    %p1131 = por %p1129, %p1130
    %s1132 = ssub.s32 %s106, %s113
    %p1133 = scmp.eq.s32.totalorder %s1132, 0
    %s1135 = sadd.s32 %s1134, 1
    %s1136 = scalar_select %p1133, %s1134, %s1135
    %p1139 = pneg %p1133
    %p1140 = scmp.eq.s32.totalorder %s106, 1
    %p1141 = por %p1139, %p1140
    %p1142 = scmp.ne.s32.totalorder %s1134, %s1137
    %p1143 = scmp.eq.s32.totalorder %s106, 0
    %p1144 = por %p1142, %p1143
    %p1145 = scmp.ne.s32.totalorder %s1134, %s1137
    %p1146 = scmp.eq.s32.totalorder %s111, 1
    %p1147 = por %p1145, %p1146
    %p1148 = scmp.ne.s32.totalorder %s1137, %s1138
    %p1149 = scmp.eq.s32.totalorder %s111, 0
    %p1150 = por %p1148, %p1149
    %p1151 = scmp.ne.s32.totalorder %s1137, %s1138
    %p1152 = scmp.eq.s32.totalorder %s112, 1
    %p1153 = por %p1151, %p1152
    %p1155 = scmp.ne.s32.totalorder %s1138, %s1154
    %p1156 = scmp.eq.s32.totalorder %s112, 0
    %p1157 = por %p1155, %p1156
    %s1158 = ssub.s32 %s106, %s113
    %p1159 = scmp.eq.s32.totalorder %s1158, 0
    %s1161 = sadd.s32 %s1160, 1
    %s1162 = scalar_select %p1159, %s1160, %s1161
    %p1165 = pneg %p1159
    %p1166 = scmp.eq.s32.totalorder %s106, 1
    %p1167 = por %p1165, %p1166
    %p1168 = scmp.ne.s32.totalorder %s1160, %s1163
    %p1169 = scmp.eq.s32.totalorder %s106, 0
    %p1170 = por %p1168, %p1169
    %p1171 = scmp.ne.s32.totalorder %s1160, %s1163
    %p1172 = scmp.eq.s32.totalorder %s111, 1
    %p1173 = por %p1171, %p1172
    %p1174 = scmp.ne.s32.totalorder %s1163, %s1164
    %p1175 = scmp.eq.s32.totalorder %s111, 0
    %p1176 = por %p1174, %p1175
    %p1177 = scmp.ne.s32.totalorder %s1163, %s1164
    %p1178 = scmp.eq.s32.totalorder %s112, 1
    %p1179 = por %p1177, %p1178
    %p1181 = scmp.ne.s32.totalorder %s1164, %s1180
    %p1182 = scmp.eq.s32.totalorder %s112, 0
    %p1183 = por %p1181, %p1182
    %p1184 = scmp.le.s32.totalorder 1, %s106
    %p1185 = scmp.lt.s32.totalorder %s106, 3
    %p1186 = pnand %p1184, %p1185
    %p1187 = pneg %p1186
    // Predicated region
    $region9: #{forward.1} parent=5 // pred_check
      _
    $region10: #{forward.1} parent=5 // pred_check_branch
      %1189 = sbr.rel (%p1186) target = $region12
    $region11: #{forward.1} parent=5 // pred_region
      %s1190 = ssub.s32 %s106, 1
      // Predicated region
      $region13: #{forward.1} parent=11 // pred_check
        %p1191 = pneg %p179
      $region14: #{forward.1} parent=11 // pred_check_branch
        %1193 = sbr.rel (%p1191) target = $region16
      $region15: #{forward.1} parent=11 // pred_region
        _
      $region16: #{forward.1} parent=11 // pred_fallthru
        _
      // Predicated region
      $region17: #{forward.1} parent=11 // pred_check
        %p1194 = pneg %p200
      $region18: #{forward.1} parent=11 // pred_check_branch
        %1196 = sbr.rel (%p1194) target = $region20
      $region19: #{forward.1} parent=11 // pred_region
        _
      $region20: #{forward.1} parent=11 // pred_fallthru
        _
      // Predicated region
      $region21: #{forward.1} parent=11 // pred_check
        %p1197 = pneg %p221
      $region22: #{forward.1} parent=11 // pred_check_branch
        %1199 = sbr.rel (%p1197) target = $region24
      $region23: #{forward.1} parent=11 // pred_region
        _
      $region24: #{forward.1} parent=11 // pred_fallthru
        _
      // Predicated region
      $region25: #{forward.1} parent=11 // pred_check
        %p1200 = pneg %p242
      $region26: #{forward.1} parent=11 // pred_check_branch
        %1202 = sbr.rel (%p1200) target = $region28
      $region27: #{forward.1} parent=11 // pred_region
        _
      $region28: #{forward.1} parent=11 // pred_fallthru
        _
      // Predicated region
      $region29: #{forward.1} parent=11 // pred_check
        %p1203 = pneg %p263
      $region30: #{forward.1} parent=11 // pred_check_branch
        %1205 = sbr.rel (%p1203) target = $region32
      $region31: #{forward.1} parent=11 // pred_region
        _
      $region32: #{forward.1} parent=11 // pred_fallthru
        _
      // Predicated region
      $region33: #{forward.1} parent=11 // pred_check
        %p1206 = pneg %p284
      $region34: #{forward.1} parent=11 // pred_check_branch
        %1208 = sbr.rel (%p1206) target = $region36
      $region35: #{forward.1} parent=11 // pred_region
        _
      $region36: #{forward.1} parent=11 // pred_fallthru
        _
      // Predicated region
      $region37: #{forward.1} parent=11 // pred_check
        %p1209 = pneg %p305
      $region38: #{forward.1} parent=11 // pred_check_branch
        %1211 = sbr.rel (%p1209) target = $region40
      $region39: #{forward.1} parent=11 // pred_region
        _
      $region40: #{forward.1} parent=11 // pred_fallthru
        _
      // Predicated region
      $region41: #{forward.1} parent=11 // pred_check
        %p1212 = pneg %p326
      $region42: #{forward.1} parent=11 // pred_check_branch
        %1214 = sbr.rel (%p1212) target = $region44
      $region43: #{forward.1} parent=11 // pred_region
        _
      $region44: #{forward.1} parent=11 // pred_fallthru
        _
      // Predicated region
      $region45: #{forward.1} parent=11 // pred_check
        %p1215 = pneg %p347
      $region46: #{forward.1} parent=11 // pred_check_branch
        %1217 = sbr.rel (%p1215) target = $region48
      $region47: #{forward.1} parent=11 // pred_region
        _
      $region48: #{forward.1} parent=11 // pred_fallthru
        _
      // Predicated region
      $region49: #{forward.1} parent=11 // pred_check
        %p1218 = pneg %p368
      $region50: #{forward.1} parent=11 // pred_check_branch
        %1220 = sbr.rel (%p1218) target = $region52
      $region51: #{forward.1} parent=11 // pred_region
        _
      $region52: #{forward.1} parent=11 // pred_fallthru
        _
      // Predicated region
      $region53: #{forward.1} parent=11 // pred_check
        %p1221 = pneg %p389
      $region54: #{forward.1} parent=11 // pred_check_branch
        %1223 = sbr.rel (%p1221) target = $region56
      $region55: #{forward.1} parent=11 // pred_region
        _
      $region56: #{forward.1} parent=11 // pred_fallthru
        _
      // Predicated region
      $region57: #{forward.1} parent=11 // pred_check
        %p1224 = pneg %p410
      $region58: #{forward.1} parent=11 // pred_check_branch
        %1226 = sbr.rel (%p1224) target = $region60
      $region59: #{forward.1} parent=11 // pred_region
        _
      $region60: #{forward.1} parent=11 // pred_fallthru
        _
      // Predicated region
      $region61: #{forward.1} parent=11 // pred_check
        %p1227 = pneg %p431
      $region62: #{forward.1} parent=11 // pred_check_branch
        %1229 = sbr.rel (%p1227) target = $region64
      $region63: #{forward.1} parent=11 // pred_region
        _
      $region64: #{forward.1} parent=11 // pred_fallthru
        _
      // Predicated region
      $region65: #{forward.1} parent=11 // pred_check
        %p1230 = pneg %p452
      $region66: #{forward.1} parent=11 // pred_check_branch
        %1232 = sbr.rel (%p1230) target = $region68
      $region67: #{forward.1} parent=11 // pred_region
        _
      $region68: #{forward.1} parent=11 // pred_fallthru
        _
      // Predicated region
      $region69: #{forward.1} parent=11 // pred_check
        %p1233 = pneg %p473
      $region70: #{forward.1} parent=11 // pred_check_branch
        %1235 = sbr.rel (%p1233) target = $region72
      $region71: #{forward.1} parent=11 // pred_region
        _
      $region72: #{forward.1} parent=11 // pred_fallthru
        _
      // Predicated region
      $region73: #{forward.1} parent=11 // pred_check
        %p1236 = pneg %p494
      $region74: #{forward.1} parent=11 // pred_check_branch
        %1238 = sbr.rel (%p1236) target = $region76
      $region75: #{forward.1} parent=11 // pred_region
        _
      $region76: #{forward.1} parent=11 // pred_fallthru
        _
      // Predicated region
      $region77: #{forward.1} parent=11 // pred_check
        %p1239 = pneg %p515
      $region78: #{forward.1} parent=11 // pred_check_branch
        %1241 = sbr.rel (%p1239) target = $region80
      $region79: #{forward.1} parent=11 // pred_region
        _
      $region80: #{forward.1} parent=11 // pred_fallthru
        _
      // Predicated region
      $region81: #{forward.1} parent=11 // pred_check
        %p1242 = pneg %p536
      $region82: #{forward.1} parent=11 // pred_check_branch
        %1244 = sbr.rel (%p1242) target = $region84
      $region83: #{forward.1} parent=11 // pred_region
        _
      $region84: #{forward.1} parent=11 // pred_fallthru
        _
      // Predicated region
      $region85: #{forward.1} parent=11 // pred_check
        %p1245 = pneg %p557
      $region86: #{forward.1} parent=11 // pred_check_branch
        %1247 = sbr.rel (%p1245) target = $region88
      $region87: #{forward.1} parent=11 // pred_region
        _
      $region88: #{forward.1} parent=11 // pred_fallthru
        _
      // Predicated region
      $region89: #{forward.1} parent=11 // pred_check
        %p1248 = pneg %p578
      $region90: #{forward.1} parent=11 // pred_check_branch
        %1250 = sbr.rel (%p1248) target = $region92
      $region91: #{forward.1} parent=11 // pred_region
        _
      $region92: #{forward.1} parent=11 // pred_fallthru
        _
      // Predicated region
      $region93: #{forward.1} parent=11 // pred_check
        %p1251 = pneg %p599
      $region94: #{forward.1} parent=11 // pred_check_branch
        %1253 = sbr.rel (%p1251) target = $region96
      $region95: #{forward.1} parent=11 // pred_region
        _
      $region96: #{forward.1} parent=11 // pred_fallthru
        _
      // Predicated region
      $region97: #{forward.1} parent=11 // pred_check
        %p1254 = pneg %p620
      $region98: #{forward.1} parent=11 // pred_check_branch
        %1256 = sbr.rel (%p1254) target = $region100
      $region99: #{forward.1} parent=11 // pred_region
        _
      $region100: #{forward.1} parent=11 // pred_fallthru
        _
      // Predicated region
      $region101: #{forward.1} parent=11 // pred_check
        %p1257 = pneg %p641
      $region102: #{forward.1} parent=11 // pred_check_branch
        %1259 = sbr.rel (%p1257) target = $region104
      $region103: #{forward.1} parent=11 // pred_region
        _
      $region104: #{forward.1} parent=11 // pred_fallthru
        _
      // Predicated region
      $region105: #{forward.1} parent=11 // pred_check
        %p1260 = pneg %p662
      $region106: #{forward.1} parent=11 // pred_check_branch
        %1262 = sbr.rel (%p1260) target = $region108
      $region107: #{forward.1} parent=11 // pred_region
        _
      $region108: #{forward.1} parent=11 // pred_fallthru
        _
      // Predicated region
      $region109: #{forward.1} parent=11 // pred_check
        %p1263 = pneg %p683
      $region110: #{forward.1} parent=11 // pred_check_branch
        %1265 = sbr.rel (%p1263) target = $region112
      $region111: #{forward.1} parent=11 // pred_region
        _
      $region112: #{forward.1} parent=11 // pred_fallthru
        _
      // Predicated region
      $region113: #{forward.1} parent=11 // pred_check
        %p1266 = pneg %p704
      $region114: #{forward.1} parent=11 // pred_check_branch
        %1268 = sbr.rel (%p1266) target = $region116
      $region115: #{forward.1} parent=11 // pred_region
        _
      $region116: #{forward.1} parent=11 // pred_fallthru
        _
      // Predicated region
      $region117: #{forward.1} parent=11 // pred_check
        %p1269 = pneg %p725
      $region118: #{forward.1} parent=11 // pred_check_branch
        %1271 = sbr.rel (%p1269) target = $region120
      $region119: #{forward.1} parent=11 // pred_region
        _
      $region120: #{forward.1} parent=11 // pred_fallthru
        _
      // Predicated region
      $region121: #{forward.1} parent=11 // pred_check
        %p1272 = pneg %p746
      $region122: #{forward.1} parent=11 // pred_check_branch
        %1274 = sbr.rel (%p1272) target = $region124
      $region123: #{forward.1} parent=11 // pred_region
        _
      $region124: #{forward.1} parent=11 // pred_fallthru
        _
      // Predicated region
      $region125: #{forward.1} parent=11 // pred_check
        %p1275 = pneg %p767
      $region126: #{forward.1} parent=11 // pred_check_branch
        %1277 = sbr.rel (%p1275) target = $region128
      $region127: #{forward.1} parent=11 // pred_region
        _
      $region128: #{forward.1} parent=11 // pred_fallthru
        _
      // Predicated region
      $region129: #{forward.1} parent=11 // pred_check
        %p1278 = pneg %p788
      $region130: #{forward.1} parent=11 // pred_check_branch
        %1280 = sbr.rel (%p1278) target = $region132
      $region131: #{forward.1} parent=11 // pred_region
        _
      $region132: #{forward.1} parent=11 // pred_fallthru
        _
      // Predicated region
      $region133: #{forward.1} parent=11 // pred_check
        %p1281 = pneg %p809
      $region134: #{forward.1} parent=11 // pred_check_branch
        %1283 = sbr.rel (%p1281) target = $region136
      $region135: #{forward.1} parent=11 // pred_region
        _
      $region136: #{forward.1} parent=11 // pred_fallthru
        _
      // Predicated region
      $region137: #{forward.1} parent=11 // pred_check
        %p1284 = pneg %p830
      $region138: #{forward.1} parent=11 // pred_check_branch
        %1286 = sbr.rel (%p1284) target = $region140
      $region139: #{forward.1} parent=11 // pred_region
        _
      $region140: #{forward.1} parent=11 // pred_fallthru
        _
      // Predicated region
      $region141: #{forward.1} parent=11 // pred_check
        %p1287 = pneg %p851
      $region142: #{forward.1} parent=11 // pred_check_branch
        %1289 = sbr.rel (%p1287) target = $region144
      $region143: #{forward.1} parent=11 // pred_region
        _
      $region144: #{forward.1} parent=11 // pred_fallthru
        _
      // Predicated region
      $region145: #{forward.1} parent=11 // pred_check
        %p1290 = pneg %p872
      $region146: #{forward.1} parent=11 // pred_check_branch
        %1292 = sbr.rel (%p1290) target = $region148
      $region147: #{forward.1} parent=11 // pred_region
        _
      $region148: #{forward.1} parent=11 // pred_fallthru
        _
      // Predicated region
      $region149: #{forward.1} parent=11 // pred_check
        %p1293 = pneg %p893
      $region150: #{forward.1} parent=11 // pred_check_branch
        %1295 = sbr.rel (%p1293) target = $region152
      $region151: #{forward.1} parent=11 // pred_region
        _
      $region152: #{forward.1} parent=11 // pred_fallthru
        _
      // Predicated region
      $region153: #{forward.1} parent=11 // pred_check
        %p1296 = pneg %p914
      $region154: #{forward.1} parent=11 // pred_check_branch
        %1298 = sbr.rel (%p1296) target = $region156
      $region155: #{forward.1} parent=11 // pred_region
        _
      $region156: #{forward.1} parent=11 // pred_fallthru
        _
      // Predicated region
      $region157: #{forward.1} parent=11 // pred_check
        %p1299 = pneg %p935
      $region158: #{forward.1} parent=11 // pred_check_branch
        %1301 = sbr.rel (%p1299) target = $region160
      $region159: #{forward.1} parent=11 // pred_region
        _
      $region160: #{forward.1} parent=11 // pred_fallthru
        _
      // Predicated region
      $region161: #{forward.1} parent=11 // pred_check
        %p1302 = pneg %p956
      $region162: #{forward.1} parent=11 // pred_check_branch
        %1304 = sbr.rel (%p1302) target = $region164
      $region163: #{forward.1} parent=11 // pred_region
        _
      $region164: #{forward.1} parent=11 // pred_fallthru
        _
      // Predicated region
      $region165: #{forward.1} parent=11 // pred_check
        %p1305 = pneg %p977
      $region166: #{forward.1} parent=11 // pred_check_branch
        %1307 = sbr.rel (%p1305) target = $region168
      $region167: #{forward.1} parent=11 // pred_region
        _
      $region168: #{forward.1} parent=11 // pred_fallthru
        _
      // Predicated region
      $region169: #{forward.1} parent=11 // pred_check
        %p1308 = pneg %p998
      $region170: #{forward.1} parent=11 // pred_check_branch
        %1310 = sbr.rel (%p1308) target = $region172
      $region171: #{forward.1} parent=11 // pred_region
        _
      $region172: #{forward.1} parent=11 // pred_fallthru
        _
      // Predicated region
      $region173: #{forward.1} parent=11 // pred_check
        %p1311 = pneg %p1019
      $region174: #{forward.1} parent=11 // pred_check_branch
        %1313 = sbr.rel (%p1311) target = $region176
      $region175: #{forward.1} parent=11 // pred_region
        _
      $region176: #{forward.1} parent=11 // pred_fallthru
        _
      // Predicated region
      $region177: #{forward.1} parent=11 // pred_check
        %p1314 = pneg %p1040
      $region178: #{forward.1} parent=11 // pred_check_branch
        %1316 = sbr.rel (%p1314) target = $region180
      $region179: #{forward.1} parent=11 // pred_region
        _
      $region180: #{forward.1} parent=11 // pred_fallthru
        _
      // Predicated region
      $region181: #{forward.1} parent=11 // pred_check
        %p1317 = pneg %p1061
      $region182: #{forward.1} parent=11 // pred_check_branch
        %1319 = sbr.rel (%p1317) target = $region184
      $region183: #{forward.1} parent=11 // pred_region
        _
      $region184: #{forward.1} parent=11 // pred_fallthru
        _
      // Predicated region
      $region185: #{forward.1} parent=11 // pred_check
        %p1320 = pneg %p1082
      $region186: #{forward.1} parent=11 // pred_check_branch
        %1322 = sbr.rel (%p1320) target = $region188
      $region187: #{forward.1} parent=11 // pred_region
        _
      $region188: #{forward.1} parent=11 // pred_fallthru
        _
      // Predicated region
      $region189: #{forward.1} parent=11 // pred_check
        %p1323 = pneg %p1103
      $region190: #{forward.1} parent=11 // pred_check_branch
        %1325 = sbr.rel (%p1323) target = $region192
      $region191: #{forward.1} parent=11 // pred_region
        _
      $region192: #{forward.1} parent=11 // pred_fallthru
        _
      // Predicated region
      $region193: #{forward.1} parent=11 // pred_check
        %p1326 = pneg %p1124
      $region194: #{forward.1} parent=11 // pred_check_branch
        %1328 = sbr.rel (%p1326) target = $region196
      $region195: #{forward.1} parent=11 // pred_region
        _
      $region196: #{forward.1} parent=11 // pred_fallthru
        _
    $region12: #{forward.1} parent=5 // pred_fallthru
      _
    %p1329 = scmp.lt.s32.totalorder %s106, 2
    // Predicated region
    $region197: #{forward.1} parent=5 // pred_check
      %p1330 = pneg %p1329
    $region198: #{forward.1} parent=5 // pred_check_branch
      %1332 = sbr.rel (%p1330) target = $region200
    $region199: #{forward.1} parent=5 // pred_region
      // Predicated region
      $region201: #{forward.1} parent=199 // pred_check
        %p1333 = pneg %p126
      $region202: #{forward.1} parent=199 // pred_check_branch
        %1335 = sbr.rel (%p1333) target = $region204
      $region203: #{forward.1} parent=199 // pred_region
        %s1336 = smul.u32 7, %s106
        %p1337 = scmp.lt.s32.totalorder %s1336, 13
        %s1338 = scalar_select %p1337, %s1336, 13
        %s1339 = smul.addr %s1338, 8
        %s1340 = scalar_lea.vmem %s1, %s1339
        %s1341 = smul.u32 7, %s106
      $region204: #{forward.1} parent=199 // pred_fallthru
        _
      // Predicated region
      $region205: #{forward.1} parent=199 // pred_check
        %p1342 = pneg %p152
      $region206: #{forward.1} parent=199 // pred_check_branch
        %1344 = sbr.rel (%p1342) target = $region208
      $region207: #{forward.1} parent=199 // pred_region
        %s1345 = smul.u32 2, %s106
        %p1346 = scmp.lt.s32.totalorder %s1345, 3
        %s1347 = scalar_select %p1346, %s1345, 3
        %s1348 = smul.addr %s1347, 8
        %s1349 = scalar_lea.vmem %s3, %s1348
        %s1350 = smul.u32 2, %s106
      $region208: #{forward.1} parent=199 // pred_fallthru
        _
    $region200: #{forward.1} parent=5 // pred_fallthru
      _
    %p1351 = scmp.le.s32.totalorder 1, %s106
    %p1352 = scmp.lt.s32.totalorder %s106, 3
    %p1353 = pnand %p1351, %p1352
    %p1354 = pneg %p1353
    // Predicated region
    $region209: #{forward.1} parent=5 // pred_check
      _
    $region210: #{forward.1} parent=5 // pred_check_branch
      %1356 = sbr.rel (%p1353) target = $region212
    $region211: #{forward.1} parent=5 // pred_region
      %s1357 = ssub.s32 %s106, 1
      %s1358 = smul.u32 7, %s111
      %p1359 = scmp.lt.s32.totalorder %s1358, 13
      %s1360 = scalar_select %p1359, %s1358, 13
      %s1361 = smul.addr %s1360, 8
      %s1362 = scalar_lea.vmem %s1, %s1361
      %p1363 = pneg %p132
      %p1364 = pneg %p129
      %s1365 = smul.u32 2, %s111
      %p1366 = scmp.lt.s32.totalorder %s1365, 3
      %s1367 = scalar_select %p1366, %s1365, 3
      %s1368 = smul.addr %s1367, 8
      %s1369 = scalar_lea.vmem %s3, %s1368
      %p1370 = pneg %p158
      %p1371 = pneg %p155
      %p1372 = pneg %p179
      %p1373 = pneg %p176
      %p1374 = pneg %p200
      %p1375 = pneg %p197
      %p1376 = pneg %p221
      %p1377 = pneg %p218
      %p1378 = pneg %p242
      %p1379 = pneg %p239
      %p1380 = pneg %p263
      %p1381 = pneg %p260
      %p1382 = pneg %p284
      %p1383 = pneg %p281
      %p1384 = pneg %p305
      %p1385 = pneg %p302
      %p1386 = pneg %p326
      %p1387 = pneg %p323
      %p1388 = pneg %p347
      %p1389 = pneg %p344
      %p1390 = pneg %p368
      %p1391 = pneg %p365
      %p1392 = pneg %p389
      %p1393 = pneg %p386
      %p1394 = pneg %p410
      %p1395 = pneg %p407
      %p1396 = pneg %p431
      %p1397 = pneg %p428
      %p1398 = pneg %p452
      %p1399 = pneg %p449
      %p1400 = pneg %p473
      %p1401 = pneg %p470
      %p1402 = pneg %p494
      %p1403 = pneg %p491
      %p1404 = pneg %p515
      %p1405 = pneg %p512
      %p1406 = pneg %p536
      %p1407 = pneg %p533
      %p1408 = pneg %p557
      %p1409 = pneg %p554
      %p1410 = pneg %p578
      %p1411 = pneg %p575
      %p1412 = pneg %p599
      %p1413 = pneg %p596
      %p1414 = pneg %p620
      %p1415 = pneg %p617
      %p1416 = pneg %p641
      %p1417 = pneg %p638
      %p1418 = pneg %p662
      %p1419 = pneg %p659
      %p1420 = pneg %p683
      %p1421 = pneg %p680
      %p1422 = pneg %p704
      %p1423 = pneg %p701
      %p1424 = pneg %p725
      %p1425 = pneg %p722
      %p1426 = pneg %p746
      %p1427 = pneg %p743
      %p1428 = pneg %p767
      %p1429 = pneg %p764
      %p1430 = pneg %p788
      %p1431 = pneg %p785
      %p1432 = pneg %p809
      %p1433 = pneg %p806
      %p1434 = pneg %p830
      %p1435 = pneg %p827
      %p1436 = pneg %p851
      %p1437 = pneg %p848
      %p1438 = pneg %p872
      %p1439 = pneg %p869
      %p1440 = pneg %p893
      %p1441 = pneg %p890
      %p1442 = pneg %p914
      %p1443 = pneg %p911
      %p1444 = pneg %p935
      %p1445 = pneg %p932
      %p1446 = pneg %p956
      %p1447 = pneg %p953
      %p1448 = pneg %p977
      %p1449 = pneg %p974
      %p1450 = pneg %p998
      %p1451 = pneg %p995
      %p1452 = pneg %p1019
      %p1453 = pneg %p1016
      %p1454 = pneg %p1040
      %p1455 = pneg %p1037
      %p1456 = pneg %p1061
      %p1457 = pneg %p1058
      %p1458 = pneg %p1082
      %p1459 = pneg %p1079
      %p1460 = pneg %p1103
      %p1461 = pneg %p1100
      %p1462 = pneg %p1124
      %p1463 = pneg %p1121
      %p1464 = pneg %p1150
      %p1465 = pneg %p1147
      %p1466 = scmp.lt.s32.totalorder %s111, 1
      %s1467 = scalar_select %p1466, %s111, 1
      %s1468 = smul.addr %s1467, 8
      %s1469 = scalar_lea.vmem %s97, %s1468
      %p1470 = pneg %p1176
      %p1471 = pneg %p1173
      %s1472 = smul.u32 2, %s111
      %p1473 = scmp.lt.s32.totalorder %s1472, 3
      %s1474 = scalar_select %p1473, %s1472, 3
      %s1475 = smul.addr %s1474, 8
      %s1476 = scalar_lea.vmem %s99, %s1475
      %s1477 = smul.u32 7, %s111
      %p1478 = scmp.lt.s32.totalorder %s1477, 13
      %s1479 = scalar_select %p1478, %s1477, 13
      %s1480 = smul.addr %s1479, 8
      %s1481 = scalar_lea.vmem %s1, %s1480
      %s1482 = smul.u32 7, %s111
      %s1483 = smul.u32 2, %s111
      %p1484 = scmp.lt.s32.totalorder %s1483, 3
      %s1485 = scalar_select %p1484, %s1483, 3
      %s1486 = smul.addr %s1485, 8
      %s1487 = scalar_lea.vmem %s3, %s1486
      %s1488 = smul.u32 2, %s111
      %p1489 = scmp.lt.s32.totalorder %s111, 1
      %s1490 = scalar_select %p1489, %s111, 1
      %s1491 = smul.addr %s1490, 8
      %s1492 = scalar_lea.vmem %s97, %s1491
      %s1493 = smul.u32 2, %s111
      %p1494 = scmp.lt.s32.totalorder %s1493, 3
      %s1495 = scalar_select %p1494, %s1493, 3
      %s1496 = smul.addr %s1495, 8
      %s1497 = scalar_lea.vmem %s99, %s1496
      %s1498 = smul.u32 2, %s111
      %v1500 = vlaneseq
      %v1501 = vshrl.u32 %v1500, 7
      %v1502 = vadd.s32 %v1501, 8
      %v1503 = vlaneseq
      %v1504 = vand.u32 %v1503, 127
      %vm1505 = vcmp.gt.s32.totalorder %v1504, %v1501
      %vm1506 = vcmp.gt.s32.totalorder %v1504, %v1502
      %v1507 = vsel %vm1505, -1e+30, 0.0
      %v1508 = vsel %vm1506, -1e+30, 0.0
      %v1509 = vld [vmem:[%s1481] sm:$0xff]
      %v1510 = vld [vmem:[%s1481 + $0x8] sm:$0xff]
      %v1511 = vld [vmem:[%s1481 + $0x10] sm:$0xff]
      %v1512 = vld [vmem:[%s1481 + $0x18] sm:$0xff]
      %v1513 = vld [vmem:[%s1481 + $0x20] sm:$0xff]
      %v1514 = vld [vmem:[%s1481 + $0x28] sm:$0xff]
      %v1515 = vld [vmem:[%s1481 + $0x30] sm:$0xff]
      %v1516 = vld [vmem:[%s9] sm:$0xff]
      %v1517 = vld [vmem:[%s9 + $0x8] sm:$0xff]
      %v1518 = vld [vmem:[%s9 + $0x10] sm:$0xff]
      %v1519 = vld [vmem:[%s9 + $0x18] sm:$0xff]
      %v1520 = vld [vmem:[%s9 + $0x20] sm:$0xff]
      %v1521 = vld [vmem:[%s9 + $0x28] sm:$0xff]
      %v1522 = vld [vmem:[%s9 + $0x30] sm:$0xff]
      %v1523 = vld [vmem:[%s9 + $0x38] sm:$0xff]
      %v1524 = vpack.c.bf16 %v1510, %v1509
      %v1525 = vpack.c.bf16 %v1512, %v1511
      %v1526 = vpack.c.bf16 %v1514, %v1513
      %v1527 = vpack.c.bf16 %v1515, %v1515
      %v1528 = vpack.c.bf16 %v1517, %v1516
      %v1529 = vpack.c.bf16 %v1519, %v1518
      %v1530 = vpack.c.bf16 %v1521, %v1520
      %v1531 = vpack.c.bf16 %v1523, %v1522
      %v1532 = vld [vmem:[%s5] sm:$0xff]
      %v1533 = vld [vmem:[%s5 + $0x8] sm:$0xff]
      %v1534 = vld [vmem:[%s5 + $0x10] sm:$0xff]
      %v1535 = vld [vmem:[%s5 + $0x18] sm:$0xff]
      %v1536 = vld [vmem:[%s5 + $0x20] sm:$0xff]
      %v1537 = vld [vmem:[%s5 + $0x28] sm:$0xff]
      %v1538 = vld [vmem:[%s5 + $0x30] sm:$0xff]
      %vm1539 = vcmask 523264
      %v1541 = vsel %vm1539, %v1524, 0
      %v1544 = vsel %vm1539, %v1525, 0
      %v1547 = vsel %vm1539, %v1526, 0
      %v1550 = vsel %vm1539, %v1527, 0
      %1552 = vmatprep.subr.bf16.mxu0 0
      %1553 = vmatpush1.bf16.msra.mxu0 0
      %1554 = vmatprep.subr.bf16.mxu0 0
      %1555 = vmatpush1.bf16.msra.mxu0 0
      %1556 = vmatprep.subr.bf16.mxu0 0
      %1557 = vmatpush1.bf16.msra.mxu0 0
      %1558 = vmatprep.subr.bf16.mxu0 0
      %1559 = vmatpush1.bf16.msra.mxu0 0
      %1560 = vmatprep.subr.bf16.mxu0 0
      %1561 = vmatpush1.bf16.msra.mxu0 %v1531
      %1562 = vmatprep.subr.bf16.mxu0 0
      %1563 = vmatpush1.bf16.msra.mxu0 %v1530
      %1564 = vmatprep.subr.bf16.mxu0 0
      %1565 = vmatpush1.bf16.msra.mxu0 %v1529
      %1566 = vmatprep.subr.bf16.mxu0 0
      %1567 = vmatpush1.bf16.msra.mxu0 %v1528
      %1568 = vmatprep.subr.bf16.mxu0 0
      %1569 = vmatpush2.bf16.msra.mxu0 0
      %1570 = vmatprep.subr.bf16.mxu0 0
      %1571 = vmatpush2.bf16.msra.mxu0 0
      %1572 = vmatprep.subr.bf16.mxu0 0
      %1573 = vmatpush2.bf16.msra.mxu0 0
      %1574 = vmatprep.subr.bf16.mxu0 0
      %1575 = vmatpush2.bf16.msra.mxu0 0
      %1576 = vmatprep.subr.bf16.mxu0 0
      %1577 = vmatpush2.bf16.msra.mxu0 0
      %1578 = vmatprep.subr.bf16.mxu0 0
      %1579 = vmatpush2.bf16.msra.mxu0 0
      %1580 = vmatprep.subr.bf16.mxu0 0
      %1581 = vmatpush2.bf16.msra.mxu0 0
      %1582 = vmatprep.subr.bf16.mxu0 0
      %1583 = vmatpush2.bf16.msra.mxu0 0
      %1584 = vmatprep.mubr.bf16.mxu0 0
      %1585 = vmatmul.mubr.bf16.gmra.mxu0 %v1541
      %v1586 = vpop.f32.mrf.mxu0
      %v1587 = vadd.f32 %v1532, %v1586
      %v1588 = vpop.f32.mrf.mxu0
      %v1589 = vpop.f32.mrf.mxu0
      %v1590 = vadd.f32 %v1533, %v1589
      %v1591 = vpop.f32.mrf.mxu0
      %1592 = vmatprep.mubr.bf16.mxu0 0
      %1593 = vmatmul.mubr.bf16.gmra.mxu0 %v1544
      %v1594 = vpop.f32.mrf.mxu0
      %v1595 = vadd.f32 %v1534, %v1594
      %v1596 = vpop.f32.mrf.mxu0
      %v1597 = vpop.f32.mrf.mxu0
      %v1598 = vadd.f32 %v1535, %v1597
      %v1599 = vpop.f32.mrf.mxu0
      %1600 = vmatprep.mubr.bf16.mxu0 0
      %1601 = vmatmul.mubr.bf16.gmra.mxu0 %v1547
      %v1602 = vpop.f32.mrf.mxu0
      %v1603 = vadd.f32 %v1536, %v1602
      %v1604 = vpop.f32.mrf.mxu0
      %v1605 = vpop.f32.mrf.mxu0
      %v1606 = vadd.f32 %v1537, %v1605
      %v1607 = vpop.f32.mrf.mxu0
      %1608 = vmatprep.mubr.bf16.mxu0 0
      %1609 = vmatmul.mubr.bf16.gmra.mxu0 %v1550
      %v1610 = vpop.f32.mrf.mxu0
      %v1611 = vadd.f32 %v1538, %v1610
      %v1612 = vpop.f32.mrf.mxu0
      %v1613 = vpop.f32.mrf.mxu0
      %v1614 = vpop.f32.mrf.mxu0
      %1615 = vdwg.mxu0
      %v1616 = vld [vmem:[%s17] sm:$0xff]
      %v1617 = vld [vmem:[%s17 + $0x8] sm:$0xff]
      %v1618 = vld [vmem:[%s17 + $0x10] sm:$0xff]
      %v1619 = vld [vmem:[%s17 + $0x18] sm:$0xff]
      %v1620 = vld [vmem:[%s17 + $0x20] sm:$0xff]
      %v1621 = vld [vmem:[%s17 + $0x28] sm:$0xff]
      %v1622 = vld [vmem:[%s17 + $0x30] sm:$0xff]
      %v1623 = vld [vmem:[%s17 + $0x38] sm:$0xff]
      %v1624 = vld [vmem:[%s19] sm:$0x1]
      %v1625 = vld [vmem:[%s13] sm:$0xff]
      %v1626 = vld [vmem:[%s13 + $0x8] sm:$0xff]
      %v1627 = vld [vmem:[%s13 + $0x10] sm:$0xff]
      %v1628 = vld [vmem:[%s13 + $0x18] sm:$0xff]
      %v1629 = vld [vmem:[%s13 + $0x20] sm:$0xff]
      %v1630 = vld [vmem:[%s13 + $0x28] sm:$0xff]
      %v1631 = vld [vmem:[%s13 + $0x30] sm:$0xff]
      %v1632 = vld [vmem:[%s13 + $0x38] sm:$0xff]
      %v1633 = vld [vmem:[%s13 + $0x40] sm:$0xff]
      %v1634 = vld [vmem:[%s13 + $0x48] sm:$0xff]
      %v1635 = vld [vmem:[%s13 + $0x50] sm:$0xff]
      %v1636 = vld [vmem:[%s13 + $0x58] sm:$0xff]
      %v1637 = vld [vmem:[%s13 + $0x60] sm:$0xff]
      %v1638 = vld [vmem:[%s13 + $0x68] sm:$0xff]
      %v1639 = vld [vmem:[%s13 + $0x70] sm:$0xff]
      %v1640 = vld [vmem:[%s13 + $0x78] sm:$0xff]
      %v1641 = vpack.c.bf16 %v1590, %v1587
      %v1642 = vpack.c.bf16 %v1598, %v1595
      %v1643 = vpack.c.bf16 %v1606, %v1603
      %v1644 = vpack.c.bf16 %v1611, %v1611
      %v1645 = vpack.c.bf16 %v1627, %v1625
      %v1646 = vpack.c.bf16 %v1628, %v1626
      %v1647 = vpack.c.bf16 %v1631, %v1629
      %v1648 = vpack.c.bf16 %v1632, %v1630
      %v1649 = vpack.c.bf16 %v1635, %v1633
      %v1650 = vpack.c.bf16 %v1636, %v1634
      %v1651 = vpack.c.bf16 %v1639, %v1637
      %v1652 = vpack.c.bf16 %v1640, %v1638
      %v1653 = vld [vmem:[%s15] sm:$0x3]
      %v1655 = vlaneseq
      %v1656 = vshrl.u32 %v1655, 7
      %v1657 = vsub.s32 0, %v1656
      %v1658 = vrot.slane %v1653, %v1657
      %v1659 = vlaneseq
      %v1660 = vshrl.u32 %v1659, 7
      %v1661 = vsub.s32 1, %v1660
      %v1662 = vrot.slane %v1653, %v1661
      %v1666 = vsel %vm1539, %v1641, 0
      %v1669 = vsel %vm1539, %v1642, 0
      %v1672 = vsel %vm1539, %v1643, 0
      %v1675 = vsel %vm1539, %v1644, 0
      %1677 = vmatprep.subr.bf16.mxu0 0
      %1678 = vmatpush1.bf16.msra.mxu0 0
      %1679 = vmatprep.subr.bf16.mxu0 0
      %1680 = vmatpush1.bf16.msra.mxu0 0
      %1681 = vmatprep.subr.bf16.mxu0 0
      %1682 = vmatpush1.bf16.msra.mxu0 0
      %1683 = vmatprep.subr.bf16.mxu0 0
      %1684 = vmatpush1.bf16.msra.mxu0 0
      %1685 = vmatprep.subr.bf16.mxu0 %v1652
      %1686 = vmatpush1.bf16.msra.mxu0 %v1651
      %1687 = vmatprep.subr.bf16.mxu0 %v1650
      %1688 = vmatpush1.bf16.msra.mxu0 %v1649
      %1689 = vmatprep.subr.bf16.mxu0 %v1648
      %1690 = vmatpush1.bf16.msra.mxu0 %v1647
      %1691 = vmatprep.subr.bf16.mxu0 %v1646
      %1692 = vmatpush1.bf16.msra.mxu0 %v1645
      %1693 = vmatprep.subr.bf16.mxu0 0
      %1694 = vmatpush2.bf16.msra.mxu0 0
      %1695 = vmatprep.subr.bf16.mxu0 0
      %1696 = vmatpush2.bf16.msra.mxu0 0
      %1697 = vmatprep.subr.bf16.mxu0 0
      %1698 = vmatpush2.bf16.msra.mxu0 0
      %1699 = vmatprep.subr.bf16.mxu0 0
      %1700 = vmatpush2.bf16.msra.mxu0 0
      %1701 = vmatprep.subr.bf16.mxu0 0
      %1702 = vmatpush2.bf16.msra.mxu0 0
      %1703 = vmatprep.subr.bf16.mxu0 0
      %1704 = vmatpush2.bf16.msra.mxu0 0
      %1705 = vmatprep.subr.bf16.mxu0 0
      %1706 = vmatpush2.bf16.msra.mxu0 0
      %1707 = vmatprep.subr.bf16.mxu0 0
      %1708 = vmatpush2.bf16.msra.mxu0 0
      %1709 = vmatprep.mubr.bf16.mxu0 0
      %1710 = vmatmul.mubr.bf16.gmra.mxu0 %v1666
      %v1711 = vpop.f32.mrf.mxu0
      %v1712 = vadd.f32 %v1658, %v1711
      %v1713 = vpop.f32.mrf.mxu0
      %v1714 = vadd.f32 %v1662, %v1713
      %v1715 = vpop.f32.mrf.mxu0
      %v1716 = vadd.f32 %v1658, %v1715
      %v1717 = vpop.f32.mrf.mxu0
      %v1718 = vadd.f32 %v1662, %v1717
      %1719 = vmatprep.mubr.bf16.mxu0 0
      %1720 = vmatmul.mubr.bf16.gmra.mxu0 %v1669
      %v1721 = vpop.f32.mrf.mxu0
      %v1722 = vadd.f32 %v1658, %v1721
      %v1723 = vpop.f32.mrf.mxu0
      %v1724 = vadd.f32 %v1662, %v1723
      %v1725 = vpop.f32.mrf.mxu0
      %v1726 = vadd.f32 %v1658, %v1725
      %v1727 = vpop.f32.mrf.mxu0
      %v1728 = vadd.f32 %v1662, %v1727
      %1729 = vmatprep.mubr.bf16.mxu0 0
      %1730 = vmatmul.mubr.bf16.gmra.mxu0 %v1672
      %v1731 = vpop.f32.mrf.mxu0
      %v1732 = vadd.f32 %v1658, %v1731
      %v1733 = vpop.f32.mrf.mxu0
      %v1734 = vadd.f32 %v1662, %v1733
      %v1735 = vpop.f32.mrf.mxu0
      %v1736 = vadd.f32 %v1658, %v1735
      %v1737 = vpop.f32.mrf.mxu0
      %v1738 = vadd.f32 %v1662, %v1737
      %1739 = vmatprep.mubr.bf16.mxu0 0
      %1740 = vmatmul.mubr.bf16.gmra.mxu0 %v1675
      %v1741 = vpop.f32.mrf.mxu0
      %v1742 = vadd.f32 %v1658, %v1741
      %v1743 = vpop.f32.mrf.mxu0
      %v1744 = vadd.f32 %v1662, %v1743
      %v1745 = vpop.f32.mrf.mxu0
      %v1746 = vpop.f32.mrf.mxu0
      %1747 = vdwg.mxu0
      %1748 = vst [vmem:[#allocation2] sm:$0xff] %v1712
      %1749 = vst [vmem:[#allocation2 + $0x8] sm:$0xff] %v1714
      %1750 = vst [vmem:[#allocation2 + $0x10] sm:$0xff] %v1716
      %1751 = vst [vmem:[#allocation2 + $0x18] sm:$0xff] %v1718
      %1752 = vst [vmem:[#allocation2 + $0x20] sm:$0xff] %v1722
      %1753 = vst [vmem:[#allocation2 + $0x28] sm:$0xff] %v1724
      %1754 = vst [vmem:[#allocation2 + $0x30] sm:$0xff] %v1726
      %1755 = vst [vmem:[#allocation2 + $0x38] sm:$0xff] %v1728
      %1756 = vst [vmem:[#allocation2 + $0x40] sm:$0xff] %v1732
      %1757 = vst [vmem:[#allocation2 + $0x48] sm:$0xff] %v1734
      %1758 = vst [vmem:[#allocation2 + $0x50] sm:$0xff] %v1736
      %1759 = vst [vmem:[#allocation2 + $0x58] sm:$0xff] %v1738
      %1760 = vst [vmem:[#allocation2 + $0x60] sm:$0xff] %v1742
      %1761 = vst [vmem:[#allocation2 + $0x68] sm:$0xff] %v1744
      %v1762 = vld [vmem:[#allocation2] sm:$0xff]
      %v1763 = vld [vmem:[#allocation2 + $0x10] sm:$0xff]
      %v1764 = vld [vmem:[#allocation2 + $0x20] sm:$0xff]
      %v1765 = vld [vmem:[#allocation2 + $0x30] sm:$0xff]
      %v1766 = vld [vmem:[#allocation2 + $0x40] sm:$0xff]
      %v1767 = vld [vmem:[#allocation2 + $0x50] sm:$0xff]
      %v1768 = vld [vmem:[#allocation2 + $0x60] sm:$0xff]
      %v1769 = vld [vmem:[#allocation2 + $0x8] sm:$0xff]
      %v1770 = vld [vmem:[#allocation2 + $0x18] sm:$0xff]
      %v1771 = vld [vmem:[#allocation2 + $0x28] sm:$0xff]
      %v1772 = vld [vmem:[#allocation2 + $0x38] sm:$0xff]
      %v1773 = vld [vmem:[#allocation2 + $0x48] sm:$0xff]
      %v1774 = vld [vmem:[#allocation2 + $0x58] sm:$0xff]
      %v1775 = vld [vmem:[#allocation2 + $0x68] sm:$0xff]
      %v1776 = vpack.c.bf16 %v1763, %v1762
      %v1777 = vpack.c.bf16 %v1765, %v1764
      %v1778 = vpack.c.bf16 %v1767, %v1766
      %v1779 = vpack.c.bf16 %v1768, %v1768
      %1784 = vrot.lane.b32.xlu0 %v1776, 64
      %v1785 = vpop.permute.xlu0 %1784
      %1786 = vrot.lane.b32.xlu0 %v1777, 64
      %v1787 = vpop.permute.xlu0 %1786
      %1788 = vrot.lane.b32.xlu0 %v1778, 64
      %v1789 = vpop.permute.xlu0 %1788
      %1790 = vrot.lane.b32.xlu0 %v1779, 64
      %v1791 = vpop.permute.xlu0 %1790
      %vm1792 = vcmask 261120
      %v1794 = vsel %vm1792, %v1776, 0
      %v1797 = vsel %vm1792, %v1777, 0
      %v1800 = vsel %vm1792, %v1778, 0
      %v1803 = vsel %vm1792, %v1779, 0
      %v1806 = vsel %vm1792, %v1785, 0
      %v1809 = vsel %vm1792, %v1787, 0
      %v1812 = vsel %vm1792, %v1789, 0
      %v1815 = vsel %vm1792, %v1791, 0
      %1817 = vmatprep.subr.bf16.mxu0 0
      %1818 = vmatpush1.bf16.xpose.msra.mxu0 0
      %1819 = vmatprep.subr.bf16.mxu0 0
      %1820 = vmatpush1.bf16.xpose.msra.mxu0 0
      %1821 = vmatprep.subr.bf16.mxu0 0
      %1822 = vmatpush1.bf16.xpose.msra.mxu0 0
      %1823 = vmatprep.subr.bf16.mxu0 0
      %1824 = vmatpush1.bf16.xpose.msra.mxu0 0
      %1825 = vmatprep.subr.bf16.mxu0 0
      %1826 = vmatpush1.bf16.xpose.msra.mxu0 %v1815
      %1827 = vmatprep.subr.bf16.mxu0 0
      %1828 = vmatpush1.bf16.xpose.msra.mxu0 %v1812
      %1829 = vmatprep.subr.bf16.mxu0 0
      %1830 = vmatpush1.bf16.xpose.msra.mxu0 %v1809
      %1831 = vmatprep.subr.bf16.mxu0 0
      %1832 = vmatpush1.bf16.xpose.msra.mxu0 %v1806
      %1833 = vmatprep.subr.bf16.mxu0 0
      %1834 = vmatpush2.bf16.xpose.msra.mxu0 0
      %1835 = vmatprep.subr.bf16.mxu0 0
      %1836 = vmatpush2.bf16.xpose.msra.mxu0 0
      %1837 = vmatprep.subr.bf16.mxu0 0
      %1838 = vmatpush2.bf16.xpose.msra.mxu0 0
      %1839 = vmatprep.subr.bf16.mxu0 0
      %1840 = vmatpush2.bf16.xpose.msra.mxu0 0
      %1841 = vmatprep.subr.bf16.mxu0 0
      %1842 = vmatpush2.bf16.xpose.msra.mxu0 0
      %1843 = vmatprep.subr.bf16.mxu0 0
      %1844 = vmatpush2.bf16.xpose.msra.mxu0 0
      %1845 = vmatprep.subr.bf16.mxu0 0
      %1846 = vmatpush2.bf16.xpose.msra.mxu0 0
      %1847 = vmatprep.subr.bf16.mxu0 0
      %1848 = vmatpush2.bf16.xpose.msra.mxu0 0
      %1849 = vmatprep.mubr.bf16.mxu0 0
      %1850 = vmatmul.mubr.bf16.gmra.mxu0 %v1794
      %v1851 = vpop.f32.mrf.mxu0
      %v1852 = vadd.f32 0.0, %v1851
      %v1853 = vpop.f32.mrf.mxu0
      %v1854 = vpop.f32.mrf.mxu0
      %v1855 = vadd.f32 0.0, %v1854
      %v1856 = vpop.f32.mrf.mxu0
      %1857 = vmatprep.mubr.bf16.mxu0 0
      %1858 = vmatmul.mubr.bf16.gmra.mxu0 %v1797
      %v1859 = vpop.f32.mrf.mxu0
      %v1860 = vadd.f32 0.0, %v1859
      %v1861 = vpop.f32.mrf.mxu0
      %v1862 = vpop.f32.mrf.mxu0
      %v1863 = vadd.f32 0.0, %v1862
      %v1864 = vpop.f32.mrf.mxu0
      %1865 = vmatprep.mubr.bf16.mxu0 0
      %1866 = vmatmul.mubr.bf16.gmra.mxu0 %v1800
      %v1867 = vpop.f32.mrf.mxu0
      %v1868 = vadd.f32 0.0, %v1867
      %v1869 = vpop.f32.mrf.mxu0
      %v1870 = vpop.f32.mrf.mxu0
      %v1871 = vadd.f32 0.0, %v1870
      %v1872 = vpop.f32.mrf.mxu0
      %1873 = vmatprep.mubr.bf16.mxu0 0
      %1874 = vmatmul.mubr.bf16.gmra.mxu0 %v1803
      %v1875 = vpop.f32.mrf.mxu0
      %v1876 = vadd.f32 0.0, %v1875
      %v1877 = vpop.f32.mrf.mxu0
      %v1878 = vpop.f32.mrf.mxu0
      %v1879 = vpop.f32.mrf.mxu0
      %1880 = vdwg.mxu0
      %v1881 = vmul.f32 %v1852, 0.17677669
      %v1882 = vmul.f32 %v1855, 0.17677669
      %v1883 = vmul.f32 %v1860, 0.17677669
      %v1884 = vmul.f32 %v1863, 0.17677669
      %v1885 = vmul.f32 %v1868, 0.17677669
      %v1886 = vmul.f32 %v1871, 0.17677669
      %v1887 = vmul.f32 %v1876, 0.17677669
      %vm1888 = vcmask 457728
      %v1889 = vsel %vm1888, %v1881, -inf
      %1890 = vmax.xlane.f32.xlu0 %v1889
      %v1891 = vpop.xlane.xlu0 %1890
      %v1892 = vsel %vm1888, %v1882, -inf
      %1893 = vmax.xlane.f32.xlu0 %v1892
      %v1894 = vpop.xlane.xlu0 %1893
      %v1895 = vsel %vm1888, %v1883, -inf
      %1896 = vmax.xlane.f32.xlu0 %v1895
      %v1897 = vpop.xlane.xlu0 %1896
      %v1898 = vsel %vm1888, %v1884, -inf
      %1899 = vmax.xlane.f32.xlu0 %v1898
      %v1900 = vpop.xlane.xlu0 %1899
      %v1901 = vsel %vm1888, %v1885, -inf
      %1902 = vmax.xlane.f32.xlu0 %v1901
      %v1903 = vpop.xlane.xlu0 %1902
      %v1904 = vsel %vm1888, %v1886, -inf
      %1905 = vmax.xlane.f32.xlu0 %v1904
      %v1906 = vpop.xlane.xlu0 %1905
      %v1907 = vsel %vm1888, %v1887, -inf
      %1908 = vmax.xlane.f32.xlu0 %v1907
      %v1909 = vpop.xlane.xlu0 %1908
      %v1910 = vsub.f32 %v1881, %v1891
      %v1911 = vsub.f32 %v1882, %v1894
      %v1912 = vsub.f32 %v1883, %v1897
      %v1913 = vsub.f32 %v1884, %v1900
      %v1914 = vsub.f32 %v1885, %v1903
      %v1915 = vsub.f32 %v1886, %v1906
      %v1916 = vsub.f32 %v1887, %v1909
      %v1917 = vmul.f32 %v1910, 1.442695
      %v1918 = vpow.pop %v1917
      %v1919 = vmul.f32 %v1911, 1.442695
      %v1920 = vpow.pop %v1919
      %v1921 = vmul.f32 %v1912, 1.442695
      %v1922 = vpow.pop %v1921
      %v1923 = vmul.f32 %v1913, 1.442695
      %v1924 = vpow.pop %v1923
      %v1925 = vmul.f32 %v1914, 1.442695
      %v1926 = vpow.pop %v1925
      %v1927 = vmul.f32 %v1915, 1.442695
      %v1928 = vpow.pop %v1927
      %v1929 = vmul.f32 %v1916, 1.442695
      %v1930 = vpow.pop %v1929
      %v1931 = vsel %vm1888, %v1918, 0.0
      %1932 = vadd.xlane.f32.xlu0 %v1931
      %v1933 = vpop.xlane.xlu0 %1932
      %v1934 = vsel %vm1888, %v1920, 0.0
      %1935 = vadd.xlane.f32.xlu0 %v1934
      %v1936 = vpop.xlane.xlu0 %1935
      %v1937 = vsel %vm1888, %v1922, 0.0
      %1938 = vadd.xlane.f32.xlu0 %v1937
      %v1939 = vpop.xlane.xlu0 %1938
      %v1940 = vsel %vm1888, %v1924, 0.0
      %1941 = vadd.xlane.f32.xlu0 %v1940
      %v1942 = vpop.xlane.xlu0 %1941
      %v1943 = vsel %vm1888, %v1926, 0.0
      %1944 = vadd.xlane.f32.xlu0 %v1943
      %v1945 = vpop.xlane.xlu0 %1944
      %v1946 = vsel %vm1888, %v1928, 0.0
      %1947 = vadd.xlane.f32.xlu0 %v1946
      %v1948 = vpop.xlane.xlu0 %1947
      %v1949 = vsel %vm1888, %v1930, 0.0
      %1950 = vadd.xlane.f32.xlu0 %v1949
      %v1951 = vpop.xlane.xlu0 %1950
      %v1952 = vrcp.pop %v1933
      %v1953 = vrcp.pop %v1936
      %v1954 = vrcp.pop %v1939
      %v1955 = vrcp.pop %v1942
      %v1956 = vrcp.pop %v1945
      %v1957 = vrcp.pop %v1948
      %v1958 = vrcp.pop %v1951
      %v1959 = vmul.f32 %v1918, %v1952
      %v1960 = vmul.f32 %v1920, %v1953
      %v1961 = vmul.f32 %v1922, %v1954
      %v1962 = vmul.f32 %v1924, %v1955
      %v1963 = vmul.f32 %v1926, %v1956
      %v1964 = vmul.f32 %v1928, %v1957
      %v1965 = vmul.f32 %v1930, %v1958
      %v1966 = vpack.c.bf16 %v1960, %v1959
      %v1967 = vpack.c.bf16 %v1962, %v1961
      %v1968 = vpack.c.bf16 %v1964, %v1963
      %v1969 = vpack.c.bf16 %v1965, %v1965
      %v1970 = vpack.c.bf16 %v1770, %v1769
      %v1971 = vpack.c.bf16 %v1772, %v1771
      %v1972 = vpack.c.bf16 %v1774, %v1773
      %v1973 = vpack.c.bf16 %v1775, %v1775
      %v1975 = vsel %vm1888, %v1966, 0
      %v1978 = vsel %vm1888, %v1967, 0
      %v1981 = vsel %vm1888, %v1968, 0
      %v1984 = vsel %vm1888, %v1969, 0
      %vm1986 = vcmask 1043456
      %v1988 = vsel %vm1986, %v1973, 0
      %1990 = vmatprep.subr.bf16.mxu0 0
      %1991 = vmatpush1.bf16.msra.mxu0 0
      %1992 = vmatprep.subr.bf16.mxu0 0
      %1993 = vmatpush1.bf16.msra.mxu0 0
      %1994 = vmatprep.subr.bf16.mxu0 0
      %1995 = vmatpush1.bf16.msra.mxu0 0
      %1996 = vmatprep.subr.bf16.mxu0 0
      %1997 = vmatpush1.bf16.msra.mxu0 0
      %1998 = vmatprep.subr.bf16.mxu0 0
      %1999 = vmatpush1.bf16.msra.mxu0 %v1988
      %2000 = vmatprep.subr.bf16.mxu0 0
      %2001 = vmatpush1.bf16.msra.mxu0 %v1972
      %2002 = vmatprep.subr.bf16.mxu0 0
      %2003 = vmatpush1.bf16.msra.mxu0 %v1971
      %2004 = vmatprep.subr.bf16.mxu0 0
      %2005 = vmatpush1.bf16.msra.mxu0 %v1970
      %2006 = vmatprep.subr.bf16.mxu0 0
      %2007 = vmatpush2.bf16.msra.mxu0 0
      %2008 = vmatprep.subr.bf16.mxu0 0
      %2009 = vmatpush2.bf16.msra.mxu0 0
      %2010 = vmatprep.subr.bf16.mxu0 0
      %2011 = vmatpush2.bf16.msra.mxu0 0
      %2012 = vmatprep.subr.bf16.mxu0 0
      %2013 = vmatpush2.bf16.msra.mxu0 0
      %2014 = vmatprep.subr.bf16.mxu0 0
      %2015 = vmatpush2.bf16.msra.mxu0 0
      %2016 = vmatprep.subr.bf16.mxu0 0
      %2017 = vmatpush2.bf16.msra.mxu0 0
      %2018 = vmatprep.subr.bf16.mxu0 0
      %2019 = vmatpush2.bf16.msra.mxu0 0
      %2020 = vmatprep.subr.bf16.mxu0 0
      %2021 = vmatpush2.bf16.msra.mxu0 0
      %2022 = vmatprep.mubr.bf16.mxu0 0
      %2023 = vmatmul.mubr.bf16.gmra.mxu0 %v1975
      %v2024 = vpop.f32.mrf.mxu0
      %v2025 = vadd.f32 0.0, %v2024
      %v2026 = vpop.f32.mrf.mxu0
      %v2027 = vpop.f32.mrf.mxu0
      %v2028 = vadd.f32 0.0, %v2027
      %v2029 = vpop.f32.mrf.mxu0
      %2030 = vmatprep.mubr.bf16.mxu0 0
      %2031 = vmatmul.mubr.bf16.gmra.mxu0 %v1978
      %v2032 = vpop.f32.mrf.mxu0
      %v2033 = vadd.f32 0.0, %v2032
      %v2034 = vpop.f32.mrf.mxu0
      %v2035 = vpop.f32.mrf.mxu0
      %v2036 = vadd.f32 0.0, %v2035
      %v2037 = vpop.f32.mrf.mxu0
      %2038 = vmatprep.mubr.bf16.mxu0 0
      %2039 = vmatmul.mubr.bf16.gmra.mxu0 %v1981
      %v2040 = vpop.f32.mrf.mxu0
      %v2041 = vadd.f32 0.0, %v2040
      %v2042 = vpop.f32.mrf.mxu0
      %v2043 = vpop.f32.mrf.mxu0
      %v2044 = vadd.f32 0.0, %v2043
      %v2045 = vpop.f32.mrf.mxu0
      %2046 = vmatprep.mubr.bf16.mxu0 0
      %2047 = vmatmul.mubr.bf16.gmra.mxu0 %v1984
      %v2048 = vpop.f32.mrf.mxu0
      %v2049 = vadd.f32 0.0, %v2048
      %v2050 = vpop.f32.mrf.mxu0
      %v2051 = vpop.f32.mrf.mxu0
      %v2052 = vpop.f32.mrf.mxu0
      %2053 = vdwg.mxu0
      %2054 = vrot.lane.b32.xlu0 %v1776, 96
      %v2055 = vpop.permute.xlu0 %2054
      %2056 = vrot.lane.b32.xlu0 %v1777, 96
      %v2057 = vpop.permute.xlu0 %2056
      %2058 = vrot.lane.b32.xlu0 %v1778, 96
      %v2059 = vpop.permute.xlu0 %2058
      %2060 = vrot.lane.b32.xlu0 %v1779, 96
      %v2061 = vpop.permute.xlu0 %2060
      %2062 = vrot.lane.b32.xlu0 %v1776, 32
      %v2063 = vpop.permute.xlu0 %2062
      %2064 = vrot.lane.b32.xlu0 %v1777, 32
      %v2065 = vpop.permute.xlu0 %2064
      %2066 = vrot.lane.b32.xlu0 %v1778, 32
      %v2067 = vpop.permute.xlu0 %2066
      %2068 = vrot.lane.b32.xlu0 %v1779, 32
      %v2069 = vpop.permute.xlu0 %2068
      %v2071 = vsel %vm1792, %v2055, 0
      %v2074 = vsel %vm1792, %v2057, 0
      %v2077 = vsel %vm1792, %v2059, 0
      %v2080 = vsel %vm1792, %v2061, 0
      %v2083 = vsel %vm1792, %v2063, 0
      %v2086 = vsel %vm1792, %v2065, 0
      %v2089 = vsel %vm1792, %v2067, 0
      %v2092 = vsel %vm1792, %v2069, 0
      %2094 = vmatprep.subr.bf16.mxu0 0
      %2095 = vmatpush1.bf16.xpose.msra.mxu0 0
      %2096 = vmatprep.subr.bf16.mxu0 0
      %2097 = vmatpush1.bf16.xpose.msra.mxu0 0
      %2098 = vmatprep.subr.bf16.mxu0 0
      %2099 = vmatpush1.bf16.xpose.msra.mxu0 0
      %2100 = vmatprep.subr.bf16.mxu0 0
      %2101 = vmatpush1.bf16.xpose.msra.mxu0 0
      %2102 = vmatprep.subr.bf16.mxu0 0
      %2103 = vmatpush1.bf16.xpose.msra.mxu0 %v2092
      %2104 = vmatprep.subr.bf16.mxu0 0
      %2105 = vmatpush1.bf16.xpose.msra.mxu0 %v2089
      %2106 = vmatprep.subr.bf16.mxu0 0
      %2107 = vmatpush1.bf16.xpose.msra.mxu0 %v2086
      %2108 = vmatprep.subr.bf16.mxu0 0
      %2109 = vmatpush1.bf16.xpose.msra.mxu0 %v2083
      %2110 = vmatprep.subr.bf16.mxu0 0
      %2111 = vmatpush2.bf16.xpose.msra.mxu0 0
      %2112 = vmatprep.subr.bf16.mxu0 0
      %2113 = vmatpush2.bf16.xpose.msra.mxu0 0
      %2114 = vmatprep.subr.bf16.mxu0 0
      %2115 = vmatpush2.bf16.xpose.msra.mxu0 0
      %2116 = vmatprep.subr.bf16.mxu0 0
      %2117 = vmatpush2.bf16.xpose.msra.mxu0 0
      %2118 = vmatprep.subr.bf16.mxu0 0
      %2119 = vmatpush2.bf16.xpose.msra.mxu0 0
      %2120 = vmatprep.subr.bf16.mxu0 0
      %2121 = vmatpush2.bf16.xpose.msra.mxu0 0
      %2122 = vmatprep.subr.bf16.mxu0 0
      %2123 = vmatpush2.bf16.xpose.msra.mxu0 0
      %2124 = vmatprep.subr.bf16.mxu0 0
      %2125 = vmatpush2.bf16.xpose.msra.mxu0 0
      %2126 = vmatprep.mubr.bf16.mxu0 0
      %2127 = vmatmul.mubr.bf16.gmra.mxu0 %v2071
      %v2128 = vpop.f32.mrf.mxu0
      %v2129 = vadd.f32 0.0, %v2128
      %v2130 = vpop.f32.mrf.mxu0
      %v2131 = vpop.f32.mrf.mxu0
      %v2132 = vadd.f32 0.0, %v2131
      %v2133 = vpop.f32.mrf.mxu0
      %2134 = vmatprep.mubr.bf16.mxu0 0
      %2135 = vmatmul.mubr.bf16.gmra.mxu0 %v2074
      %v2136 = vpop.f32.mrf.mxu0
      %v2137 = vadd.f32 0.0, %v2136
      %v2138 = vpop.f32.mrf.mxu0
      %v2139 = vpop.f32.mrf.mxu0
      %v2140 = vadd.f32 0.0, %v2139
      %v2141 = vpop.f32.mrf.mxu0
      %2142 = vmatprep.mubr.bf16.mxu0 0
      %2143 = vmatmul.mubr.bf16.gmra.mxu0 %v2077
      %v2144 = vpop.f32.mrf.mxu0
      %v2145 = vadd.f32 0.0, %v2144
      %v2146 = vpop.f32.mrf.mxu0
      %v2147 = vpop.f32.mrf.mxu0
      %v2148 = vadd.f32 0.0, %v2147
      %v2149 = vpop.f32.mrf.mxu0
      %2150 = vmatprep.mubr.bf16.mxu0 0
      %2151 = vmatmul.mubr.bf16.gmra.mxu0 %v2080
      %v2152 = vpop.f32.mrf.mxu0
      %v2153 = vadd.f32 0.0, %v2152
      %v2154 = vpop.f32.mrf.mxu0
      %v2155 = vpop.f32.mrf.mxu0
      %v2156 = vpop.f32.mrf.mxu0
      %2157 = vdwg.mxu0
      %v2158 = vmul.f32 %v2129, 0.17677669
      %v2159 = vmul.f32 %v2132, 0.17677669
      %v2160 = vmul.f32 %v2137, 0.17677669
      %v2161 = vmul.f32 %v2140, 0.17677669
      %v2162 = vmul.f32 %v2145, 0.17677669
      %v2163 = vmul.f32 %v2148, 0.17677669
      %v2164 = vmul.f32 %v2153, 0.17677669
      %v2165 = vsel %vm1888, %v2158, -inf
      %2166 = vmax.xlane.f32.xlu0 %v2165
      %v2167 = vpop.xlane.xlu0 %2166
      %v2168 = vsel %vm1888, %v2159, -inf
      %2169 = vmax.xlane.f32.xlu0 %v2168
      %v2170 = vpop.xlane.xlu0 %2169
      %v2171 = vsel %vm1888, %v2160, -inf
      %2172 = vmax.xlane.f32.xlu0 %v2171
      %v2173 = vpop.xlane.xlu0 %2172
      %v2174 = vsel %vm1888, %v2161, -inf
      %2175 = vmax.xlane.f32.xlu0 %v2174
      %v2176 = vpop.xlane.xlu0 %2175
      %v2177 = vsel %vm1888, %v2162, -inf
      %2178 = vmax.xlane.f32.xlu0 %v2177
      %v2179 = vpop.xlane.xlu0 %2178
      %v2180 = vsel %vm1888, %v2163, -inf
      %2181 = vmax.xlane.f32.xlu0 %v2180
      %v2182 = vpop.xlane.xlu0 %2181
      %v2183 = vsel %vm1888, %v2164, -inf
      %2184 = vmax.xlane.f32.xlu0 %v2183
      %v2185 = vpop.xlane.xlu0 %2184
      %v2186 = vsub.f32 %v2158, %v2167
      %v2187 = vsub.f32 %v2159, %v2170
      %v2188 = vsub.f32 %v2160, %v2173
      %v2189 = vsub.f32 %v2161, %v2176
      %v2190 = vsub.f32 %v2162, %v2179
      %v2191 = vsub.f32 %v2163, %v2182
      %v2192 = vsub.f32 %v2164, %v2185
      %v2193 = vmul.f32 %v2186, 1.442695
      %v2194 = vpow.pop %v2193
      %v2195 = vmul.f32 %v2187, 1.442695
      %v2196 = vpow.pop %v2195
      %v2197 = vmul.f32 %v2188, 1.442695
      %v2198 = vpow.pop %v2197
      %v2199 = vmul.f32 %v2189, 1.442695
      %v2200 = vpow.pop %v2199
      %v2201 = vmul.f32 %v2190, 1.442695
      %v2202 = vpow.pop %v2201
      %v2203 = vmul.f32 %v2191, 1.442695
      %v2204 = vpow.pop %v2203
      %v2205 = vmul.f32 %v2192, 1.442695
      %v2206 = vpow.pop %v2205
      %v2207 = vsel %vm1888, %v2194, 0.0
      %2208 = vadd.xlane.f32.xlu0 %v2207
      %v2209 = vpop.xlane.xlu0 %2208
      %v2210 = vsel %vm1888, %v2196, 0.0
      %2211 = vadd.xlane.f32.xlu0 %v2210
      %v2212 = vpop.xlane.xlu0 %2211
      %v2213 = vsel %vm1888, %v2198, 0.0
      %2214 = vadd.xlane.f32.xlu0 %v2213
      %v2215 = vpop.xlane.xlu0 %2214
      %v2216 = vsel %vm1888, %v2200, 0.0
      %2217 = vadd.xlane.f32.xlu0 %v2216
      %v2218 = vpop.xlane.xlu0 %2217
      %v2219 = vsel %vm1888, %v2202, 0.0
      %2220 = vadd.xlane.f32.xlu0 %v2219
      %v2221 = vpop.xlane.xlu0 %2220
      %v2222 = vsel %vm1888, %v2204, 0.0
      %2223 = vadd.xlane.f32.xlu0 %v2222
      %v2224 = vpop.xlane.xlu0 %2223
      %v2225 = vsel %vm1888, %v2206, 0.0
      %2226 = vadd.xlane.f32.xlu0 %v2225
      %v2227 = vpop.xlane.xlu0 %2226
      %v2228 = vrcp.pop %v2209
      %v2229 = vrcp.pop %v2212
      %v2230 = vrcp.pop %v2215
      %v2231 = vrcp.pop %v2218
      %v2232 = vrcp.pop %v2221
      %v2233 = vrcp.pop %v2224
      %v2234 = vrcp.pop %v2227
      %v2235 = vmul.f32 %v2194, %v2228
      %v2236 = vmul.f32 %v2196, %v2229
      %v2237 = vmul.f32 %v2198, %v2230
      %v2238 = vmul.f32 %v2200, %v2231
      %v2239 = vmul.f32 %v2202, %v2232
      %v2240 = vmul.f32 %v2204, %v2233
      %v2241 = vmul.f32 %v2206, %v2234
      %v2242 = vpack.c.bf16 %v2236, %v2235
      %v2243 = vpack.c.bf16 %v2238, %v2237
      %v2244 = vpack.c.bf16 %v2240, %v2239
      %v2245 = vpack.c.bf16 %v2241, %v2241
      %2250 = vrot.lane.b32.xlu0 %v1970, 96
      %v2251 = vpop.permute.xlu0 %2250
      %2252 = vrot.lane.b32.xlu0 %v1971, 96
      %v2253 = vpop.permute.xlu0 %2252
      %2254 = vrot.lane.b32.xlu0 %v1972, 96
      %v2255 = vpop.permute.xlu0 %2254
      %2256 = vrot.lane.b32.xlu0 %v1973, 96
      %v2257 = vpop.permute.xlu0 %2256
      %v2262 = vsel %vm1888, %v2242, 0
      %v2265 = vsel %vm1888, %v2243, 0
      %v2268 = vsel %vm1888, %v2244, 0
      %v2271 = vsel %vm1888, %v2245, 0
      %v2274 = vsel %vm1986, %v2257, 0
      %2276 = vmatprep.subr.bf16.mxu0 0
      %2277 = vmatpush1.bf16.msra.mxu0 0
      %2278 = vmatprep.subr.bf16.mxu0 0
      %2279 = vmatpush1.bf16.msra.mxu0 0
      %2280 = vmatprep.subr.bf16.mxu0 0
      %2281 = vmatpush1.bf16.msra.mxu0 0
      %2282 = vmatprep.subr.bf16.mxu0 0
      %2283 = vmatpush1.bf16.msra.mxu0 0
      %2284 = vmatprep.subr.bf16.mxu0 0
      %2285 = vmatpush1.bf16.msra.mxu0 %v2274
      %2286 = vmatprep.subr.bf16.mxu0 0
      %2287 = vmatpush1.bf16.msra.mxu0 %v2255
      %2288 = vmatprep.subr.bf16.mxu0 0
      %2289 = vmatpush1.bf16.msra.mxu0 %v2253
      %2290 = vmatprep.subr.bf16.mxu0 0
      %2291 = vmatpush1.bf16.msra.mxu0 %v2251
      %2292 = vmatprep.subr.bf16.mxu0 0
      %2293 = vmatpush2.bf16.msra.mxu0 0
      %2294 = vmatprep.subr.bf16.mxu0 0
      %2295 = vmatpush2.bf16.msra.mxu0 0
      %2296 = vmatprep.subr.bf16.mxu0 0
      %2297 = vmatpush2.bf16.msra.mxu0 0
      %2298 = vmatprep.subr.bf16.mxu0 0
      %2299 = vmatpush2.bf16.msra.mxu0 0
      %2300 = vmatprep.subr.bf16.mxu0 0
      %2301 = vmatpush2.bf16.msra.mxu0 0
      %2302 = vmatprep.subr.bf16.mxu0 0
      %2303 = vmatpush2.bf16.msra.mxu0 0
      %2304 = vmatprep.subr.bf16.mxu0 0
      %2305 = vmatpush2.bf16.msra.mxu0 0
      %2306 = vmatprep.subr.bf16.mxu0 0
      %2307 = vmatpush2.bf16.msra.mxu0 0
      %2308 = vmatprep.mubr.bf16.mxu0 0
      %2309 = vmatmul.mubr.bf16.gmra.mxu0 %v2262
      %v2310 = vpop.f32.mrf.mxu0
      %v2311 = vadd.f32 0.0, %v2310
      %v2312 = vpop.f32.mrf.mxu0
      %v2313 = vpop.f32.mrf.mxu0
      %v2314 = vadd.f32 0.0, %v2313
      %v2315 = vpop.f32.mrf.mxu0
      %2316 = vmatprep.mubr.bf16.mxu0 0
      %2317 = vmatmul.mubr.bf16.gmra.mxu0 %v2265
      %v2318 = vpop.f32.mrf.mxu0
      %v2319 = vadd.f32 0.0, %v2318
      %v2320 = vpop.f32.mrf.mxu0
      %v2321 = vpop.f32.mrf.mxu0
      %v2322 = vadd.f32 0.0, %v2321
      %v2323 = vpop.f32.mrf.mxu0
      %2324 = vmatprep.mubr.bf16.mxu0 0
      %2325 = vmatmul.mubr.bf16.gmra.mxu0 %v2268
      %v2326 = vpop.f32.mrf.mxu0
      %v2327 = vadd.f32 0.0, %v2326
      %v2328 = vpop.f32.mrf.mxu0
      %v2329 = vpop.f32.mrf.mxu0
      %v2330 = vadd.f32 0.0, %v2329
      %v2331 = vpop.f32.mrf.mxu0
      %2332 = vmatprep.mubr.bf16.mxu0 0
      %2333 = vmatmul.mubr.bf16.gmra.mxu0 %v2271
      %v2334 = vpop.f32.mrf.mxu0
      %v2335 = vadd.f32 0.0, %v2334
      %v2336 = vpop.f32.mrf.mxu0
      %v2337 = vpop.f32.mrf.mxu0
      %v2338 = vpop.f32.mrf.mxu0
      %2339 = vdwg.mxu0
      %2347 = vrot.lane.b32.xlu0 %v2311, 32
      %v2348 = vpop.permute.xlu0 %2347
      %2349 = vrot.lane.b32.xlu0 %v2314, 32
      %v2350 = vpop.permute.xlu0 %2349
      %2351 = vrot.lane.b32.xlu0 %v2319, 32
      %v2352 = vpop.permute.xlu0 %2351
      %2353 = vrot.lane.b32.xlu0 %v2322, 32
      %v2354 = vpop.permute.xlu0 %2353
      %2355 = vrot.lane.b32.xlu0 %v2327, 32
      %v2356 = vpop.permute.xlu0 %2355
      %2357 = vrot.lane.b32.xlu0 %v2330, 32
      %v2358 = vpop.permute.xlu0 %2357
      %2359 = vrot.lane.b32.xlu0 %v2335, 32
      %v2360 = vpop.permute.xlu0 %2359
      %v2368 = vsel %vm1792, %v2025, %v2348
      %v2369 = vsel %vm1792, %v2028, %v2350
      %v2370 = vsel %vm1792, %v2033, %v2352
      %v2371 = vsel %vm1792, %v2036, %v2354
      %v2372 = vsel %vm1792, %v2041, %v2356
      %v2373 = vsel %vm1792, %v2044, %v2358
      %v2374 = vsel %vm1792, %v2049, %v2360
      %v2375 = vpack.c.bf16 %v2369, %v2368
      %v2376 = vpack.c.bf16 %v2371, %v2370
      %v2377 = vpack.c.bf16 %v2373, %v2372
      %v2378 = vpack.c.bf16 %v2374, %v2374
      %v2379 = vpack.c.bf16 %v1617, %v1616
      %v2380 = vpack.c.bf16 %v1619, %v1618
      %v2381 = vpack.c.bf16 %v1621, %v1620
      %v2382 = vpack.c.bf16 %v1623, %v1622
      %v2384 = vlaneseq
      %v2385 = vshrl.u32 %v2384, 7
      %v2386 = vsub.s32 0, %v2385
      %v2387 = vrot.slane %v1624, %v2386
      %v2390 = vsel %vm1539, %v2375, 0
      %v2393 = vsel %vm1539, %v2376, 0
      %v2396 = vsel %vm1539, %v2377, 0
      %v2399 = vsel %vm1539, %v2378, 0
      %2401 = vmatprep.subr.bf16.mxu0 0
      %2402 = vmatpush1.bf16.msra.mxu0 0
      %2403 = vmatprep.subr.bf16.mxu0 0
      %2404 = vmatpush1.bf16.msra.mxu0 0
      %2405 = vmatprep.subr.bf16.mxu0 0
      %2406 = vmatpush1.bf16.msra.mxu0 0
      %2407 = vmatprep.subr.bf16.mxu0 0
      %2408 = vmatpush1.bf16.msra.mxu0 0
      %2409 = vmatprep.subr.bf16.mxu0 0
      %2410 = vmatpush1.bf16.msra.mxu0 %v2382
      %2411 = vmatprep.subr.bf16.mxu0 0
      %2412 = vmatpush1.bf16.msra.mxu0 %v2381
      %2413 = vmatprep.subr.bf16.mxu0 0
      %2414 = vmatpush1.bf16.msra.mxu0 %v2380
      %2415 = vmatprep.subr.bf16.mxu0 0
      %2416 = vmatpush1.bf16.msra.mxu0 %v2379
      %2417 = vmatprep.subr.bf16.mxu0 0
      %2418 = vmatpush2.bf16.msra.mxu0 0
      %2419 = vmatprep.subr.bf16.mxu0 0
      %2420 = vmatpush2.bf16.msra.mxu0 0
      %2421 = vmatprep.subr.bf16.mxu0 0
      %2422 = vmatpush2.bf16.msra.mxu0 0
      %2423 = vmatprep.subr.bf16.mxu0 0
      %2424 = vmatpush2.bf16.msra.mxu0 0
      %2425 = vmatprep.subr.bf16.mxu0 0
      %2426 = vmatpush2.bf16.msra.mxu0 0
      %2427 = vmatprep.subr.bf16.mxu0 0
      %2428 = vmatpush2.bf16.msra.mxu0 0
      %2429 = vmatprep.subr.bf16.mxu0 0
      %2430 = vmatpush2.bf16.msra.mxu0 0
      %2431 = vmatprep.subr.bf16.mxu0 0
      %2432 = vmatpush2.bf16.msra.mxu0 0
      %2433 = vmatprep.mubr.bf16.mxu0 0
      %2434 = vmatmul.mubr.bf16.gmra.mxu0 %v2390
      %v2435 = vpop.f32.mrf.mxu0
      %v2436 = vadd.f32 %v2387, %v2435
      %v2437 = vpop.f32.mrf.mxu0
      %v2438 = vpop.f32.mrf.mxu0
      %v2439 = vadd.f32 %v2387, %v2438
      %v2440 = vpop.f32.mrf.mxu0
      %2441 = vmatprep.mubr.bf16.mxu0 0
      %2442 = vmatmul.mubr.bf16.gmra.mxu0 %v2393
      %v2443 = vpop.f32.mrf.mxu0
      %v2444 = vadd.f32 %v2387, %v2443
      %v2445 = vpop.f32.mrf.mxu0
      %v2446 = vpop.f32.mrf.mxu0
      %v2447 = vadd.f32 %v2387, %v2446
      %v2448 = vpop.f32.mrf.mxu0
      %2449 = vmatprep.mubr.bf16.mxu0 0
      %2450 = vmatmul.mubr.bf16.gmra.mxu0 %v2396
      %v2451 = vpop.f32.mrf.mxu0
      %v2452 = vadd.f32 %v2387, %v2451
      %v2453 = vpop.f32.mrf.mxu0
      %v2454 = vpop.f32.mrf.mxu0
      %v2455 = vadd.f32 %v2387, %v2454
      %v2456 = vpop.f32.mrf.mxu0
      %2457 = vmatprep.mubr.bf16.mxu0 0
      %2458 = vmatmul.mubr.bf16.gmra.mxu0 %v2399
      %v2459 = vpop.f32.mrf.mxu0
      %v2460 = vadd.f32 %v2387, %v2459
      %v2461 = vpop.f32.mrf.mxu0
      %v2462 = vpop.f32.mrf.mxu0
      %v2463 = vpop.f32.mrf.mxu0
      %2464 = vdwg.mxu0
      %v2465 = vadd.f32 %v2436, %v1587
      %v2466 = vadd.f32 %v2439, %v1590
      %v2467 = vadd.f32 %v2444, %v1595
      %v2468 = vadd.f32 %v2447, %v1598
      %v2469 = vadd.f32 %v2452, %v1603
      %v2470 = vadd.f32 %v2455, %v1606
      %v2471 = vadd.f32 %v2460, %v1611
      %v2472 = vld [vmem:[%s21] sm:$0x1]
      %v2473 = vld [vmem:[%s23] sm:$0x1]
      %v2474 = vsel %vm1539, %v2465, 0.0
      %2475 = vadd.xlane.f32.xlu0 %v2474
      %v2476 = vpop.xlane.xlu0 %2475
      %v2477 = vsel %vm1539, %v2466, 0.0
      %2478 = vadd.xlane.f32.xlu0 %v2477
      %v2479 = vpop.xlane.xlu0 %2478
      %v2480 = vsel %vm1539, %v2467, 0.0
      %2481 = vadd.xlane.f32.xlu0 %v2480
      %v2482 = vpop.xlane.xlu0 %2481
      %v2483 = vsel %vm1539, %v2468, 0.0
      %2484 = vadd.xlane.f32.xlu0 %v2483
      %v2485 = vpop.xlane.xlu0 %2484
      %v2486 = vsel %vm1539, %v2469, 0.0
      %2487 = vadd.xlane.f32.xlu0 %v2486
      %v2488 = vpop.xlane.xlu0 %2487
      %v2489 = vsel %vm1539, %v2470, 0.0
      %2490 = vadd.xlane.f32.xlu0 %v2489
      %v2491 = vpop.xlane.xlu0 %2490
      %v2492 = vsel %vm1539, %v2471, 0.0
      %2493 = vadd.xlane.f32.xlu0 %v2492
      %v2494 = vpop.xlane.xlu0 %2493
      %v2495 = vrcp.pop 64.0
      %v2496 = vmul.f32 %v2476, %v2495
      %v2497 = vmul.f32 %v2479, %v2495
      %v2498 = vmul.f32 %v2482, %v2495
      %v2499 = vmul.f32 %v2485, %v2495
      %v2500 = vmul.f32 %v2488, %v2495
      %v2501 = vmul.f32 %v2491, %v2495
      %v2502 = vmul.f32 %v2494, %v2495
      %v2503 = vsub.f32 %v2465, %v2496
      %v2504 = vsub.f32 %v2466, %v2497
      %v2505 = vsub.f32 %v2467, %v2498
      %v2506 = vsub.f32 %v2468, %v2499
      %v2507 = vsub.f32 %v2469, %v2500
      %v2508 = vsub.f32 %v2470, %v2501
      %v2509 = vsub.f32 %v2471, %v2502
      %v2510 = vmul.f32 %v2503, %v2503
      %v2511 = vmul.f32 %v2504, %v2504
      %v2512 = vmul.f32 %v2505, %v2505
      %v2513 = vmul.f32 %v2506, %v2506
      %v2514 = vmul.f32 %v2507, %v2507
      %v2515 = vmul.f32 %v2508, %v2508
      %v2516 = vmul.f32 %v2509, %v2509
      %v2517 = vsel %vm1539, %v2510, 0.0
      %2518 = vadd.xlane.f32.xlu0 %v2517
      %v2519 = vpop.xlane.xlu0 %2518
      %v2520 = vsel %vm1539, %v2511, 0.0
      %2521 = vadd.xlane.f32.xlu0 %v2520
      %v2522 = vpop.xlane.xlu0 %2521
      %v2523 = vsel %vm1539, %v2512, 0.0
      %2524 = vadd.xlane.f32.xlu0 %v2523
      %v2525 = vpop.xlane.xlu0 %2524
      %v2526 = vsel %vm1539, %v2513, 0.0
      %2527 = vadd.xlane.f32.xlu0 %v2526
      %v2528 = vpop.xlane.xlu0 %2527
      %v2529 = vsel %vm1539, %v2514, 0.0
      %2530 = vadd.xlane.f32.xlu0 %v2529
      %v2531 = vpop.xlane.xlu0 %2530
      %v2532 = vsel %vm1539, %v2515, 0.0
      %2533 = vadd.xlane.f32.xlu0 %v2532
      %v2534 = vpop.xlane.xlu0 %2533
      %v2535 = vsel %vm1539, %v2516, 0.0
      %2536 = vadd.xlane.f32.xlu0 %v2535
      %v2537 = vpop.xlane.xlu0 %2536
      %v2538 = vmul.f32 %v2519, 0.015873017
      %v2539 = vmul.f32 %v2522, 0.015873017
      %v2540 = vmul.f32 %v2525, 0.015873017
      %v2541 = vmul.f32 %v2528, 0.015873017
      %v2542 = vmul.f32 %v2531, 0.015873017
      %v2543 = vmul.f32 %v2534, 0.015873017
      %v2544 = vmul.f32 %v2537, 0.015873017
      %v2545 = vrsqrt.pop %v2538
      %v2546 = vmul.f32 %v2538, %v2545
      %vm2547 = vcmp.eq.f32.partialorder %v2538, inf
      %v2548 = vsel %vm2547, %v2538, %v2546
      %vm2549 = vcmp.eq.f32.partialorder %v2538, 0.0
      %v2550 = vand.u32 %v2538, 2147483648
      %v2551 = vsel %vm2549, %v2550, %v2548
      %v2552 = vrsqrt.pop %v2539
      %v2553 = vmul.f32 %v2539, %v2552
      %vm2554 = vcmp.eq.f32.partialorder %v2539, inf
      %v2555 = vsel %vm2554, %v2539, %v2553
      %vm2556 = vcmp.eq.f32.partialorder %v2539, 0.0
      %v2557 = vand.u32 %v2539, 2147483648
      %v2558 = vsel %vm2556, %v2557, %v2555
      %v2559 = vrsqrt.pop %v2540
      %v2560 = vmul.f32 %v2540, %v2559
      %vm2561 = vcmp.eq.f32.partialorder %v2540, inf
      %v2562 = vsel %vm2561, %v2540, %v2560
      %vm2563 = vcmp.eq.f32.partialorder %v2540, 0.0
      %v2564 = vand.u32 %v2540, 2147483648
      %v2565 = vsel %vm2563, %v2564, %v2562
      %v2566 = vrsqrt.pop %v2541
      %v2567 = vmul.f32 %v2541, %v2566
      %vm2568 = vcmp.eq.f32.partialorder %v2541, inf
      %v2569 = vsel %vm2568, %v2541, %v2567
      %vm2570 = vcmp.eq.f32.partialorder %v2541, 0.0
      %v2571 = vand.u32 %v2541, 2147483648
      %v2572 = vsel %vm2570, %v2571, %v2569
      %v2573 = vrsqrt.pop %v2542
      %v2574 = vmul.f32 %v2542, %v2573
      %vm2575 = vcmp.eq.f32.partialorder %v2542, inf
      %v2576 = vsel %vm2575, %v2542, %v2574
      %vm2577 = vcmp.eq.f32.partialorder %v2542, 0.0
      %v2578 = vand.u32 %v2542, 2147483648
      %v2579 = vsel %vm2577, %v2578, %v2576
      %v2580 = vrsqrt.pop %v2543
      %v2581 = vmul.f32 %v2543, %v2580
      %vm2582 = vcmp.eq.f32.partialorder %v2543, inf
      %v2583 = vsel %vm2582, %v2543, %v2581
      %vm2584 = vcmp.eq.f32.partialorder %v2543, 0.0
      %v2585 = vand.u32 %v2543, 2147483648
      %v2586 = vsel %vm2584, %v2585, %v2583
      %v2587 = vrsqrt.pop %v2544
      %v2588 = vmul.f32 %v2544, %v2587
      %vm2589 = vcmp.eq.f32.partialorder %v2544, inf
      %v2590 = vsel %vm2589, %v2544, %v2588
      %vm2591 = vcmp.eq.f32.partialorder %v2544, 0.0
      %v2592 = vand.u32 %v2544, 2147483648
      %v2593 = vsel %vm2591, %v2592, %v2590
      %v2594 = vadd.f32 %v2551, 0.001
      %v2595 = vadd.f32 %v2558, 0.001
      %v2596 = vadd.f32 %v2565, 0.001
      %v2597 = vadd.f32 %v2572, 0.001
      %v2598 = vadd.f32 %v2579, 0.001
      %v2599 = vadd.f32 %v2586, 0.001
      %v2600 = vadd.f32 %v2593, 0.001
      %v2601 = vrcp.pop %v2594
      %v2602 = vmul.f32 %v2503, %v2601
      %v2603 = vrcp.pop %v2595
      %v2604 = vmul.f32 %v2504, %v2603
      %v2605 = vrcp.pop %v2596
      %v2606 = vmul.f32 %v2505, %v2605
      %v2607 = vrcp.pop %v2597
      %v2608 = vmul.f32 %v2506, %v2607
      %v2609 = vrcp.pop %v2598
      %v2610 = vmul.f32 %v2507, %v2609
      %v2611 = vrcp.pop %v2599
      %v2612 = vmul.f32 %v2508, %v2611
      %v2613 = vrcp.pop %v2600
      %v2614 = vmul.f32 %v2509, %v2613
      %v2616 = vlaneseq
      %v2617 = vshrl.u32 %v2616, 7
      %v2618 = vsub.s32 0, %v2617
      %v2619 = vrot.slane %v2472, %v2618
      %v2621 = vmul.f32 %v2602, %v2619
      %v2622 = vmul.f32 %v2604, %v2619
      %v2623 = vmul.f32 %v2606, %v2619
      %v2624 = vmul.f32 %v2608, %v2619
      %v2625 = vmul.f32 %v2610, %v2619
      %v2626 = vmul.f32 %v2612, %v2619
      %v2627 = vmul.f32 %v2614, %v2619
      %v2629 = vlaneseq
      %v2630 = vshrl.u32 %v2629, 7
      %v2631 = vsub.s32 0, %v2630
      %v2632 = vrot.slane %v2473, %v2631
      %v2634 = vadd.f32 %v2621, %v2632
      %v2635 = vadd.f32 %v2622, %v2632
      %v2636 = vadd.f32 %v2623, %v2632
      %v2637 = vadd.f32 %v2624, %v2632
      %v2638 = vadd.f32 %v2625, %v2632
      %v2639 = vadd.f32 %v2626, %v2632
      %v2640 = vadd.f32 %v2627, %v2632
      %v2641 = vld [vmem:[%s25] sm:$0xff]
      %v2642 = vld [vmem:[%s25 + $0x8] sm:$0xff]
      %v2643 = vld [vmem:[%s25 + $0x10] sm:$0xff]
      %v2644 = vld [vmem:[%s25 + $0x18] sm:$0xff]
      %v2645 = vld [vmem:[%s25 + $0x20] sm:$0xff]
      %v2646 = vld [vmem:[%s25 + $0x28] sm:$0xff]
      %v2647 = vld [vmem:[%s25 + $0x30] sm:$0xff]
      %v2648 = vld [vmem:[%s25 + $0x38] sm:$0xff]
      %v2649 = vld [vmem:[%s27] sm:$0x1]
      %v2650 = vld [vmem:[%s29] sm:$0xff]
      %v2651 = vld [vmem:[%s29 + $0x8] sm:$0xff]
      %v2652 = vld [vmem:[%s29 + $0x10] sm:$0xff]
      %v2653 = vld [vmem:[%s29 + $0x18] sm:$0xff]
      %v2654 = vld [vmem:[%s29 + $0x20] sm:$0xff]
      %v2655 = vld [vmem:[%s29 + $0x28] sm:$0xff]
      %v2656 = vld [vmem:[%s29 + $0x30] sm:$0xff]
      %v2657 = vld [vmem:[%s29 + $0x38] sm:$0xff]
      %v2658 = vld [vmem:[%s29 + $0x40] sm:$0xff]
      %v2659 = vld [vmem:[%s29 + $0x48] sm:$0xff]
      %v2660 = vld [vmem:[%s29 + $0x50] sm:$0xff]
      %v2661 = vld [vmem:[%s29 + $0x58] sm:$0xff]
      %v2662 = vld [vmem:[%s29 + $0x60] sm:$0xff]
      %v2663 = vld [vmem:[%s29 + $0x68] sm:$0xff]
      %v2664 = vld [vmem:[%s29 + $0x70] sm:$0xff]
      %v2665 = vld [vmem:[%s29 + $0x78] sm:$0xff]
      %v2666 = vld [vmem:[%s31] sm:$0x1]
      %v2667 = vpack.c.bf16 %v2635, %v2634
      %v2668 = vpack.c.bf16 %v2637, %v2636
      %v2669 = vpack.c.bf16 %v2639, %v2638
      %v2670 = vpack.c.bf16 %v2640, %v2640
      %v2671 = vpack.c.bf16 %v2642, %v2641
      %v2672 = vpack.c.bf16 %v2644, %v2643
      %v2673 = vpack.c.bf16 %v2646, %v2645
      %v2674 = vpack.c.bf16 %v2648, %v2647
      %v2676 = vlaneseq
      %v2677 = vshrl.u32 %v2676, 7
      %v2678 = vsub.s32 0, %v2677
      %v2679 = vrot.slane %v2649, %v2678
      %v2682 = vsel %vm1539, %v2667, 0
      %v2685 = vsel %vm1539, %v2668, 0
      %v2688 = vsel %vm1539, %v2669, 0
      %v2691 = vsel %vm1539, %v2670, 0
      %2693 = vmatprep.subr.bf16.mxu0 0
      %2694 = vmatpush1.bf16.msra.mxu0 0
      %2695 = vmatprep.subr.bf16.mxu0 0
      %2696 = vmatpush1.bf16.msra.mxu0 0
      %2697 = vmatprep.subr.bf16.mxu0 0
      %2698 = vmatpush1.bf16.msra.mxu0 0
      %2699 = vmatprep.subr.bf16.mxu0 0
      %2700 = vmatpush1.bf16.msra.mxu0 0
      %2701 = vmatprep.subr.bf16.mxu0 0
      %2702 = vmatpush1.bf16.msra.mxu0 %v2674
      %2703 = vmatprep.subr.bf16.mxu0 0
      %2704 = vmatpush1.bf16.msra.mxu0 %v2673
      %2705 = vmatprep.subr.bf16.mxu0 0
      %2706 = vmatpush1.bf16.msra.mxu0 %v2672
      %2707 = vmatprep.subr.bf16.mxu0 0
      %2708 = vmatpush1.bf16.msra.mxu0 %v2671
      %2709 = vmatprep.subr.bf16.mxu0 0
      %2710 = vmatpush2.bf16.msra.mxu0 0
      %2711 = vmatprep.subr.bf16.mxu0 0
      %2712 = vmatpush2.bf16.msra.mxu0 0
      %2713 = vmatprep.subr.bf16.mxu0 0
      %2714 = vmatpush2.bf16.msra.mxu0 0
      %2715 = vmatprep.subr.bf16.mxu0 0
      %2716 = vmatpush2.bf16.msra.mxu0 0
      %2717 = vmatprep.subr.bf16.mxu0 0
      %2718 = vmatpush2.bf16.msra.mxu0 0
      %2719 = vmatprep.subr.bf16.mxu0 0
      %2720 = vmatpush2.bf16.msra.mxu0 0
      %2721 = vmatprep.subr.bf16.mxu0 0
      %2722 = vmatpush2.bf16.msra.mxu0 0
      %2723 = vmatprep.subr.bf16.mxu0 0
      %2724 = vmatpush2.bf16.msra.mxu0 0
      %2725 = vmatprep.mubr.bf16.mxu0 0
      %2726 = vmatmul.mubr.bf16.gmra.mxu0 %v2682
      %v2727 = vpop.f32.mrf.mxu0
      %v2728 = vadd.f32 %v2679, %v2727
      %v2729 = vpop.f32.mrf.mxu0
      %v2730 = vpop.f32.mrf.mxu0
      %v2731 = vadd.f32 %v2679, %v2730
      %v2732 = vpop.f32.mrf.mxu0
      %2733 = vmatprep.mubr.bf16.mxu0 0
      %2734 = vmatmul.mubr.bf16.gmra.mxu0 %v2685
      %v2735 = vpop.f32.mrf.mxu0
      %v2736 = vadd.f32 %v2679, %v2735
      %v2737 = vpop.f32.mrf.mxu0
      %v2738 = vpop.f32.mrf.mxu0
      %v2739 = vadd.f32 %v2679, %v2738
      %v2740 = vpop.f32.mrf.mxu0
      %2741 = vmatprep.mubr.bf16.mxu0 0
      %2742 = vmatmul.mubr.bf16.gmra.mxu0 %v2688
      %v2743 = vpop.f32.mrf.mxu0
      %v2744 = vadd.f32 %v2679, %v2743
      %v2745 = vpop.f32.mrf.mxu0
      %v2746 = vpop.f32.mrf.mxu0
      %v2747 = vadd.f32 %v2679, %v2746
      %v2748 = vpop.f32.mrf.mxu0
      %2749 = vmatprep.mubr.bf16.mxu0 0
      %2750 = vmatmul.mubr.bf16.gmra.mxu0 %v2691
      %v2751 = vpop.f32.mrf.mxu0
      %v2752 = vadd.f32 %v2679, %v2751
      %v2753 = vpop.f32.mrf.mxu0
      %v2754 = vpop.f32.mrf.mxu0
      %v2755 = vpop.f32.mrf.mxu0
      %2756 = vdwg.mxu0
      %v2757 = vmax.f32 %v2728, 0.0
      %v2758 = vmax.f32 %v2731, 0.0
      %v2759 = vmax.f32 %v2736, 0.0
      %v2760 = vmax.f32 %v2739, 0.0
      %v2761 = vmax.f32 %v2744, 0.0
      %v2762 = vmax.f32 %v2747, 0.0
      %v2763 = vmax.f32 %v2752, 0.0
      %v2764 = vpack.c.bf16 %v2758, %v2757
      %v2765 = vpack.c.bf16 %v2760, %v2759
      %v2766 = vpack.c.bf16 %v2762, %v2761
      %v2767 = vpack.c.bf16 %v2763, %v2763
      %v2768 = vpack.c.bf16 %v2651, %v2650
      %v2769 = vpack.c.bf16 %v2653, %v2652
      %v2770 = vpack.c.bf16 %v2655, %v2654
      %v2771 = vpack.c.bf16 %v2657, %v2656
      %v2772 = vpack.c.bf16 %v2659, %v2658
      %v2773 = vpack.c.bf16 %v2661, %v2660
      %v2774 = vpack.c.bf16 %v2663, %v2662
      %v2775 = vpack.c.bf16 %v2665, %v2664
      %v2777 = vlaneseq
      %v2778 = vshrl.u32 %v2777, 7
      %v2779 = vsub.s32 0, %v2778
      %v2780 = vrot.slane %v2666, %v2779
      %2782 = vmatprep.subr.bf16.mxu0 0
      %2783 = vmatpush1.bf16.msra.mxu0 %v2775
      %2784 = vmatprep.subr.bf16.mxu0 0
      %2785 = vmatpush1.bf16.msra.mxu0 %v2774
      %2786 = vmatprep.subr.bf16.mxu0 0
      %2787 = vmatpush1.bf16.msra.mxu0 %v2773
      %2788 = vmatprep.subr.bf16.mxu0 0
      %2789 = vmatpush1.bf16.msra.mxu0 %v2772
      %2790 = vmatprep.subr.bf16.mxu0 0
      %2791 = vmatpush1.bf16.msra.mxu0 %v2771
      %2792 = vmatprep.subr.bf16.mxu0 0
      %2793 = vmatpush1.bf16.msra.mxu0 %v2770
      %2794 = vmatprep.subr.bf16.mxu0 0
      %2795 = vmatpush1.bf16.msra.mxu0 %v2769
      %2796 = vmatprep.subr.bf16.mxu0 0
      %2797 = vmatpush1.bf16.msra.mxu0 %v2768
      %2798 = vmatprep.subr.bf16.mxu0 0
      %2799 = vmatpush2.bf16.msra.mxu0 0
      %2800 = vmatprep.subr.bf16.mxu0 0
      %2801 = vmatpush2.bf16.msra.mxu0 0
      %2802 = vmatprep.subr.bf16.mxu0 0
      %2803 = vmatpush2.bf16.msra.mxu0 0
      %2804 = vmatprep.subr.bf16.mxu0 0
      %2805 = vmatpush2.bf16.msra.mxu0 0
      %2806 = vmatprep.subr.bf16.mxu0 0
      %2807 = vmatpush2.bf16.msra.mxu0 0
      %2808 = vmatprep.subr.bf16.mxu0 0
      %2809 = vmatpush2.bf16.msra.mxu0 0
      %2810 = vmatprep.subr.bf16.mxu0 0
      %2811 = vmatpush2.bf16.msra.mxu0 0
      %2812 = vmatprep.subr.bf16.mxu0 0
      %2813 = vmatpush2.bf16.msra.mxu0 0
      %2814 = vmatprep.mubr.bf16.mxu0 0
      %2815 = vmatmul.mubr.bf16.gmra.mxu0 %v2764
      %v2816 = vpop.f32.mrf.mxu0
      %v2817 = vadd.f32 %v2780, %v2816
      %v2818 = vpop.f32.mrf.mxu0
      %v2819 = vpop.f32.mrf.mxu0
      %v2820 = vadd.f32 %v2780, %v2819
      %v2821 = vpop.f32.mrf.mxu0
      %2822 = vmatprep.mubr.bf16.mxu0 0
      %2823 = vmatmul.mubr.bf16.gmra.mxu0 %v2765
      %v2824 = vpop.f32.mrf.mxu0
      %v2825 = vadd.f32 %v2780, %v2824
      %v2826 = vpop.f32.mrf.mxu0
      %v2827 = vpop.f32.mrf.mxu0
      %v2828 = vadd.f32 %v2780, %v2827
      %v2829 = vpop.f32.mrf.mxu0
      %2830 = vmatprep.mubr.bf16.mxu0 0
      %2831 = vmatmul.mubr.bf16.gmra.mxu0 %v2766
      %v2832 = vpop.f32.mrf.mxu0
      %v2833 = vadd.f32 %v2780, %v2832
      %v2834 = vpop.f32.mrf.mxu0
      %v2835 = vpop.f32.mrf.mxu0
      %v2836 = vadd.f32 %v2780, %v2835
      %v2837 = vpop.f32.mrf.mxu0
      %2838 = vmatprep.mubr.bf16.mxu0 0
      %2839 = vmatmul.mubr.bf16.gmra.mxu0 %v2767
      %v2840 = vpop.f32.mrf.mxu0
      %v2841 = vadd.f32 %v2780, %v2840
      %v2842 = vpop.f32.mrf.mxu0
      %v2843 = vpop.f32.mrf.mxu0
      %v2844 = vpop.f32.mrf.mxu0
      %2845 = vdwg.mxu0
      %v2846 = vadd.f32 %v2817, %v2634
      %v2847 = vadd.f32 %v2820, %v2635
      %v2848 = vadd.f32 %v2825, %v2636
      %v2849 = vadd.f32 %v2828, %v2637
      %v2850 = vadd.f32 %v2833, %v2638
      %v2851 = vadd.f32 %v2836, %v2639
      %v2852 = vadd.f32 %v2841, %v2640
      %v2853 = vld [vmem:[%s33] sm:$0x1]
      %v2854 = vld [vmem:[%s35] sm:$0x1]
      %v2855 = vsel %vm1539, %v2846, 0.0
      %2856 = vadd.xlane.f32.xlu0 %v2855
      %v2857 = vpop.xlane.xlu0 %2856
      %v2858 = vsel %vm1539, %v2847, 0.0
      %2859 = vadd.xlane.f32.xlu0 %v2858
      %v2860 = vpop.xlane.xlu0 %2859
      %v2861 = vsel %vm1539, %v2848, 0.0
      %2862 = vadd.xlane.f32.xlu0 %v2861
      %v2863 = vpop.xlane.xlu0 %2862
      %v2864 = vsel %vm1539, %v2849, 0.0
      %2865 = vadd.xlane.f32.xlu0 %v2864
      %v2866 = vpop.xlane.xlu0 %2865
      %v2867 = vsel %vm1539, %v2850, 0.0
      %2868 = vadd.xlane.f32.xlu0 %v2867
      %v2869 = vpop.xlane.xlu0 %2868
      %v2870 = vsel %vm1539, %v2851, 0.0
      %2871 = vadd.xlane.f32.xlu0 %v2870
      %v2872 = vpop.xlane.xlu0 %2871
      %v2873 = vsel %vm1539, %v2852, 0.0
      %2874 = vadd.xlane.f32.xlu0 %v2873
      %v2875 = vpop.xlane.xlu0 %2874
      %v2876 = vmul.f32 %v2857, %v2495
      %v2877 = vmul.f32 %v2860, %v2495
      %v2878 = vmul.f32 %v2863, %v2495
      %v2879 = vmul.f32 %v2866, %v2495
      %v2880 = vmul.f32 %v2869, %v2495
      %v2881 = vmul.f32 %v2872, %v2495
      %v2882 = vmul.f32 %v2875, %v2495
      %v2883 = vsub.f32 %v2846, %v2876
      %v2884 = vsub.f32 %v2847, %v2877
      %v2885 = vsub.f32 %v2848, %v2878
      %v2886 = vsub.f32 %v2849, %v2879
      %v2887 = vsub.f32 %v2850, %v2880
      %v2888 = vsub.f32 %v2851, %v2881
      %v2889 = vsub.f32 %v2852, %v2882
      %v2890 = vmul.f32 %v2883, %v2883
      %v2891 = vmul.f32 %v2884, %v2884
      %v2892 = vmul.f32 %v2885, %v2885
      %v2893 = vmul.f32 %v2886, %v2886
      %v2894 = vmul.f32 %v2887, %v2887
      %v2895 = vmul.f32 %v2888, %v2888
      %v2896 = vmul.f32 %v2889, %v2889
      %v2897 = vsel %vm1539, %v2890, 0.0
      %2898 = vadd.xlane.f32.xlu0 %v2897
      %v2899 = vpop.xlane.xlu0 %2898
      %v2900 = vsel %vm1539, %v2891, 0.0
      %2901 = vadd.xlane.f32.xlu0 %v2900
      %v2902 = vpop.xlane.xlu0 %2901
      %v2903 = vsel %vm1539, %v2892, 0.0
      %2904 = vadd.xlane.f32.xlu0 %v2903
      %v2905 = vpop.xlane.xlu0 %2904
      %v2906 = vsel %vm1539, %v2893, 0.0
      %2907 = vadd.xlane.f32.xlu0 %v2906
      %v2908 = vpop.xlane.xlu0 %2907
      %v2909 = vsel %vm1539, %v2894, 0.0
      %2910 = vadd.xlane.f32.xlu0 %v2909
      %v2911 = vpop.xlane.xlu0 %2910
      %v2912 = vsel %vm1539, %v2895, 0.0
      %2913 = vadd.xlane.f32.xlu0 %v2912
      %v2914 = vpop.xlane.xlu0 %2913
      %v2915 = vsel %vm1539, %v2896, 0.0
      %2916 = vadd.xlane.f32.xlu0 %v2915
      %v2917 = vpop.xlane.xlu0 %2916
      %v2918 = vmul.f32 %v2899, 0.015873017
      %v2919 = vmul.f32 %v2902, 0.015873017
      %v2920 = vmul.f32 %v2905, 0.015873017
      %v2921 = vmul.f32 %v2908, 0.015873017
      %v2922 = vmul.f32 %v2911, 0.015873017
      %v2923 = vmul.f32 %v2914, 0.015873017
      %v2924 = vmul.f32 %v2917, 0.015873017
      %v2925 = vrsqrt.pop %v2918
      %v2926 = vmul.f32 %v2918, %v2925
      %vm2927 = vcmp.eq.f32.partialorder %v2918, inf
      %v2928 = vsel %vm2927, %v2918, %v2926
      %vm2929 = vcmp.eq.f32.partialorder %v2918, 0.0
      %v2930 = vand.u32 %v2918, 2147483648
      %v2931 = vsel %vm2929, %v2930, %v2928
      %v2932 = vrsqrt.pop %v2919
      %v2933 = vmul.f32 %v2919, %v2932
      %vm2934 = vcmp.eq.f32.partialorder %v2919, inf
      %v2935 = vsel %vm2934, %v2919, %v2933
      %vm2936 = vcmp.eq.f32.partialorder %v2919, 0.0
      %v2937 = vand.u32 %v2919, 2147483648
      %v2938 = vsel %vm2936, %v2937, %v2935
      %v2939 = vrsqrt.pop %v2920
      %v2940 = vmul.f32 %v2920, %v2939
      %vm2941 = vcmp.eq.f32.partialorder %v2920, inf
      %v2942 = vsel %vm2941, %v2920, %v2940
      %vm2943 = vcmp.eq.f32.partialorder %v2920, 0.0
      %v2944 = vand.u32 %v2920, 2147483648
      %v2945 = vsel %vm2943, %v2944, %v2942
      %v2946 = vrsqrt.pop %v2921
      %v2947 = vmul.f32 %v2921, %v2946
      %vm2948 = vcmp.eq.f32.partialorder %v2921, inf
      %v2949 = vsel %vm2948, %v2921, %v2947
      %vm2950 = vcmp.eq.f32.partialorder %v2921, 0.0
      %v2951 = vand.u32 %v2921, 2147483648
      %v2952 = vsel %vm2950, %v2951, %v2949
      %v2953 = vrsqrt.pop %v2922
      %v2954 = vmul.f32 %v2922, %v2953
      %vm2955 = vcmp.eq.f32.partialorder %v2922, inf
      %v2956 = vsel %vm2955, %v2922, %v2954
      %vm2957 = vcmp.eq.f32.partialorder %v2922, 0.0
      %v2958 = vand.u32 %v2922, 2147483648
      %v2959 = vsel %vm2957, %v2958, %v2956
      %v2960 = vrsqrt.pop %v2923
      %v2961 = vmul.f32 %v2923, %v2960
      %vm2962 = vcmp.eq.f32.partialorder %v2923, inf
      %v2963 = vsel %vm2962, %v2923, %v2961
      %vm2964 = vcmp.eq.f32.partialorder %v2923, 0.0
      %v2965 = vand.u32 %v2923, 2147483648
      %v2966 = vsel %vm2964, %v2965, %v2963
      %v2967 = vrsqrt.pop %v2924
      %v2968 = vmul.f32 %v2924, %v2967
      %vm2969 = vcmp.eq.f32.partialorder %v2924, inf
      %v2970 = vsel %vm2969, %v2924, %v2968
      %vm2971 = vcmp.eq.f32.partialorder %v2924, 0.0
      %v2972 = vand.u32 %v2924, 2147483648
      %v2973 = vsel %vm2971, %v2972, %v2970
      %v2974 = vadd.f32 %v2931, 0.001
      %v2975 = vadd.f32 %v2938, 0.001
      %v2976 = vadd.f32 %v2945, 0.001
      %v2977 = vadd.f32 %v2952, 0.001
      %v2978 = vadd.f32 %v2959, 0.001
      %v2979 = vadd.f32 %v2966, 0.001
      %v2980 = vadd.f32 %v2973, 0.001
      %v2981 = vrcp.pop %v2974
      %v2982 = vmul.f32 %v2883, %v2981
      %v2983 = vrcp.pop %v2975
      %v2984 = vmul.f32 %v2884, %v2983
      %v2985 = vrcp.pop %v2976
      %v2986 = vmul.f32 %v2885, %v2985
      %v2987 = vrcp.pop %v2977
      %v2988 = vmul.f32 %v2886, %v2987
      %v2989 = vrcp.pop %v2978
      %v2990 = vmul.f32 %v2887, %v2989
      %v2991 = vrcp.pop %v2979
      %v2992 = vmul.f32 %v2888, %v2991
      %v2993 = vrcp.pop %v2980
      %v2994 = vmul.f32 %v2889, %v2993
      %v2996 = vlaneseq
      %v2997 = vshrl.u32 %v2996, 7
      %v2998 = vsub.s32 0, %v2997
      %v2999 = vrot.slane %v2853, %v2998
      %v3001 = vmul.f32 %v2982, %v2999
      %v3002 = vmul.f32 %v2984, %v2999
      %v3003 = vmul.f32 %v2986, %v2999
      %v3004 = vmul.f32 %v2988, %v2999
      %v3005 = vmul.f32 %v2990, %v2999
      %v3006 = vmul.f32 %v2992, %v2999
      %v3007 = vmul.f32 %v2994, %v2999
      %v3009 = vlaneseq
      %v3010 = vshrl.u32 %v3009, 7
      %v3011 = vsub.s32 0, %v3010
      %v3012 = vrot.slane %v2854, %v3011
      %v3014 = vadd.f32 %v3001, %v3012
      %v3015 = vadd.f32 %v3002, %v3012
      %v3016 = vadd.f32 %v3003, %v3012
      %v3017 = vadd.f32 %v3004, %v3012
      %v3018 = vadd.f32 %v3005, %v3012
      %v3019 = vadd.f32 %v3006, %v3012
      %v3020 = vadd.f32 %v3007, %v3012
      %s3021 = scalar_lea.vmem %s17, 64
      %v3022 = vld [vmem:[%s3021] sm:$0xff]
      %v3023 = vld [vmem:[%s3021 + $0x8] sm:$0xff]
      %v3024 = vld [vmem:[%s3021 + $0x10] sm:$0xff]
      %v3025 = vld [vmem:[%s3021 + $0x18] sm:$0xff]
      %v3026 = vld [vmem:[%s3021 + $0x20] sm:$0xff]
      %v3027 = vld [vmem:[%s3021 + $0x28] sm:$0xff]
      %v3028 = vld [vmem:[%s3021 + $0x30] sm:$0xff]
      %v3029 = vld [vmem:[%s3021 + $0x38] sm:$0xff]
      %s3030 = scalar_lea.vmem %s19, 1
      %v3031 = vld [vmem:[%s3030] sm:$0x1]
      %s3032 = scalar_lea.vmem %s13, 128
      %v3033 = vld [vmem:[%s3032] sm:$0xff]
      %v3034 = vld [vmem:[%s3032 + $0x8] sm:$0xff]
      %v3035 = vld [vmem:[%s3032 + $0x10] sm:$0xff]
      %v3036 = vld [vmem:[%s3032 + $0x18] sm:$0xff]
      %v3037 = vld [vmem:[%s3032 + $0x20] sm:$0xff]
      %v3038 = vld [vmem:[%s3032 + $0x28] sm:$0xff]
      %v3039 = vld [vmem:[%s3032 + $0x30] sm:$0xff]
      %v3040 = vld [vmem:[%s3032 + $0x38] sm:$0xff]
      %v3041 = vld [vmem:[%s3032 + $0x40] sm:$0xff]
      %v3042 = vld [vmem:[%s3032 + $0x48] sm:$0xff]
      %v3043 = vld [vmem:[%s3032 + $0x50] sm:$0xff]
      %v3044 = vld [vmem:[%s3032 + $0x58] sm:$0xff]
      %v3045 = vld [vmem:[%s3032 + $0x60] sm:$0xff]
      %v3046 = vld [vmem:[%s3032 + $0x68] sm:$0xff]
      %v3047 = vld [vmem:[%s3032 + $0x70] sm:$0xff]
      %v3048 = vld [vmem:[%s3032 + $0x78] sm:$0xff]
      %v3049 = vpack.c.bf16 %v3015, %v3014
      %v3050 = vpack.c.bf16 %v3017, %v3016
      %v3051 = vpack.c.bf16 %v3019, %v3018
      %v3052 = vpack.c.bf16 %v3020, %v3020
      %v3053 = vpack.c.bf16 %v3035, %v3033
      %v3054 = vpack.c.bf16 %v3036, %v3034
      %v3055 = vpack.c.bf16 %v3039, %v3037
      %v3056 = vpack.c.bf16 %v3040, %v3038
      %v3057 = vpack.c.bf16 %v3043, %v3041
      %v3058 = vpack.c.bf16 %v3044, %v3042
      %v3059 = vpack.c.bf16 %v3047, %v3045
      %v3060 = vpack.c.bf16 %v3048, %v3046
      %s3061 = scalar_lea.vmem %s15, 2
      %v3062 = vld [vmem:[%s3061] sm:$0x3]
      %v3064 = vlaneseq
      %v3065 = vshrl.u32 %v3064, 7
      %v3066 = vsub.s32 0, %v3065
      %v3067 = vrot.slane %v3062, %v3066
      %v3068 = vlaneseq
      %v3069 = vshrl.u32 %v3068, 7
      %v3070 = vsub.s32 1, %v3069
      %v3071 = vrot.slane %v3062, %v3070
      %v3075 = vsel %vm1539, %v3049, 0
      %v3078 = vsel %vm1539, %v3050, 0
      %v3081 = vsel %vm1539, %v3051, 0
      %v3084 = vsel %vm1539, %v3052, 0
      %3086 = vmatprep.subr.bf16.mxu0 0
      %3087 = vmatpush1.bf16.msra.mxu0 0
      %3088 = vmatprep.subr.bf16.mxu0 0
      %3089 = vmatpush1.bf16.msra.mxu0 0
      %3090 = vmatprep.subr.bf16.mxu0 0
      %3091 = vmatpush1.bf16.msra.mxu0 0
      %3092 = vmatprep.subr.bf16.mxu0 0
      %3093 = vmatpush1.bf16.msra.mxu0 0
      %3094 = vmatprep.subr.bf16.mxu0 %v3060
      %3095 = vmatpush1.bf16.msra.mxu0 %v3059
      %3096 = vmatprep.subr.bf16.mxu0 %v3058
      %3097 = vmatpush1.bf16.msra.mxu0 %v3057
      %3098 = vmatprep.subr.bf16.mxu0 %v3056
      %3099 = vmatpush1.bf16.msra.mxu0 %v3055
      %3100 = vmatprep.subr.bf16.mxu0 %v3054
      %3101 = vmatpush1.bf16.msra.mxu0 %v3053
      %3102 = vmatprep.subr.bf16.mxu0 0
      %3103 = vmatpush2.bf16.msra.mxu0 0
      %3104 = vmatprep.subr.bf16.mxu0 0
      %3105 = vmatpush2.bf16.msra.mxu0 0
      %3106 = vmatprep.subr.bf16.mxu0 0
      %3107 = vmatpush2.bf16.msra.mxu0 0
      %3108 = vmatprep.subr.bf16.mxu0 0
      %3109 = vmatpush2.bf16.msra.mxu0 0
      %3110 = vmatprep.subr.bf16.mxu0 0
      %3111 = vmatpush2.bf16.msra.mxu0 0
      %3112 = vmatprep.subr.bf16.mxu0 0
      %3113 = vmatpush2.bf16.msra.mxu0 0
      %3114 = vmatprep.subr.bf16.mxu0 0
      %3115 = vmatpush2.bf16.msra.mxu0 0
      %3116 = vmatprep.subr.bf16.mxu0 0
      %3117 = vmatpush2.bf16.msra.mxu0 0
      %3118 = vmatprep.mubr.bf16.mxu0 0
      %3119 = vmatmul.mubr.bf16.gmra.mxu0 %v3075
      %v3120 = vpop.f32.mrf.mxu0
      %v3121 = vadd.f32 %v3067, %v3120
      %v3122 = vpop.f32.mrf.mxu0
      %v3123 = vadd.f32 %v3071, %v3122
      %v3124 = vpop.f32.mrf.mxu0
      %v3125 = vadd.f32 %v3067, %v3124
      %v3126 = vpop.f32.mrf.mxu0
      %v3127 = vadd.f32 %v3071, %v3126
      %3128 = vmatprep.mubr.bf16.mxu0 0
      %3129 = vmatmul.mubr.bf16.gmra.mxu0 %v3078
      %v3130 = vpop.f32.mrf.mxu0
      %v3131 = vadd.f32 %v3067, %v3130
      %v3132 = vpop.f32.mrf.mxu0
      %v3133 = vadd.f32 %v3071, %v3132
      %v3134 = vpop.f32.mrf.mxu0
      %v3135 = vadd.f32 %v3067, %v3134
      %v3136 = vpop.f32.mrf.mxu0
      %v3137 = vadd.f32 %v3071, %v3136
      %3138 = vmatprep.mubr.bf16.mxu0 0
      %3139 = vmatmul.mubr.bf16.gmra.mxu0 %v3081
      %v3140 = vpop.f32.mrf.mxu0
      %v3141 = vadd.f32 %v3067, %v3140
      %v3142 = vpop.f32.mrf.mxu0
      %v3143 = vadd.f32 %v3071, %v3142
      %v3144 = vpop.f32.mrf.mxu0
      %v3145 = vadd.f32 %v3067, %v3144
      %v3146 = vpop.f32.mrf.mxu0
      %v3147 = vadd.f32 %v3071, %v3146
      %3148 = vmatprep.mubr.bf16.mxu0 0
      %3149 = vmatmul.mubr.bf16.gmra.mxu0 %v3084
      %v3150 = vpop.f32.mrf.mxu0
      %v3151 = vadd.f32 %v3067, %v3150
      %v3152 = vpop.f32.mrf.mxu0
      %v3153 = vadd.f32 %v3071, %v3152
      %v3154 = vpop.f32.mrf.mxu0
      %v3155 = vpop.f32.mrf.mxu0
      %3156 = vdwg.mxu0
      %3157 = vst [vmem:[#allocation2] sm:$0xff] %v3121
      %3158 = vst [vmem:[#allocation2 + $0x8] sm:$0xff] %v3123
      %3159 = vst [vmem:[#allocation2 + $0x10] sm:$0xff] %v3125
      %3160 = vst [vmem:[#allocation2 + $0x18] sm:$0xff] %v3127
      %3161 = vst [vmem:[#allocation2 + $0x20] sm:$0xff] %v3131
      %3162 = vst [vmem:[#allocation2 + $0x28] sm:$0xff] %v3133
      %3163 = vst [vmem:[#allocation2 + $0x30] sm:$0xff] %v3135
      %3164 = vst [vmem:[#allocation2 + $0x38] sm:$0xff] %v3137
      %3165 = vst [vmem:[#allocation2 + $0x40] sm:$0xff] %v3141
      %3166 = vst [vmem:[#allocation2 + $0x48] sm:$0xff] %v3143
      %3167 = vst [vmem:[#allocation2 + $0x50] sm:$0xff] %v3145
      %3168 = vst [vmem:[#allocation2 + $0x58] sm:$0xff] %v3147
      %3169 = vst [vmem:[#allocation2 + $0x60] sm:$0xff] %v3151
      %3170 = vst [vmem:[#allocation2 + $0x68] sm:$0xff] %v3153
      %v3171 = vld [vmem:[#allocation2] sm:$0xff]
      %v3172 = vld [vmem:[#allocation2 + $0x10] sm:$0xff]
      %v3173 = vld [vmem:[#allocation2 + $0x20] sm:$0xff]
      %v3174 = vld [vmem:[#allocation2 + $0x30] sm:$0xff]
      %v3175 = vld [vmem:[#allocation2 + $0x40] sm:$0xff]
      %v3176 = vld [vmem:[#allocation2 + $0x50] sm:$0xff]
      %v3177 = vld [vmem:[#allocation2 + $0x60] sm:$0xff]
      %v3178 = vld [vmem:[#allocation2 + $0x8] sm:$0xff]
      %v3179 = vld [vmem:[#allocation2 + $0x18] sm:$0xff]
      %v3180 = vld [vmem:[#allocation2 + $0x28] sm:$0xff]
      %v3181 = vld [vmem:[#allocation2 + $0x38] sm:$0xff]
      %v3182 = vld [vmem:[#allocation2 + $0x48] sm:$0xff]
      %v3183 = vld [vmem:[#allocation2 + $0x58] sm:$0xff]
      %v3184 = vld [vmem:[#allocation2 + $0x68] sm:$0xff]
      %v3185 = vpack.c.bf16 %v3172, %v3171
      %v3186 = vpack.c.bf16 %v3174, %v3173
      %v3187 = vpack.c.bf16 %v3176, %v3175
      %v3188 = vpack.c.bf16 %v3177, %v3177
      %3193 = vrot.lane.b32.xlu0 %v3185, 64
      %v3194 = vpop.permute.xlu0 %3193
      %3195 = vrot.lane.b32.xlu0 %v3186, 64
      %v3196 = vpop.permute.xlu0 %3195
      %3197 = vrot.lane.b32.xlu0 %v3187, 64
      %v3198 = vpop.permute.xlu0 %3197
      %3199 = vrot.lane.b32.xlu0 %v3188, 64
      %v3200 = vpop.permute.xlu0 %3199
      %v3202 = vsel %vm1792, %v3185, 0
      %v3205 = vsel %vm1792, %v3186, 0
      %v3208 = vsel %vm1792, %v3187, 0
      %v3211 = vsel %vm1792, %v3188, 0
      %v3214 = vsel %vm1792, %v3194, 0
      %v3217 = vsel %vm1792, %v3196, 0
      %v3220 = vsel %vm1792, %v3198, 0
      %v3223 = vsel %vm1792, %v3200, 0
      %3225 = vmatprep.subr.bf16.mxu0 0
      %3226 = vmatpush1.bf16.xpose.msra.mxu0 0
      %3227 = vmatprep.subr.bf16.mxu0 0
      %3228 = vmatpush1.bf16.xpose.msra.mxu0 0
      %3229 = vmatprep.subr.bf16.mxu0 0
      %3230 = vmatpush1.bf16.xpose.msra.mxu0 0
      %3231 = vmatprep.subr.bf16.mxu0 0
      %3232 = vmatpush1.bf16.xpose.msra.mxu0 0
      %3233 = vmatprep.subr.bf16.mxu0 0
      %3234 = vmatpush1.bf16.xpose.msra.mxu0 %v3223
      %3235 = vmatprep.subr.bf16.mxu0 0
      %3236 = vmatpush1.bf16.xpose.msra.mxu0 %v3220
      %3237 = vmatprep.subr.bf16.mxu0 0
      %3238 = vmatpush1.bf16.xpose.msra.mxu0 %v3217
      %3239 = vmatprep.subr.bf16.mxu0 0
      %3240 = vmatpush1.bf16.xpose.msra.mxu0 %v3214
      %3241 = vmatprep.subr.bf16.mxu0 0
      %3242 = vmatpush2.bf16.xpose.msra.mxu0 0
      %3243 = vmatprep.subr.bf16.mxu0 0
      %3244 = vmatpush2.bf16.xpose.msra.mxu0 0
      %3245 = vmatprep.subr.bf16.mxu0 0
      %3246 = vmatpush2.bf16.xpose.msra.mxu0 0
      %3247 = vmatprep.subr.bf16.mxu0 0
      %3248 = vmatpush2.bf16.xpose.msra.mxu0 0
      %3249 = vmatprep.subr.bf16.mxu0 0
      %3250 = vmatpush2.bf16.xpose.msra.mxu0 0
      %3251 = vmatprep.subr.bf16.mxu0 0
      %3252 = vmatpush2.bf16.xpose.msra.mxu0 0
      %3253 = vmatprep.subr.bf16.mxu0 0
      %3254 = vmatpush2.bf16.xpose.msra.mxu0 0
      %3255 = vmatprep.subr.bf16.mxu0 0
      %3256 = vmatpush2.bf16.xpose.msra.mxu0 0
      %3257 = vmatprep.mubr.bf16.mxu0 0
      %3258 = vmatmul.mubr.bf16.gmra.mxu0 %v3202
      %v3259 = vpop.f32.mrf.mxu0
      %v3260 = vadd.f32 0.0, %v3259
      %v3261 = vpop.f32.mrf.mxu0
      %v3262 = vpop.f32.mrf.mxu0
      %v3263 = vadd.f32 0.0, %v3262
      %v3264 = vpop.f32.mrf.mxu0
      %3265 = vmatprep.mubr.bf16.mxu0 0
      %3266 = vmatmul.mubr.bf16.gmra.mxu0 %v3205
      %v3267 = vpop.f32.mrf.mxu0
      %v3268 = vadd.f32 0.0, %v3267
      %v3269 = vpop.f32.mrf.mxu0
      %v3270 = vpop.f32.mrf.mxu0
      %v3271 = vadd.f32 0.0, %v3270
      %v3272 = vpop.f32.mrf.mxu0
      %3273 = vmatprep.mubr.bf16.mxu0 0
      %3274 = vmatmul.mubr.bf16.gmra.mxu0 %v3208
      %v3275 = vpop.f32.mrf.mxu0
      %v3276 = vadd.f32 0.0, %v3275
      %v3277 = vpop.f32.mrf.mxu0
      %v3278 = vpop.f32.mrf.mxu0
      %v3279 = vadd.f32 0.0, %v3278
      %v3280 = vpop.f32.mrf.mxu0
      %3281 = vmatprep.mubr.bf16.mxu0 0
      %3282 = vmatmul.mubr.bf16.gmra.mxu0 %v3211
      %v3283 = vpop.f32.mrf.mxu0
      %v3284 = vadd.f32 0.0, %v3283
      %v3285 = vpop.f32.mrf.mxu0
      %v3286 = vpop.f32.mrf.mxu0
      %v3287 = vpop.f32.mrf.mxu0
      %3288 = vdwg.mxu0
      %v3289 = vmul.f32 %v3260, 0.17677669
      %v3290 = vmul.f32 %v3263, 0.17677669
      %v3291 = vmul.f32 %v3268, 0.17677669
      %v3292 = vmul.f32 %v3271, 0.17677669
      %v3293 = vmul.f32 %v3276, 0.17677669
      %v3294 = vmul.f32 %v3279, 0.17677669
      %v3295 = vmul.f32 %v3284, 0.17677669
      %v3296 = vsel %vm1888, %v3289, -inf
      %3297 = vmax.xlane.f32.xlu0 %v3296
      %v3298 = vpop.xlane.xlu0 %3297
      %v3299 = vsel %vm1888, %v3290, -inf
      %3300 = vmax.xlane.f32.xlu0 %v3299
      %v3301 = vpop.xlane.xlu0 %3300
      %v3302 = vsel %vm1888, %v3291, -inf
      %3303 = vmax.xlane.f32.xlu0 %v3302
      %v3304 = vpop.xlane.xlu0 %3303
      %v3305 = vsel %vm1888, %v3292, -inf
      %3306 = vmax.xlane.f32.xlu0 %v3305
      %v3307 = vpop.xlane.xlu0 %3306
      %v3308 = vsel %vm1888, %v3293, -inf
      %3309 = vmax.xlane.f32.xlu0 %v3308
      %v3310 = vpop.xlane.xlu0 %3309
      %v3311 = vsel %vm1888, %v3294, -inf
      %3312 = vmax.xlane.f32.xlu0 %v3311
      %v3313 = vpop.xlane.xlu0 %3312
      %v3314 = vsel %vm1888, %v3295, -inf
      %3315 = vmax.xlane.f32.xlu0 %v3314
      %v3316 = vpop.xlane.xlu0 %3315
      %v3317 = vsub.f32 %v3289, %v3298
      %v3318 = vsub.f32 %v3290, %v3301
      %v3319 = vsub.f32 %v3291, %v3304
      %v3320 = vsub.f32 %v3292, %v3307
      %v3321 = vsub.f32 %v3293, %v3310
      %v3322 = vsub.f32 %v3294, %v3313
      %v3323 = vsub.f32 %v3295, %v3316
      %v3324 = vmul.f32 %v3317, 1.442695
      %v3325 = vpow.pop %v3324
      %v3326 = vmul.f32 %v3318, 1.442695
      %v3327 = vpow.pop %v3326
      %v3328 = vmul.f32 %v3319, 1.442695
      %v3329 = vpow.pop %v3328
      %v3330 = vmul.f32 %v3320, 1.442695
      %v3331 = vpow.pop %v3330
      %v3332 = vmul.f32 %v3321, 1.442695
      %v3333 = vpow.pop %v3332
      %v3334 = vmul.f32 %v3322, 1.442695
      %v3335 = vpow.pop %v3334
      %v3336 = vmul.f32 %v3323, 1.442695
      %v3337 = vpow.pop %v3336
      %v3338 = vsel %vm1888, %v3325, 0.0
      %3339 = vadd.xlane.f32.xlu0 %v3338
      %v3340 = vpop.xlane.xlu0 %3339
      %v3341 = vsel %vm1888, %v3327, 0.0
      %3342 = vadd.xlane.f32.xlu0 %v3341
      %v3343 = vpop.xlane.xlu0 %3342
      %v3344 = vsel %vm1888, %v3329, 0.0
      %3345 = vadd.xlane.f32.xlu0 %v3344
      %v3346 = vpop.xlane.xlu0 %3345
      %v3347 = vsel %vm1888, %v3331, 0.0
      %3348 = vadd.xlane.f32.xlu0 %v3347
      %v3349 = vpop.xlane.xlu0 %3348
      %v3350 = vsel %vm1888, %v3333, 0.0
      %3351 = vadd.xlane.f32.xlu0 %v3350
      %v3352 = vpop.xlane.xlu0 %3351
      %v3353 = vsel %vm1888, %v3335, 0.0
      %3354 = vadd.xlane.f32.xlu0 %v3353
      %v3355 = vpop.xlane.xlu0 %3354
      %v3356 = vsel %vm1888, %v3337, 0.0
      %3357 = vadd.xlane.f32.xlu0 %v3356
      %v3358 = vpop.xlane.xlu0 %3357
      %v3359 = vrcp.pop %v3340
      %v3360 = vrcp.pop %v3343
      %v3361 = vrcp.pop %v3346
      %v3362 = vrcp.pop %v3349
      %v3363 = vrcp.pop %v3352
      %v3364 = vrcp.pop %v3355
      %v3365 = vrcp.pop %v3358
      %v3366 = vmul.f32 %v3325, %v3359
      %v3367 = vmul.f32 %v3327, %v3360
      %v3368 = vmul.f32 %v3329, %v3361
      %v3369 = vmul.f32 %v3331, %v3362
      %v3370 = vmul.f32 %v3333, %v3363
      %v3371 = vmul.f32 %v3335, %v3364
      %v3372 = vmul.f32 %v3337, %v3365
      %v3373 = vpack.c.bf16 %v3367, %v3366
      %v3374 = vpack.c.bf16 %v3369, %v3368
      %v3375 = vpack.c.bf16 %v3371, %v3370
      %v3376 = vpack.c.bf16 %v3372, %v3372
      %v3377 = vpack.c.bf16 %v3179, %v3178
      %v3378 = vpack.c.bf16 %v3181, %v3180
      %v3379 = vpack.c.bf16 %v3183, %v3182
      %v3380 = vpack.c.bf16 %v3184, %v3184
      %v3382 = vsel %vm1888, %v3373, 0
      %v3385 = vsel %vm1888, %v3374, 0
      %v3388 = vsel %vm1888, %v3375, 0
      %v3391 = vsel %vm1888, %v3376, 0
      %v3394 = vsel %vm1986, %v3380, 0
      %3396 = vmatprep.subr.bf16.mxu0 0
      %3397 = vmatpush1.bf16.msra.mxu0 0
      %3398 = vmatprep.subr.bf16.mxu0 0
      %3399 = vmatpush1.bf16.msra.mxu0 0
      %3400 = vmatprep.subr.bf16.mxu0 0
      %3401 = vmatpush1.bf16.msra.mxu0 0
      %3402 = vmatprep.subr.bf16.mxu0 0
      %3403 = vmatpush1.bf16.msra.mxu0 0
      %3404 = vmatprep.subr.bf16.mxu0 0
      %3405 = vmatpush1.bf16.msra.mxu0 %v3394
      %3406 = vmatprep.subr.bf16.mxu0 0
      %3407 = vmatpush1.bf16.msra.mxu0 %v3379
      %3408 = vmatprep.subr.bf16.mxu0 0
      %3409 = vmatpush1.bf16.msra.mxu0 %v3378
      %3410 = vmatprep.subr.bf16.mxu0 0
      %3411 = vmatpush1.bf16.msra.mxu0 %v3377
      %3412 = vmatprep.subr.bf16.mxu0 0
      %3413 = vmatpush2.bf16.msra.mxu0 0
      %3414 = vmatprep.subr.bf16.mxu0 0
      %3415 = vmatpush2.bf16.msra.mxu0 0
      %3416 = vmatprep.subr.bf16.mxu0 0
      %3417 = vmatpush2.bf16.msra.mxu0 0
      %3418 = vmatprep.subr.bf16.mxu0 0
      %3419 = vmatpush2.bf16.msra.mxu0 0
      %3420 = vmatprep.subr.bf16.mxu0 0
      %3421 = vmatpush2.bf16.msra.mxu0 0
      %3422 = vmatprep.subr.bf16.mxu0 0
      %3423 = vmatpush2.bf16.msra.mxu0 0
      %3424 = vmatprep.subr.bf16.mxu0 0
      %3425 = vmatpush2.bf16.msra.mxu0 0
      %3426 = vmatprep.subr.bf16.mxu0 0
      %3427 = vmatpush2.bf16.msra.mxu0 0
      %3428 = vmatprep.mubr.bf16.mxu0 0
      %3429 = vmatmul.mubr.bf16.gmra.mxu0 %v3382
      %v3430 = vpop.f32.mrf.mxu0
      %v3431 = vadd.f32 0.0, %v3430
      %v3432 = vpop.f32.mrf.mxu0
      %v3433 = vpop.f32.mrf.mxu0
      %v3434 = vadd.f32 0.0, %v3433
      %v3435 = vpop.f32.mrf.mxu0
      %3436 = vmatprep.mubr.bf16.mxu0 0
      %3437 = vmatmul.mubr.bf16.gmra.mxu0 %v3385
      %v3438 = vpop.f32.mrf.mxu0
      %v3439 = vadd.f32 0.0, %v3438
      %v3440 = vpop.f32.mrf.mxu0
      %v3441 = vpop.f32.mrf.mxu0
      %v3442 = vadd.f32 0.0, %v3441
      %v3443 = vpop.f32.mrf.mxu0
      %3444 = vmatprep.mubr.bf16.mxu0 0
      %3445 = vmatmul.mubr.bf16.gmra.mxu0 %v3388
      %v3446 = vpop.f32.mrf.mxu0
      %v3447 = vadd.f32 0.0, %v3446
      %v3448 = vpop.f32.mrf.mxu0
      %v3449 = vpop.f32.mrf.mxu0
      %v3450 = vadd.f32 0.0, %v3449
      %v3451 = vpop.f32.mrf.mxu0
      %3452 = vmatprep.mubr.bf16.mxu0 0
      %3453 = vmatmul.mubr.bf16.gmra.mxu0 %v3391
      %v3454 = vpop.f32.mrf.mxu0
      %v3455 = vadd.f32 0.0, %v3454
      %v3456 = vpop.f32.mrf.mxu0
      %v3457 = vpop.f32.mrf.mxu0
      %v3458 = vpop.f32.mrf.mxu0
      %3459 = vdwg.mxu0
      %3460 = vrot.lane.b32.xlu0 %v3185, 96
      %v3461 = vpop.permute.xlu0 %3460
      %3462 = vrot.lane.b32.xlu0 %v3186, 96
      %v3463 = vpop.permute.xlu0 %3462
      %3464 = vrot.lane.b32.xlu0 %v3187, 96
      %v3465 = vpop.permute.xlu0 %3464
      %3466 = vrot.lane.b32.xlu0 %v3188, 96
      %v3467 = vpop.permute.xlu0 %3466
      %3468 = vrot.lane.b32.xlu0 %v3185, 32
      %v3469 = vpop.permute.xlu0 %3468
      %3470 = vrot.lane.b32.xlu0 %v3186, 32
      %v3471 = vpop.permute.xlu0 %3470
      %3472 = vrot.lane.b32.xlu0 %v3187, 32
      %v3473 = vpop.permute.xlu0 %3472
      %3474 = vrot.lane.b32.xlu0 %v3188, 32
      %v3475 = vpop.permute.xlu0 %3474
      %v3477 = vsel %vm1792, %v3461, 0
      %v3480 = vsel %vm1792, %v3463, 0
      %v3483 = vsel %vm1792, %v3465, 0
      %v3486 = vsel %vm1792, %v3467, 0
      %v3489 = vsel %vm1792, %v3469, 0
      %v3492 = vsel %vm1792, %v3471, 0
      %v3495 = vsel %vm1792, %v3473, 0
      %v3498 = vsel %vm1792, %v3475, 0
      %3500 = vmatprep.subr.bf16.mxu0 0
      %3501 = vmatpush1.bf16.xpose.msra.mxu0 0
      %3502 = vmatprep.subr.bf16.mxu0 0
      %3503 = vmatpush1.bf16.xpose.msra.mxu0 0
      %3504 = vmatprep.subr.bf16.mxu0 0
      %3505 = vmatpush1.bf16.xpose.msra.mxu0 0
      %3506 = vmatprep.subr.bf16.mxu0 0
      %3507 = vmatpush1.bf16.xpose.msra.mxu0 0
      %3508 = vmatprep.subr.bf16.mxu0 0
      %3509 = vmatpush1.bf16.xpose.msra.mxu0 %v3498
      %3510 = vmatprep.subr.bf16.mxu0 0
      %3511 = vmatpush1.bf16.xpose.msra.mxu0 %v3495
      %3512 = vmatprep.subr.bf16.mxu0 0
      %3513 = vmatpush1.bf16.xpose.msra.mxu0 %v3492
      %3514 = vmatprep.subr.bf16.mxu0 0
      %3515 = vmatpush1.bf16.xpose.msra.mxu0 %v3489
      %3516 = vmatprep.subr.bf16.mxu0 0
      %3517 = vmatpush2.bf16.xpose.msra.mxu0 0
      %3518 = vmatprep.subr.bf16.mxu0 0
      %3519 = vmatpush2.bf16.xpose.msra.mxu0 0
      %3520 = vmatprep.subr.bf16.mxu0 0
      %3521 = vmatpush2.bf16.xpose.msra.mxu0 0
      %3522 = vmatprep.subr.bf16.mxu0 0
      %3523 = vmatpush2.bf16.xpose.msra.mxu0 0
      %3524 = vmatprep.subr.bf16.mxu0 0
      %3525 = vmatpush2.bf16.xpose.msra.mxu0 0
      %3526 = vmatprep.subr.bf16.mxu0 0
      %3527 = vmatpush2.bf16.xpose.msra.mxu0 0
      %3528 = vmatprep.subr.bf16.mxu0 0
      %3529 = vmatpush2.bf16.xpose.msra.mxu0 0
      %3530 = vmatprep.subr.bf16.mxu0 0
      %3531 = vmatpush2.bf16.xpose.msra.mxu0 0
      %3532 = vmatprep.mubr.bf16.mxu0 0
      %3533 = vmatmul.mubr.bf16.gmra.mxu0 %v3477
      %v3534 = vpop.f32.mrf.mxu0
      %v3535 = vadd.f32 0.0, %v3534
      %v3536 = vpop.f32.mrf.mxu0
      %v3537 = vpop.f32.mrf.mxu0
      %v3538 = vadd.f32 0.0, %v3537
      %v3539 = vpop.f32.mrf.mxu0
      %3540 = vmatprep.mubr.bf16.mxu0 0
      %3541 = vmatmul.mubr.bf16.gmra.mxu0 %v3480
      %v3542 = vpop.f32.mrf.mxu0
      %v3543 = vadd.f32 0.0, %v3542
      %v3544 = vpop.f32.mrf.mxu0
      %v3545 = vpop.f32.mrf.mxu0
      %v3546 = vadd.f32 0.0, %v3545
      %v3547 = vpop.f32.mrf.mxu0
      %3548 = vmatprep.mubr.bf16.mxu0 0
      %3549 = vmatmul.mubr.bf16.gmra.mxu0 %v3483
      %v3550 = vpop.f32.mrf.mxu0
      %v3551 = vadd.f32 0.0, %v3550
      %v3552 = vpop.f32.mrf.mxu0
      %v3553 = vpop.f32.mrf.mxu0
      %v3554 = vadd.f32 0.0, %v3553
      %v3555 = vpop.f32.mrf.mxu0
      %3556 = vmatprep.mubr.bf16.mxu0 0
      %3557 = vmatmul.mubr.bf16.gmra.mxu0 %v3486
      %v3558 = vpop.f32.mrf.mxu0
      %v3559 = vadd.f32 0.0, %v3558
      %v3560 = vpop.f32.mrf.mxu0
      %v3561 = vpop.f32.mrf.mxu0
      %v3562 = vpop.f32.mrf.mxu0
      %3563 = vdwg.mxu0
      %v3564 = vmul.f32 %v3535, 0.17677669
      %v3565 = vmul.f32 %v3538, 0.17677669
      %v3566 = vmul.f32 %v3543, 0.17677669
      %v3567 = vmul.f32 %v3546, 0.17677669
      %v3568 = vmul.f32 %v3551, 0.17677669
      %v3569 = vmul.f32 %v3554, 0.17677669
      %v3570 = vmul.f32 %v3559, 0.17677669
      %v3571 = vsel %vm1888, %v3564, -inf
      %3572 = vmax.xlane.f32.xlu0 %v3571
      %v3573 = vpop.xlane.xlu0 %3572
      %v3574 = vsel %vm1888, %v3565, -inf
      %3575 = vmax.xlane.f32.xlu0 %v3574
      %v3576 = vpop.xlane.xlu0 %3575
      %v3577 = vsel %vm1888, %v3566, -inf
      %3578 = vmax.xlane.f32.xlu0 %v3577
      %v3579 = vpop.xlane.xlu0 %3578
      %v3580 = vsel %vm1888, %v3567, -inf
      %3581 = vmax.xlane.f32.xlu0 %v3580
      %v3582 = vpop.xlane.xlu0 %3581
      %v3583 = vsel %vm1888, %v3568, -inf
      %3584 = vmax.xlane.f32.xlu0 %v3583
      %v3585 = vpop.xlane.xlu0 %3584
      %v3586 = vsel %vm1888, %v3569, -inf
      %3587 = vmax.xlane.f32.xlu0 %v3586
      %v3588 = vpop.xlane.xlu0 %3587
      %v3589 = vsel %vm1888, %v3570, -inf
      %3590 = vmax.xlane.f32.xlu0 %v3589
      %v3591 = vpop.xlane.xlu0 %3590
      %v3592 = vsub.f32 %v3564, %v3573
      %v3593 = vsub.f32 %v3565, %v3576
      %v3594 = vsub.f32 %v3566, %v3579
      %v3595 = vsub.f32 %v3567, %v3582
      %v3596 = vsub.f32 %v3568, %v3585
      %v3597 = vsub.f32 %v3569, %v3588
      %v3598 = vsub.f32 %v3570, %v3591
      %v3599 = vmul.f32 %v3592, 1.442695
      %v3600 = vpow.pop %v3599
      %v3601 = vmul.f32 %v3593, 1.442695
      %v3602 = vpow.pop %v3601
      %v3603 = vmul.f32 %v3594, 1.442695
      %v3604 = vpow.pop %v3603
      %v3605 = vmul.f32 %v3595, 1.442695
      %v3606 = vpow.pop %v3605
      %v3607 = vmul.f32 %v3596, 1.442695
      %v3608 = vpow.pop %v3607
      %v3609 = vmul.f32 %v3597, 1.442695
      %v3610 = vpow.pop %v3609
      %v3611 = vmul.f32 %v3598, 1.442695
      %v3612 = vpow.pop %v3611
      %v3613 = vsel %vm1888, %v3600, 0.0
      %3614 = vadd.xlane.f32.xlu0 %v3613
      %v3615 = vpop.xlane.xlu0 %3614
      %v3616 = vsel %vm1888, %v3602, 0.0
      %3617 = vadd.xlane.f32.xlu0 %v3616
      %v3618 = vpop.xlane.xlu0 %3617
      %v3619 = vsel %vm1888, %v3604, 0.0
      %3620 = vadd.xlane.f32.xlu0 %v3619
      %v3621 = vpop.xlane.xlu0 %3620
      %v3622 = vsel %vm1888, %v3606, 0.0
      %3623 = vadd.xlane.f32.xlu0 %v3622
      %v3624 = vpop.xlane.xlu0 %3623
      %v3625 = vsel %vm1888, %v3608, 0.0
      %3626 = vadd.xlane.f32.xlu0 %v3625
      %v3627 = vpop.xlane.xlu0 %3626
      %v3628 = vsel %vm1888, %v3610, 0.0
      %3629 = vadd.xlane.f32.xlu0 %v3628
      %v3630 = vpop.xlane.xlu0 %3629
      %v3631 = vsel %vm1888, %v3612, 0.0
      %3632 = vadd.xlane.f32.xlu0 %v3631
      %v3633 = vpop.xlane.xlu0 %3632
      %v3634 = vrcp.pop %v3615
      %v3635 = vrcp.pop %v3618
      %v3636 = vrcp.pop %v3621
      %v3637 = vrcp.pop %v3624
      %v3638 = vrcp.pop %v3627
      %v3639 = vrcp.pop %v3630
      %v3640 = vrcp.pop %v3633
      %v3641 = vmul.f32 %v3600, %v3634
      %v3642 = vmul.f32 %v3602, %v3635
      %v3643 = vmul.f32 %v3604, %v3636
      %v3644 = vmul.f32 %v3606, %v3637
      %v3645 = vmul.f32 %v3608, %v3638
      %v3646 = vmul.f32 %v3610, %v3639
      %v3647 = vmul.f32 %v3612, %v3640
      %v3648 = vpack.c.bf16 %v3642, %v3641
      %v3649 = vpack.c.bf16 %v3644, %v3643
      %v3650 = vpack.c.bf16 %v3646, %v3645
      %v3651 = vpack.c.bf16 %v3647, %v3647
      %3656 = vrot.lane.b32.xlu0 %v3377, 96
      %v3657 = vpop.permute.xlu0 %3656
      %3658 = vrot.lane.b32.xlu0 %v3378, 96
      %v3659 = vpop.permute.xlu0 %3658
      %3660 = vrot.lane.b32.xlu0 %v3379, 96
      %v3661 = vpop.permute.xlu0 %3660
      %3662 = vrot.lane.b32.xlu0 %v3380, 96
      %v3663 = vpop.permute.xlu0 %3662
      %v3668 = vsel %vm1888, %v3648, 0
      %v3671 = vsel %vm1888, %v3649, 0
      %v3674 = vsel %vm1888, %v3650, 0
      %v3677 = vsel %vm1888, %v3651, 0
      %v3680 = vsel %vm1986, %v3663, 0
      %3682 = vmatprep.subr.bf16.mxu0 0
      %3683 = vmatpush1.bf16.msra.mxu0 0
      %3684 = vmatprep.subr.bf16.mxu0 0
      %3685 = vmatpush1.bf16.msra.mxu0 0
      %3686 = vmatprep.subr.bf16.mxu0 0
      %3687 = vmatpush1.bf16.msra.mxu0 0
      %3688 = vmatprep.subr.bf16.mxu0 0
      %3689 = vmatpush1.bf16.msra.mxu0 0
      %3690 = vmatprep.subr.bf16.mxu0 0
      %3691 = vmatpush1.bf16.msra.mxu0 %v3680
      %3692 = vmatprep.subr.bf16.mxu0 0
      %3693 = vmatpush1.bf16.msra.mxu0 %v3661
      %3694 = vmatprep.subr.bf16.mxu0 0
      %3695 = vmatpush1.bf16.msra.mxu0 %v3659
      %3696 = vmatprep.subr.bf16.mxu0 0
      %3697 = vmatpush1.bf16.msra.mxu0 %v3657
      %3698 = vmatprep.subr.bf16.mxu0 0
      %3699 = vmatpush2.bf16.msra.mxu0 0
      %3700 = vmatprep.subr.bf16.mxu0 0
      %3701 = vmatpush2.bf16.msra.mxu0 0
      %3702 = vmatprep.subr.bf16.mxu0 0
      %3703 = vmatpush2.bf16.msra.mxu0 0
      %3704 = vmatprep.subr.bf16.mxu0 0
      %3705 = vmatpush2.bf16.msra.mxu0 0
      %3706 = vmatprep.subr.bf16.mxu0 0
      %3707 = vmatpush2.bf16.msra.mxu0 0
      %3708 = vmatprep.subr.bf16.mxu0 0
      %3709 = vmatpush2.bf16.msra.mxu0 0
      %3710 = vmatprep.subr.bf16.mxu0 0
      %3711 = vmatpush2.bf16.msra.mxu0 0
      %3712 = vmatprep.subr.bf16.mxu0 0
      %3713 = vmatpush2.bf16.msra.mxu0 0
      %3714 = vmatprep.mubr.bf16.mxu0 0
      %3715 = vmatmul.mubr.bf16.gmra.mxu0 %v3668
      %v3716 = vpop.f32.mrf.mxu0
      %v3717 = vadd.f32 0.0, %v3716
      %v3718 = vpop.f32.mrf.mxu0
      %v3719 = vpop.f32.mrf.mxu0
      %v3720 = vadd.f32 0.0, %v3719
      %v3721 = vpop.f32.mrf.mxu0
      %3722 = vmatprep.mubr.bf16.mxu0 0
      %3723 = vmatmul.mubr.bf16.gmra.mxu0 %v3671
      %v3724 = vpop.f32.mrf.mxu0
      %v3725 = vadd.f32 0.0, %v3724
      %v3726 = vpop.f32.mrf.mxu0
      %v3727 = vpop.f32.mrf.mxu0
      %v3728 = vadd.f32 0.0, %v3727
      %v3729 = vpop.f32.mrf.mxu0
      %3730 = vmatprep.mubr.bf16.mxu0 0
      %3731 = vmatmul.mubr.bf16.gmra.mxu0 %v3674
      %v3732 = vpop.f32.mrf.mxu0
      %v3733 = vadd.f32 0.0, %v3732
      %v3734 = vpop.f32.mrf.mxu0
      %v3735 = vpop.f32.mrf.mxu0
      %v3736 = vadd.f32 0.0, %v3735
      %v3737 = vpop.f32.mrf.mxu0
      %3738 = vmatprep.mubr.bf16.mxu0 0
      %3739 = vmatmul.mubr.bf16.gmra.mxu0 %v3677
      %v3740 = vpop.f32.mrf.mxu0
      %v3741 = vadd.f32 0.0, %v3740
      %v3742 = vpop.f32.mrf.mxu0
      %v3743 = vpop.f32.mrf.mxu0
      %v3744 = vpop.f32.mrf.mxu0
      %3745 = vdwg.mxu0
      %3753 = vrot.lane.b32.xlu0 %v3717, 32
      %v3754 = vpop.permute.xlu0 %3753
      %3755 = vrot.lane.b32.xlu0 %v3720, 32
      %v3756 = vpop.permute.xlu0 %3755
      %3757 = vrot.lane.b32.xlu0 %v3725, 32
      %v3758 = vpop.permute.xlu0 %3757
      %3759 = vrot.lane.b32.xlu0 %v3728, 32
      %v3760 = vpop.permute.xlu0 %3759
      %3761 = vrot.lane.b32.xlu0 %v3733, 32
      %v3762 = vpop.permute.xlu0 %3761
      %3763 = vrot.lane.b32.xlu0 %v3736, 32
      %v3764 = vpop.permute.xlu0 %3763
      %3765 = vrot.lane.b32.xlu0 %v3741, 32
      %v3766 = vpop.permute.xlu0 %3765
      %v3774 = vsel %vm1792, %v3431, %v3754
      %v3775 = vsel %vm1792, %v3434, %v3756
      %v3776 = vsel %vm1792, %v3439, %v3758
      %v3777 = vsel %vm1792, %v3442, %v3760
      %v3778 = vsel %vm1792, %v3447, %v3762
      %v3779 = vsel %vm1792, %v3450, %v3764
      %v3780 = vsel %vm1792, %v3455, %v3766
      %v3781 = vpack.c.bf16 %v3775, %v3774
      %v3782 = vpack.c.bf16 %v3777, %v3776
      %v3783 = vpack.c.bf16 %v3779, %v3778
      %v3784 = vpack.c.bf16 %v3780, %v3780
      %v3785 = vpack.c.bf16 %v3023, %v3022
      %v3786 = vpack.c.bf16 %v3025, %v3024
      %v3787 = vpack.c.bf16 %v3027, %v3026
      %v3788 = vpack.c.bf16 %v3029, %v3028
      %v3790 = vlaneseq
      %v3791 = vshrl.u32 %v3790, 7
      %v3792 = vsub.s32 0, %v3791
      %v3793 = vrot.slane %v3031, %v3792
      %v3796 = vsel %vm1539, %v3781, 0
      %v3799 = vsel %vm1539, %v3782, 0
      %v3802 = vsel %vm1539, %v3783, 0
      %v3805 = vsel %vm1539, %v3784, 0
      %3807 = vmatprep.subr.bf16.mxu0 0
      %3808 = vmatpush1.bf16.msra.mxu0 0
      %3809 = vmatprep.subr.bf16.mxu0 0
      %3810 = vmatpush1.bf16.msra.mxu0 0
      %3811 = vmatprep.subr.bf16.mxu0 0
      %3812 = vmatpush1.bf16.msra.mxu0 0
      %3813 = vmatprep.subr.bf16.mxu0 0
      %3814 = vmatpush1.bf16.msra.mxu0 0
      %3815 = vmatprep.subr.bf16.mxu0 0
      %3816 = vmatpush1.bf16.msra.mxu0 %v3788
      %3817 = vmatprep.subr.bf16.mxu0 0
      %3818 = vmatpush1.bf16.msra.mxu0 %v3787
      %3819 = vmatprep.subr.bf16.mxu0 0
      %3820 = vmatpush1.bf16.msra.mxu0 %v3786
      %3821 = vmatprep.subr.bf16.mxu0 0
      %3822 = vmatpush1.bf16.msra.mxu0 %v3785
      %3823 = vmatprep.subr.bf16.mxu0 0
      %3824 = vmatpush2.bf16.msra.mxu0 0
      %3825 = vmatprep.subr.bf16.mxu0 0
      %3826 = vmatpush2.bf16.msra.mxu0 0
      %3827 = vmatprep.subr.bf16.mxu0 0
      %3828 = vmatpush2.bf16.msra.mxu0 0
      %3829 = vmatprep.subr.bf16.mxu0 0
      %3830 = vmatpush2.bf16.msra.mxu0 0
      %3831 = vmatprep.subr.bf16.mxu0 0
      %3832 = vmatpush2.bf16.msra.mxu0 0
      %3833 = vmatprep.subr.bf16.mxu0 0
      %3834 = vmatpush2.bf16.msra.mxu0 0
      %3835 = vmatprep.subr.bf16.mxu0 0
      %3836 = vmatpush2.bf16.msra.mxu0 0
      %3837 = vmatprep.subr.bf16.mxu0 0
      %3838 = vmatpush2.bf16.msra.mxu0 0
      %3839 = vmatprep.mubr.bf16.mxu0 0
      %3840 = vmatmul.mubr.bf16.gmra.mxu0 %v3796
      %v3841 = vpop.f32.mrf.mxu0
      %v3842 = vadd.f32 %v3793, %v3841
      %v3843 = vpop.f32.mrf.mxu0
      %v3844 = vpop.f32.mrf.mxu0
      %v3845 = vadd.f32 %v3793, %v3844
      %v3846 = vpop.f32.mrf.mxu0
      %3847 = vmatprep.mubr.bf16.mxu0 0
      %3848 = vmatmul.mubr.bf16.gmra.mxu0 %v3799
      %v3849 = vpop.f32.mrf.mxu0
      %v3850 = vadd.f32 %v3793, %v3849
      %v3851 = vpop.f32.mrf.mxu0
      %v3852 = vpop.f32.mrf.mxu0
      %v3853 = vadd.f32 %v3793, %v3852
      %v3854 = vpop.f32.mrf.mxu0
      %3855 = vmatprep.mubr.bf16.mxu0 0
      %3856 = vmatmul.mubr.bf16.gmra.mxu0 %v3802
      %v3857 = vpop.f32.mrf.mxu0
      %v3858 = vadd.f32 %v3793, %v3857
      %v3859 = vpop.f32.mrf.mxu0
      %v3860 = vpop.f32.mrf.mxu0
      %v3861 = vadd.f32 %v3793, %v3860
      %v3862 = vpop.f32.mrf.mxu0
      %3863 = vmatprep.mubr.bf16.mxu0 0
      %3864 = vmatmul.mubr.bf16.gmra.mxu0 %v3805
      %v3865 = vpop.f32.mrf.mxu0
      %v3866 = vadd.f32 %v3793, %v3865
      %v3867 = vpop.f32.mrf.mxu0
      %v3868 = vpop.f32.mrf.mxu0
      %v3869 = vpop.f32.mrf.mxu0
      %3870 = vdwg.mxu0
      %v3871 = vadd.f32 %v3842, %v3014
      %v3872 = vadd.f32 %v3845, %v3015
      %v3873 = vadd.f32 %v3850, %v3016
      %v3874 = vadd.f32 %v3853, %v3017
      %v3875 = vadd.f32 %v3858, %v3018
      %v3876 = vadd.f32 %v3861, %v3019
      %v3877 = vadd.f32 %v3866, %v3020
      %s3878 = scalar_lea.vmem %s21, 1
      %v3879 = vld [vmem:[%s3878] sm:$0x1]
      %s3880 = scalar_lea.vmem %s23, 1
      %v3881 = vld [vmem:[%s3880] sm:$0x1]
      %v3882 = vsel %vm1539, %v3871, 0.0
      %3883 = vadd.xlane.f32.xlu0 %v3882
      %v3884 = vpop.xlane.xlu0 %3883
      %v3885 = vsel %vm1539, %v3872, 0.0
      %3886 = vadd.xlane.f32.xlu0 %v3885
      %v3887 = vpop.xlane.xlu0 %3886
      %v3888 = vsel %vm1539, %v3873, 0.0
      %3889 = vadd.xlane.f32.xlu0 %v3888
      %v3890 = vpop.xlane.xlu0 %3889
      %v3891 = vsel %vm1539, %v3874, 0.0
      %3892 = vadd.xlane.f32.xlu0 %v3891
      %v3893 = vpop.xlane.xlu0 %3892
      %v3894 = vsel %vm1539, %v3875, 0.0
      %3895 = vadd.xlane.f32.xlu0 %v3894
      %v3896 = vpop.xlane.xlu0 %3895
      %v3897 = vsel %vm1539, %v3876, 0.0
      %3898 = vadd.xlane.f32.xlu0 %v3897
      %v3899 = vpop.xlane.xlu0 %3898
      %v3900 = vsel %vm1539, %v3877, 0.0
      %3901 = vadd.xlane.f32.xlu0 %v3900
      %v3902 = vpop.xlane.xlu0 %3901
      %v3903 = vmul.f32 %v3884, %v2495
      %v3904 = vmul.f32 %v3887, %v2495
      %v3905 = vmul.f32 %v3890, %v2495
      %v3906 = vmul.f32 %v3893, %v2495
      %v3907 = vmul.f32 %v3896, %v2495
      %v3908 = vmul.f32 %v3899, %v2495
      %v3909 = vmul.f32 %v3902, %v2495
      %v3910 = vsub.f32 %v3871, %v3903
      %v3911 = vsub.f32 %v3872, %v3904
      %v3912 = vsub.f32 %v3873, %v3905
      %v3913 = vsub.f32 %v3874, %v3906
      %v3914 = vsub.f32 %v3875, %v3907
      %v3915 = vsub.f32 %v3876, %v3908
      %v3916 = vsub.f32 %v3877, %v3909
      %v3917 = vmul.f32 %v3910, %v3910
      %v3918 = vmul.f32 %v3911, %v3911
      %v3919 = vmul.f32 %v3912, %v3912
      %v3920 = vmul.f32 %v3913, %v3913
      %v3921 = vmul.f32 %v3914, %v3914
      %v3922 = vmul.f32 %v3915, %v3915
      %v3923 = vmul.f32 %v3916, %v3916
      %v3924 = vsel %vm1539, %v3917, 0.0
      %3925 = vadd.xlane.f32.xlu0 %v3924
      %v3926 = vpop.xlane.xlu0 %3925
      %v3927 = vsel %vm1539, %v3918, 0.0
      %3928 = vadd.xlane.f32.xlu0 %v3927
      %v3929 = vpop.xlane.xlu0 %3928
      %v3930 = vsel %vm1539, %v3919, 0.0
      %3931 = vadd.xlane.f32.xlu0 %v3930
      %v3932 = vpop.xlane.xlu0 %3931
      %v3933 = vsel %vm1539, %v3920, 0.0
      %3934 = vadd.xlane.f32.xlu0 %v3933
      %v3935 = vpop.xlane.xlu0 %3934
      %v3936 = vsel %vm1539, %v3921, 0.0
      %3937 = vadd.xlane.f32.xlu0 %v3936
      %v3938 = vpop.xlane.xlu0 %3937
      %v3939 = vsel %vm1539, %v3922, 0.0
      %3940 = vadd.xlane.f32.xlu0 %v3939
      %v3941 = vpop.xlane.xlu0 %3940
      %v3942 = vsel %vm1539, %v3923, 0.0
      %3943 = vadd.xlane.f32.xlu0 %v3942
      %v3944 = vpop.xlane.xlu0 %3943
      %v3945 = vmul.f32 %v3926, 0.015873017
      %v3946 = vmul.f32 %v3929, 0.015873017
      %v3947 = vmul.f32 %v3932, 0.015873017
      %v3948 = vmul.f32 %v3935, 0.015873017
      %v3949 = vmul.f32 %v3938, 0.015873017
      %v3950 = vmul.f32 %v3941, 0.015873017
      %v3951 = vmul.f32 %v3944, 0.015873017
      %v3952 = vrsqrt.pop %v3945
      %v3953 = vmul.f32 %v3945, %v3952
      %vm3954 = vcmp.eq.f32.partialorder %v3945, inf
      %v3955 = vsel %vm3954, %v3945, %v3953
      %vm3956 = vcmp.eq.f32.partialorder %v3945, 0.0
      %v3957 = vand.u32 %v3945, 2147483648
      %v3958 = vsel %vm3956, %v3957, %v3955
      %v3959 = vrsqrt.pop %v3946
      %v3960 = vmul.f32 %v3946, %v3959
      %vm3961 = vcmp.eq.f32.partialorder %v3946, inf
      %v3962 = vsel %vm3961, %v3946, %v3960
      %vm3963 = vcmp.eq.f32.partialorder %v3946, 0.0
      %v3964 = vand.u32 %v3946, 2147483648
      %v3965 = vsel %vm3963, %v3964, %v3962
      %v3966 = vrsqrt.pop %v3947
      %v3967 = vmul.f32 %v3947, %v3966
      %vm3968 = vcmp.eq.f32.partialorder %v3947, inf
      %v3969 = vsel %vm3968, %v3947, %v3967
      %vm3970 = vcmp.eq.f32.partialorder %v3947, 0.0
      %v3971 = vand.u32 %v3947, 2147483648
      %v3972 = vsel %vm3970, %v3971, %v3969
      %v3973 = vrsqrt.pop %v3948
      %v3974 = vmul.f32 %v3948, %v3973
      %vm3975 = vcmp.eq.f32.partialorder %v3948, inf
      %v3976 = vsel %vm3975, %v3948, %v3974
      %vm3977 = vcmp.eq.f32.partialorder %v3948, 0.0
      %v3978 = vand.u32 %v3948, 2147483648
      %v3979 = vsel %vm3977, %v3978, %v3976
      %v3980 = vrsqrt.pop %v3949
      %v3981 = vmul.f32 %v3949, %v3980
      %vm3982 = vcmp.eq.f32.partialorder %v3949, inf
      %v3983 = vsel %vm3982, %v3949, %v3981
      %vm3984 = vcmp.eq.f32.partialorder %v3949, 0.0
      %v3985 = vand.u32 %v3949, 2147483648
      %v3986 = vsel %vm3984, %v3985, %v3983
      %v3987 = vrsqrt.pop %v3950
      %v3988 = vmul.f32 %v3950, %v3987
      %vm3989 = vcmp.eq.f32.partialorder %v3950, inf
      %v3990 = vsel %vm3989, %v3950, %v3988
      %vm3991 = vcmp.eq.f32.partialorder %v3950, 0.0
      %v3992 = vand.u32 %v3950, 2147483648
      %v3993 = vsel %vm3991, %v3992, %v3990
      %v3994 = vrsqrt.pop %v3951
      %v3995 = vmul.f32 %v3951, %v3994
      %vm3996 = vcmp.eq.f32.partialorder %v3951, inf
      %v3997 = vsel %vm3996, %v3951, %v3995
      %vm3998 = vcmp.eq.f32.partialorder %v3951, 0.0
      %v3999 = vand.u32 %v3951, 2147483648
      %v4000 = vsel %vm3998, %v3999, %v3997
      %v4001 = vadd.f32 %v3958, 0.001
      %v4002 = vadd.f32 %v3965, 0.001
      %v4003 = vadd.f32 %v3972, 0.001
      %v4004 = vadd.f32 %v3979, 0.001
      %v4005 = vadd.f32 %v3986, 0.001
      %v4006 = vadd.f32 %v3993, 0.001
      %v4007 = vadd.f32 %v4000, 0.001
      %v4008 = vrcp.pop %v4001
      %v4009 = vmul.f32 %v3910, %v4008
      %v4010 = vrcp.pop %v4002
      %v4011 = vmul.f32 %v3911, %v4010
      %v4012 = vrcp.pop %v4003
      %v4013 = vmul.f32 %v3912, %v4012
      %v4014 = vrcp.pop %v4004
      %v4015 = vmul.f32 %v3913, %v4014
      %v4016 = vrcp.pop %v4005
      %v4017 = vmul.f32 %v3914, %v4016
      %v4018 = vrcp.pop %v4006
      %v4019 = vmul.f32 %v3915, %v4018
      %v4020 = vrcp.pop %v4007
      %v4021 = vmul.f32 %v3916, %v4020
      %v4023 = vlaneseq
      %v4024 = vshrl.u32 %v4023, 7
      %v4025 = vsub.s32 0, %v4024
      %v4026 = vrot.slane %v3879, %v4025
      %v4028 = vmul.f32 %v4009, %v4026
      %v4029 = vmul.f32 %v4011, %v4026
      %v4030 = vmul.f32 %v4013, %v4026
      %v4031 = vmul.f32 %v4015, %v4026
      %v4032 = vmul.f32 %v4017, %v4026
      %v4033 = vmul.f32 %v4019, %v4026
      %v4034 = vmul.f32 %v4021, %v4026
      %v4036 = vlaneseq
      %v4037 = vshrl.u32 %v4036, 7
      %v4038 = vsub.s32 0, %v4037
      %v4039 = vrot.slane %v3881, %v4038
      %v4041 = vadd.f32 %v4028, %v4039
      %v4042 = vadd.f32 %v4029, %v4039
      %v4043 = vadd.f32 %v4030, %v4039
      %v4044 = vadd.f32 %v4031, %v4039
      %v4045 = vadd.f32 %v4032, %v4039
      %v4046 = vadd.f32 %v4033, %v4039
      %v4047 = vadd.f32 %v4034, %v4039
      %s4048 = scalar_lea.vmem %s25, 64
      %v4049 = vld [vmem:[%s4048] sm:$0xff]
      %v4050 = vld [vmem:[%s4048 + $0x8] sm:$0xff]
      %v4051 = vld [vmem:[%s4048 + $0x10] sm:$0xff]
      %v4052 = vld [vmem:[%s4048 + $0x18] sm:$0xff]
      %v4053 = vld [vmem:[%s4048 + $0x20] sm:$0xff]
      %v4054 = vld [vmem:[%s4048 + $0x28] sm:$0xff]
      %v4055 = vld [vmem:[%s4048 + $0x30] sm:$0xff]
      %v4056 = vld [vmem:[%s4048 + $0x38] sm:$0xff]
      %s4057 = scalar_lea.vmem %s27, 1
      %v4058 = vld [vmem:[%s4057] sm:$0x1]
      %s4059 = scalar_lea.vmem %s29, 128
      %v4060 = vld [vmem:[%s4059] sm:$0xff]
      %v4061 = vld [vmem:[%s4059 + $0x8] sm:$0xff]
      %v4062 = vld [vmem:[%s4059 + $0x10] sm:$0xff]
      %v4063 = vld [vmem:[%s4059 + $0x18] sm:$0xff]
      %v4064 = vld [vmem:[%s4059 + $0x20] sm:$0xff]
      %v4065 = vld [vmem:[%s4059 + $0x28] sm:$0xff]
      %v4066 = vld [vmem:[%s4059 + $0x30] sm:$0xff]
      %v4067 = vld [vmem:[%s4059 + $0x38] sm:$0xff]
      %v4068 = vld [vmem:[%s4059 + $0x40] sm:$0xff]
      %v4069 = vld [vmem:[%s4059 + $0x48] sm:$0xff]
      %v4070 = vld [vmem:[%s4059 + $0x50] sm:$0xff]
      %v4071 = vld [vmem:[%s4059 + $0x58] sm:$0xff]
      %v4072 = vld [vmem:[%s4059 + $0x60] sm:$0xff]
      %v4073 = vld [vmem:[%s4059 + $0x68] sm:$0xff]
      %v4074 = vld [vmem:[%s4059 + $0x70] sm:$0xff]
      %v4075 = vld [vmem:[%s4059 + $0x78] sm:$0xff]
      %s4076 = scalar_lea.vmem %s31, 1
      %v4077 = vld [vmem:[%s4076] sm:$0x1]
      %v4078 = vpack.c.bf16 %v4042, %v4041
      %v4079 = vpack.c.bf16 %v4044, %v4043
      %v4080 = vpack.c.bf16 %v4046, %v4045
      %v4081 = vpack.c.bf16 %v4047, %v4047
      %v4082 = vpack.c.bf16 %v4050, %v4049
      %v4083 = vpack.c.bf16 %v4052, %v4051
      %v4084 = vpack.c.bf16 %v4054, %v4053
      %v4085 = vpack.c.bf16 %v4056, %v4055
      %v4087 = vlaneseq
      %v4088 = vshrl.u32 %v4087, 7
      %v4089 = vsub.s32 0, %v4088
      %v4090 = vrot.slane %v4058, %v4089
      %v4093 = vsel %vm1539, %v4078, 0
      %v4096 = vsel %vm1539, %v4079, 0
      %v4099 = vsel %vm1539, %v4080, 0
      %v4102 = vsel %vm1539, %v4081, 0
      %4104 = vmatprep.subr.bf16.mxu0 0
      %4105 = vmatpush1.bf16.msra.mxu0 0
      %4106 = vmatprep.subr.bf16.mxu0 0
      %4107 = vmatpush1.bf16.msra.mxu0 0
      %4108 = vmatprep.subr.bf16.mxu0 0
      %4109 = vmatpush1.bf16.msra.mxu0 0
      %4110 = vmatprep.subr.bf16.mxu0 0
      %4111 = vmatpush1.bf16.msra.mxu0 0
      %4112 = vmatprep.subr.bf16.mxu0 0
      %4113 = vmatpush1.bf16.msra.mxu0 %v4085
      %4114 = vmatprep.subr.bf16.mxu0 0
      %4115 = vmatpush1.bf16.msra.mxu0 %v4084
      %4116 = vmatprep.subr.bf16.mxu0 0
      %4117 = vmatpush1.bf16.msra.mxu0 %v4083
      %4118 = vmatprep.subr.bf16.mxu0 0
      %4119 = vmatpush1.bf16.msra.mxu0 %v4082
      %4120 = vmatprep.subr.bf16.mxu0 0
      %4121 = vmatpush2.bf16.msra.mxu0 0
      %4122 = vmatprep.subr.bf16.mxu0 0
      %4123 = vmatpush2.bf16.msra.mxu0 0
      %4124 = vmatprep.subr.bf16.mxu0 0
      %4125 = vmatpush2.bf16.msra.mxu0 0
      %4126 = vmatprep.subr.bf16.mxu0 0
      %4127 = vmatpush2.bf16.msra.mxu0 0
      %4128 = vmatprep.subr.bf16.mxu0 0
      %4129 = vmatpush2.bf16.msra.mxu0 0
      %4130 = vmatprep.subr.bf16.mxu0 0
      %4131 = vmatpush2.bf16.msra.mxu0 0
      %4132 = vmatprep.subr.bf16.mxu0 0
      %4133 = vmatpush2.bf16.msra.mxu0 0
      %4134 = vmatprep.subr.bf16.mxu0 0
      %4135 = vmatpush2.bf16.msra.mxu0 0
      %4136 = vmatprep.mubr.bf16.mxu0 0
      %4137 = vmatmul.mubr.bf16.gmra.mxu0 %v4093
      %v4138 = vpop.f32.mrf.mxu0
      %v4139 = vadd.f32 %v4090, %v4138
      %v4140 = vpop.f32.mrf.mxu0
      %v4141 = vpop.f32.mrf.mxu0
      %v4142 = vadd.f32 %v4090, %v4141
      %v4143 = vpop.f32.mrf.mxu0
      %4144 = vmatprep.mubr.bf16.mxu0 0
      %4145 = vmatmul.mubr.bf16.gmra.mxu0 %v4096
      %v4146 = vpop.f32.mrf.mxu0
      %v4147 = vadd.f32 %v4090, %v4146
      %v4148 = vpop.f32.mrf.mxu0
      %v4149 = vpop.f32.mrf.mxu0
      %v4150 = vadd.f32 %v4090, %v4149
      %v4151 = vpop.f32.mrf.mxu0
      %4152 = vmatprep.mubr.bf16.mxu0 0
      %4153 = vmatmul.mubr.bf16.gmra.mxu0 %v4099
      %v4154 = vpop.f32.mrf.mxu0
      %v4155 = vadd.f32 %v4090, %v4154
      %v4156 = vpop.f32.mrf.mxu0
      %v4157 = vpop.f32.mrf.mxu0
      %v4158 = vadd.f32 %v4090, %v4157
      %v4159 = vpop.f32.mrf.mxu0
      %4160 = vmatprep.mubr.bf16.mxu0 0
      %4161 = vmatmul.mubr.bf16.gmra.mxu0 %v4102
      %v4162 = vpop.f32.mrf.mxu0
      %v4163 = vadd.f32 %v4090, %v4162
      %v4164 = vpop.f32.mrf.mxu0
      %v4165 = vpop.f32.mrf.mxu0
      %v4166 = vpop.f32.mrf.mxu0
      %4167 = vdwg.mxu0
      %v4168 = vmax.f32 %v4139, 0.0
      %v4169 = vmax.f32 %v4142, 0.0
      %v4170 = vmax.f32 %v4147, 0.0
      %v4171 = vmax.f32 %v4150, 0.0
      %v4172 = vmax.f32 %v4155, 0.0
      %v4173 = vmax.f32 %v4158, 0.0
      %v4174 = vmax.f32 %v4163, 0.0
      %v4175 = vpack.c.bf16 %v4169, %v4168
      %v4176 = vpack.c.bf16 %v4171, %v4170
      %v4177 = vpack.c.bf16 %v4173, %v4172
      %v4178 = vpack.c.bf16 %v4174, %v4174
      %v4179 = vpack.c.bf16 %v4061, %v4060
      %v4180 = vpack.c.bf16 %v4063, %v4062
      %v4181 = vpack.c.bf16 %v4065, %v4064
      %v4182 = vpack.c.bf16 %v4067, %v4066
      %v4183 = vpack.c.bf16 %v4069, %v4068
      %v4184 = vpack.c.bf16 %v4071, %v4070
      %v4185 = vpack.c.bf16 %v4073, %v4072
      %v4186 = vpack.c.bf16 %v4075, %v4074
      %v4188 = vlaneseq
      %v4189 = vshrl.u32 %v4188, 7
      %v4190 = vsub.s32 0, %v4189
      %v4191 = vrot.slane %v4077, %v4190
      %4193 = vmatprep.subr.bf16.mxu0 0
      %4194 = vmatpush1.bf16.msra.mxu0 %v4186
      %4195 = vmatprep.subr.bf16.mxu0 0
      %4196 = vmatpush1.bf16.msra.mxu0 %v4185
      %4197 = vmatprep.subr.bf16.mxu0 0
      %4198 = vmatpush1.bf16.msra.mxu0 %v4184
      %4199 = vmatprep.subr.bf16.mxu0 0
      %4200 = vmatpush1.bf16.msra.mxu0 %v4183
      %4201 = vmatprep.subr.bf16.mxu0 0
      %4202 = vmatpush1.bf16.msra.mxu0 %v4182
      %4203 = vmatprep.subr.bf16.mxu0 0
      %4204 = vmatpush1.bf16.msra.mxu0 %v4181
      %4205 = vmatprep.subr.bf16.mxu0 0
      %4206 = vmatpush1.bf16.msra.mxu0 %v4180
      %4207 = vmatprep.subr.bf16.mxu0 0
      %4208 = vmatpush1.bf16.msra.mxu0 %v4179
      %4209 = vmatprep.subr.bf16.mxu0 0
      %4210 = vmatpush2.bf16.msra.mxu0 0
      %4211 = vmatprep.subr.bf16.mxu0 0
      %4212 = vmatpush2.bf16.msra.mxu0 0
      %4213 = vmatprep.subr.bf16.mxu0 0
      %4214 = vmatpush2.bf16.msra.mxu0 0
      %4215 = vmatprep.subr.bf16.mxu0 0
      %4216 = vmatpush2.bf16.msra.mxu0 0
      %4217 = vmatprep.subr.bf16.mxu0 0
      %4218 = vmatpush2.bf16.msra.mxu0 0
      %4219 = vmatprep.subr.bf16.mxu0 0
      %4220 = vmatpush2.bf16.msra.mxu0 0
      %4221 = vmatprep.subr.bf16.mxu0 0
      %4222 = vmatpush2.bf16.msra.mxu0 0
      %4223 = vmatprep.subr.bf16.mxu0 0
      %4224 = vmatpush2.bf16.msra.mxu0 0
      %4225 = vmatprep.mubr.bf16.mxu0 0
      %4226 = vmatmul.mubr.bf16.gmra.mxu0 %v4175
      %v4227 = vpop.f32.mrf.mxu0
      %v4228 = vadd.f32 %v4191, %v4227
      %v4229 = vpop.f32.mrf.mxu0
      %v4230 = vpop.f32.mrf.mxu0
      %v4231 = vadd.f32 %v4191, %v4230
      %v4232 = vpop.f32.mrf.mxu0
      %4233 = vmatprep.mubr.bf16.mxu0 0
      %4234 = vmatmul.mubr.bf16.gmra.mxu0 %v4176
      %v4235 = vpop.f32.mrf.mxu0
      %v4236 = vadd.f32 %v4191, %v4235
      %v4237 = vpop.f32.mrf.mxu0
      %v4238 = vpop.f32.mrf.mxu0
      %v4239 = vadd.f32 %v4191, %v4238
      %v4240 = vpop.f32.mrf.mxu0
      %4241 = vmatprep.mubr.bf16.mxu0 0
      %4242 = vmatmul.mubr.bf16.gmra.mxu0 %v4177
      %v4243 = vpop.f32.mrf.mxu0
      %v4244 = vadd.f32 %v4191, %v4243
      %v4245 = vpop.f32.mrf.mxu0
      %v4246 = vpop.f32.mrf.mxu0
      %v4247 = vadd.f32 %v4191, %v4246
      %v4248 = vpop.f32.mrf.mxu0
      %4249 = vmatprep.mubr.bf16.mxu0 0
      %4250 = vmatmul.mubr.bf16.gmra.mxu0 %v4178
      %v4251 = vpop.f32.mrf.mxu0
      %v4252 = vadd.f32 %v4191, %v4251
      %v4253 = vpop.f32.mrf.mxu0
      %v4254 = vpop.f32.mrf.mxu0
      %v4255 = vpop.f32.mrf.mxu0
      %4256 = vdwg.mxu0
      %v4257 = vadd.f32 %v4228, %v4041
      %v4258 = vadd.f32 %v4231, %v4042
      %v4259 = vadd.f32 %v4236, %v4043
      %v4260 = vadd.f32 %v4239, %v4044
      %v4261 = vadd.f32 %v4244, %v4045
      %v4262 = vadd.f32 %v4247, %v4046
      %v4263 = vadd.f32 %v4252, %v4047
      %s4264 = scalar_lea.vmem %s33, 1
      %v4265 = vld [vmem:[%s4264] sm:$0x1]
      %s4266 = scalar_lea.vmem %s35, 1
      %v4267 = vld [vmem:[%s4266] sm:$0x1]
      %v4268 = vsel %vm1539, %v4257, 0.0
      %4269 = vadd.xlane.f32.xlu0 %v4268
      %v4270 = vpop.xlane.xlu0 %4269
      %v4271 = vsel %vm1539, %v4258, 0.0
      %4272 = vadd.xlane.f32.xlu0 %v4271
      %v4273 = vpop.xlane.xlu0 %4272
      %v4274 = vsel %vm1539, %v4259, 0.0
      %4275 = vadd.xlane.f32.xlu0 %v4274
      %v4276 = vpop.xlane.xlu0 %4275
      %v4277 = vsel %vm1539, %v4260, 0.0
      %4278 = vadd.xlane.f32.xlu0 %v4277
      %v4279 = vpop.xlane.xlu0 %4278
      %v4280 = vsel %vm1539, %v4261, 0.0
      %4281 = vadd.xlane.f32.xlu0 %v4280
      %v4282 = vpop.xlane.xlu0 %4281
      %v4283 = vsel %vm1539, %v4262, 0.0
      %4284 = vadd.xlane.f32.xlu0 %v4283
      %v4285 = vpop.xlane.xlu0 %4284
      %v4286 = vsel %vm1539, %v4263, 0.0
      %4287 = vadd.xlane.f32.xlu0 %v4286
      %v4288 = vpop.xlane.xlu0 %4287
      %v4289 = vmul.f32 %v4270, %v2495
      %v4290 = vmul.f32 %v4273, %v2495
      %v4291 = vmul.f32 %v4276, %v2495
      %v4292 = vmul.f32 %v4279, %v2495
      %v4293 = vmul.f32 %v4282, %v2495
      %v4294 = vmul.f32 %v4285, %v2495
      %v4295 = vmul.f32 %v4288, %v2495
      %v4296 = vsub.f32 %v4257, %v4289
      %v4297 = vsub.f32 %v4258, %v4290
      %v4298 = vsub.f32 %v4259, %v4291
      %v4299 = vsub.f32 %v4260, %v4292
      %v4300 = vsub.f32 %v4261, %v4293
      %v4301 = vsub.f32 %v4262, %v4294
      %v4302 = vsub.f32 %v4263, %v4295
      %v4303 = vmul.f32 %v4296, %v4296
      %v4304 = vmul.f32 %v4297, %v4297
      %v4305 = vmul.f32 %v4298, %v4298
      %v4306 = vmul.f32 %v4299, %v4299
      %v4307 = vmul.f32 %v4300, %v4300
      %v4308 = vmul.f32 %v4301, %v4301
      %v4309 = vmul.f32 %v4302, %v4302
      %v4310 = vsel %vm1539, %v4303, 0.0
      %4311 = vadd.xlane.f32.xlu0 %v4310
      %v4312 = vpop.xlane.xlu0 %4311
      %v4313 = vsel %vm1539, %v4304, 0.0
      %4314 = vadd.xlane.f32.xlu0 %v4313
      %v4315 = vpop.xlane.xlu0 %4314
      %v4316 = vsel %vm1539, %v4305, 0.0
      %4317 = vadd.xlane.f32.xlu0 %v4316
      %v4318 = vpop.xlane.xlu0 %4317
      %v4319 = vsel %vm1539, %v4306, 0.0
      %4320 = vadd.xlane.f32.xlu0 %v4319
      %v4321 = vpop.xlane.xlu0 %4320
      %v4322 = vsel %vm1539, %v4307, 0.0
      %4323 = vadd.xlane.f32.xlu0 %v4322
      %v4324 = vpop.xlane.xlu0 %4323
      %v4325 = vsel %vm1539, %v4308, 0.0
      %4326 = vadd.xlane.f32.xlu0 %v4325
      %v4327 = vpop.xlane.xlu0 %4326
      %v4328 = vsel %vm1539, %v4309, 0.0
      %4329 = vadd.xlane.f32.xlu0 %v4328
      %v4330 = vpop.xlane.xlu0 %4329
      %v4331 = vmul.f32 %v4312, 0.015873017
      %v4332 = vmul.f32 %v4315, 0.015873017
      %v4333 = vmul.f32 %v4318, 0.015873017
      %v4334 = vmul.f32 %v4321, 0.015873017
      %v4335 = vmul.f32 %v4324, 0.015873017
      %v4336 = vmul.f32 %v4327, 0.015873017
      %v4337 = vmul.f32 %v4330, 0.015873017
      %v4338 = vrsqrt.pop %v4331
      %v4339 = vmul.f32 %v4331, %v4338
      %vm4340 = vcmp.eq.f32.partialorder %v4331, inf
      %v4341 = vsel %vm4340, %v4331, %v4339
      %vm4342 = vcmp.eq.f32.partialorder %v4331, 0.0
      %v4343 = vand.u32 %v4331, 2147483648
      %v4344 = vsel %vm4342, %v4343, %v4341
      %v4345 = vrsqrt.pop %v4332
      %v4346 = vmul.f32 %v4332, %v4345
      %vm4347 = vcmp.eq.f32.partialorder %v4332, inf
      %v4348 = vsel %vm4347, %v4332, %v4346
      %vm4349 = vcmp.eq.f32.partialorder %v4332, 0.0
      %v4350 = vand.u32 %v4332, 2147483648
      %v4351 = vsel %vm4349, %v4350, %v4348
      %v4352 = vrsqrt.pop %v4333
      %v4353 = vmul.f32 %v4333, %v4352
      %vm4354 = vcmp.eq.f32.partialorder %v4333, inf
      %v4355 = vsel %vm4354, %v4333, %v4353
      %vm4356 = vcmp.eq.f32.partialorder %v4333, 0.0
      %v4357 = vand.u32 %v4333, 2147483648
      %v4358 = vsel %vm4356, %v4357, %v4355
      %v4359 = vrsqrt.pop %v4334
      %v4360 = vmul.f32 %v4334, %v4359
      %vm4361 = vcmp.eq.f32.partialorder %v4334, inf
      %v4362 = vsel %vm4361, %v4334, %v4360
      %vm4363 = vcmp.eq.f32.partialorder %v4334, 0.0
      %v4364 = vand.u32 %v4334, 2147483648
      %v4365 = vsel %vm4363, %v4364, %v4362
      %v4366 = vrsqrt.pop %v4335
      %v4367 = vmul.f32 %v4335, %v4366
      %vm4368 = vcmp.eq.f32.partialorder %v4335, inf
      %v4369 = vsel %vm4368, %v4335, %v4367
      %vm4370 = vcmp.eq.f32.partialorder %v4335, 0.0
      %v4371 = vand.u32 %v4335, 2147483648
      %v4372 = vsel %vm4370, %v4371, %v4369
      %v4373 = vrsqrt.pop %v4336
      %v4374 = vmul.f32 %v4336, %v4373
      %vm4375 = vcmp.eq.f32.partialorder %v4336, inf
      %v4376 = vsel %vm4375, %v4336, %v4374
      %vm4377 = vcmp.eq.f32.partialorder %v4336, 0.0
      %v4378 = vand.u32 %v4336, 2147483648
      %v4379 = vsel %vm4377, %v4378, %v4376
      %v4380 = vrsqrt.pop %v4337
      %v4381 = vmul.f32 %v4337, %v4380
      %vm4382 = vcmp.eq.f32.partialorder %v4337, inf
      %v4383 = vsel %vm4382, %v4337, %v4381
      %vm4384 = vcmp.eq.f32.partialorder %v4337, 0.0
      %v4385 = vand.u32 %v4337, 2147483648
      %v4386 = vsel %vm4384, %v4385, %v4383
      %v4387 = vadd.f32 %v4344, 0.001
      %v4388 = vadd.f32 %v4351, 0.001
      %v4389 = vadd.f32 %v4358, 0.001
      %v4390 = vadd.f32 %v4365, 0.001
      %v4391 = vadd.f32 %v4372, 0.001
      %v4392 = vadd.f32 %v4379, 0.001
      %v4393 = vadd.f32 %v4386, 0.001
      %v4394 = vrcp.pop %v4387
      %v4395 = vmul.f32 %v4296, %v4394
      %v4396 = vrcp.pop %v4388
      %v4397 = vmul.f32 %v4297, %v4396
      %v4398 = vrcp.pop %v4389
      %v4399 = vmul.f32 %v4298, %v4398
      %v4400 = vrcp.pop %v4390
      %v4401 = vmul.f32 %v4299, %v4400
      %v4402 = vrcp.pop %v4391
      %v4403 = vmul.f32 %v4300, %v4402
      %v4404 = vrcp.pop %v4392
      %v4405 = vmul.f32 %v4301, %v4404
      %v4406 = vrcp.pop %v4393
      %v4407 = vmul.f32 %v4302, %v4406
      %v4409 = vlaneseq
      %v4410 = vshrl.u32 %v4409, 7
      %v4411 = vsub.s32 0, %v4410
      %v4412 = vrot.slane %v4265, %v4411
      %v4414 = vmul.f32 %v4395, %v4412
      %v4415 = vmul.f32 %v4397, %v4412
      %v4416 = vmul.f32 %v4399, %v4412
      %v4417 = vmul.f32 %v4401, %v4412
      %v4418 = vmul.f32 %v4403, %v4412
      %v4419 = vmul.f32 %v4405, %v4412
      %v4420 = vmul.f32 %v4407, %v4412
      %v4422 = vlaneseq
      %v4423 = vshrl.u32 %v4422, 7
      %v4424 = vsub.s32 0, %v4423
      %v4425 = vrot.slane %v4267, %v4424
      %v4427 = vadd.f32 %v4414, %v4425
      %v4428 = vadd.f32 %v4415, %v4425
      %v4429 = vadd.f32 %v4416, %v4425
      %v4430 = vadd.f32 %v4417, %v4425
      %v4431 = vadd.f32 %v4418, %v4425
      %v4432 = vadd.f32 %v4419, %v4425
      %v4433 = vadd.f32 %v4420, %v4425
      %v4434 = vld [vmem:[%s73] sm:$0xff]
      %v4435 = vld [vmem:[%s73 + $0x8] sm:$0xff]
      %v4436 = vld [vmem:[%s73 + $0x10] sm:$0xff]
      %v4437 = vld [vmem:[%s73 + $0x18] sm:$0xff]
      %v4438 = vld [vmem:[%s73 + $0x20] sm:$0xff]
      %v4439 = vld [vmem:[%s73 + $0x28] sm:$0xff]
      %v4440 = vld [vmem:[%s73 + $0x30] sm:$0xff]
      %v4441 = vld [vmem:[%s73 + $0x38] sm:$0xff]
      %v4442 = vld [vmem:[%s75] sm:$0x1]
      %v4443 = vld [vmem:[%s77] sm:$0x1]
      %v4444 = vld [vmem:[%s79] sm:$0x1]
      %v4445 = vld [vmem:[%s81] sm:$0xff]
      %v4446 = vld [vmem:[%s81 + $0x8] sm:$0xff]
      %v4447 = vld [vmem:[%s81 + $0x10] sm:$0xff]
      %v4448 = vld [vmem:[%s81 + $0x18] sm:$0xff]
      %v4449 = vld [vmem:[%s81 + $0x20] sm:$0xff]
      %v4450 = vld [vmem:[%s81 + $0x28] sm:$0xff]
      %v4451 = vld [vmem:[%s81 + $0x30] sm:$0xff]
      %v4452 = vld [vmem:[%s81 + $0x38] sm:$0xff]
      %v4453 = vld [vmem:[%s83] sm:$0x1]
      %v4454 = vpack.c.bf16 %v4433, %v4433
      %v4455 = vpack.c.bf16 %v4435, %v4434
      %v4456 = vpack.c.bf16 %v4437, %v4436
      %v4457 = vpack.c.bf16 %v4439, %v4438
      %v4458 = vpack.c.bf16 %v4441, %v4440
      %v4460 = vlaneseq
      %v4461 = vshrl.u32 %v4460, 7
      %v4462 = vsub.s32 0, %v4461
      %v4463 = vrot.slane %v4442, %v4462
      %v4466 = vsel %vm1539, %v4454, 0
      %4468 = vmatprep.subr.bf16.mxu0 0
      %4469 = vmatpush1.bf16.msra.mxu0 0
      %4470 = vmatprep.subr.bf16.mxu0 0
      %4471 = vmatpush1.bf16.msra.mxu0 0
      %4472 = vmatprep.subr.bf16.mxu0 0
      %4473 = vmatpush1.bf16.msra.mxu0 0
      %4474 = vmatprep.subr.bf16.mxu0 0
      %4475 = vmatpush1.bf16.msra.mxu0 0
      %4476 = vmatprep.subr.bf16.mxu0 0
      %4477 = vmatpush1.bf16.msra.mxu0 %v4458
      %4478 = vmatprep.subr.bf16.mxu0 0
      %4479 = vmatpush1.bf16.msra.mxu0 %v4457
      %4480 = vmatprep.subr.bf16.mxu0 0
      %4481 = vmatpush1.bf16.msra.mxu0 %v4456
      %4482 = vmatprep.subr.bf16.mxu0 0
      %4483 = vmatpush1.bf16.msra.mxu0 %v4455
      %4484 = vmatprep.subr.bf16.mxu0 0
      %4485 = vmatpush2.bf16.msra.mxu0 0
      %4486 = vmatprep.subr.bf16.mxu0 0
      %4487 = vmatpush2.bf16.msra.mxu0 0
      %4488 = vmatprep.subr.bf16.mxu0 0
      %4489 = vmatpush2.bf16.msra.mxu0 0
      %4490 = vmatprep.subr.bf16.mxu0 0
      %4491 = vmatpush2.bf16.msra.mxu0 0
      %4492 = vmatprep.subr.bf16.mxu0 0
      %4493 = vmatpush2.bf16.msra.mxu0 0
      %4494 = vmatprep.subr.bf16.mxu0 0
      %4495 = vmatpush2.bf16.msra.mxu0 0
      %4496 = vmatprep.subr.bf16.mxu0 0
      %4497 = vmatpush2.bf16.msra.mxu0 0
      %4498 = vmatprep.subr.bf16.mxu0 0
      %4499 = vmatpush2.bf16.msra.mxu0 0
      %4500 = vmatprep.mubr.bf16.mxu0 0
      %4501 = vmatmul.mubr.bf16.gmra.mxu0 %v4466
      %v4502 = vpop.f32.mrf.mxu0
      %v4503 = vadd.f32 %v4463, %v4502
      %v4504 = vpop.f32.mrf.mxu0
      %v4505 = vpop.f32.mrf.mxu0
      %v4506 = vpop.f32.mrf.mxu0
      %4507 = vdwg.mxu0
      %v4508 = vmax.f32 %v4503, 0.0
      %v4509 = vsel %vm1539, %v4508, 0.0
      %4510 = vadd.xlane.f32.xlu0 %v4509
      %v4511 = vpop.xlane.xlu0 %4510
      %v4512 = vmul.f32 %v4511, %v2495
      %v4513 = vsub.f32 %v4508, %v4512
      %v4514 = vmul.f32 %v4513, %v4513
      %v4515 = vsel %vm1539, %v4514, 0.0
      %4516 = vadd.xlane.f32.xlu0 %v4515
      %v4517 = vpop.xlane.xlu0 %4516
      %v4518 = vmul.f32 %v4517, 0.015873017
      %v4519 = vrsqrt.pop %v4518
      %v4520 = vmul.f32 %v4518, %v4519
      %vm4521 = vcmp.eq.f32.partialorder %v4518, inf
      %v4522 = vsel %vm4521, %v4518, %v4520
      %vm4523 = vcmp.eq.f32.partialorder %v4518, 0.0
      %v4524 = vand.u32 %v4518, 2147483648
      %v4525 = vsel %vm4523, %v4524, %v4522
      %v4526 = vadd.f32 %v4525, 0.001
      %v4527 = vrcp.pop %v4526
      %v4528 = vmul.f32 %v4513, %v4527
      %v4530 = vlaneseq
      %v4531 = vshrl.u32 %v4530, 7
      %v4532 = vsub.s32 0, %v4531
      %v4533 = vrot.slane %v4443, %v4532
      %v4535 = vmul.f32 %v4528, %v4533
      %v4537 = vlaneseq
      %v4538 = vshrl.u32 %v4537, 7
      %v4539 = vsub.s32 0, %v4538
      %v4540 = vrot.slane %v4444, %v4539
      %v4542 = vadd.f32 %v4535, %v4540
      %v4543 = vpack.c.bf16 %v4542, %v4542
      %v4544 = vpack.c.bf16 %v4446, %v4445
      %v4545 = vpack.c.bf16 %v4448, %v4447
      %v4546 = vpack.c.bf16 %v4450, %v4449
      %v4547 = vpack.c.bf16 %v4452, %v4451
      %v4549 = vlaneseq
      %v4550 = vshrl.u32 %v4549, 7
      %v4551 = vsub.s32 0, %v4550
      %v4552 = vrot.slane %v4453, %v4551
      %v4555 = vsel %vm1539, %v4543, 0
      %4557 = vmatprep.subr.bf16.mxu0 0
      %4558 = vmatpush1.bf16.msra.mxu0 0
      %4559 = vmatprep.subr.bf16.mxu0 0
      %4560 = vmatpush1.bf16.msra.mxu0 0
      %4561 = vmatprep.subr.bf16.mxu0 0
      %4562 = vmatpush1.bf16.msra.mxu0 0
      %4563 = vmatprep.subr.bf16.mxu0 0
      %4564 = vmatpush1.bf16.msra.mxu0 0
      %4565 = vmatprep.subr.bf16.mxu0 0
      %4566 = vmatpush1.bf16.msra.mxu0 %v4547
      %4567 = vmatprep.subr.bf16.mxu0 0
      %4568 = vmatpush1.bf16.msra.mxu0 %v4546
      %4569 = vmatprep.subr.bf16.mxu0 0
      %4570 = vmatpush1.bf16.msra.mxu0 %v4545
      %4571 = vmatprep.subr.bf16.mxu0 0
      %4572 = vmatpush1.bf16.msra.mxu0 %v4544
      %4573 = vmatprep.subr.bf16.mxu0 0
      %4574 = vmatpush2.bf16.msra.mxu0 0
      %4575 = vmatprep.subr.bf16.mxu0 0
      %4576 = vmatpush2.bf16.msra.mxu0 0
      %4577 = vmatprep.subr.bf16.mxu0 0
      %4578 = vmatpush2.bf16.msra.mxu0 0
      %4579 = vmatprep.subr.bf16.mxu0 0
      %4580 = vmatpush2.bf16.msra.mxu0 0
      %4581 = vmatprep.subr.bf16.mxu0 0
      %4582 = vmatpush2.bf16.msra.mxu0 0
      %4583 = vmatprep.subr.bf16.mxu0 0
      %4584 = vmatpush2.bf16.msra.mxu0 0
      %4585 = vmatprep.subr.bf16.mxu0 0
      %4586 = vmatpush2.bf16.msra.mxu0 0
      %4587 = vmatprep.subr.bf16.mxu0 0
      %4588 = vmatpush2.bf16.msra.mxu0 0
      %4589 = vmatprep.mubr.bf16.mxu0 0
      %4590 = vmatmul.mubr.bf16.gmra.mxu0 %v4555
      %v4591 = vpop.f32.mrf.mxu0
      %v4592 = vadd.f32 %v4552, %v4591
      %v4593 = vpop.f32.mrf.mxu0
      %v4594 = vpop.f32.mrf.mxu0
      %v4595 = vpop.f32.mrf.mxu0
      %4596 = vdwg.mxu0
      %4597 = vst [vmem:[%s1492] sm:$0xff] %v4592
      %v4598 = vld [vmem:[%s1487] sm:$0xff]
      %v4599 = vld [vmem:[%s1487 + $0x8] sm:$0xff]
      %v4600 = vld [vmem:[%s11] sm:$0xff]
      %v4601 = vld [vmem:[%s11 + $0x8] sm:$0xff]
      %v4602 = vld [vmem:[%s11 + $0x10] sm:$0xff]
      %v4603 = vld [vmem:[%s11 + $0x18] sm:$0xff]
      %v4604 = vld [vmem:[%s11 + $0x20] sm:$0xff]
      %v4605 = vld [vmem:[%s11 + $0x28] sm:$0xff]
      %v4606 = vld [vmem:[%s11 + $0x30] sm:$0xff]
      %v4607 = vld [vmem:[%s11 + $0x38] sm:$0xff]
      %v4608 = vld [vmem:[%s11 + $0x40] sm:$0xff]
      %v4609 = vld [vmem:[%s11 + $0x48] sm:$0xff]
      %v4610 = vld [vmem:[%s11 + $0x50] sm:$0xff]
      %v4611 = vld [vmem:[%s11 + $0x58] sm:$0xff]
      %v4612 = vld [vmem:[%s11 + $0x60] sm:$0xff]
      %v4613 = vld [vmem:[%s11 + $0x68] sm:$0xff]
      %v4614 = vld [vmem:[%s11 + $0x70] sm:$0xff]
      %v4615 = vld [vmem:[%s11 + $0x78] sm:$0xff]
      %v4616 = vpack.c.bf16 %v4599, %v4598
      %v4617 = vpack.c.bf16 %v4601, %v4600
      %v4618 = vpack.c.bf16 %v4603, %v4602
      %v4619 = vpack.c.bf16 %v4605, %v4604
      %v4620 = vpack.c.bf16 %v4607, %v4606
      %v4621 = vpack.c.bf16 %v4609, %v4608
      %v4622 = vpack.c.bf16 %v4611, %v4610
      %v4623 = vpack.c.bf16 %v4613, %v4612
      %v4624 = vpack.c.bf16 %v4615, %v4614
      %v4625 = vld [vmem:[%s7] sm:$0xff]
      %v4626 = vld [vmem:[%s7 + $0x8] sm:$0xff]
      %4627 = vmatprep.subr.bf16.mxu0 0
      %4628 = vmatpush1.bf16.msra.mxu0 %v4624
      %4629 = vmatprep.subr.bf16.mxu0 0
      %4630 = vmatpush1.bf16.msra.mxu0 %v4623
      %4631 = vmatprep.subr.bf16.mxu0 0
      %4632 = vmatpush1.bf16.msra.mxu0 %v4622
      %4633 = vmatprep.subr.bf16.mxu0 0
      %4634 = vmatpush1.bf16.msra.mxu0 %v4621
      %4635 = vmatprep.subr.bf16.mxu0 0
      %4636 = vmatpush1.bf16.msra.mxu0 %v4620
      %4637 = vmatprep.subr.bf16.mxu0 0
      %4638 = vmatpush1.bf16.msra.mxu0 %v4619
      %4639 = vmatprep.subr.bf16.mxu0 0
      %4640 = vmatpush1.bf16.msra.mxu0 %v4618
      %4641 = vmatprep.subr.bf16.mxu0 0
      %4642 = vmatpush1.bf16.msra.mxu0 %v4617
      %4643 = vmatprep.subr.bf16.mxu0 0
      %4644 = vmatpush2.bf16.msra.mxu0 0
      %4645 = vmatprep.subr.bf16.mxu0 0
      %4646 = vmatpush2.bf16.msra.mxu0 0
      %4647 = vmatprep.subr.bf16.mxu0 0
      %4648 = vmatpush2.bf16.msra.mxu0 0
      %4649 = vmatprep.subr.bf16.mxu0 0
      %4650 = vmatpush2.bf16.msra.mxu0 0
      %4651 = vmatprep.subr.bf16.mxu0 0
      %4652 = vmatpush2.bf16.msra.mxu0 0
      %4653 = vmatprep.subr.bf16.mxu0 0
      %4654 = vmatpush2.bf16.msra.mxu0 0
      %4655 = vmatprep.subr.bf16.mxu0 0
      %4656 = vmatpush2.bf16.msra.mxu0 0
      %4657 = vmatprep.subr.bf16.mxu0 0
      %4658 = vmatpush2.bf16.msra.mxu0 0
      %4659 = vmatprep.mubr.bf16.mxu0 0
      %4660 = vmatmul.mubr.bf16.gmra.mxu0 %v4616
      %v4661 = vpop.f32.mrf.mxu0
      %v4662 = vadd.f32 %v4625, %v4661
      %v4663 = vpop.f32.mrf.mxu0
      %v4664 = vpop.f32.mrf.mxu0
      %v4665 = vadd.f32 %v4626, %v4664
      %v4666 = vpop.f32.mrf.mxu0
      %4667 = vdwg.mxu0
      %v4668 = vld [vmem:[%s41] sm:$0xff]
      %v4669 = vld [vmem:[%s41 + $0x8] sm:$0xff]
      %v4670 = vld [vmem:[%s41 + $0x10] sm:$0xff]
      %v4671 = vld [vmem:[%s41 + $0x18] sm:$0xff]
      %v4672 = vld [vmem:[%s41 + $0x20] sm:$0xff]
      %v4673 = vld [vmem:[%s41 + $0x28] sm:$0xff]
      %v4674 = vld [vmem:[%s41 + $0x30] sm:$0xff]
      %v4675 = vld [vmem:[%s41 + $0x38] sm:$0xff]
      %v4676 = vld [vmem:[%s43] sm:$0x1]
      %v4677 = vld [vmem:[%s37] sm:$0xff]
      %v4678 = vld [vmem:[%s37 + $0x8] sm:$0xff]
      %v4679 = vld [vmem:[%s37 + $0x10] sm:$0xff]
      %v4680 = vld [vmem:[%s37 + $0x18] sm:$0xff]
      %v4681 = vld [vmem:[%s37 + $0x20] sm:$0xff]
      %v4682 = vld [vmem:[%s37 + $0x28] sm:$0xff]
      %v4683 = vld [vmem:[%s37 + $0x30] sm:$0xff]
      %v4684 = vld [vmem:[%s37 + $0x38] sm:$0xff]
      %v4685 = vld [vmem:[%s37 + $0x40] sm:$0xff]
      %v4686 = vld [vmem:[%s37 + $0x48] sm:$0xff]
      %v4687 = vld [vmem:[%s37 + $0x50] sm:$0xff]
      %v4688 = vld [vmem:[%s37 + $0x58] sm:$0xff]
      %v4689 = vld [vmem:[%s37 + $0x60] sm:$0xff]
      %v4690 = vld [vmem:[%s37 + $0x68] sm:$0xff]
      %v4691 = vld [vmem:[%s37 + $0x70] sm:$0xff]
      %v4692 = vld [vmem:[%s37 + $0x78] sm:$0xff]
      %v4693 = vpack.c.bf16 %v4665, %v4662
      %v4694 = vpack.c.bf16 %v4679, %v4677
      %v4695 = vpack.c.bf16 %v4680, %v4678
      %v4696 = vpack.c.bf16 %v4683, %v4681
      %v4697 = vpack.c.bf16 %v4684, %v4682
      %v4698 = vpack.c.bf16 %v4687, %v4685
      %v4699 = vpack.c.bf16 %v4688, %v4686
      %v4700 = vpack.c.bf16 %v4691, %v4689
      %v4701 = vpack.c.bf16 %v4692, %v4690
      %v4702 = vld [vmem:[%s39] sm:$0x3]
      %v4704 = vlaneseq
      %v4705 = vshrl.u32 %v4704, 7
      %v4706 = vsub.s32 0, %v4705
      %v4707 = vrot.slane %v4702, %v4706
      %v4708 = vlaneseq
      %v4709 = vshrl.u32 %v4708, 7
      %v4710 = vsub.s32 1, %v4709
      %v4711 = vrot.slane %v4702, %v4710
      %v4715 = vsel %vm1539, %v4693, 0
      %4717 = vmatprep.subr.bf16.mxu0 0
      %4718 = vmatpush1.bf16.msra.mxu0 0
      %4719 = vmatprep.subr.bf16.mxu0 0
      %4720 = vmatpush1.bf16.msra.mxu0 0
      %4721 = vmatprep.subr.bf16.mxu0 0
      %4722 = vmatpush1.bf16.msra.mxu0 0
      %4723 = vmatprep.subr.bf16.mxu0 0
      %4724 = vmatpush1.bf16.msra.mxu0 0
      %4725 = vmatprep.subr.bf16.mxu0 %v4701
      %4726 = vmatpush1.bf16.msra.mxu0 %v4700
      %4727 = vmatprep.subr.bf16.mxu0 %v4699
      %4728 = vmatpush1.bf16.msra.mxu0 %v4698
      %4729 = vmatprep.subr.bf16.mxu0 %v4697
      %4730 = vmatpush1.bf16.msra.mxu0 %v4696
      %4731 = vmatprep.subr.bf16.mxu0 %v4695
      %4732 = vmatpush1.bf16.msra.mxu0 %v4694
      %4733 = vmatprep.subr.bf16.mxu0 0
      %4734 = vmatpush2.bf16.msra.mxu0 0
      %4735 = vmatprep.subr.bf16.mxu0 0
      %4736 = vmatpush2.bf16.msra.mxu0 0
      %4737 = vmatprep.subr.bf16.mxu0 0
      %4738 = vmatpush2.bf16.msra.mxu0 0
      %4739 = vmatprep.subr.bf16.mxu0 0
      %4740 = vmatpush2.bf16.msra.mxu0 0
      %4741 = vmatprep.subr.bf16.mxu0 0
      %4742 = vmatpush2.bf16.msra.mxu0 0
      %4743 = vmatprep.subr.bf16.mxu0 0
      %4744 = vmatpush2.bf16.msra.mxu0 0
      %4745 = vmatprep.subr.bf16.mxu0 0
      %4746 = vmatpush2.bf16.msra.mxu0 0
      %4747 = vmatprep.subr.bf16.mxu0 0
      %4748 = vmatpush2.bf16.msra.mxu0 0
      %4749 = vmatprep.mubr.bf16.mxu0 0
      %4750 = vmatmul.mubr.bf16.gmra.mxu0 %v4715
      %v4751 = vpop.f32.mrf.mxu0
      %v4752 = vadd.f32 %v4707, %v4751
      %v4753 = vpop.f32.mrf.mxu0
      %v4754 = vadd.f32 %v4711, %v4753
      %v4755 = vpop.f32.mrf.mxu0
      %v4756 = vadd.f32 %v4707, %v4755
      %v4757 = vpop.f32.mrf.mxu0
      %v4758 = vadd.f32 %v4711, %v4757
      %4759 = vdwg.mxu0
      %4760 = vst [vmem:[#allocation2] sm:$0xff] %v4752
      %4761 = vst [vmem:[#allocation2 + $0x8] sm:$0xff] %v4754
      %4762 = vst [vmem:[#allocation2 + $0x10] sm:$0xff] %v4756
      %4763 = vst [vmem:[#allocation2 + $0x18] sm:$0xff] %v4758
      %v4764 = vld [vmem:[#allocation2] sm:$0xff]
      %v4765 = vld [vmem:[#allocation2 + $0x10] sm:$0xff]
      %v4766 = vld [vmem:[#allocation2 + $0x8] sm:$0xff]
      %v4767 = vld [vmem:[#allocation2 + $0x18] sm:$0xff]
      %v4768 = vpack.c.bf16 %v4765, %v4764
      %4770 = vrot.lane.b32.xlu0 %v4768, 64
      %v4771 = vpop.permute.xlu0 %4770
      %v4773 = vsel %vm1792, %v4768, 0
      %v4776 = vsel %vm1792, %v4771, 0
      %4778 = vmatprep.subr.bf16.mxu0 0
      %4779 = vmatpush1.bf16.xpose.msra.mxu0 0
      %4780 = vmatprep.subr.bf16.mxu0 0
      %4781 = vmatpush1.bf16.xpose.msra.mxu0 0
      %4782 = vmatprep.subr.bf16.mxu0 0
      %4783 = vmatpush1.bf16.xpose.msra.mxu0 0
      %4784 = vmatprep.subr.bf16.mxu0 0
      %4785 = vmatpush1.bf16.xpose.msra.mxu0 0
      %4786 = vmatprep.subr.bf16.mxu0 0
      %4787 = vmatpush1.bf16.xpose.msra.mxu0 0
      %4788 = vmatprep.subr.bf16.mxu0 0
      %4789 = vmatpush1.bf16.xpose.msra.mxu0 0
      %4790 = vmatprep.subr.bf16.mxu0 0
      %4791 = vmatpush1.bf16.xpose.msra.mxu0 0
      %4792 = vmatprep.subr.bf16.mxu0 0
      %4793 = vmatpush1.bf16.xpose.msra.mxu0 %v4776
      %4794 = vmatprep.subr.bf16.mxu0 0
      %4795 = vmatpush2.bf16.xpose.msra.mxu0 0
      %4796 = vmatprep.subr.bf16.mxu0 0
      %4797 = vmatpush2.bf16.xpose.msra.mxu0 0
      %4798 = vmatprep.subr.bf16.mxu0 0
      %4799 = vmatpush2.bf16.xpose.msra.mxu0 0
      %4800 = vmatprep.subr.bf16.mxu0 0
      %4801 = vmatpush2.bf16.xpose.msra.mxu0 0
      %4802 = vmatprep.subr.bf16.mxu0 0
      %4803 = vmatpush2.bf16.xpose.msra.mxu0 0
      %4804 = vmatprep.subr.bf16.mxu0 0
      %4805 = vmatpush2.bf16.xpose.msra.mxu0 0
      %4806 = vmatprep.subr.bf16.mxu0 0
      %4807 = vmatpush2.bf16.xpose.msra.mxu0 0
      %4808 = vmatprep.subr.bf16.mxu0 0
      %4809 = vmatpush2.bf16.xpose.msra.mxu0 0
      %4810 = vmatprep.mubr.bf16.mxu0 0
      %4811 = vmatmul.mubr.bf16.gmra.mxu0 %v4773
      %v4812 = vpop.f32.mrf.mxu0
      %v4813 = vadd.f32 0.0, %v4812
      %v4814 = vpop.f32.mrf.mxu0
      %v4815 = vpop.f32.mrf.mxu0
      %v4816 = vadd.f32 0.0, %v4815
      %v4817 = vpop.f32.mrf.mxu0
      %4818 = vdwg.mxu0
      %v4819 = vmul.f32 %v4813, 0.17677669
      %v4820 = vmul.f32 %v4816, 0.17677669
      %v4821 = vadd.f32 %v4819, %v1507
      %v4822 = vadd.f32 %v4820, %v1508
      %vm4823 = vcmask 130048
      %v4824 = vsel %vm4823, %v4821, -inf
      %4825 = vmax.xlane.f32.xlu0 %v4824
      %v4826 = vpop.xlane.xlu0 %4825
      %v4827 = vsel %vm4823, %v4822, -inf
      %4828 = vmax.xlane.f32.xlu0 %v4827
      %v4829 = vpop.xlane.xlu0 %4828
      %v4830 = vsub.f32 %v4821, %v4826
      %v4831 = vsub.f32 %v4822, %v4829
      %v4832 = vmul.f32 %v4830, 1.442695
      %v4833 = vpow.pop %v4832
      %v4834 = vmul.f32 %v4831, 1.442695
      %v4835 = vpow.pop %v4834
      %v4836 = vsel %vm4823, %v4833, 0.0
      %4837 = vadd.xlane.f32.xlu0 %v4836
      %v4838 = vpop.xlane.xlu0 %4837
      %v4839 = vsel %vm4823, %v4835, 0.0
      %4840 = vadd.xlane.f32.xlu0 %v4839
      %v4841 = vpop.xlane.xlu0 %4840
      %v4842 = vrcp.pop %v4838
      %v4843 = vrcp.pop %v4841
      %v4844 = vmul.f32 %v4833, %v4842
      %v4845 = vmul.f32 %v4835, %v4843
      %v4846 = vpack.c.bf16 %v4845, %v4844
      %v4847 = vpack.c.bf16 %v4767, %v4766
      %v4849 = vsel %vm4823, %v4846, 0
      %4851 = vmatprep.subr.bf16.mxu0 0
      %4852 = vmatpush1.bf16.msra.mxu0 0
      %4853 = vmatprep.subr.bf16.mxu0 0
      %4854 = vmatpush1.bf16.msra.mxu0 0
      %4855 = vmatprep.subr.bf16.mxu0 0
      %4856 = vmatpush1.bf16.msra.mxu0 0
      %4857 = vmatprep.subr.bf16.mxu0 0
      %4858 = vmatpush1.bf16.msra.mxu0 0
      %4859 = vmatprep.subr.bf16.mxu0 0
      %4860 = vmatpush1.bf16.msra.mxu0 0
      %4861 = vmatprep.subr.bf16.mxu0 0
      %4862 = vmatpush1.bf16.msra.mxu0 0
      %4863 = vmatprep.subr.bf16.mxu0 0
      %4864 = vmatpush1.bf16.msra.mxu0 0
      %4865 = vmatprep.subr.bf16.mxu0 0
      %4866 = vmatpush1.bf16.msra.mxu0 %v4847
      %4867 = vmatprep.subr.bf16.mxu0 0
      %4868 = vmatpush2.bf16.msra.mxu0 0
      %4869 = vmatprep.subr.bf16.mxu0 0
      %4870 = vmatpush2.bf16.msra.mxu0 0
      %4871 = vmatprep.subr.bf16.mxu0 0
      %4872 = vmatpush2.bf16.msra.mxu0 0
      %4873 = vmatprep.subr.bf16.mxu0 0
      %4874 = vmatpush2.bf16.msra.mxu0 0
      %4875 = vmatprep.subr.bf16.mxu0 0
      %4876 = vmatpush2.bf16.msra.mxu0 0
      %4877 = vmatprep.subr.bf16.mxu0 0
      %4878 = vmatpush2.bf16.msra.mxu0 0
      %4879 = vmatprep.subr.bf16.mxu0 0
      %4880 = vmatpush2.bf16.msra.mxu0 0
      %4881 = vmatprep.subr.bf16.mxu0 0
      %4882 = vmatpush2.bf16.msra.mxu0 0
      %4883 = vmatprep.mubr.bf16.mxu0 0
      %4884 = vmatmul.mubr.bf16.gmra.mxu0 %v4849
      %v4885 = vpop.f32.mrf.mxu0
      %v4886 = vadd.f32 0.0, %v4885
      %v4887 = vpop.f32.mrf.mxu0
      %v4888 = vpop.f32.mrf.mxu0
      %v4889 = vadd.f32 0.0, %v4888
      %v4890 = vpop.f32.mrf.mxu0
      %4891 = vdwg.mxu0
      %4892 = vrot.lane.b32.xlu0 %v4768, 96
      %v4893 = vpop.permute.xlu0 %4892
      %4894 = vrot.lane.b32.xlu0 %v4768, 32
      %v4895 = vpop.permute.xlu0 %4894
      %v4897 = vsel %vm1792, %v4893, 0
      %v4900 = vsel %vm1792, %v4895, 0
      %4902 = vmatprep.subr.bf16.mxu0 0
      %4903 = vmatpush1.bf16.xpose.msra.mxu0 0
      %4904 = vmatprep.subr.bf16.mxu0 0
      %4905 = vmatpush1.bf16.xpose.msra.mxu0 0
      %4906 = vmatprep.subr.bf16.mxu0 0
      %4907 = vmatpush1.bf16.xpose.msra.mxu0 0
      %4908 = vmatprep.subr.bf16.mxu0 0
      %4909 = vmatpush1.bf16.xpose.msra.mxu0 0
      %4910 = vmatprep.subr.bf16.mxu0 0
      %4911 = vmatpush1.bf16.xpose.msra.mxu0 0
      %4912 = vmatprep.subr.bf16.mxu0 0
      %4913 = vmatpush1.bf16.xpose.msra.mxu0 0
      %4914 = vmatprep.subr.bf16.mxu0 0
      %4915 = vmatpush1.bf16.xpose.msra.mxu0 0
      %4916 = vmatprep.subr.bf16.mxu0 0
      %4917 = vmatpush1.bf16.xpose.msra.mxu0 %v4900
      %4918 = vmatprep.subr.bf16.mxu0 0
      %4919 = vmatpush2.bf16.xpose.msra.mxu0 0
      %4920 = vmatprep.subr.bf16.mxu0 0
      %4921 = vmatpush2.bf16.xpose.msra.mxu0 0
      %4922 = vmatprep.subr.bf16.mxu0 0
      %4923 = vmatpush2.bf16.xpose.msra.mxu0 0
      %4924 = vmatprep.subr.bf16.mxu0 0
      %4925 = vmatpush2.bf16.xpose.msra.mxu0 0
      %4926 = vmatprep.subr.bf16.mxu0 0
      %4927 = vmatpush2.bf16.xpose.msra.mxu0 0
      %4928 = vmatprep.subr.bf16.mxu0 0
      %4929 = vmatpush2.bf16.xpose.msra.mxu0 0
      %4930 = vmatprep.subr.bf16.mxu0 0
      %4931 = vmatpush2.bf16.xpose.msra.mxu0 0
      %4932 = vmatprep.subr.bf16.mxu0 0
      %4933 = vmatpush2.bf16.xpose.msra.mxu0 0
      %4934 = vmatprep.mubr.bf16.mxu0 0
      %4935 = vmatmul.mubr.bf16.gmra.mxu0 %v4897
      %v4936 = vpop.f32.mrf.mxu0
      %v4937 = vadd.f32 0.0, %v4936
      %v4938 = vpop.f32.mrf.mxu0
      %v4939 = vpop.f32.mrf.mxu0
      %v4940 = vadd.f32 0.0, %v4939
      %v4941 = vpop.f32.mrf.mxu0
      %4942 = vdwg.mxu0
      %v4943 = vmul.f32 %v4937, 0.17677669
      %v4944 = vmul.f32 %v4940, 0.17677669
      %v4945 = vadd.f32 %v4943, %v1507
      %v4946 = vadd.f32 %v4944, %v1508
      %v4947 = vsel %vm4823, %v4945, -inf
      %4948 = vmax.xlane.f32.xlu0 %v4947
      %v4949 = vpop.xlane.xlu0 %4948
      %v4950 = vsel %vm4823, %v4946, -inf
      %4951 = vmax.xlane.f32.xlu0 %v4950
      %v4952 = vpop.xlane.xlu0 %4951
      %v4953 = vsub.f32 %v4945, %v4949
      %v4954 = vsub.f32 %v4946, %v4952
      %v4955 = vmul.f32 %v4953, 1.442695
      %v4956 = vpow.pop %v4955
      %v4957 = vmul.f32 %v4954, 1.442695
      %v4958 = vpow.pop %v4957
      %v4959 = vsel %vm4823, %v4956, 0.0
      %4960 = vadd.xlane.f32.xlu0 %v4959
      %v4961 = vpop.xlane.xlu0 %4960
      %v4962 = vsel %vm4823, %v4958, 0.0
      %4963 = vadd.xlane.f32.xlu0 %v4962
      %v4964 = vpop.xlane.xlu0 %4963
      %v4965 = vrcp.pop %v4961
      %v4966 = vrcp.pop %v4964
      %v4967 = vmul.f32 %v4956, %v4965
      %v4968 = vmul.f32 %v4958, %v4966
      %v4969 = vpack.c.bf16 %v4968, %v4967
      %4971 = vrot.lane.b32.xlu0 %v4847, 96
      %v4972 = vpop.permute.xlu0 %4971
      %v4975 = vsel %vm4823, %v4969, 0
      %4977 = vmatprep.subr.bf16.mxu0 0
      %4978 = vmatpush1.bf16.msra.mxu0 0
      %4979 = vmatprep.subr.bf16.mxu0 0
      %4980 = vmatpush1.bf16.msra.mxu0 0
      %4981 = vmatprep.subr.bf16.mxu0 0
      %4982 = vmatpush1.bf16.msra.mxu0 0
      %4983 = vmatprep.subr.bf16.mxu0 0
      %4984 = vmatpush1.bf16.msra.mxu0 0
      %4985 = vmatprep.subr.bf16.mxu0 0
      %4986 = vmatpush1.bf16.msra.mxu0 0
      %4987 = vmatprep.subr.bf16.mxu0 0
      %4988 = vmatpush1.bf16.msra.mxu0 0
      %4989 = vmatprep.subr.bf16.mxu0 0
      %4990 = vmatpush1.bf16.msra.mxu0 0
      %4991 = vmatprep.subr.bf16.mxu0 0
      %4992 = vmatpush1.bf16.msra.mxu0 %v4972
      %4993 = vmatprep.subr.bf16.mxu0 0
      %4994 = vmatpush2.bf16.msra.mxu0 0
      %4995 = vmatprep.subr.bf16.mxu0 0
      %4996 = vmatpush2.bf16.msra.mxu0 0
      %4997 = vmatprep.subr.bf16.mxu0 0
      %4998 = vmatpush2.bf16.msra.mxu0 0
      %4999 = vmatprep.subr.bf16.mxu0 0
      %5000 = vmatpush2.bf16.msra.mxu0 0
      %5001 = vmatprep.subr.bf16.mxu0 0
      %5002 = vmatpush2.bf16.msra.mxu0 0
      %5003 = vmatprep.subr.bf16.mxu0 0
      %5004 = vmatpush2.bf16.msra.mxu0 0
      %5005 = vmatprep.subr.bf16.mxu0 0
      %5006 = vmatpush2.bf16.msra.mxu0 0
      %5007 = vmatprep.subr.bf16.mxu0 0
      %5008 = vmatpush2.bf16.msra.mxu0 0
      %5009 = vmatprep.mubr.bf16.mxu0 0
      %5010 = vmatmul.mubr.bf16.gmra.mxu0 %v4975
      %v5011 = vpop.f32.mrf.mxu0
      %v5012 = vadd.f32 0.0, %v5011
      %v5013 = vpop.f32.mrf.mxu0
      %v5014 = vpop.f32.mrf.mxu0
      %v5015 = vadd.f32 0.0, %v5014
      %v5016 = vpop.f32.mrf.mxu0
      %5017 = vdwg.mxu0
      %5020 = vrot.lane.b32.xlu0 %v5012, 32
      %v5021 = vpop.permute.xlu0 %5020
      %5022 = vrot.lane.b32.xlu0 %v5015, 32
      %v5023 = vpop.permute.xlu0 %5022
      %v5026 = vsel %vm1792, %v4886, %v5021
      %v5027 = vsel %vm1792, %v4889, %v5023
      %v5028 = vpack.c.bf16 %v5027, %v5026
      %v5029 = vpack.c.bf16 %v4669, %v4668
      %v5030 = vpack.c.bf16 %v4671, %v4670
      %v5031 = vpack.c.bf16 %v4673, %v4672
      %v5032 = vpack.c.bf16 %v4675, %v4674
      %v5034 = vlaneseq
      %v5035 = vshrl.u32 %v5034, 7
      %v5036 = vsub.s32 0, %v5035
      %v5037 = vrot.slane %v4676, %v5036
      %v5040 = vsel %vm1539, %v5028, 0
      %5042 = vmatprep.subr.bf16.mxu0 0
      %5043 = vmatpush1.bf16.msra.mxu0 0
      %5044 = vmatprep.subr.bf16.mxu0 0
      %5045 = vmatpush1.bf16.msra.mxu0 0
      %5046 = vmatprep.subr.bf16.mxu0 0
      %5047 = vmatpush1.bf16.msra.mxu0 0
      %5048 = vmatprep.subr.bf16.mxu0 0
      %5049 = vmatpush1.bf16.msra.mxu0 0
      %5050 = vmatprep.subr.bf16.mxu0 0
      %5051 = vmatpush1.bf16.msra.mxu0 %v5032
      %5052 = vmatprep.subr.bf16.mxu0 0
      %5053 = vmatpush1.bf16.msra.mxu0 %v5031
      %5054 = vmatprep.subr.bf16.mxu0 0
      %5055 = vmatpush1.bf16.msra.mxu0 %v5030
      %5056 = vmatprep.subr.bf16.mxu0 0
      %5057 = vmatpush1.bf16.msra.mxu0 %v5029
      %5058 = vmatprep.subr.bf16.mxu0 0
      %5059 = vmatpush2.bf16.msra.mxu0 0
      %5060 = vmatprep.subr.bf16.mxu0 0
      %5061 = vmatpush2.bf16.msra.mxu0 0
      %5062 = vmatprep.subr.bf16.mxu0 0
      %5063 = vmatpush2.bf16.msra.mxu0 0
      %5064 = vmatprep.subr.bf16.mxu0 0
      %5065 = vmatpush2.bf16.msra.mxu0 0
      %5066 = vmatprep.subr.bf16.mxu0 0
      %5067 = vmatpush2.bf16.msra.mxu0 0
      %5068 = vmatprep.subr.bf16.mxu0 0
      %5069 = vmatpush2.bf16.msra.mxu0 0
      %5070 = vmatprep.subr.bf16.mxu0 0
      %5071 = vmatpush2.bf16.msra.mxu0 0
      %5072 = vmatprep.subr.bf16.mxu0 0
      %5073 = vmatpush2.bf16.msra.mxu0 0
      %5074 = vmatprep.mubr.bf16.mxu0 0
      %5075 = vmatmul.mubr.bf16.gmra.mxu0 %v5040
      %v5076 = vpop.f32.mrf.mxu0
      %v5077 = vadd.f32 %v5037, %v5076
      %v5078 = vpop.f32.mrf.mxu0
      %v5079 = vpop.f32.mrf.mxu0
      %v5080 = vadd.f32 %v5037, %v5079
      %v5081 = vpop.f32.mrf.mxu0
      %5082 = vdwg.mxu0
      %v5083 = vadd.f32 %v5077, %v4662
      %v5084 = vadd.f32 %v5080, %v4665
      %v5085 = vld [vmem:[%s45] sm:$0x1]
      %v5086 = vld [vmem:[%s47] sm:$0x1]
      %v5087 = vsel %vm1539, %v5083, 0.0
      %5088 = vadd.xlane.f32.xlu0 %v5087
      %v5089 = vpop.xlane.xlu0 %5088
      %v5090 = vsel %vm1539, %v5084, 0.0
      %5091 = vadd.xlane.f32.xlu0 %v5090
      %v5092 = vpop.xlane.xlu0 %5091
      %v5093 = vmul.f32 %v5089, %v2495
      %v5094 = vmul.f32 %v5092, %v2495
      %v5095 = vsub.f32 %v5083, %v5093
      %v5096 = vsub.f32 %v5084, %v5094
      %v5097 = vmul.f32 %v5095, %v5095
      %v5098 = vmul.f32 %v5096, %v5096
      %v5099 = vsel %vm1539, %v5097, 0.0
      %5100 = vadd.xlane.f32.xlu0 %v5099
      %v5101 = vpop.xlane.xlu0 %5100
      %v5102 = vsel %vm1539, %v5098, 0.0
      %5103 = vadd.xlane.f32.xlu0 %v5102
      %v5104 = vpop.xlane.xlu0 %5103
      %v5105 = vmul.f32 %v5101, 0.015873017
      %v5106 = vmul.f32 %v5104, 0.015873017
      %v5107 = vrsqrt.pop %v5105
      %v5108 = vmul.f32 %v5105, %v5107
      %vm5109 = vcmp.eq.f32.partialorder %v5105, inf
      %v5110 = vsel %vm5109, %v5105, %v5108
      %vm5111 = vcmp.eq.f32.partialorder %v5105, 0.0
      %v5112 = vand.u32 %v5105, 2147483648
      %v5113 = vsel %vm5111, %v5112, %v5110
      %v5114 = vrsqrt.pop %v5106
      %v5115 = vmul.f32 %v5106, %v5114
      %vm5116 = vcmp.eq.f32.partialorder %v5106, inf
      %v5117 = vsel %vm5116, %v5106, %v5115
      %vm5118 = vcmp.eq.f32.partialorder %v5106, 0.0
      %v5119 = vand.u32 %v5106, 2147483648
      %v5120 = vsel %vm5118, %v5119, %v5117
      %v5121 = vadd.f32 %v5113, 0.001
      %v5122 = vadd.f32 %v5120, 0.001
      %v5123 = vrcp.pop %v5121
      %v5124 = vmul.f32 %v5095, %v5123
      %v5125 = vrcp.pop %v5122
      %v5126 = vmul.f32 %v5096, %v5125
      %v5128 = vlaneseq
      %v5129 = vshrl.u32 %v5128, 7
      %v5130 = vsub.s32 0, %v5129
      %v5131 = vrot.slane %v5085, %v5130
      %v5133 = vmul.f32 %v5124, %v5131
      %v5134 = vmul.f32 %v5126, %v5131
      %v5136 = vlaneseq
      %v5137 = vshrl.u32 %v5136, 7
      %v5138 = vsub.s32 0, %v5137
      %v5139 = vrot.slane %v5086, %v5138
      %v5141 = vadd.f32 %v5133, %v5139
      %v5142 = vadd.f32 %v5134, %v5139
      %v5143 = vld [vmem:[%s53] sm:$0xff]
      %v5144 = vld [vmem:[%s53 + $0x8] sm:$0xff]
      %v5145 = vld [vmem:[%s53 + $0x10] sm:$0xff]
      %v5146 = vld [vmem:[%s53 + $0x18] sm:$0xff]
      %v5147 = vld [vmem:[%s53 + $0x20] sm:$0xff]
      %v5148 = vld [vmem:[%s53 + $0x28] sm:$0xff]
      %v5149 = vld [vmem:[%s53 + $0x30] sm:$0xff]
      %v5150 = vld [vmem:[%s53 + $0x38] sm:$0xff]
      %v5151 = vld [vmem:[%s55] sm:$0x1]
      %v5152 = vld [vmem:[%s49] sm:$0xff]
      %v5153 = vld [vmem:[%s49 + $0x8] sm:$0xff]
      %v5154 = vld [vmem:[%s49 + $0x10] sm:$0xff]
      %v5155 = vld [vmem:[%s49 + $0x18] sm:$0xff]
      %v5156 = vld [vmem:[%s49 + $0x20] sm:$0xff]
      %v5157 = vld [vmem:[%s49 + $0x28] sm:$0xff]
      %v5158 = vld [vmem:[%s49 + $0x30] sm:$0xff]
      %v5159 = vld [vmem:[%s49 + $0x38] sm:$0xff]
      %v5160 = vld [vmem:[%s49 + $0x40] sm:$0xff]
      %v5161 = vld [vmem:[%s49 + $0x48] sm:$0xff]
      %v5162 = vld [vmem:[%s49 + $0x50] sm:$0xff]
      %v5163 = vld [vmem:[%s49 + $0x58] sm:$0xff]
      %v5164 = vld [vmem:[%s49 + $0x60] sm:$0xff]
      %v5165 = vld [vmem:[%s49 + $0x68] sm:$0xff]
      %v5166 = vld [vmem:[%s49 + $0x70] sm:$0xff]
      %v5167 = vld [vmem:[%s49 + $0x78] sm:$0xff]
      %v5168 = vld [vmem:[%s51] sm:$0x3]
      %v5169 = vpack.c.bf16 %v5142, %v5141
      %v5170 = vpack.c.bf16 %v5154, %v5152
      %v5171 = vpack.c.bf16 %v5158, %v5156
      %v5172 = vpack.c.bf16 %v5162, %v5160
      %v5173 = vpack.c.bf16 %v5166, %v5164
      %v5175 = vlaneseq
      %v5176 = vshrl.u32 %v5175, 7
      %v5177 = vsub.s32 0, %v5176
      %v5178 = vrot.slane %v5168, %v5177
      %v5181 = vsel %vm1539, %v5169, 0
      %5183 = vmatprep.subr.bf16.mxu0 0
      %5184 = vmatpush1.bf16.msra.mxu0 0
      %5185 = vmatprep.subr.bf16.mxu0 0
      %5186 = vmatpush1.bf16.msra.mxu0 0
      %5187 = vmatprep.subr.bf16.mxu0 0
      %5188 = vmatpush1.bf16.msra.mxu0 0
      %5189 = vmatprep.subr.bf16.mxu0 0
      %5190 = vmatpush1.bf16.msra.mxu0 0
      %5191 = vmatprep.subr.bf16.mxu0 0
      %5192 = vmatpush1.bf16.msra.mxu0 %v5173
      %5193 = vmatprep.subr.bf16.mxu0 0
      %5194 = vmatpush1.bf16.msra.mxu0 %v5172
      %5195 = vmatprep.subr.bf16.mxu0 0
      %5196 = vmatpush1.bf16.msra.mxu0 %v5171
      %5197 = vmatprep.subr.bf16.mxu0 0
      %5198 = vmatpush1.bf16.msra.mxu0 %v5170
      %5199 = vmatprep.subr.bf16.mxu0 0
      %5200 = vmatpush2.bf16.msra.mxu0 0
      %5201 = vmatprep.subr.bf16.mxu0 0
      %5202 = vmatpush2.bf16.msra.mxu0 0
      %5203 = vmatprep.subr.bf16.mxu0 0
      %5204 = vmatpush2.bf16.msra.mxu0 0
      %5205 = vmatprep.subr.bf16.mxu0 0
      %5206 = vmatpush2.bf16.msra.mxu0 0
      %5207 = vmatprep.subr.bf16.mxu0 0
      %5208 = vmatpush2.bf16.msra.mxu0 0
      %5209 = vmatprep.subr.bf16.mxu0 0
      %5210 = vmatpush2.bf16.msra.mxu0 0
      %5211 = vmatprep.subr.bf16.mxu0 0
      %5212 = vmatpush2.bf16.msra.mxu0 0
      %5213 = vmatprep.subr.bf16.mxu0 0
      %5214 = vmatpush2.bf16.msra.mxu0 0
      %5215 = vmatprep.mubr.bf16.mxu0 0
      %5216 = vmatmul.mubr.bf16.gmra.mxu0 %v5181
      %v5217 = vpop.f32.mrf.mxu0
      %v5218 = vadd.f32 %v5178, %v5217
      %v5219 = vpop.f32.mrf.mxu0
      %v5220 = vpop.f32.mrf.mxu0
      %v5221 = vadd.f32 %v5178, %v5220
      %v5222 = vpop.f32.mrf.mxu0
      %5223 = vdwg.mxu0
      %5224 = vst.msk [vmem:[#allocation2] sm:$0xff] %vm1539, %v5218
      %5225 = vst.msk [vmem:[#allocation2 + $0x10] sm:$0xff] %vm1539, %v5221
      %v5226 = vpack.c.bf16 %v4428, %v4427
      %v5227 = vpack.c.bf16 %v4430, %v4429
      %v5228 = vpack.c.bf16 %v4432, %v4431
      %v5229 = vpack.c.bf16 %v5155, %v5153
      %v5230 = vpack.c.bf16 %v5159, %v5157
      %v5231 = vpack.c.bf16 %v5163, %v5161
      %v5232 = vpack.c.bf16 %v5167, %v5165
      %v5233 = vlaneseq
      %v5234 = vshrl.u32 %v5233, 7
      %v5235 = vsub.s32 1, %v5234
      %v5236 = vrot.slane %v5168, %v5235
      %5245 = vrot.lane.b32.xlu0 %v5170, 64
      %v5246 = vpop.permute.xlu0 %5245
      %5247 = vrot.lane.b32.xlu0 %v5229, 64
      %v5248 = vpop.permute.xlu0 %5247
      %5249 = vrot.lane.b32.xlu0 %v5171, 64
      %v5250 = vpop.permute.xlu0 %5249
      %5251 = vrot.lane.b32.xlu0 %v5230, 64
      %v5252 = vpop.permute.xlu0 %5251
      %5253 = vrot.lane.b32.xlu0 %v5172, 64
      %v5254 = vpop.permute.xlu0 %5253
      %5255 = vrot.lane.b32.xlu0 %v5231, 64
      %v5256 = vpop.permute.xlu0 %5255
      %5257 = vrot.lane.b32.xlu0 %v5173, 64
      %v5258 = vpop.permute.xlu0 %5257
      %5259 = vrot.lane.b32.xlu0 %v5232, 64
      %v5260 = vpop.permute.xlu0 %5259
      %vm5261 = vcmask 523264
      %v5262 = vsel %vm5261, %v5246, %v5248
      %v5263 = vsel %vm5261, %v5250, %v5252
      %v5264 = vsel %vm5261, %v5254, %v5256
      %v5265 = vsel %vm5261, %v5258, %v5260
      %5270 = vrot.lane.b32.xlu0 %v5178, 64
      %v5271 = vpop.permute.xlu0 %5270
      %5272 = vrot.lane.b32.xlu0 %v5236, 64
      %v5273 = vpop.permute.xlu0 %5272
      %v5274 = vsel %vm1539, %v5271, %v5273
      %v5277 = vsel %vm1539, %v5226, 0
      %v5280 = vsel %vm1539, %v5227, 0
      %v5283 = vsel %vm1539, %v5228, 0
      %5285 = vmatprep.subr.bf16.mxu0 0
      %5286 = vmatpush1.bf16.msra.mxu0 0
      %5287 = vmatprep.subr.bf16.mxu0 0
      %5288 = vmatpush1.bf16.msra.mxu0 0
      %5289 = vmatprep.subr.bf16.mxu0 0
      %5290 = vmatpush1.bf16.msra.mxu0 0
      %5291 = vmatprep.subr.bf16.mxu0 0
      %5292 = vmatpush1.bf16.msra.mxu0 0
      %5293 = vmatprep.subr.bf16.mxu0 0
      %5294 = vmatpush1.bf16.msra.mxu0 %v5265
      %5295 = vmatprep.subr.bf16.mxu0 0
      %5296 = vmatpush1.bf16.msra.mxu0 %v5264
      %5297 = vmatprep.subr.bf16.mxu0 0
      %5298 = vmatpush1.bf16.msra.mxu0 %v5263
      %5299 = vmatprep.subr.bf16.mxu0 0
      %5300 = vmatpush1.bf16.msra.mxu0 %v5262
      %5301 = vmatprep.subr.bf16.mxu0 0
      %5302 = vmatpush2.bf16.msra.mxu0 0
      %5303 = vmatprep.subr.bf16.mxu0 0
      %5304 = vmatpush2.bf16.msra.mxu0 0
      %5305 = vmatprep.subr.bf16.mxu0 0
      %5306 = vmatpush2.bf16.msra.mxu0 0
      %5307 = vmatprep.subr.bf16.mxu0 0
      %5308 = vmatpush2.bf16.msra.mxu0 0
      %5309 = vmatprep.subr.bf16.mxu0 0
      %5310 = vmatpush2.bf16.msra.mxu0 0
      %5311 = vmatprep.subr.bf16.mxu0 0
      %5312 = vmatpush2.bf16.msra.mxu0 0
      %5313 = vmatprep.subr.bf16.mxu0 0
      %5314 = vmatpush2.bf16.msra.mxu0 0
      %5315 = vmatprep.subr.bf16.mxu0 0
      %5316 = vmatpush2.bf16.msra.mxu0 0
      %5317 = vmatprep.mubr.bf16.mxu0 0
      %5318 = vmatmul.mubr.bf16.gmra.mxu0 %v5277
      %v5319 = vpop.f32.mrf.mxu0
      %v5320 = vadd.f32 %v5274, %v5319
      %v5321 = vpop.f32.mrf.mxu0
      %v5322 = vpop.f32.mrf.mxu0
      %v5323 = vadd.f32 %v5274, %v5322
      %v5324 = vpop.f32.mrf.mxu0
      %5325 = vmatprep.mubr.bf16.mxu0 0
      %5326 = vmatmul.mubr.bf16.gmra.mxu0 %v5280
      %v5327 = vpop.f32.mrf.mxu0
      %v5328 = vadd.f32 %v5274, %v5327
      %v5329 = vpop.f32.mrf.mxu0
      %v5330 = vpop.f32.mrf.mxu0
      %v5331 = vadd.f32 %v5274, %v5330
      %v5332 = vpop.f32.mrf.mxu0
      %5333 = vmatprep.mubr.bf16.mxu0 0
      %5334 = vmatmul.mubr.bf16.gmra.mxu0 %v5283
      %v5335 = vpop.f32.mrf.mxu0
      %v5336 = vadd.f32 %v5274, %v5335
      %v5337 = vpop.f32.mrf.mxu0
      %v5338 = vpop.f32.mrf.mxu0
      %v5339 = vadd.f32 %v5274, %v5338
      %v5340 = vpop.f32.mrf.mxu0
      %5341 = vmatprep.mubr.bf16.mxu0 0
      %5342 = vmatmul.mubr.bf16.gmra.mxu0 %v4466
      %v5343 = vpop.f32.mrf.mxu0
      %v5344 = vadd.f32 %v5274, %v5343
      %v5345 = vpop.f32.mrf.mxu0
      %v5346 = vpop.f32.mrf.mxu0
      %v5347 = vpop.f32.mrf.mxu0
      %5348 = vdwg.mxu0
      %5349 = vst [vmem:[#allocation3] sm:$0xff] %v5320
      %5350 = vst [vmem:[#allocation3 + $0x8] sm:$0xff] %v5323
      %5351 = vst [vmem:[#allocation3 + $0x10] sm:$0xff] %v5328
      %5352 = vst [vmem:[#allocation3 + $0x18] sm:$0xff] %v5331
      %5353 = vst [vmem:[#allocation3 + $0x20] sm:$0xff] %v5336
      %5354 = vst [vmem:[#allocation3 + $0x28] sm:$0xff] %v5339
      %5355 = vst [vmem:[#allocation3 + $0x30] sm:$0xff] %v5344
      %v5356 = vld [vmem:[#allocation2] sm:$0xff]
      %v5357 = vld [vmem:[#allocation2 + $0x10] sm:$0xff]
      %v5358 = vld [vmem:[#allocation3] sm:$0xff]
      %v5359 = vld [vmem:[#allocation3 + $0x8] sm:$0xff]
      %v5360 = vld [vmem:[#allocation3 + $0x10] sm:$0xff]
      %v5361 = vld [vmem:[#allocation3 + $0x18] sm:$0xff]
      %v5362 = vld [vmem:[#allocation3 + $0x20] sm:$0xff]
      %v5363 = vld [vmem:[#allocation3 + $0x28] sm:$0xff]
      %v5364 = vld [vmem:[#allocation3 + $0x30] sm:$0xff]
      %v5365 = vpack.c.bf16 %v5357, %v5356
      %v5366 = vpack.c.bf16 %v5359, %v5358
      %v5367 = vpack.c.bf16 %v5361, %v5360
      %v5368 = vpack.c.bf16 %v5363, %v5362
      %v5369 = vpack.c.bf16 %v5364, %v5364
      %v5371 = vsel %vm1792, %v5365, 0
      %v5374 = vsel %vm1792, %v5366, 0
      %v5377 = vsel %vm1792, %v5367, 0
      %v5380 = vsel %vm1792, %v5368, 0
      %v5383 = vsel %vm1792, %v5369, 0
      %5385 = vmatprep.subr.bf16.mxu0 0
      %5386 = vmatpush1.bf16.xpose.msra.mxu0 0
      %5387 = vmatprep.subr.bf16.mxu0 0
      %5388 = vmatpush1.bf16.xpose.msra.mxu0 0
      %5389 = vmatprep.subr.bf16.mxu0 0
      %5390 = vmatpush1.bf16.xpose.msra.mxu0 0
      %5391 = vmatprep.subr.bf16.mxu0 0
      %5392 = vmatpush1.bf16.xpose.msra.mxu0 0
      %5393 = vmatprep.subr.bf16.mxu0 0
      %5394 = vmatpush1.bf16.xpose.msra.mxu0 %v5383
      %5395 = vmatprep.subr.bf16.mxu0 0
      %5396 = vmatpush1.bf16.xpose.msra.mxu0 %v5380
      %5397 = vmatprep.subr.bf16.mxu0 0
      %5398 = vmatpush1.bf16.xpose.msra.mxu0 %v5377
      %5399 = vmatprep.subr.bf16.mxu0 0
      %5400 = vmatpush1.bf16.xpose.msra.mxu0 %v5374
      %5401 = vmatprep.subr.bf16.mxu0 0
      %5402 = vmatpush2.bf16.xpose.msra.mxu0 0
      %5403 = vmatprep.subr.bf16.mxu0 0
      %5404 = vmatpush2.bf16.xpose.msra.mxu0 0
      %5405 = vmatprep.subr.bf16.mxu0 0
      %5406 = vmatpush2.bf16.xpose.msra.mxu0 0
      %5407 = vmatprep.subr.bf16.mxu0 0
      %5408 = vmatpush2.bf16.xpose.msra.mxu0 0
      %5409 = vmatprep.subr.bf16.mxu0 0
      %5410 = vmatpush2.bf16.xpose.msra.mxu0 0
      %5411 = vmatprep.subr.bf16.mxu0 0
      %5412 = vmatpush2.bf16.xpose.msra.mxu0 0
      %5413 = vmatprep.subr.bf16.mxu0 0
      %5414 = vmatpush2.bf16.xpose.msra.mxu0 0
      %5415 = vmatprep.subr.bf16.mxu0 0
      %5416 = vmatpush2.bf16.xpose.msra.mxu0 0
      %5417 = vmatprep.mubr.bf16.mxu0 0
      %5418 = vmatmul.mubr.bf16.gmra.mxu0 %v5371
      %v5419 = vpop.f32.mrf.mxu0
      %v5420 = vadd.f32 0.0, %v5419
      %v5421 = vpop.f32.mrf.mxu0
      %v5422 = vpop.f32.mrf.mxu0
      %v5423 = vadd.f32 0.0, %v5422
      %v5424 = vpop.f32.mrf.mxu0
      %5425 = vdwg.mxu0
      %v5426 = vmul.f32 %v5420, 0.17677669
      %v5427 = vmul.f32 %v5423, 0.17677669
      %v5428 = vsel %vm1888, %v5426, -inf
      %5429 = vmax.xlane.f32.xlu0 %v5428
      %v5430 = vpop.xlane.xlu0 %5429
      %v5431 = vsel %vm1888, %v5427, -inf
      %5432 = vmax.xlane.f32.xlu0 %v5431
      %v5433 = vpop.xlane.xlu0 %5432
      %v5434 = vsub.f32 %v5426, %v5430
      %v5435 = vsub.f32 %v5427, %v5433
      %v5436 = vmul.f32 %v5434, 1.442695
      %v5437 = vpow.pop %v5436
      %v5438 = vmul.f32 %v5435, 1.442695
      %v5439 = vpow.pop %v5438
      %v5440 = vsel %vm1888, %v5437, 0.0
      %5441 = vadd.xlane.f32.xlu0 %v5440
      %v5442 = vpop.xlane.xlu0 %5441
      %v5443 = vsel %vm1888, %v5439, 0.0
      %5444 = vadd.xlane.f32.xlu0 %v5443
      %v5445 = vpop.xlane.xlu0 %5444
      %v5446 = vrcp.pop %v5442
      %v5447 = vrcp.pop %v5445
      %v5448 = vmul.f32 %v5437, %v5446
      %v5449 = vmul.f32 %v5439, %v5447
      %v5450 = vpack.c.bf16 %v5449, %v5448
      %5455 = vrot.lane.b32.xlu0 %v5366, 64
      %v5456 = vpop.permute.xlu0 %5455
      %5457 = vrot.lane.b32.xlu0 %v5367, 64
      %v5458 = vpop.permute.xlu0 %5457
      %5459 = vrot.lane.b32.xlu0 %v5368, 64
      %v5460 = vpop.permute.xlu0 %5459
      %5461 = vrot.lane.b32.xlu0 %v5369, 64
      %v5462 = vpop.permute.xlu0 %5461
      %v5467 = vsel %vm1888, %v5450, 0
      %v5470 = vsel %vm1986, %v5462, 0
      %5472 = vmatprep.subr.bf16.mxu0 0
      %5473 = vmatpush1.bf16.msra.mxu0 0
      %5474 = vmatprep.subr.bf16.mxu0 0
      %5475 = vmatpush1.bf16.msra.mxu0 0
      %5476 = vmatprep.subr.bf16.mxu0 0
      %5477 = vmatpush1.bf16.msra.mxu0 0
      %5478 = vmatprep.subr.bf16.mxu0 0
      %5479 = vmatpush1.bf16.msra.mxu0 0
      %5480 = vmatprep.subr.bf16.mxu0 0
      %5481 = vmatpush1.bf16.msra.mxu0 %v5470
      %5482 = vmatprep.subr.bf16.mxu0 0
      %5483 = vmatpush1.bf16.msra.mxu0 %v5460
      %5484 = vmatprep.subr.bf16.mxu0 0
      %5485 = vmatpush1.bf16.msra.mxu0 %v5458
      %5486 = vmatprep.subr.bf16.mxu0 0
      %5487 = vmatpush1.bf16.msra.mxu0 %v5456
      %5488 = vmatprep.subr.bf16.mxu0 0
      %5489 = vmatpush2.bf16.msra.mxu0 0
      %5490 = vmatprep.subr.bf16.mxu0 0
      %5491 = vmatpush2.bf16.msra.mxu0 0
      %5492 = vmatprep.subr.bf16.mxu0 0
      %5493 = vmatpush2.bf16.msra.mxu0 0
      %5494 = vmatprep.subr.bf16.mxu0 0
      %5495 = vmatpush2.bf16.msra.mxu0 0
      %5496 = vmatprep.subr.bf16.mxu0 0
      %5497 = vmatpush2.bf16.msra.mxu0 0
      %5498 = vmatprep.subr.bf16.mxu0 0
      %5499 = vmatpush2.bf16.msra.mxu0 0
      %5500 = vmatprep.subr.bf16.mxu0 0
      %5501 = vmatpush2.bf16.msra.mxu0 0
      %5502 = vmatprep.subr.bf16.mxu0 0
      %5503 = vmatpush2.bf16.msra.mxu0 0
      %5504 = vmatprep.mubr.bf16.mxu0 0
      %5505 = vmatmul.mubr.bf16.gmra.mxu0 %v5467
      %v5506 = vpop.f32.mrf.mxu0
      %v5507 = vadd.f32 0.0, %v5506
      %v5508 = vpop.f32.mrf.mxu0
      %v5509 = vpop.f32.mrf.mxu0
      %v5510 = vadd.f32 0.0, %v5509
      %v5511 = vpop.f32.mrf.mxu0
      %5512 = vdwg.mxu0
      %5514 = vrot.lane.b32.xlu0 %v5365, 96
      %v5515 = vpop.permute.xlu0 %5514
      %5516 = vrot.lane.b32.xlu0 %v5366, 96
      %v5517 = vpop.permute.xlu0 %5516
      %5518 = vrot.lane.b32.xlu0 %v5367, 96
      %v5519 = vpop.permute.xlu0 %5518
      %5520 = vrot.lane.b32.xlu0 %v5368, 96
      %v5521 = vpop.permute.xlu0 %5520
      %5522 = vrot.lane.b32.xlu0 %v5369, 96
      %v5523 = vpop.permute.xlu0 %5522
      %v5525 = vsel %vm1792, %v5515, 0
      %v5528 = vsel %vm1792, %v5517, 0
      %v5531 = vsel %vm1792, %v5519, 0
      %v5534 = vsel %vm1792, %v5521, 0
      %v5537 = vsel %vm1792, %v5523, 0
      %5539 = vmatprep.subr.bf16.mxu0 0
      %5540 = vmatpush1.bf16.xpose.msra.mxu0 0
      %5541 = vmatprep.subr.bf16.mxu0 0
      %5542 = vmatpush1.bf16.xpose.msra.mxu0 0
      %5543 = vmatprep.subr.bf16.mxu0 0
      %5544 = vmatpush1.bf16.xpose.msra.mxu0 0
      %5545 = vmatprep.subr.bf16.mxu0 0
      %5546 = vmatpush1.bf16.xpose.msra.mxu0 0
      %5547 = vmatprep.subr.bf16.mxu0 0
      %5548 = vmatpush1.bf16.xpose.msra.mxu0 %v5537
      %5549 = vmatprep.subr.bf16.mxu0 0
      %5550 = vmatpush1.bf16.xpose.msra.mxu0 %v5534
      %5551 = vmatprep.subr.bf16.mxu0 0
      %5552 = vmatpush1.bf16.xpose.msra.mxu0 %v5531
      %5553 = vmatprep.subr.bf16.mxu0 0
      %5554 = vmatpush1.bf16.xpose.msra.mxu0 %v5528
      %5555 = vmatprep.subr.bf16.mxu0 0
      %5556 = vmatpush2.bf16.xpose.msra.mxu0 0
      %5557 = vmatprep.subr.bf16.mxu0 0
      %5558 = vmatpush2.bf16.xpose.msra.mxu0 0
      %5559 = vmatprep.subr.bf16.mxu0 0
      %5560 = vmatpush2.bf16.xpose.msra.mxu0 0
      %5561 = vmatprep.subr.bf16.mxu0 0
      %5562 = vmatpush2.bf16.xpose.msra.mxu0 0
      %5563 = vmatprep.subr.bf16.mxu0 0
      %5564 = vmatpush2.bf16.xpose.msra.mxu0 0
      %5565 = vmatprep.subr.bf16.mxu0 0
      %5566 = vmatpush2.bf16.xpose.msra.mxu0 0
      %5567 = vmatprep.subr.bf16.mxu0 0
      %5568 = vmatpush2.bf16.xpose.msra.mxu0 0
      %5569 = vmatprep.subr.bf16.mxu0 0
      %5570 = vmatpush2.bf16.xpose.msra.mxu0 0
      %5571 = vmatprep.mubr.bf16.mxu0 0
      %5572 = vmatmul.mubr.bf16.gmra.mxu0 %v5525
      %v5573 = vpop.f32.mrf.mxu0
      %v5574 = vadd.f32 0.0, %v5573
      %v5575 = vpop.f32.mrf.mxu0
      %v5576 = vpop.f32.mrf.mxu0
      %v5577 = vadd.f32 0.0, %v5576
      %v5578 = vpop.f32.mrf.mxu0
      %5579 = vdwg.mxu0
      %v5580 = vmul.f32 %v5574, 0.17677669
      %v5581 = vmul.f32 %v5577, 0.17677669
      %v5582 = vsel %vm1888, %v5580, -inf
      %5583 = vmax.xlane.f32.xlu0 %v5582
      %v5584 = vpop.xlane.xlu0 %5583
      %v5585 = vsel %vm1888, %v5581, -inf
      %5586 = vmax.xlane.f32.xlu0 %v5585
      %v5587 = vpop.xlane.xlu0 %5586
      %v5588 = vsub.f32 %v5580, %v5584
      %v5589 = vsub.f32 %v5581, %v5587
      %v5590 = vmul.f32 %v5588, 1.442695
      %v5591 = vpow.pop %v5590
      %v5592 = vmul.f32 %v5589, 1.442695
      %v5593 = vpow.pop %v5592
      %v5594 = vsel %vm1888, %v5591, 0.0
      %5595 = vadd.xlane.f32.xlu0 %v5594
      %v5596 = vpop.xlane.xlu0 %5595
      %v5597 = vsel %vm1888, %v5593, 0.0
      %5598 = vadd.xlane.f32.xlu0 %v5597
      %v5599 = vpop.xlane.xlu0 %5598
      %v5600 = vrcp.pop %v5596
      %v5601 = vrcp.pop %v5599
      %v5602 = vmul.f32 %v5591, %v5600
      %v5603 = vmul.f32 %v5593, %v5601
      %v5604 = vpack.c.bf16 %v5603, %v5602
      %5605 = vrot.lane.b32.xlu0 %v5366, 32
      %v5606 = vpop.permute.xlu0 %5605
      %5607 = vrot.lane.b32.xlu0 %v5367, 32
      %v5608 = vpop.permute.xlu0 %5607
      %5609 = vrot.lane.b32.xlu0 %v5368, 32
      %v5610 = vpop.permute.xlu0 %5609
      %5611 = vrot.lane.b32.xlu0 %v5369, 32
      %v5612 = vpop.permute.xlu0 %5611
      %v5617 = vsel %vm1888, %v5604, 0
      %v5620 = vsel %vm1986, %v5612, 0
      %5622 = vmatprep.subr.bf16.mxu0 0
      %5623 = vmatpush1.bf16.msra.mxu0 0
      %5624 = vmatprep.subr.bf16.mxu0 0
      %5625 = vmatpush1.bf16.msra.mxu0 0
      %5626 = vmatprep.subr.bf16.mxu0 0
      %5627 = vmatpush1.bf16.msra.mxu0 0
      %5628 = vmatprep.subr.bf16.mxu0 0
      %5629 = vmatpush1.bf16.msra.mxu0 0
      %5630 = vmatprep.subr.bf16.mxu0 0
      %5631 = vmatpush1.bf16.msra.mxu0 %v5620
      %5632 = vmatprep.subr.bf16.mxu0 0
      %5633 = vmatpush1.bf16.msra.mxu0 %v5610
      %5634 = vmatprep.subr.bf16.mxu0 0
      %5635 = vmatpush1.bf16.msra.mxu0 %v5608
      %5636 = vmatprep.subr.bf16.mxu0 0
      %5637 = vmatpush1.bf16.msra.mxu0 %v5606
      %5638 = vmatprep.subr.bf16.mxu0 0
      %5639 = vmatpush2.bf16.msra.mxu0 0
      %5640 = vmatprep.subr.bf16.mxu0 0
      %5641 = vmatpush2.bf16.msra.mxu0 0
      %5642 = vmatprep.subr.bf16.mxu0 0
      %5643 = vmatpush2.bf16.msra.mxu0 0
      %5644 = vmatprep.subr.bf16.mxu0 0
      %5645 = vmatpush2.bf16.msra.mxu0 0
      %5646 = vmatprep.subr.bf16.mxu0 0
      %5647 = vmatpush2.bf16.msra.mxu0 0
      %5648 = vmatprep.subr.bf16.mxu0 0
      %5649 = vmatpush2.bf16.msra.mxu0 0
      %5650 = vmatprep.subr.bf16.mxu0 0
      %5651 = vmatpush2.bf16.msra.mxu0 0
      %5652 = vmatprep.subr.bf16.mxu0 0
      %5653 = vmatpush2.bf16.msra.mxu0 0
      %5654 = vmatprep.mubr.bf16.mxu0 0
      %5655 = vmatmul.mubr.bf16.gmra.mxu0 %v5617
      %v5656 = vpop.f32.mrf.mxu0
      %v5657 = vadd.f32 0.0, %v5656
      %v5658 = vpop.f32.mrf.mxu0
      %v5659 = vpop.f32.mrf.mxu0
      %v5660 = vadd.f32 0.0, %v5659
      %v5661 = vpop.f32.mrf.mxu0
      %5662 = vdwg.mxu0
      %5665 = vrot.lane.b32.xlu0 %v5657, 32
      %v5666 = vpop.permute.xlu0 %5665
      %5667 = vrot.lane.b32.xlu0 %v5660, 32
      %v5668 = vpop.permute.xlu0 %5667
      %v5671 = vsel %vm1792, %v5507, %v5666
      %v5672 = vsel %vm1792, %v5510, %v5668
      %v5673 = vpack.c.bf16 %v5672, %v5671
      %v5674 = vpack.c.bf16 %v5144, %v5143
      %v5675 = vpack.c.bf16 %v5146, %v5145
      %v5676 = vpack.c.bf16 %v5148, %v5147
      %v5677 = vpack.c.bf16 %v5150, %v5149
      %v5679 = vlaneseq
      %v5680 = vshrl.u32 %v5679, 7
      %v5681 = vsub.s32 0, %v5680
      %v5682 = vrot.slane %v5151, %v5681
      %v5685 = vsel %vm1539, %v5673, 0
      %5687 = vmatprep.subr.bf16.mxu0 0
      %5688 = vmatpush1.bf16.msra.mxu0 0
      %5689 = vmatprep.subr.bf16.mxu0 0
      %5690 = vmatpush1.bf16.msra.mxu0 0
      %5691 = vmatprep.subr.bf16.mxu0 0
      %5692 = vmatpush1.bf16.msra.mxu0 0
      %5693 = vmatprep.subr.bf16.mxu0 0
      %5694 = vmatpush1.bf16.msra.mxu0 0
      %5695 = vmatprep.subr.bf16.mxu0 0
      %5696 = vmatpush1.bf16.msra.mxu0 %v5677
      %5697 = vmatprep.subr.bf16.mxu0 0
      %5698 = vmatpush1.bf16.msra.mxu0 %v5676
      %5699 = vmatprep.subr.bf16.mxu0 0
      %5700 = vmatpush1.bf16.msra.mxu0 %v5675
      %5701 = vmatprep.subr.bf16.mxu0 0
      %5702 = vmatpush1.bf16.msra.mxu0 %v5674
      %5703 = vmatprep.subr.bf16.mxu0 0
      %5704 = vmatpush2.bf16.msra.mxu0 0
      %5705 = vmatprep.subr.bf16.mxu0 0
      %5706 = vmatpush2.bf16.msra.mxu0 0
      %5707 = vmatprep.subr.bf16.mxu0 0
      %5708 = vmatpush2.bf16.msra.mxu0 0
      %5709 = vmatprep.subr.bf16.mxu0 0
      %5710 = vmatpush2.bf16.msra.mxu0 0
      %5711 = vmatprep.subr.bf16.mxu0 0
      %5712 = vmatpush2.bf16.msra.mxu0 0
      %5713 = vmatprep.subr.bf16.mxu0 0
      %5714 = vmatpush2.bf16.msra.mxu0 0
      %5715 = vmatprep.subr.bf16.mxu0 0
      %5716 = vmatpush2.bf16.msra.mxu0 0
      %5717 = vmatprep.subr.bf16.mxu0 0
      %5718 = vmatpush2.bf16.msra.mxu0 0
      %5719 = vmatprep.mubr.bf16.mxu0 0
      %5720 = vmatmul.mubr.bf16.gmra.mxu0 %v5685
      %v5721 = vpop.f32.mrf.mxu0
      %v5722 = vadd.f32 %v5682, %v5721
      %v5723 = vpop.f32.mrf.mxu0
      %v5724 = vpop.f32.mrf.mxu0
      %v5725 = vadd.f32 %v5682, %v5724
      %v5726 = vpop.f32.mrf.mxu0
      %5727 = vdwg.mxu0
      %v5728 = vadd.f32 %v5722, %v5141
      %v5729 = vadd.f32 %v5725, %v5142
      %v5730 = vld [vmem:[%s57] sm:$0x1]
      %v5731 = vld [vmem:[%s59] sm:$0x1]
      %v5732 = vsel %vm1539, %v5728, 0.0
      %5733 = vadd.xlane.f32.xlu0 %v5732
      %v5734 = vpop.xlane.xlu0 %5733
      %v5735 = vsel %vm1539, %v5729, 0.0
      %5736 = vadd.xlane.f32.xlu0 %v5735
      %v5737 = vpop.xlane.xlu0 %5736
      %v5738 = vmul.f32 %v5734, %v2495
      %v5739 = vmul.f32 %v5737, %v2495
      %v5740 = vsub.f32 %v5728, %v5738
      %v5741 = vsub.f32 %v5729, %v5739
      %v5742 = vmul.f32 %v5740, %v5740
      %v5743 = vmul.f32 %v5741, %v5741
      %v5744 = vsel %vm1539, %v5742, 0.0
      %5745 = vadd.xlane.f32.xlu0 %v5744
      %v5746 = vpop.xlane.xlu0 %5745
      %v5747 = vsel %vm1539, %v5743, 0.0
      %5748 = vadd.xlane.f32.xlu0 %v5747
      %v5749 = vpop.xlane.xlu0 %5748
      %v5750 = vmul.f32 %v5746, 0.015873017
      %v5751 = vmul.f32 %v5749, 0.015873017
      %v5752 = vrsqrt.pop %v5750
      %v5753 = vmul.f32 %v5750, %v5752
      %vm5754 = vcmp.eq.f32.partialorder %v5750, inf
      %v5755 = vsel %vm5754, %v5750, %v5753
      %vm5756 = vcmp.eq.f32.partialorder %v5750, 0.0
      %v5757 = vand.u32 %v5750, 2147483648
      %v5758 = vsel %vm5756, %v5757, %v5755
      %v5759 = vrsqrt.pop %v5751
      %v5760 = vmul.f32 %v5751, %v5759
      %vm5761 = vcmp.eq.f32.partialorder %v5751, inf
      %v5762 = vsel %vm5761, %v5751, %v5760
      %vm5763 = vcmp.eq.f32.partialorder %v5751, 0.0
      %v5764 = vand.u32 %v5751, 2147483648
      %v5765 = vsel %vm5763, %v5764, %v5762
      %v5766 = vadd.f32 %v5758, 0.001
      %v5767 = vadd.f32 %v5765, 0.001
      %v5768 = vrcp.pop %v5766
      %v5769 = vmul.f32 %v5740, %v5768
      %v5770 = vrcp.pop %v5767
      %v5771 = vmul.f32 %v5741, %v5770
      %v5773 = vlaneseq
      %v5774 = vshrl.u32 %v5773, 7
      %v5775 = vsub.s32 0, %v5774
      %v5776 = vrot.slane %v5730, %v5775
      %v5778 = vmul.f32 %v5769, %v5776
      %v5779 = vmul.f32 %v5771, %v5776
      %v5781 = vlaneseq
      %v5782 = vshrl.u32 %v5781, 7
      %v5783 = vsub.s32 0, %v5782
      %v5784 = vrot.slane %v5731, %v5783
      %v5786 = vadd.f32 %v5778, %v5784
      %v5787 = vadd.f32 %v5779, %v5784
      %v5788 = vld [vmem:[%s61] sm:$0xff]
      %v5789 = vld [vmem:[%s61 + $0x8] sm:$0xff]
      %v5790 = vld [vmem:[%s61 + $0x10] sm:$0xff]
      %v5791 = vld [vmem:[%s61 + $0x18] sm:$0xff]
      %v5792 = vld [vmem:[%s61 + $0x20] sm:$0xff]
      %v5793 = vld [vmem:[%s61 + $0x28] sm:$0xff]
      %v5794 = vld [vmem:[%s61 + $0x30] sm:$0xff]
      %v5795 = vld [vmem:[%s61 + $0x38] sm:$0xff]
      %v5796 = vld [vmem:[%s63] sm:$0x1]
      %v5797 = vld [vmem:[%s65] sm:$0xff]
      %v5798 = vld [vmem:[%s65 + $0x8] sm:$0xff]
      %v5799 = vld [vmem:[%s65 + $0x10] sm:$0xff]
      %v5800 = vld [vmem:[%s65 + $0x18] sm:$0xff]
      %v5801 = vld [vmem:[%s65 + $0x20] sm:$0xff]
      %v5802 = vld [vmem:[%s65 + $0x28] sm:$0xff]
      %v5803 = vld [vmem:[%s65 + $0x30] sm:$0xff]
      %v5804 = vld [vmem:[%s65 + $0x38] sm:$0xff]
      %v5805 = vld [vmem:[%s65 + $0x40] sm:$0xff]
      %v5806 = vld [vmem:[%s65 + $0x48] sm:$0xff]
      %v5807 = vld [vmem:[%s65 + $0x50] sm:$0xff]
      %v5808 = vld [vmem:[%s65 + $0x58] sm:$0xff]
      %v5809 = vld [vmem:[%s65 + $0x60] sm:$0xff]
      %v5810 = vld [vmem:[%s65 + $0x68] sm:$0xff]
      %v5811 = vld [vmem:[%s65 + $0x70] sm:$0xff]
      %v5812 = vld [vmem:[%s65 + $0x78] sm:$0xff]
      %v5813 = vld [vmem:[%s67] sm:$0x1]
      %v5814 = vpack.c.bf16 %v5787, %v5786
      %v5815 = vpack.c.bf16 %v5789, %v5788
      %v5816 = vpack.c.bf16 %v5791, %v5790
      %v5817 = vpack.c.bf16 %v5793, %v5792
      %v5818 = vpack.c.bf16 %v5795, %v5794
      %v5820 = vlaneseq
      %v5821 = vshrl.u32 %v5820, 7
      %v5822 = vsub.s32 0, %v5821
      %v5823 = vrot.slane %v5796, %v5822
      %v5826 = vsel %vm1539, %v5814, 0
      %5828 = vmatprep.subr.bf16.mxu0 0
      %5829 = vmatpush1.bf16.msra.mxu0 0
      %5830 = vmatprep.subr.bf16.mxu0 0
      %5831 = vmatpush1.bf16.msra.mxu0 0
      %5832 = vmatprep.subr.bf16.mxu0 0
      %5833 = vmatpush1.bf16.msra.mxu0 0
      %5834 = vmatprep.subr.bf16.mxu0 0
      %5835 = vmatpush1.bf16.msra.mxu0 0
      %5836 = vmatprep.subr.bf16.mxu0 0
      %5837 = vmatpush1.bf16.msra.mxu0 %v5818
      %5838 = vmatprep.subr.bf16.mxu0 0
      %5839 = vmatpush1.bf16.msra.mxu0 %v5817
      %5840 = vmatprep.subr.bf16.mxu0 0
      %5841 = vmatpush1.bf16.msra.mxu0 %v5816
      %5842 = vmatprep.subr.bf16.mxu0 0
      %5843 = vmatpush1.bf16.msra.mxu0 %v5815
      %5844 = vmatprep.subr.bf16.mxu0 0
      %5845 = vmatpush2.bf16.msra.mxu0 0
      %5846 = vmatprep.subr.bf16.mxu0 0
      %5847 = vmatpush2.bf16.msra.mxu0 0
      %5848 = vmatprep.subr.bf16.mxu0 0
      %5849 = vmatpush2.bf16.msra.mxu0 0
      %5850 = vmatprep.subr.bf16.mxu0 0
      %5851 = vmatpush2.bf16.msra.mxu0 0
      %5852 = vmatprep.subr.bf16.mxu0 0
      %5853 = vmatpush2.bf16.msra.mxu0 0
      %5854 = vmatprep.subr.bf16.mxu0 0
      %5855 = vmatpush2.bf16.msra.mxu0 0
      %5856 = vmatprep.subr.bf16.mxu0 0
      %5857 = vmatpush2.bf16.msra.mxu0 0
      %5858 = vmatprep.subr.bf16.mxu0 0
      %5859 = vmatpush2.bf16.msra.mxu0 0
      %5860 = vmatprep.mubr.bf16.mxu0 0
      %5861 = vmatmul.mubr.bf16.gmra.mxu0 %v5826
      %v5862 = vpop.f32.mrf.mxu0
      %v5863 = vadd.f32 %v5823, %v5862
      %v5864 = vpop.f32.mrf.mxu0
      %v5865 = vpop.f32.mrf.mxu0
      %v5866 = vadd.f32 %v5823, %v5865
      %v5867 = vpop.f32.mrf.mxu0
      %5868 = vdwg.mxu0
      %v5869 = vmax.f32 %v5863, 0.0
      %v5870 = vmax.f32 %v5866, 0.0
      %v5871 = vpack.c.bf16 %v5870, %v5869
      %v5872 = vpack.c.bf16 %v5798, %v5797
      %v5873 = vpack.c.bf16 %v5800, %v5799
      %v5874 = vpack.c.bf16 %v5802, %v5801
      %v5875 = vpack.c.bf16 %v5804, %v5803
      %v5876 = vpack.c.bf16 %v5806, %v5805
      %v5877 = vpack.c.bf16 %v5808, %v5807
      %v5878 = vpack.c.bf16 %v5810, %v5809
      %v5879 = vpack.c.bf16 %v5812, %v5811
      %v5881 = vlaneseq
      %v5882 = vshrl.u32 %v5881, 7
      %v5883 = vsub.s32 0, %v5882
      %v5884 = vrot.slane %v5813, %v5883
      %5886 = vmatprep.subr.bf16.mxu0 0
      %5887 = vmatpush1.bf16.msra.mxu0 %v5879
      %5888 = vmatprep.subr.bf16.mxu0 0
      %5889 = vmatpush1.bf16.msra.mxu0 %v5878
      %5890 = vmatprep.subr.bf16.mxu0 0
      %5891 = vmatpush1.bf16.msra.mxu0 %v5877
      %5892 = vmatprep.subr.bf16.mxu0 0
      %5893 = vmatpush1.bf16.msra.mxu0 %v5876
      %5894 = vmatprep.subr.bf16.mxu0 0
      %5895 = vmatpush1.bf16.msra.mxu0 %v5875
      %5896 = vmatprep.subr.bf16.mxu0 0
      %5897 = vmatpush1.bf16.msra.mxu0 %v5874
      %5898 = vmatprep.subr.bf16.mxu0 0
      %5899 = vmatpush1.bf16.msra.mxu0 %v5873
      %5900 = vmatprep.subr.bf16.mxu0 0
      %5901 = vmatpush1.bf16.msra.mxu0 %v5872
      %5902 = vmatprep.subr.bf16.mxu0 0
      %5903 = vmatpush2.bf16.msra.mxu0 0
      %5904 = vmatprep.subr.bf16.mxu0 0
      %5905 = vmatpush2.bf16.msra.mxu0 0
      %5906 = vmatprep.subr.bf16.mxu0 0
      %5907 = vmatpush2.bf16.msra.mxu0 0
      %5908 = vmatprep.subr.bf16.mxu0 0
      %5909 = vmatpush2.bf16.msra.mxu0 0
      %5910 = vmatprep.subr.bf16.mxu0 0
      %5911 = vmatpush2.bf16.msra.mxu0 0
      %5912 = vmatprep.subr.bf16.mxu0 0
      %5913 = vmatpush2.bf16.msra.mxu0 0
      %5914 = vmatprep.subr.bf16.mxu0 0
      %5915 = vmatpush2.bf16.msra.mxu0 0
      %5916 = vmatprep.subr.bf16.mxu0 0
      %5917 = vmatpush2.bf16.msra.mxu0 0
      %5918 = vmatprep.mubr.bf16.mxu0 0
      %5919 = vmatmul.mubr.bf16.gmra.mxu0 %v5871
      %v5920 = vpop.f32.mrf.mxu0
      %v5921 = vadd.f32 %v5884, %v5920
      %v5922 = vpop.f32.mrf.mxu0
      %v5923 = vpop.f32.mrf.mxu0
      %v5924 = vadd.f32 %v5884, %v5923
      %v5925 = vpop.f32.mrf.mxu0
      %5926 = vdwg.mxu0
      %v5927 = vadd.f32 %v5921, %v5786
      %v5928 = vadd.f32 %v5924, %v5787
      %v5929 = vld [vmem:[%s69] sm:$0x1]
      %v5930 = vld [vmem:[%s71] sm:$0x1]
      %v5931 = vsel %vm1539, %v5927, 0.0
      %5932 = vadd.xlane.f32.xlu0 %v5931
      %v5933 = vpop.xlane.xlu0 %5932
      %v5934 = vsel %vm1539, %v5928, 0.0
      %5935 = vadd.xlane.f32.xlu0 %v5934
      %v5936 = vpop.xlane.xlu0 %5935
      %v5937 = vmul.f32 %v5933, %v2495
      %v5938 = vmul.f32 %v5936, %v2495
      %v5939 = vsub.f32 %v5927, %v5937
      %v5940 = vsub.f32 %v5928, %v5938
      %v5941 = vmul.f32 %v5939, %v5939
      %v5942 = vmul.f32 %v5940, %v5940
      %v5943 = vsel %vm1539, %v5941, 0.0
      %5944 = vadd.xlane.f32.xlu0 %v5943
      %v5945 = vpop.xlane.xlu0 %5944
      %v5946 = vsel %vm1539, %v5942, 0.0
      %5947 = vadd.xlane.f32.xlu0 %v5946
      %v5948 = vpop.xlane.xlu0 %5947
      %v5949 = vmul.f32 %v5945, 0.015873017
      %v5950 = vmul.f32 %v5948, 0.015873017
      %v5951 = vrsqrt.pop %v5949
      %v5952 = vmul.f32 %v5949, %v5951
      %vm5953 = vcmp.eq.f32.partialorder %v5949, inf
      %v5954 = vsel %vm5953, %v5949, %v5952
      %vm5955 = vcmp.eq.f32.partialorder %v5949, 0.0
      %v5956 = vand.u32 %v5949, 2147483648
      %v5957 = vsel %vm5955, %v5956, %v5954
      %v5958 = vrsqrt.pop %v5950
      %v5959 = vmul.f32 %v5950, %v5958
      %vm5960 = vcmp.eq.f32.partialorder %v5950, inf
      %v5961 = vsel %vm5960, %v5950, %v5959
      %vm5962 = vcmp.eq.f32.partialorder %v5950, 0.0
      %v5963 = vand.u32 %v5950, 2147483648
      %v5964 = vsel %vm5962, %v5963, %v5961
      %v5965 = vadd.f32 %v5957, 0.001
      %v5966 = vadd.f32 %v5964, 0.001
      %v5967 = vrcp.pop %v5965
      %v5968 = vmul.f32 %v5939, %v5967
      %v5969 = vrcp.pop %v5966
      %v5970 = vmul.f32 %v5940, %v5969
      %v5972 = vlaneseq
      %v5973 = vshrl.u32 %v5972, 7
      %v5974 = vsub.s32 0, %v5973
      %v5975 = vrot.slane %v5929, %v5974
      %v5977 = vmul.f32 %v5968, %v5975
      %v5978 = vmul.f32 %v5970, %v5975
      %v5980 = vlaneseq
      %v5981 = vshrl.u32 %v5980, 7
      %v5982 = vsub.s32 0, %v5981
      %v5983 = vrot.slane %v5930, %v5982
      %v5985 = vadd.f32 %v5977, %v5983
      %v5986 = vadd.f32 %v5978, %v5983
      %s5987 = scalar_lea.vmem %s41, 64
      %v5988 = vld [vmem:[%s5987] sm:$0xff]
      %v5989 = vld [vmem:[%s5987 + $0x8] sm:$0xff]
      %v5990 = vld [vmem:[%s5987 + $0x10] sm:$0xff]
      %v5991 = vld [vmem:[%s5987 + $0x18] sm:$0xff]
      %v5992 = vld [vmem:[%s5987 + $0x20] sm:$0xff]
      %v5993 = vld [vmem:[%s5987 + $0x28] sm:$0xff]
      %v5994 = vld [vmem:[%s5987 + $0x30] sm:$0xff]
      %v5995 = vld [vmem:[%s5987 + $0x38] sm:$0xff]
      %s5996 = scalar_lea.vmem %s43, 1
      %v5997 = vld [vmem:[%s5996] sm:$0x1]
      %s5998 = scalar_lea.vmem %s37, 128
      %v5999 = vld [vmem:[%s5998] sm:$0xff]
      %v6000 = vld [vmem:[%s5998 + $0x8] sm:$0xff]
      %v6001 = vld [vmem:[%s5998 + $0x10] sm:$0xff]
      %v6002 = vld [vmem:[%s5998 + $0x18] sm:$0xff]
      %v6003 = vld [vmem:[%s5998 + $0x20] sm:$0xff]
      %v6004 = vld [vmem:[%s5998 + $0x28] sm:$0xff]
      %v6005 = vld [vmem:[%s5998 + $0x30] sm:$0xff]
      %v6006 = vld [vmem:[%s5998 + $0x38] sm:$0xff]
      %v6007 = vld [vmem:[%s5998 + $0x40] sm:$0xff]
      %v6008 = vld [vmem:[%s5998 + $0x48] sm:$0xff]
      %v6009 = vld [vmem:[%s5998 + $0x50] sm:$0xff]
      %v6010 = vld [vmem:[%s5998 + $0x58] sm:$0xff]
      %v6011 = vld [vmem:[%s5998 + $0x60] sm:$0xff]
      %v6012 = vld [vmem:[%s5998 + $0x68] sm:$0xff]
      %v6013 = vld [vmem:[%s5998 + $0x70] sm:$0xff]
      %v6014 = vld [vmem:[%s5998 + $0x78] sm:$0xff]
      %v6015 = vpack.c.bf16 %v5986, %v5985
      %v6016 = vpack.c.bf16 %v6001, %v5999
      %v6017 = vpack.c.bf16 %v6002, %v6000
      %v6018 = vpack.c.bf16 %v6005, %v6003
      %v6019 = vpack.c.bf16 %v6006, %v6004
      %v6020 = vpack.c.bf16 %v6009, %v6007
      %v6021 = vpack.c.bf16 %v6010, %v6008
      %v6022 = vpack.c.bf16 %v6013, %v6011
      %v6023 = vpack.c.bf16 %v6014, %v6012
      %s6024 = scalar_lea.vmem %s39, 2
      %v6025 = vld [vmem:[%s6024] sm:$0x3]
      %v6027 = vlaneseq
      %v6028 = vshrl.u32 %v6027, 7
      %v6029 = vsub.s32 0, %v6028
      %v6030 = vrot.slane %v6025, %v6029
      %v6031 = vlaneseq
      %v6032 = vshrl.u32 %v6031, 7
      %v6033 = vsub.s32 1, %v6032
      %v6034 = vrot.slane %v6025, %v6033
      %v6038 = vsel %vm1539, %v6015, 0
      %6040 = vmatprep.subr.bf16.mxu0 0
      %6041 = vmatpush1.bf16.msra.mxu0 0
      %6042 = vmatprep.subr.bf16.mxu0 0
      %6043 = vmatpush1.bf16.msra.mxu0 0
      %6044 = vmatprep.subr.bf16.mxu0 0
      %6045 = vmatpush1.bf16.msra.mxu0 0
      %6046 = vmatprep.subr.bf16.mxu0 0
      %6047 = vmatpush1.bf16.msra.mxu0 0
      %6048 = vmatprep.subr.bf16.mxu0 %v6023
      %6049 = vmatpush1.bf16.msra.mxu0 %v6022
      %6050 = vmatprep.subr.bf16.mxu0 %v6021
      %6051 = vmatpush1.bf16.msra.mxu0 %v6020
      %6052 = vmatprep.subr.bf16.mxu0 %v6019
      %6053 = vmatpush1.bf16.msra.mxu0 %v6018
      %6054 = vmatprep.subr.bf16.mxu0 %v6017
      %6055 = vmatpush1.bf16.msra.mxu0 %v6016
      %6056 = vmatprep.subr.bf16.mxu0 0
      %6057 = vmatpush2.bf16.msra.mxu0 0
      %6058 = vmatprep.subr.bf16.mxu0 0
      %6059 = vmatpush2.bf16.msra.mxu0 0
      %6060 = vmatprep.subr.bf16.mxu0 0
      %6061 = vmatpush2.bf16.msra.mxu0 0
      %6062 = vmatprep.subr.bf16.mxu0 0
      %6063 = vmatpush2.bf16.msra.mxu0 0
      %6064 = vmatprep.subr.bf16.mxu0 0
      %6065 = vmatpush2.bf16.msra.mxu0 0
      %6066 = vmatprep.subr.bf16.mxu0 0
      %6067 = vmatpush2.bf16.msra.mxu0 0
      %6068 = vmatprep.subr.bf16.mxu0 0
      %6069 = vmatpush2.bf16.msra.mxu0 0
      %6070 = vmatprep.subr.bf16.mxu0 0
      %6071 = vmatpush2.bf16.msra.mxu0 0
      %6072 = vmatprep.mubr.bf16.mxu0 0
      %6073 = vmatmul.mubr.bf16.gmra.mxu0 %v6038
      %v6074 = vpop.f32.mrf.mxu0
      %v6075 = vadd.f32 %v6030, %v6074
      %v6076 = vpop.f32.mrf.mxu0
      %v6077 = vadd.f32 %v6034, %v6076
      %v6078 = vpop.f32.mrf.mxu0
      %v6079 = vadd.f32 %v6030, %v6078
      %v6080 = vpop.f32.mrf.mxu0
      %v6081 = vadd.f32 %v6034, %v6080
      %6082 = vdwg.mxu0
      %6083 = vst [vmem:[#allocation2] sm:$0xff] %v6075
      %6084 = vst [vmem:[#allocation2 + $0x8] sm:$0xff] %v6077
      %6085 = vst [vmem:[#allocation2 + $0x10] sm:$0xff] %v6079
      %6086 = vst [vmem:[#allocation2 + $0x18] sm:$0xff] %v6081
      %v6087 = vld [vmem:[#allocation2] sm:$0xff]
      %v6088 = vld [vmem:[#allocation2 + $0x10] sm:$0xff]
      %v6089 = vld [vmem:[#allocation2 + $0x8] sm:$0xff]
      %v6090 = vld [vmem:[#allocation2 + $0x18] sm:$0xff]
      %v6091 = vpack.c.bf16 %v6088, %v6087
      %6093 = vrot.lane.b32.xlu0 %v6091, 64
      %v6094 = vpop.permute.xlu0 %6093
      %v6096 = vsel %vm1792, %v6091, 0
      %v6099 = vsel %vm1792, %v6094, 0
      %6101 = vmatprep.subr.bf16.mxu0 0
      %6102 = vmatpush1.bf16.xpose.msra.mxu0 0
      %6103 = vmatprep.subr.bf16.mxu0 0
      %6104 = vmatpush1.bf16.xpose.msra.mxu0 0
      %6105 = vmatprep.subr.bf16.mxu0 0
      %6106 = vmatpush1.bf16.xpose.msra.mxu0 0
      %6107 = vmatprep.subr.bf16.mxu0 0
      %6108 = vmatpush1.bf16.xpose.msra.mxu0 0
      %6109 = vmatprep.subr.bf16.mxu0 0
      %6110 = vmatpush1.bf16.xpose.msra.mxu0 0
      %6111 = vmatprep.subr.bf16.mxu0 0
      %6112 = vmatpush1.bf16.xpose.msra.mxu0 0
      %6113 = vmatprep.subr.bf16.mxu0 0
      %6114 = vmatpush1.bf16.xpose.msra.mxu0 0
      %6115 = vmatprep.subr.bf16.mxu0 0
      %6116 = vmatpush1.bf16.xpose.msra.mxu0 %v6099
      %6117 = vmatprep.subr.bf16.mxu0 0
      %6118 = vmatpush2.bf16.xpose.msra.mxu0 0
      %6119 = vmatprep.subr.bf16.mxu0 0
      %6120 = vmatpush2.bf16.xpose.msra.mxu0 0
      %6121 = vmatprep.subr.bf16.mxu0 0
      %6122 = vmatpush2.bf16.xpose.msra.mxu0 0
      %6123 = vmatprep.subr.bf16.mxu0 0
      %6124 = vmatpush2.bf16.xpose.msra.mxu0 0
      %6125 = vmatprep.subr.bf16.mxu0 0
      %6126 = vmatpush2.bf16.xpose.msra.mxu0 0
      %6127 = vmatprep.subr.bf16.mxu0 0
      %6128 = vmatpush2.bf16.xpose.msra.mxu0 0
      %6129 = vmatprep.subr.bf16.mxu0 0
      %6130 = vmatpush2.bf16.xpose.msra.mxu0 0
      %6131 = vmatprep.subr.bf16.mxu0 0
      %6132 = vmatpush2.bf16.xpose.msra.mxu0 0
      %6133 = vmatprep.mubr.bf16.mxu0 0
      %6134 = vmatmul.mubr.bf16.gmra.mxu0 %v6096
      %v6135 = vpop.f32.mrf.mxu0
      %v6136 = vadd.f32 0.0, %v6135
      %v6137 = vpop.f32.mrf.mxu0
      %v6138 = vpop.f32.mrf.mxu0
      %v6139 = vadd.f32 0.0, %v6138
      %v6140 = vpop.f32.mrf.mxu0
      %6141 = vdwg.mxu0
      %v6142 = vmul.f32 %v6136, 0.17677669
      %v6143 = vmul.f32 %v6139, 0.17677669
      %v6144 = vadd.f32 %v6142, %v1507
      %v6145 = vadd.f32 %v6143, %v1508
      %v6146 = vsel %vm4823, %v6144, -inf
      %6147 = vmax.xlane.f32.xlu0 %v6146
      %v6148 = vpop.xlane.xlu0 %6147
      %v6149 = vsel %vm4823, %v6145, -inf
      %6150 = vmax.xlane.f32.xlu0 %v6149
      %v6151 = vpop.xlane.xlu0 %6150
      %v6152 = vsub.f32 %v6144, %v6148
      %v6153 = vsub.f32 %v6145, %v6151
      %v6154 = vmul.f32 %v6152, 1.442695
      %v6155 = vpow.pop %v6154
      %v6156 = vmul.f32 %v6153, 1.442695
      %v6157 = vpow.pop %v6156
      %v6158 = vsel %vm4823, %v6155, 0.0
      %6159 = vadd.xlane.f32.xlu0 %v6158
      %v6160 = vpop.xlane.xlu0 %6159
      %v6161 = vsel %vm4823, %v6157, 0.0
      %6162 = vadd.xlane.f32.xlu0 %v6161
      %v6163 = vpop.xlane.xlu0 %6162
      %v6164 = vrcp.pop %v6160
      %v6165 = vrcp.pop %v6163
      %v6166 = vmul.f32 %v6155, %v6164
      %v6167 = vmul.f32 %v6157, %v6165
      %v6168 = vpack.c.bf16 %v6167, %v6166
      %v6169 = vpack.c.bf16 %v6090, %v6089
      %v6171 = vsel %vm4823, %v6168, 0
      %6173 = vmatprep.subr.bf16.mxu0 0
      %6174 = vmatpush1.bf16.msra.mxu0 0
      %6175 = vmatprep.subr.bf16.mxu0 0
      %6176 = vmatpush1.bf16.msra.mxu0 0
      %6177 = vmatprep.subr.bf16.mxu0 0
      %6178 = vmatpush1.bf16.msra.mxu0 0
      %6179 = vmatprep.subr.bf16.mxu0 0
      %6180 = vmatpush1.bf16.msra.mxu0 0
      %6181 = vmatprep.subr.bf16.mxu0 0
      %6182 = vmatpush1.bf16.msra.mxu0 0
      %6183 = vmatprep.subr.bf16.mxu0 0
      %6184 = vmatpush1.bf16.msra.mxu0 0
      %6185 = vmatprep.subr.bf16.mxu0 0
      %6186 = vmatpush1.bf16.msra.mxu0 0
      %6187 = vmatprep.subr.bf16.mxu0 0
      %6188 = vmatpush1.bf16.msra.mxu0 %v6169
      %6189 = vmatprep.subr.bf16.mxu0 0
      %6190 = vmatpush2.bf16.msra.mxu0 0
      %6191 = vmatprep.subr.bf16.mxu0 0
      %6192 = vmatpush2.bf16.msra.mxu0 0
      %6193 = vmatprep.subr.bf16.mxu0 0
      %6194 = vmatpush2.bf16.msra.mxu0 0
      %6195 = vmatprep.subr.bf16.mxu0 0
      %6196 = vmatpush2.bf16.msra.mxu0 0
      %6197 = vmatprep.subr.bf16.mxu0 0
      %6198 = vmatpush2.bf16.msra.mxu0 0
      %6199 = vmatprep.subr.bf16.mxu0 0
      %6200 = vmatpush2.bf16.msra.mxu0 0
      %6201 = vmatprep.subr.bf16.mxu0 0
      %6202 = vmatpush2.bf16.msra.mxu0 0
      %6203 = vmatprep.subr.bf16.mxu0 0
      %6204 = vmatpush2.bf16.msra.mxu0 0
      %6205 = vmatprep.mubr.bf16.mxu0 0
      %6206 = vmatmul.mubr.bf16.gmra.mxu0 %v6171
      %v6207 = vpop.f32.mrf.mxu0
      %v6208 = vadd.f32 0.0, %v6207
      %v6209 = vpop.f32.mrf.mxu0
      %v6210 = vpop.f32.mrf.mxu0
      %v6211 = vadd.f32 0.0, %v6210
      %v6212 = vpop.f32.mrf.mxu0
      %6213 = vdwg.mxu0
      %6214 = vrot.lane.b32.xlu0 %v6091, 96
      %v6215 = vpop.permute.xlu0 %6214
      %6216 = vrot.lane.b32.xlu0 %v6091, 32
      %v6217 = vpop.permute.xlu0 %6216
      %v6219 = vsel %vm1792, %v6215, 0
      %v6222 = vsel %vm1792, %v6217, 0
      %6224 = vmatprep.subr.bf16.mxu0 0
      %6225 = vmatpush1.bf16.xpose.msra.mxu0 0
      %6226 = vmatprep.subr.bf16.mxu0 0
      %6227 = vmatpush1.bf16.xpose.msra.mxu0 0
      %6228 = vmatprep.subr.bf16.mxu0 0
      %6229 = vmatpush1.bf16.xpose.msra.mxu0 0
      %6230 = vmatprep.subr.bf16.mxu0 0
      %6231 = vmatpush1.bf16.xpose.msra.mxu0 0
      %6232 = vmatprep.subr.bf16.mxu0 0
      %6233 = vmatpush1.bf16.xpose.msra.mxu0 0
      %6234 = vmatprep.subr.bf16.mxu0 0
      %6235 = vmatpush1.bf16.xpose.msra.mxu0 0
      %6236 = vmatprep.subr.bf16.mxu0 0
      %6237 = vmatpush1.bf16.xpose.msra.mxu0 0
      %6238 = vmatprep.subr.bf16.mxu0 0
      %6239 = vmatpush1.bf16.xpose.msra.mxu0 %v6222
      %6240 = vmatprep.subr.bf16.mxu0 0
      %6241 = vmatpush2.bf16.xpose.msra.mxu0 0
      %6242 = vmatprep.subr.bf16.mxu0 0
      %6243 = vmatpush2.bf16.xpose.msra.mxu0 0
      %6244 = vmatprep.subr.bf16.mxu0 0
      %6245 = vmatpush2.bf16.xpose.msra.mxu0 0
      %6246 = vmatprep.subr.bf16.mxu0 0
      %6247 = vmatpush2.bf16.xpose.msra.mxu0 0
      %6248 = vmatprep.subr.bf16.mxu0 0
      %6249 = vmatpush2.bf16.xpose.msra.mxu0 0
      %6250 = vmatprep.subr.bf16.mxu0 0
      %6251 = vmatpush2.bf16.xpose.msra.mxu0 0
      %6252 = vmatprep.subr.bf16.mxu0 0
      %6253 = vmatpush2.bf16.xpose.msra.mxu0 0
      %6254 = vmatprep.subr.bf16.mxu0 0
      %6255 = vmatpush2.bf16.xpose.msra.mxu0 0
      %6256 = vmatprep.mubr.bf16.mxu0 0
      %6257 = vmatmul.mubr.bf16.gmra.mxu0 %v6219
      %v6258 = vpop.f32.mrf.mxu0
      %v6259 = vadd.f32 0.0, %v6258
      %v6260 = vpop.f32.mrf.mxu0
      %v6261 = vpop.f32.mrf.mxu0
      %v6262 = vadd.f32 0.0, %v6261
      %v6263 = vpop.f32.mrf.mxu0
      %6264 = vdwg.mxu0
      %v6265 = vmul.f32 %v6259, 0.17677669
      %v6266 = vmul.f32 %v6262, 0.17677669
      %v6267 = vadd.f32 %v6265, %v1507
      %v6268 = vadd.f32 %v6266, %v1508
      %v6269 = vsel %vm4823, %v6267, -inf
      %6270 = vmax.xlane.f32.xlu0 %v6269
      %v6271 = vpop.xlane.xlu0 %6270
      %v6272 = vsel %vm4823, %v6268, -inf
      %6273 = vmax.xlane.f32.xlu0 %v6272
      %v6274 = vpop.xlane.xlu0 %6273
      %v6275 = vsub.f32 %v6267, %v6271
      %v6276 = vsub.f32 %v6268, %v6274
      %v6277 = vmul.f32 %v6275, 1.442695
      %v6278 = vpow.pop %v6277
      %v6279 = vmul.f32 %v6276, 1.442695
      %v6280 = vpow.pop %v6279
      %v6281 = vsel %vm4823, %v6278, 0.0
      %6282 = vadd.xlane.f32.xlu0 %v6281
      %v6283 = vpop.xlane.xlu0 %6282
      %v6284 = vsel %vm4823, %v6280, 0.0
      %6285 = vadd.xlane.f32.xlu0 %v6284
      %v6286 = vpop.xlane.xlu0 %6285
      %v6287 = vrcp.pop %v6283
      %v6288 = vrcp.pop %v6286
      %v6289 = vmul.f32 %v6278, %v6287
      %v6290 = vmul.f32 %v6280, %v6288
      %v6291 = vpack.c.bf16 %v6290, %v6289
      %6293 = vrot.lane.b32.xlu0 %v6169, 96
      %v6294 = vpop.permute.xlu0 %6293
      %v6297 = vsel %vm4823, %v6291, 0
      %6299 = vmatprep.subr.bf16.mxu0 0
      %6300 = vmatpush1.bf16.msra.mxu0 0
      %6301 = vmatprep.subr.bf16.mxu0 0
      %6302 = vmatpush1.bf16.msra.mxu0 0
      %6303 = vmatprep.subr.bf16.mxu0 0
      %6304 = vmatpush1.bf16.msra.mxu0 0
      %6305 = vmatprep.subr.bf16.mxu0 0
      %6306 = vmatpush1.bf16.msra.mxu0 0
      %6307 = vmatprep.subr.bf16.mxu0 0
      %6308 = vmatpush1.bf16.msra.mxu0 0
      %6309 = vmatprep.subr.bf16.mxu0 0
      %6310 = vmatpush1.bf16.msra.mxu0 0
      %6311 = vmatprep.subr.bf16.mxu0 0
      %6312 = vmatpush1.bf16.msra.mxu0 0
      %6313 = vmatprep.subr.bf16.mxu0 0
      %6314 = vmatpush1.bf16.msra.mxu0 %v6294
      %6315 = vmatprep.subr.bf16.mxu0 0
      %6316 = vmatpush2.bf16.msra.mxu0 0
      %6317 = vmatprep.subr.bf16.mxu0 0
      %6318 = vmatpush2.bf16.msra.mxu0 0
      %6319 = vmatprep.subr.bf16.mxu0 0
      %6320 = vmatpush2.bf16.msra.mxu0 0
      %6321 = vmatprep.subr.bf16.mxu0 0
      %6322 = vmatpush2.bf16.msra.mxu0 0
      %6323 = vmatprep.subr.bf16.mxu0 0
      %6324 = vmatpush2.bf16.msra.mxu0 0
      %6325 = vmatprep.subr.bf16.mxu0 0
      %6326 = vmatpush2.bf16.msra.mxu0 0
      %6327 = vmatprep.subr.bf16.mxu0 0
      %6328 = vmatpush2.bf16.msra.mxu0 0
      %6329 = vmatprep.subr.bf16.mxu0 0
      %6330 = vmatpush2.bf16.msra.mxu0 0
      %6331 = vmatprep.mubr.bf16.mxu0 0
      %6332 = vmatmul.mubr.bf16.gmra.mxu0 %v6297
      %v6333 = vpop.f32.mrf.mxu0
      %v6334 = vadd.f32 0.0, %v6333
      %v6335 = vpop.f32.mrf.mxu0
      %v6336 = vpop.f32.mrf.mxu0
      %v6337 = vadd.f32 0.0, %v6336
      %v6338 = vpop.f32.mrf.mxu0
      %6339 = vdwg.mxu0
      %6342 = vrot.lane.b32.xlu0 %v6334, 32
      %v6343 = vpop.permute.xlu0 %6342
      %6344 = vrot.lane.b32.xlu0 %v6337, 32
      %v6345 = vpop.permute.xlu0 %6344
      %v6348 = vsel %vm1792, %v6208, %v6343
      %v6349 = vsel %vm1792, %v6211, %v6345
      %v6350 = vpack.c.bf16 %v6349, %v6348
      %v6351 = vpack.c.bf16 %v5989, %v5988
      %v6352 = vpack.c.bf16 %v5991, %v5990
      %v6353 = vpack.c.bf16 %v5993, %v5992
      %v6354 = vpack.c.bf16 %v5995, %v5994
      %v6356 = vlaneseq
      %v6357 = vshrl.u32 %v6356, 7
      %v6358 = vsub.s32 0, %v6357
      %v6359 = vrot.slane %v5997, %v6358
      %v6362 = vsel %vm1539, %v6350, 0
      %6364 = vmatprep.subr.bf16.mxu0 0
      %6365 = vmatpush1.bf16.msra.mxu0 0
      %6366 = vmatprep.subr.bf16.mxu0 0
      %6367 = vmatpush1.bf16.msra.mxu0 0
      %6368 = vmatprep.subr.bf16.mxu0 0
      %6369 = vmatpush1.bf16.msra.mxu0 0
      %6370 = vmatprep.subr.bf16.mxu0 0
      %6371 = vmatpush1.bf16.msra.mxu0 0
      %6372 = vmatprep.subr.bf16.mxu0 0
      %6373 = vmatpush1.bf16.msra.mxu0 %v6354
      %6374 = vmatprep.subr.bf16.mxu0 0
      %6375 = vmatpush1.bf16.msra.mxu0 %v6353
      %6376 = vmatprep.subr.bf16.mxu0 0
      %6377 = vmatpush1.bf16.msra.mxu0 %v6352
      %6378 = vmatprep.subr.bf16.mxu0 0
      %6379 = vmatpush1.bf16.msra.mxu0 %v6351
      %6380 = vmatprep.subr.bf16.mxu0 0
      %6381 = vmatpush2.bf16.msra.mxu0 0
      %6382 = vmatprep.subr.bf16.mxu0 0
      %6383 = vmatpush2.bf16.msra.mxu0 0
      %6384 = vmatprep.subr.bf16.mxu0 0
      %6385 = vmatpush2.bf16.msra.mxu0 0
      %6386 = vmatprep.subr.bf16.mxu0 0
      %6387 = vmatpush2.bf16.msra.mxu0 0
      %6388 = vmatprep.subr.bf16.mxu0 0
      %6389 = vmatpush2.bf16.msra.mxu0 0
      %6390 = vmatprep.subr.bf16.mxu0 0
      %6391 = vmatpush2.bf16.msra.mxu0 0
      %6392 = vmatprep.subr.bf16.mxu0 0
      %6393 = vmatpush2.bf16.msra.mxu0 0
      %6394 = vmatprep.subr.bf16.mxu0 0
      %6395 = vmatpush2.bf16.msra.mxu0 0
      %6396 = vmatprep.mubr.bf16.mxu0 0
      %6397 = vmatmul.mubr.bf16.gmra.mxu0 %v6362
      %v6398 = vpop.f32.mrf.mxu0
      %v6399 = vadd.f32 %v6359, %v6398
      %v6400 = vpop.f32.mrf.mxu0
      %v6401 = vpop.f32.mrf.mxu0
      %v6402 = vadd.f32 %v6359, %v6401
      %v6403 = vpop.f32.mrf.mxu0
      %6404 = vdwg.mxu0
      %v6405 = vadd.f32 %v6399, %v5985
      %v6406 = vadd.f32 %v6402, %v5986
      %s6407 = scalar_lea.vmem %s45, 1
      %v6408 = vld [vmem:[%s6407] sm:$0x1]
      %s6409 = scalar_lea.vmem %s47, 1
      %v6410 = vld [vmem:[%s6409] sm:$0x1]
      %v6411 = vsel %vm1539, %v6405, 0.0
      %6412 = vadd.xlane.f32.xlu0 %v6411
      %v6413 = vpop.xlane.xlu0 %6412
      %v6414 = vsel %vm1539, %v6406, 0.0
      %6415 = vadd.xlane.f32.xlu0 %v6414
      %v6416 = vpop.xlane.xlu0 %6415
      %v6417 = vmul.f32 %v6413, %v2495
      %v6418 = vmul.f32 %v6416, %v2495
      %v6419 = vsub.f32 %v6405, %v6417
      %v6420 = vsub.f32 %v6406, %v6418
      %v6421 = vmul.f32 %v6419, %v6419
      %v6422 = vmul.f32 %v6420, %v6420
      %v6423 = vsel %vm1539, %v6421, 0.0
      %6424 = vadd.xlane.f32.xlu0 %v6423
      %v6425 = vpop.xlane.xlu0 %6424
      %v6426 = vsel %vm1539, %v6422, 0.0
      %6427 = vadd.xlane.f32.xlu0 %v6426
      %v6428 = vpop.xlane.xlu0 %6427
      %v6429 = vmul.f32 %v6425, 0.015873017
      %v6430 = vmul.f32 %v6428, 0.015873017
      %v6431 = vrsqrt.pop %v6429
      %v6432 = vmul.f32 %v6429, %v6431
      %vm6433 = vcmp.eq.f32.partialorder %v6429, inf
      %v6434 = vsel %vm6433, %v6429, %v6432
      %vm6435 = vcmp.eq.f32.partialorder %v6429, 0.0
      %v6436 = vand.u32 %v6429, 2147483648
      %v6437 = vsel %vm6435, %v6436, %v6434
      %v6438 = vrsqrt.pop %v6430
      %v6439 = vmul.f32 %v6430, %v6438
      %vm6440 = vcmp.eq.f32.partialorder %v6430, inf
      %v6441 = vsel %vm6440, %v6430, %v6439
      %vm6442 = vcmp.eq.f32.partialorder %v6430, 0.0
      %v6443 = vand.u32 %v6430, 2147483648
      %v6444 = vsel %vm6442, %v6443, %v6441
      %v6445 = vadd.f32 %v6437, 0.001
      %v6446 = vadd.f32 %v6444, 0.001
      %v6447 = vrcp.pop %v6445
      %v6448 = vmul.f32 %v6419, %v6447
      %v6449 = vrcp.pop %v6446
      %v6450 = vmul.f32 %v6420, %v6449
      %v6452 = vlaneseq
      %v6453 = vshrl.u32 %v6452, 7
      %v6454 = vsub.s32 0, %v6453
      %v6455 = vrot.slane %v6408, %v6454
      %v6457 = vmul.f32 %v6448, %v6455
      %v6458 = vmul.f32 %v6450, %v6455
      %v6460 = vlaneseq
      %v6461 = vshrl.u32 %v6460, 7
      %v6462 = vsub.s32 0, %v6461
      %v6463 = vrot.slane %v6410, %v6462
      %v6465 = vadd.f32 %v6457, %v6463
      %v6466 = vadd.f32 %v6458, %v6463
      %s6467 = scalar_lea.vmem %s53, 64
      %v6468 = vld [vmem:[%s6467] sm:$0xff]
      %v6469 = vld [vmem:[%s6467 + $0x8] sm:$0xff]
      %v6470 = vld [vmem:[%s6467 + $0x10] sm:$0xff]
      %v6471 = vld [vmem:[%s6467 + $0x18] sm:$0xff]
      %v6472 = vld [vmem:[%s6467 + $0x20] sm:$0xff]
      %v6473 = vld [vmem:[%s6467 + $0x28] sm:$0xff]
      %v6474 = vld [vmem:[%s6467 + $0x30] sm:$0xff]
      %v6475 = vld [vmem:[%s6467 + $0x38] sm:$0xff]
      %s6476 = scalar_lea.vmem %s55, 1
      %v6477 = vld [vmem:[%s6476] sm:$0x1]
      %s6478 = scalar_lea.vmem %s49, 128
      %v6479 = vld [vmem:[%s6478] sm:$0xff]
      %v6480 = vld [vmem:[%s6478 + $0x8] sm:$0xff]
      %v6481 = vld [vmem:[%s6478 + $0x10] sm:$0xff]
      %v6482 = vld [vmem:[%s6478 + $0x18] sm:$0xff]
      %v6483 = vld [vmem:[%s6478 + $0x20] sm:$0xff]
      %v6484 = vld [vmem:[%s6478 + $0x28] sm:$0xff]
      %v6485 = vld [vmem:[%s6478 + $0x30] sm:$0xff]
      %v6486 = vld [vmem:[%s6478 + $0x38] sm:$0xff]
      %v6487 = vld [vmem:[%s6478 + $0x40] sm:$0xff]
      %v6488 = vld [vmem:[%s6478 + $0x48] sm:$0xff]
      %v6489 = vld [vmem:[%s6478 + $0x50] sm:$0xff]
      %v6490 = vld [vmem:[%s6478 + $0x58] sm:$0xff]
      %v6491 = vld [vmem:[%s6478 + $0x60] sm:$0xff]
      %v6492 = vld [vmem:[%s6478 + $0x68] sm:$0xff]
      %v6493 = vld [vmem:[%s6478 + $0x70] sm:$0xff]
      %v6494 = vld [vmem:[%s6478 + $0x78] sm:$0xff]
      %s6495 = scalar_lea.vmem %s51, 2
      %v6496 = vld [vmem:[%s6495] sm:$0x3]
      %v6497 = vpack.c.bf16 %v6466, %v6465
      %v6498 = vpack.c.bf16 %v6481, %v6479
      %v6499 = vpack.c.bf16 %v6485, %v6483
      %v6500 = vpack.c.bf16 %v6489, %v6487
      %v6501 = vpack.c.bf16 %v6493, %v6491
      %v6503 = vlaneseq
      %v6504 = vshrl.u32 %v6503, 7
      %v6505 = vsub.s32 0, %v6504
      %v6506 = vrot.slane %v6496, %v6505
      %v6509 = vsel %vm1539, %v6497, 0
      %6511 = vmatprep.subr.bf16.mxu0 0
      %6512 = vmatpush1.bf16.msra.mxu0 0
      %6513 = vmatprep.subr.bf16.mxu0 0
      %6514 = vmatpush1.bf16.msra.mxu0 0
      %6515 = vmatprep.subr.bf16.mxu0 0
      %6516 = vmatpush1.bf16.msra.mxu0 0
      %6517 = vmatprep.subr.bf16.mxu0 0
      %6518 = vmatpush1.bf16.msra.mxu0 0
      %6519 = vmatprep.subr.bf16.mxu0 0
      %6520 = vmatpush1.bf16.msra.mxu0 %v6501
      %6521 = vmatprep.subr.bf16.mxu0 0
      %6522 = vmatpush1.bf16.msra.mxu0 %v6500
      %6523 = vmatprep.subr.bf16.mxu0 0
      %6524 = vmatpush1.bf16.msra.mxu0 %v6499
      %6525 = vmatprep.subr.bf16.mxu0 0
      %6526 = vmatpush1.bf16.msra.mxu0 %v6498
      %6527 = vmatprep.subr.bf16.mxu0 0
      %6528 = vmatpush2.bf16.msra.mxu0 0
      %6529 = vmatprep.subr.bf16.mxu0 0
      %6530 = vmatpush2.bf16.msra.mxu0 0
      %6531 = vmatprep.subr.bf16.mxu0 0
      %6532 = vmatpush2.bf16.msra.mxu0 0
      %6533 = vmatprep.subr.bf16.mxu0 0
      %6534 = vmatpush2.bf16.msra.mxu0 0
      %6535 = vmatprep.subr.bf16.mxu0 0
      %6536 = vmatpush2.bf16.msra.mxu0 0
      %6537 = vmatprep.subr.bf16.mxu0 0
      %6538 = vmatpush2.bf16.msra.mxu0 0
      %6539 = vmatprep.subr.bf16.mxu0 0
      %6540 = vmatpush2.bf16.msra.mxu0 0
      %6541 = vmatprep.subr.bf16.mxu0 0
      %6542 = vmatpush2.bf16.msra.mxu0 0
      %6543 = vmatprep.mubr.bf16.mxu0 0
      %6544 = vmatmul.mubr.bf16.gmra.mxu0 %v6509
      %v6545 = vpop.f32.mrf.mxu0
      %v6546 = vadd.f32 %v6506, %v6545
      %v6547 = vpop.f32.mrf.mxu0
      %v6548 = vpop.f32.mrf.mxu0
      %v6549 = vadd.f32 %v6506, %v6548
      %v6550 = vpop.f32.mrf.mxu0
      %6551 = vdwg.mxu0
      %6552 = vst.msk [vmem:[#allocation2] sm:$0xff] %vm1539, %v6546
      %6553 = vst.msk [vmem:[#allocation2 + $0x10] sm:$0xff] %vm1539, %v6549
      %v6554 = vpack.c.bf16 %v6482, %v6480
      %v6555 = vpack.c.bf16 %v6486, %v6484
      %v6556 = vpack.c.bf16 %v6490, %v6488
      %v6557 = vpack.c.bf16 %v6494, %v6492
      %v6558 = vlaneseq
      %v6559 = vshrl.u32 %v6558, 7
      %v6560 = vsub.s32 1, %v6559
      %v6561 = vrot.slane %v6496, %v6560
      %6570 = vrot.lane.b32.xlu0 %v6498, 64
      %v6571 = vpop.permute.xlu0 %6570
      %6572 = vrot.lane.b32.xlu0 %v6554, 64
      %v6573 = vpop.permute.xlu0 %6572
      %6574 = vrot.lane.b32.xlu0 %v6499, 64
      %v6575 = vpop.permute.xlu0 %6574
      %6576 = vrot.lane.b32.xlu0 %v6555, 64
      %v6577 = vpop.permute.xlu0 %6576
      %6578 = vrot.lane.b32.xlu0 %v6500, 64
      %v6579 = vpop.permute.xlu0 %6578
      %6580 = vrot.lane.b32.xlu0 %v6556, 64
      %v6581 = vpop.permute.xlu0 %6580
      %6582 = vrot.lane.b32.xlu0 %v6501, 64
      %v6583 = vpop.permute.xlu0 %6582
      %6584 = vrot.lane.b32.xlu0 %v6557, 64
      %v6585 = vpop.permute.xlu0 %6584
      %v6586 = vsel %vm5261, %v6571, %v6573
      %v6587 = vsel %vm5261, %v6575, %v6577
      %v6588 = vsel %vm5261, %v6579, %v6581
      %v6589 = vsel %vm5261, %v6583, %v6585
      %6594 = vrot.lane.b32.xlu0 %v6506, 64
      %v6595 = vpop.permute.xlu0 %6594
      %6596 = vrot.lane.b32.xlu0 %v6561, 64
      %v6597 = vpop.permute.xlu0 %6596
      %v6598 = vsel %vm1539, %v6595, %v6597
      %6600 = vmatprep.subr.bf16.mxu0 0
      %6601 = vmatpush1.bf16.msra.mxu0 0
      %6602 = vmatprep.subr.bf16.mxu0 0
      %6603 = vmatpush1.bf16.msra.mxu0 0
      %6604 = vmatprep.subr.bf16.mxu0 0
      %6605 = vmatpush1.bf16.msra.mxu0 0
      %6606 = vmatprep.subr.bf16.mxu0 0
      %6607 = vmatpush1.bf16.msra.mxu0 0
      %6608 = vmatprep.subr.bf16.mxu0 0
      %6609 = vmatpush1.bf16.msra.mxu0 %v6589
      %6610 = vmatprep.subr.bf16.mxu0 0
      %6611 = vmatpush1.bf16.msra.mxu0 %v6588
      %6612 = vmatprep.subr.bf16.mxu0 0
      %6613 = vmatpush1.bf16.msra.mxu0 %v6587
      %6614 = vmatprep.subr.bf16.mxu0 0
      %6615 = vmatpush1.bf16.msra.mxu0 %v6586
      %6616 = vmatprep.subr.bf16.mxu0 0
      %6617 = vmatpush2.bf16.msra.mxu0 0
      %6618 = vmatprep.subr.bf16.mxu0 0
      %6619 = vmatpush2.bf16.msra.mxu0 0
      %6620 = vmatprep.subr.bf16.mxu0 0
      %6621 = vmatpush2.bf16.msra.mxu0 0
      %6622 = vmatprep.subr.bf16.mxu0 0
      %6623 = vmatpush2.bf16.msra.mxu0 0
      %6624 = vmatprep.subr.bf16.mxu0 0
      %6625 = vmatpush2.bf16.msra.mxu0 0
      %6626 = vmatprep.subr.bf16.mxu0 0
      %6627 = vmatpush2.bf16.msra.mxu0 0
      %6628 = vmatprep.subr.bf16.mxu0 0
      %6629 = vmatpush2.bf16.msra.mxu0 0
      %6630 = vmatprep.subr.bf16.mxu0 0
      %6631 = vmatpush2.bf16.msra.mxu0 0
      %6632 = vmatprep.mubr.bf16.mxu0 0
      %6633 = vmatmul.mubr.bf16.gmra.mxu0 %v5277
      %v6634 = vpop.f32.mrf.mxu0
      %v6635 = vadd.f32 %v6598, %v6634
      %v6636 = vpop.f32.mrf.mxu0
      %v6637 = vpop.f32.mrf.mxu0
      %v6638 = vadd.f32 %v6598, %v6637
      %v6639 = vpop.f32.mrf.mxu0
      %6640 = vmatprep.mubr.bf16.mxu0 0
      %6641 = vmatmul.mubr.bf16.gmra.mxu0 %v5280
      %v6642 = vpop.f32.mrf.mxu0
      %v6643 = vadd.f32 %v6598, %v6642
      %v6644 = vpop.f32.mrf.mxu0
      %v6645 = vpop.f32.mrf.mxu0
      %v6646 = vadd.f32 %v6598, %v6645
      %v6647 = vpop.f32.mrf.mxu0
      %6648 = vmatprep.mubr.bf16.mxu0 0
      %6649 = vmatmul.mubr.bf16.gmra.mxu0 %v5283
      %v6650 = vpop.f32.mrf.mxu0
      %v6651 = vadd.f32 %v6598, %v6650
      %v6652 = vpop.f32.mrf.mxu0
      %v6653 = vpop.f32.mrf.mxu0
      %v6654 = vadd.f32 %v6598, %v6653
      %v6655 = vpop.f32.mrf.mxu0
      %6656 = vmatprep.mubr.bf16.mxu0 0
      %6657 = vmatmul.mubr.bf16.gmra.mxu0 %v4466
      %v6658 = vpop.f32.mrf.mxu0
      %v6659 = vadd.f32 %v6598, %v6658
      %v6660 = vpop.f32.mrf.mxu0
      %v6661 = vpop.f32.mrf.mxu0
      %v6662 = vpop.f32.mrf.mxu0
      %6663 = vdwg.mxu0
      %6664 = vst [vmem:[#allocation3] sm:$0xff] %v6635
      %6665 = vst [vmem:[#allocation3 + $0x8] sm:$0xff] %v6638
      %6666 = vst [vmem:[#allocation3 + $0x10] sm:$0xff] %v6643
      %6667 = vst [vmem:[#allocation3 + $0x18] sm:$0xff] %v6646
      %6668 = vst [vmem:[#allocation3 + $0x20] sm:$0xff] %v6651
      %6669 = vst [vmem:[#allocation3 + $0x28] sm:$0xff] %v6654
      %6670 = vst [vmem:[#allocation3 + $0x30] sm:$0xff] %v6659
      %v6671 = vld [vmem:[#allocation2] sm:$0xff]
      %v6672 = vld [vmem:[#allocation2 + $0x10] sm:$0xff]
      %v6673 = vld [vmem:[#allocation3] sm:$0xff]
      %v6674 = vld [vmem:[#allocation3 + $0x8] sm:$0xff]
      %v6675 = vld [vmem:[#allocation3 + $0x10] sm:$0xff]
      %v6676 = vld [vmem:[#allocation3 + $0x18] sm:$0xff]
      %v6677 = vld [vmem:[#allocation3 + $0x20] sm:$0xff]
      %v6678 = vld [vmem:[#allocation3 + $0x28] sm:$0xff]
      %v6679 = vld [vmem:[#allocation3 + $0x30] sm:$0xff]
      %v6680 = vpack.c.bf16 %v6672, %v6671
      %v6681 = vpack.c.bf16 %v6674, %v6673
      %v6682 = vpack.c.bf16 %v6676, %v6675
      %v6683 = vpack.c.bf16 %v6678, %v6677
      %v6684 = vpack.c.bf16 %v6679, %v6679
      %v6686 = vsel %vm1792, %v6680, 0
      %v6689 = vsel %vm1792, %v6681, 0
      %v6692 = vsel %vm1792, %v6682, 0
      %v6695 = vsel %vm1792, %v6683, 0
      %v6698 = vsel %vm1792, %v6684, 0
      %6700 = vmatprep.subr.bf16.mxu0 0
      %6701 = vmatpush1.bf16.xpose.msra.mxu0 0
      %6702 = vmatprep.subr.bf16.mxu0 0
      %6703 = vmatpush1.bf16.xpose.msra.mxu0 0
      %6704 = vmatprep.subr.bf16.mxu0 0
      %6705 = vmatpush1.bf16.xpose.msra.mxu0 0
      %6706 = vmatprep.subr.bf16.mxu0 0
      %6707 = vmatpush1.bf16.xpose.msra.mxu0 0
      %6708 = vmatprep.subr.bf16.mxu0 0
      %6709 = vmatpush1.bf16.xpose.msra.mxu0 %v6698
      %6710 = vmatprep.subr.bf16.mxu0 0
      %6711 = vmatpush1.bf16.xpose.msra.mxu0 %v6695
      %6712 = vmatprep.subr.bf16.mxu0 0
      %6713 = vmatpush1.bf16.xpose.msra.mxu0 %v6692
      %6714 = vmatprep.subr.bf16.mxu0 0
      %6715 = vmatpush1.bf16.xpose.msra.mxu0 %v6689
      %6716 = vmatprep.subr.bf16.mxu0 0
      %6717 = vmatpush2.bf16.xpose.msra.mxu0 0
      %6718 = vmatprep.subr.bf16.mxu0 0
      %6719 = vmatpush2.bf16.xpose.msra.mxu0 0
      %6720 = vmatprep.subr.bf16.mxu0 0
      %6721 = vmatpush2.bf16.xpose.msra.mxu0 0
      %6722 = vmatprep.subr.bf16.mxu0 0
      %6723 = vmatpush2.bf16.xpose.msra.mxu0 0
      %6724 = vmatprep.subr.bf16.mxu0 0
      %6725 = vmatpush2.bf16.xpose.msra.mxu0 0
      %6726 = vmatprep.subr.bf16.mxu0 0
      %6727 = vmatpush2.bf16.xpose.msra.mxu0 0
      %6728 = vmatprep.subr.bf16.mxu0 0
      %6729 = vmatpush2.bf16.xpose.msra.mxu0 0
      %6730 = vmatprep.subr.bf16.mxu0 0
      %6731 = vmatpush2.bf16.xpose.msra.mxu0 0
      %6732 = vmatprep.mubr.bf16.mxu0 0
      %6733 = vmatmul.mubr.bf16.gmra.mxu0 %v6686
      %v6734 = vpop.f32.mrf.mxu0
      %v6735 = vadd.f32 0.0, %v6734
      %v6736 = vpop.f32.mrf.mxu0
      %v6737 = vpop.f32.mrf.mxu0
      %v6738 = vadd.f32 0.0, %v6737
      %v6739 = vpop.f32.mrf.mxu0
      %6740 = vdwg.mxu0
      %v6741 = vmul.f32 %v6735, 0.17677669
      %v6742 = vmul.f32 %v6738, 0.17677669
      %v6743 = vsel %vm1888, %v6741, -inf
      %6744 = vmax.xlane.f32.xlu0 %v6743
      %v6745 = vpop.xlane.xlu0 %6744
      %v6746 = vsel %vm1888, %v6742, -inf
      %6747 = vmax.xlane.f32.xlu0 %v6746
      %v6748 = vpop.xlane.xlu0 %6747
      %v6749 = vsub.f32 %v6741, %v6745
      %v6750 = vsub.f32 %v6742, %v6748
      %v6751 = vmul.f32 %v6749, 1.442695
      %v6752 = vpow.pop %v6751
      %v6753 = vmul.f32 %v6750, 1.442695
      %v6754 = vpow.pop %v6753
      %v6755 = vsel %vm1888, %v6752, 0.0
      %6756 = vadd.xlane.f32.xlu0 %v6755
      %v6757 = vpop.xlane.xlu0 %6756
      %v6758 = vsel %vm1888, %v6754, 0.0
      %6759 = vadd.xlane.f32.xlu0 %v6758
      %v6760 = vpop.xlane.xlu0 %6759
      %v6761 = vrcp.pop %v6757
      %v6762 = vrcp.pop %v6760
      %v6763 = vmul.f32 %v6752, %v6761
      %v6764 = vmul.f32 %v6754, %v6762
      %v6765 = vpack.c.bf16 %v6764, %v6763
      %6770 = vrot.lane.b32.xlu0 %v6681, 64
      %v6771 = vpop.permute.xlu0 %6770
      %6772 = vrot.lane.b32.xlu0 %v6682, 64
      %v6773 = vpop.permute.xlu0 %6772
      %6774 = vrot.lane.b32.xlu0 %v6683, 64
      %v6775 = vpop.permute.xlu0 %6774
      %6776 = vrot.lane.b32.xlu0 %v6684, 64
      %v6777 = vpop.permute.xlu0 %6776
      %v6782 = vsel %vm1888, %v6765, 0
      %v6785 = vsel %vm1986, %v6777, 0
      %6787 = vmatprep.subr.bf16.mxu0 0
      %6788 = vmatpush1.bf16.msra.mxu0 0
      %6789 = vmatprep.subr.bf16.mxu0 0
      %6790 = vmatpush1.bf16.msra.mxu0 0
      %6791 = vmatprep.subr.bf16.mxu0 0
      %6792 = vmatpush1.bf16.msra.mxu0 0
      %6793 = vmatprep.subr.bf16.mxu0 0
      %6794 = vmatpush1.bf16.msra.mxu0 0
      %6795 = vmatprep.subr.bf16.mxu0 0
      %6796 = vmatpush1.bf16.msra.mxu0 %v6785
      %6797 = vmatprep.subr.bf16.mxu0 0
      %6798 = vmatpush1.bf16.msra.mxu0 %v6775
      %6799 = vmatprep.subr.bf16.mxu0 0
      %6800 = vmatpush1.bf16.msra.mxu0 %v6773
      %6801 = vmatprep.subr.bf16.mxu0 0
      %6802 = vmatpush1.bf16.msra.mxu0 %v6771
      %6803 = vmatprep.subr.bf16.mxu0 0
      %6804 = vmatpush2.bf16.msra.mxu0 0
      %6805 = vmatprep.subr.bf16.mxu0 0
      %6806 = vmatpush2.bf16.msra.mxu0 0
      %6807 = vmatprep.subr.bf16.mxu0 0
      %6808 = vmatpush2.bf16.msra.mxu0 0
      %6809 = vmatprep.subr.bf16.mxu0 0
      %6810 = vmatpush2.bf16.msra.mxu0 0
      %6811 = vmatprep.subr.bf16.mxu0 0
      %6812 = vmatpush2.bf16.msra.mxu0 0
      %6813 = vmatprep.subr.bf16.mxu0 0
      %6814 = vmatpush2.bf16.msra.mxu0 0
      %6815 = vmatprep.subr.bf16.mxu0 0
      %6816 = vmatpush2.bf16.msra.mxu0 0
      %6817 = vmatprep.subr.bf16.mxu0 0
      %6818 = vmatpush2.bf16.msra.mxu0 0
      %6819 = vmatprep.mubr.bf16.mxu0 0
      %6820 = vmatmul.mubr.bf16.gmra.mxu0 %v6782
      %v6821 = vpop.f32.mrf.mxu0
      %v6822 = vadd.f32 0.0, %v6821
      %v6823 = vpop.f32.mrf.mxu0
      %v6824 = vpop.f32.mrf.mxu0
      %v6825 = vadd.f32 0.0, %v6824
      %v6826 = vpop.f32.mrf.mxu0
      %6827 = vdwg.mxu0
      %6829 = vrot.lane.b32.xlu0 %v6680, 96
      %v6830 = vpop.permute.xlu0 %6829
      %6831 = vrot.lane.b32.xlu0 %v6681, 96
      %v6832 = vpop.permute.xlu0 %6831
      %6833 = vrot.lane.b32.xlu0 %v6682, 96
      %v6834 = vpop.permute.xlu0 %6833
      %6835 = vrot.lane.b32.xlu0 %v6683, 96
      %v6836 = vpop.permute.xlu0 %6835
      %6837 = vrot.lane.b32.xlu0 %v6684, 96
      %v6838 = vpop.permute.xlu0 %6837
      %v6840 = vsel %vm1792, %v6830, 0
      %v6843 = vsel %vm1792, %v6832, 0
      %v6846 = vsel %vm1792, %v6834, 0
      %v6849 = vsel %vm1792, %v6836, 0
      %v6852 = vsel %vm1792, %v6838, 0
      %6854 = vmatprep.subr.bf16.mxu0 0
      %6855 = vmatpush1.bf16.xpose.msra.mxu0 0
      %6856 = vmatprep.subr.bf16.mxu0 0
      %6857 = vmatpush1.bf16.xpose.msra.mxu0 0
      %6858 = vmatprep.subr.bf16.mxu0 0
      %6859 = vmatpush1.bf16.xpose.msra.mxu0 0
      %6860 = vmatprep.subr.bf16.mxu0 0
      %6861 = vmatpush1.bf16.xpose.msra.mxu0 0
      %6862 = vmatprep.subr.bf16.mxu0 0
      %6863 = vmatpush1.bf16.xpose.msra.mxu0 %v6852
      %6864 = vmatprep.subr.bf16.mxu0 0
      %6865 = vmatpush1.bf16.xpose.msra.mxu0 %v6849
      %6866 = vmatprep.subr.bf16.mxu0 0
      %6867 = vmatpush1.bf16.xpose.msra.mxu0 %v6846
      %6868 = vmatprep.subr.bf16.mxu0 0
      %6869 = vmatpush1.bf16.xpose.msra.mxu0 %v6843
      %6870 = vmatprep.subr.bf16.mxu0 0
      %6871 = vmatpush2.bf16.xpose.msra.mxu0 0
      %6872 = vmatprep.subr.bf16.mxu0 0
      %6873 = vmatpush2.bf16.xpose.msra.mxu0 0
      %6874 = vmatprep.subr.bf16.mxu0 0
      %6875 = vmatpush2.bf16.xpose.msra.mxu0 0
      %6876 = vmatprep.subr.bf16.mxu0 0
      %6877 = vmatpush2.bf16.xpose.msra.mxu0 0
      %6878 = vmatprep.subr.bf16.mxu0 0
      %6879 = vmatpush2.bf16.xpose.msra.mxu0 0
      %6880 = vmatprep.subr.bf16.mxu0 0
      %6881 = vmatpush2.bf16.xpose.msra.mxu0 0
      %6882 = vmatprep.subr.bf16.mxu0 0
      %6883 = vmatpush2.bf16.xpose.msra.mxu0 0
      %6884 = vmatprep.subr.bf16.mxu0 0
      %6885 = vmatpush2.bf16.xpose.msra.mxu0 0
      %6886 = vmatprep.mubr.bf16.mxu0 0
      %6887 = vmatmul.mubr.bf16.gmra.mxu0 %v6840
      %v6888 = vpop.f32.mrf.mxu0
      %v6889 = vadd.f32 0.0, %v6888
      %v6890 = vpop.f32.mrf.mxu0
      %v6891 = vpop.f32.mrf.mxu0
      %v6892 = vadd.f32 0.0, %v6891
      %v6893 = vpop.f32.mrf.mxu0
      %6894 = vdwg.mxu0
      %v6895 = vmul.f32 %v6889, 0.17677669
      %v6896 = vmul.f32 %v6892, 0.17677669
      %v6897 = vsel %vm1888, %v6895, -inf
      %6898 = vmax.xlane.f32.xlu0 %v6897
      %v6899 = vpop.xlane.xlu0 %6898
      %v6900 = vsel %vm1888, %v6896, -inf
      %6901 = vmax.xlane.f32.xlu0 %v6900
      %v6902 = vpop.xlane.xlu0 %6901
      %v6903 = vsub.f32 %v6895, %v6899
      %v6904 = vsub.f32 %v6896, %v6902
      %v6905 = vmul.f32 %v6903, 1.442695
      %v6906 = vpow.pop %v6905
      %v6907 = vmul.f32 %v6904, 1.442695
      %v6908 = vpow.pop %v6907
      %v6909 = vsel %vm1888, %v6906, 0.0
      %6910 = vadd.xlane.f32.xlu0 %v6909
      %v6911 = vpop.xlane.xlu0 %6910
      %v6912 = vsel %vm1888, %v6908, 0.0
      %6913 = vadd.xlane.f32.xlu0 %v6912
      %v6914 = vpop.xlane.xlu0 %6913
      %v6915 = vrcp.pop %v6911
      %v6916 = vrcp.pop %v6914
      %v6917 = vmul.f32 %v6906, %v6915
      %v6918 = vmul.f32 %v6908, %v6916
      %v6919 = vpack.c.bf16 %v6918, %v6917
      %6920 = vrot.lane.b32.xlu0 %v6681, 32
      %v6921 = vpop.permute.xlu0 %6920
      %6922 = vrot.lane.b32.xlu0 %v6682, 32
      %v6923 = vpop.permute.xlu0 %6922
      %6924 = vrot.lane.b32.xlu0 %v6683, 32
      %v6925 = vpop.permute.xlu0 %6924
      %6926 = vrot.lane.b32.xlu0 %v6684, 32
      %v6927 = vpop.permute.xlu0 %6926
      %v6932 = vsel %vm1888, %v6919, 0
      %v6935 = vsel %vm1986, %v6927, 0
      %6937 = vmatprep.subr.bf16.mxu0 0
      %6938 = vmatpush1.bf16.msra.mxu0 0
      %6939 = vmatprep.subr.bf16.mxu0 0
      %6940 = vmatpush1.bf16.msra.mxu0 0
      %6941 = vmatprep.subr.bf16.mxu0 0
      %6942 = vmatpush1.bf16.msra.mxu0 0
      %6943 = vmatprep.subr.bf16.mxu0 0
      %6944 = vmatpush1.bf16.msra.mxu0 0
      %6945 = vmatprep.subr.bf16.mxu0 0
      %6946 = vmatpush1.bf16.msra.mxu0 %v6935
      %6947 = vmatprep.subr.bf16.mxu0 0
      %6948 = vmatpush1.bf16.msra.mxu0 %v6925
      %6949 = vmatprep.subr.bf16.mxu0 0
      %6950 = vmatpush1.bf16.msra.mxu0 %v6923
      %6951 = vmatprep.subr.bf16.mxu0 0
      %6952 = vmatpush1.bf16.msra.mxu0 %v6921
      %6953 = vmatprep.subr.bf16.mxu0 0
      %6954 = vmatpush2.bf16.msra.mxu0 0
      %6955 = vmatprep.subr.bf16.mxu0 0
      %6956 = vmatpush2.bf16.msra.mxu0 0
      %6957 = vmatprep.subr.bf16.mxu0 0
      %6958 = vmatpush2.bf16.msra.mxu0 0
      %6959 = vmatprep.subr.bf16.mxu0 0
      %6960 = vmatpush2.bf16.msra.mxu0 0
      %6961 = vmatprep.subr.bf16.mxu0 0
      %6962 = vmatpush2.bf16.msra.mxu0 0
      %6963 = vmatprep.subr.bf16.mxu0 0
      %6964 = vmatpush2.bf16.msra.mxu0 0
      %6965 = vmatprep.subr.bf16.mxu0 0
      %6966 = vmatpush2.bf16.msra.mxu0 0
      %6967 = vmatprep.subr.bf16.mxu0 0
      %6968 = vmatpush2.bf16.msra.mxu0 0
      %6969 = vmatprep.mubr.bf16.mxu0 0
      %6970 = vmatmul.mubr.bf16.gmra.mxu0 %v6932
      %v6971 = vpop.f32.mrf.mxu0
      %v6972 = vadd.f32 0.0, %v6971
      %v6973 = vpop.f32.mrf.mxu0
      %v6974 = vpop.f32.mrf.mxu0
      %v6975 = vadd.f32 0.0, %v6974
      %v6976 = vpop.f32.mrf.mxu0
      %6977 = vdwg.mxu0
      %6980 = vrot.lane.b32.xlu0 %v6972, 32
      %v6981 = vpop.permute.xlu0 %6980
      %6982 = vrot.lane.b32.xlu0 %v6975, 32
      %v6983 = vpop.permute.xlu0 %6982
      %v6986 = vsel %vm1792, %v6822, %v6981
      %v6987 = vsel %vm1792, %v6825, %v6983
      %v6988 = vpack.c.bf16 %v6987, %v6986
      %v6989 = vpack.c.bf16 %v6469, %v6468
      %v6990 = vpack.c.bf16 %v6471, %v6470
      %v6991 = vpack.c.bf16 %v6473, %v6472
      %v6992 = vpack.c.bf16 %v6475, %v6474
      %v6994 = vlaneseq
      %v6995 = vshrl.u32 %v6994, 7
      %v6996 = vsub.s32 0, %v6995
      %v6997 = vrot.slane %v6477, %v6996
      %v7000 = vsel %vm1539, %v6988, 0
      %7002 = vmatprep.subr.bf16.mxu0 0
      %7003 = vmatpush1.bf16.msra.mxu0 0
      %7004 = vmatprep.subr.bf16.mxu0 0
      %7005 = vmatpush1.bf16.msra.mxu0 0
      %7006 = vmatprep.subr.bf16.mxu0 0
      %7007 = vmatpush1.bf16.msra.mxu0 0
      %7008 = vmatprep.subr.bf16.mxu0 0
      %7009 = vmatpush1.bf16.msra.mxu0 0
      %7010 = vmatprep.subr.bf16.mxu0 0
      %7011 = vmatpush1.bf16.msra.mxu0 %v6992
      %7012 = vmatprep.subr.bf16.mxu0 0
      %7013 = vmatpush1.bf16.msra.mxu0 %v6991
      %7014 = vmatprep.subr.bf16.mxu0 0
      %7015 = vmatpush1.bf16.msra.mxu0 %v6990
      %7016 = vmatprep.subr.bf16.mxu0 0
      %7017 = vmatpush1.bf16.msra.mxu0 %v6989
      %7018 = vmatprep.subr.bf16.mxu0 0
      %7019 = vmatpush2.bf16.msra.mxu0 0
      %7020 = vmatprep.subr.bf16.mxu0 0
      %7021 = vmatpush2.bf16.msra.mxu0 0
      %7022 = vmatprep.subr.bf16.mxu0 0
      %7023 = vmatpush2.bf16.msra.mxu0 0
      %7024 = vmatprep.subr.bf16.mxu0 0
      %7025 = vmatpush2.bf16.msra.mxu0 0
      %7026 = vmatprep.subr.bf16.mxu0 0
      %7027 = vmatpush2.bf16.msra.mxu0 0
      %7028 = vmatprep.subr.bf16.mxu0 0
      %7029 = vmatpush2.bf16.msra.mxu0 0
      %7030 = vmatprep.subr.bf16.mxu0 0
      %7031 = vmatpush2.bf16.msra.mxu0 0
      %7032 = vmatprep.subr.bf16.mxu0 0
      %7033 = vmatpush2.bf16.msra.mxu0 0
      %7034 = vmatprep.mubr.bf16.mxu0 0
      %7035 = vmatmul.mubr.bf16.gmra.mxu0 %v7000
      %v7036 = vpop.f32.mrf.mxu0
      %v7037 = vadd.f32 %v6997, %v7036
      %v7038 = vpop.f32.mrf.mxu0
      %v7039 = vpop.f32.mrf.mxu0
      %v7040 = vadd.f32 %v6997, %v7039
      %v7041 = vpop.f32.mrf.mxu0
      %7042 = vdwg.mxu0
      %v7043 = vadd.f32 %v7037, %v6465
      %v7044 = vadd.f32 %v7040, %v6466
      %s7045 = scalar_lea.vmem %s57, 1
      %v7046 = vld [vmem:[%s7045] sm:$0x1]
      %s7047 = scalar_lea.vmem %s59, 1
      %v7048 = vld [vmem:[%s7047] sm:$0x1]
      %v7049 = vsel %vm1539, %v7043, 0.0
      %7050 = vadd.xlane.f32.xlu0 %v7049
      %v7051 = vpop.xlane.xlu0 %7050
      %v7052 = vsel %vm1539, %v7044, 0.0
      %7053 = vadd.xlane.f32.xlu0 %v7052
      %v7054 = vpop.xlane.xlu0 %7053
      %v7055 = vmul.f32 %v7051, %v2495
      %v7056 = vmul.f32 %v7054, %v2495
      %v7057 = vsub.f32 %v7043, %v7055
      %v7058 = vsub.f32 %v7044, %v7056
      %v7059 = vmul.f32 %v7057, %v7057
      %v7060 = vmul.f32 %v7058, %v7058
      %v7061 = vsel %vm1539, %v7059, 0.0
      %7062 = vadd.xlane.f32.xlu0 %v7061
      %v7063 = vpop.xlane.xlu0 %7062
      %v7064 = vsel %vm1539, %v7060, 0.0
      %7065 = vadd.xlane.f32.xlu0 %v7064
      %v7066 = vpop.xlane.xlu0 %7065
      %v7067 = vmul.f32 %v7063, 0.015873017
      %v7068 = vmul.f32 %v7066, 0.015873017
      %v7069 = vrsqrt.pop %v7067
      %v7070 = vmul.f32 %v7067, %v7069
      %vm7071 = vcmp.eq.f32.partialorder %v7067, inf
      %v7072 = vsel %vm7071, %v7067, %v7070
      %vm7073 = vcmp.eq.f32.partialorder %v7067, 0.0
      %v7074 = vand.u32 %v7067, 2147483648
      %v7075 = vsel %vm7073, %v7074, %v7072
      %v7076 = vrsqrt.pop %v7068
      %v7077 = vmul.f32 %v7068, %v7076
      %vm7078 = vcmp.eq.f32.partialorder %v7068, inf
      %v7079 = vsel %vm7078, %v7068, %v7077
      %vm7080 = vcmp.eq.f32.partialorder %v7068, 0.0
      %v7081 = vand.u32 %v7068, 2147483648
      %v7082 = vsel %vm7080, %v7081, %v7079
      %v7083 = vadd.f32 %v7075, 0.001
      %v7084 = vadd.f32 %v7082, 0.001
      %v7085 = vrcp.pop %v7083
      %v7086 = vmul.f32 %v7057, %v7085
      %v7087 = vrcp.pop %v7084
      %v7088 = vmul.f32 %v7058, %v7087
      %v7090 = vlaneseq
      %v7091 = vshrl.u32 %v7090, 7
      %v7092 = vsub.s32 0, %v7091
      %v7093 = vrot.slane %v7046, %v7092
      %v7095 = vmul.f32 %v7086, %v7093
      %v7096 = vmul.f32 %v7088, %v7093
      %v7098 = vlaneseq
      %v7099 = vshrl.u32 %v7098, 7
      %v7100 = vsub.s32 0, %v7099
      %v7101 = vrot.slane %v7048, %v7100
      %v7103 = vadd.f32 %v7095, %v7101
      %v7104 = vadd.f32 %v7096, %v7101
      %s7105 = scalar_lea.vmem %s61, 64
      %v7106 = vld [vmem:[%s7105] sm:$0xff]
      %v7107 = vld [vmem:[%s7105 + $0x8] sm:$0xff]
      %v7108 = vld [vmem:[%s7105 + $0x10] sm:$0xff]
      %v7109 = vld [vmem:[%s7105 + $0x18] sm:$0xff]
      %v7110 = vld [vmem:[%s7105 + $0x20] sm:$0xff]
      %v7111 = vld [vmem:[%s7105 + $0x28] sm:$0xff]
      %v7112 = vld [vmem:[%s7105 + $0x30] sm:$0xff]
      %v7113 = vld [vmem:[%s7105 + $0x38] sm:$0xff]
      %s7114 = scalar_lea.vmem %s63, 1
      %v7115 = vld [vmem:[%s7114] sm:$0x1]
      %s7116 = scalar_lea.vmem %s65, 128
      %v7117 = vld [vmem:[%s7116] sm:$0xff]
      %v7118 = vld [vmem:[%s7116 + $0x8] sm:$0xff]
      %v7119 = vld [vmem:[%s7116 + $0x10] sm:$0xff]
      %v7120 = vld [vmem:[%s7116 + $0x18] sm:$0xff]
      %v7121 = vld [vmem:[%s7116 + $0x20] sm:$0xff]
      %v7122 = vld [vmem:[%s7116 + $0x28] sm:$0xff]
      %v7123 = vld [vmem:[%s7116 + $0x30] sm:$0xff]
      %v7124 = vld [vmem:[%s7116 + $0x38] sm:$0xff]
      %v7125 = vld [vmem:[%s7116 + $0x40] sm:$0xff]
      %v7126 = vld [vmem:[%s7116 + $0x48] sm:$0xff]
      %v7127 = vld [vmem:[%s7116 + $0x50] sm:$0xff]
      %v7128 = vld [vmem:[%s7116 + $0x58] sm:$0xff]
      %v7129 = vld [vmem:[%s7116 + $0x60] sm:$0xff]
      %v7130 = vld [vmem:[%s7116 + $0x68] sm:$0xff]
      %v7131 = vld [vmem:[%s7116 + $0x70] sm:$0xff]
      %v7132 = vld [vmem:[%s7116 + $0x78] sm:$0xff]
      %s7133 = scalar_lea.vmem %s67, 1
      %v7134 = vld [vmem:[%s7133] sm:$0x1]
      %v7135 = vpack.c.bf16 %v7104, %v7103
      %v7136 = vpack.c.bf16 %v7107, %v7106
      %v7137 = vpack.c.bf16 %v7109, %v7108
      %v7138 = vpack.c.bf16 %v7111, %v7110
      %v7139 = vpack.c.bf16 %v7113, %v7112
      %v7141 = vlaneseq
      %v7142 = vshrl.u32 %v7141, 7
      %v7143 = vsub.s32 0, %v7142
      %v7144 = vrot.slane %v7115, %v7143
      %v7147 = vsel %vm1539, %v7135, 0
      %7149 = vmatprep.subr.bf16.mxu0 0
      %7150 = vmatpush1.bf16.msra.mxu0 0
      %7151 = vmatprep.subr.bf16.mxu0 0
      %7152 = vmatpush1.bf16.msra.mxu0 0
      %7153 = vmatprep.subr.bf16.mxu0 0
      %7154 = vmatpush1.bf16.msra.mxu0 0
      %7155 = vmatprep.subr.bf16.mxu0 0
      %7156 = vmatpush1.bf16.msra.mxu0 0
      %7157 = vmatprep.subr.bf16.mxu0 0
      %7158 = vmatpush1.bf16.msra.mxu0 %v7139
      %7159 = vmatprep.subr.bf16.mxu0 0
      %7160 = vmatpush1.bf16.msra.mxu0 %v7138
      %7161 = vmatprep.subr.bf16.mxu0 0
      %7162 = vmatpush1.bf16.msra.mxu0 %v7137
      %7163 = vmatprep.subr.bf16.mxu0 0
      %7164 = vmatpush1.bf16.msra.mxu0 %v7136
      %7165 = vmatprep.subr.bf16.mxu0 0
      %7166 = vmatpush2.bf16.msra.mxu0 0
      %7167 = vmatprep.subr.bf16.mxu0 0
      %7168 = vmatpush2.bf16.msra.mxu0 0
      %7169 = vmatprep.subr.bf16.mxu0 0
      %7170 = vmatpush2.bf16.msra.mxu0 0
      %7171 = vmatprep.subr.bf16.mxu0 0
      %7172 = vmatpush2.bf16.msra.mxu0 0
      %7173 = vmatprep.subr.bf16.mxu0 0
      %7174 = vmatpush2.bf16.msra.mxu0 0
      %7175 = vmatprep.subr.bf16.mxu0 0
      %7176 = vmatpush2.bf16.msra.mxu0 0
      %7177 = vmatprep.subr.bf16.mxu0 0
      %7178 = vmatpush2.bf16.msra.mxu0 0
      %7179 = vmatprep.subr.bf16.mxu0 0
      %7180 = vmatpush2.bf16.msra.mxu0 0
      %7181 = vmatprep.mubr.bf16.mxu0 0
      %7182 = vmatmul.mubr.bf16.gmra.mxu0 %v7147
      %v7183 = vpop.f32.mrf.mxu0
      %v7184 = vadd.f32 %v7144, %v7183
      %v7185 = vpop.f32.mrf.mxu0
      %v7186 = vpop.f32.mrf.mxu0
      %v7187 = vadd.f32 %v7144, %v7186
      %v7188 = vpop.f32.mrf.mxu0
      %7189 = vdwg.mxu0
      %v7190 = vmax.f32 %v7184, 0.0
      %v7191 = vmax.f32 %v7187, 0.0
      %v7192 = vpack.c.bf16 %v7191, %v7190
      %v7193 = vpack.c.bf16 %v7118, %v7117
      %v7194 = vpack.c.bf16 %v7120, %v7119
      %v7195 = vpack.c.bf16 %v7122, %v7121
      %v7196 = vpack.c.bf16 %v7124, %v7123
      %v7197 = vpack.c.bf16 %v7126, %v7125
      %v7198 = vpack.c.bf16 %v7128, %v7127
      %v7199 = vpack.c.bf16 %v7130, %v7129
      %v7200 = vpack.c.bf16 %v7132, %v7131
      %v7202 = vlaneseq
      %v7203 = vshrl.u32 %v7202, 7
      %v7204 = vsub.s32 0, %v7203
      %v7205 = vrot.slane %v7134, %v7204
      %7207 = vmatprep.subr.bf16.mxu0 0
      %7208 = vmatpush1.bf16.msra.mxu0 %v7200
      %7209 = vmatprep.subr.bf16.mxu0 0
      %7210 = vmatpush1.bf16.msra.mxu0 %v7199
      %7211 = vmatprep.subr.bf16.mxu0 0
      %7212 = vmatpush1.bf16.msra.mxu0 %v7198
      %7213 = vmatprep.subr.bf16.mxu0 0
      %7214 = vmatpush1.bf16.msra.mxu0 %v7197
      %7215 = vmatprep.subr.bf16.mxu0 0
      %7216 = vmatpush1.bf16.msra.mxu0 %v7196
      %7217 = vmatprep.subr.bf16.mxu0 0
      %7218 = vmatpush1.bf16.msra.mxu0 %v7195
      %7219 = vmatprep.subr.bf16.mxu0 0
      %7220 = vmatpush1.bf16.msra.mxu0 %v7194
      %7221 = vmatprep.subr.bf16.mxu0 0
      %7222 = vmatpush1.bf16.msra.mxu0 %v7193
      %7223 = vmatprep.subr.bf16.mxu0 0
      %7224 = vmatpush2.bf16.msra.mxu0 0
      %7225 = vmatprep.subr.bf16.mxu0 0
      %7226 = vmatpush2.bf16.msra.mxu0 0
      %7227 = vmatprep.subr.bf16.mxu0 0
      %7228 = vmatpush2.bf16.msra.mxu0 0
      %7229 = vmatprep.subr.bf16.mxu0 0
      %7230 = vmatpush2.bf16.msra.mxu0 0
      %7231 = vmatprep.subr.bf16.mxu0 0
      %7232 = vmatpush2.bf16.msra.mxu0 0
      %7233 = vmatprep.subr.bf16.mxu0 0
      %7234 = vmatpush2.bf16.msra.mxu0 0
      %7235 = vmatprep.subr.bf16.mxu0 0
      %7236 = vmatpush2.bf16.msra.mxu0 0
      %7237 = vmatprep.subr.bf16.mxu0 0
      %7238 = vmatpush2.bf16.msra.mxu0 0
      %7239 = vmatprep.mubr.bf16.mxu0 0
      %7240 = vmatmul.mubr.bf16.gmra.mxu0 %v7192
      %v7241 = vpop.f32.mrf.mxu0
      %v7242 = vadd.f32 %v7205, %v7241
      %v7243 = vpop.f32.mrf.mxu0
      %v7244 = vpop.f32.mrf.mxu0
      %v7245 = vadd.f32 %v7205, %v7244
      %v7246 = vpop.f32.mrf.mxu0
      %7247 = vdwg.mxu0
      %v7248 = vadd.f32 %v7242, %v7103
      %v7249 = vadd.f32 %v7245, %v7104
      %s7250 = scalar_lea.vmem %s69, 1
      %v7251 = vld [vmem:[%s7250] sm:$0x1]
      %s7252 = scalar_lea.vmem %s71, 1
      %v7253 = vld [vmem:[%s7252] sm:$0x1]
      %v7254 = vsel %vm1539, %v7248, 0.0
      %7255 = vadd.xlane.f32.xlu0 %v7254
      %v7256 = vpop.xlane.xlu0 %7255
      %v7257 = vsel %vm1539, %v7249, 0.0
      %7258 = vadd.xlane.f32.xlu0 %v7257
      %v7259 = vpop.xlane.xlu0 %7258
      %v7260 = vmul.f32 %v7256, %v2495
      %v7261 = vmul.f32 %v7259, %v2495
      %v7262 = vsub.f32 %v7248, %v7260
      %v7263 = vsub.f32 %v7249, %v7261
      %v7264 = vmul.f32 %v7262, %v7262
      %v7265 = vmul.f32 %v7263, %v7263
      %v7266 = vsel %vm1539, %v7264, 0.0
      %7267 = vadd.xlane.f32.xlu0 %v7266
      %v7268 = vpop.xlane.xlu0 %7267
      %v7269 = vsel %vm1539, %v7265, 0.0
      %7270 = vadd.xlane.f32.xlu0 %v7269
      %v7271 = vpop.xlane.xlu0 %7270
      %v7272 = vmul.f32 %v7268, 0.015873017
      %v7273 = vmul.f32 %v7271, 0.015873017
      %v7274 = vrsqrt.pop %v7272
      %v7275 = vmul.f32 %v7272, %v7274
      %vm7276 = vcmp.eq.f32.partialorder %v7272, inf
      %v7277 = vsel %vm7276, %v7272, %v7275
      %vm7278 = vcmp.eq.f32.partialorder %v7272, 0.0
      %v7279 = vand.u32 %v7272, 2147483648
      %v7280 = vsel %vm7278, %v7279, %v7277
      %v7281 = vrsqrt.pop %v7273
      %v7282 = vmul.f32 %v7273, %v7281
      %vm7283 = vcmp.eq.f32.partialorder %v7273, inf
      %v7284 = vsel %vm7283, %v7273, %v7282
      %vm7285 = vcmp.eq.f32.partialorder %v7273, 0.0
      %v7286 = vand.u32 %v7273, 2147483648
      %v7287 = vsel %vm7285, %v7286, %v7284
      %v7288 = vadd.f32 %v7280, 0.001
      %v7289 = vadd.f32 %v7287, 0.001
      %v7290 = vrcp.pop %v7288
      %v7291 = vmul.f32 %v7262, %v7290
      %v7292 = vrcp.pop %v7289
      %v7293 = vmul.f32 %v7263, %v7292
      %v7295 = vlaneseq
      %v7296 = vshrl.u32 %v7295, 7
      %v7297 = vsub.s32 0, %v7296
      %v7298 = vrot.slane %v7251, %v7297
      %v7300 = vmul.f32 %v7291, %v7298
      %v7301 = vmul.f32 %v7293, %v7298
      %v7303 = vlaneseq
      %v7304 = vshrl.u32 %v7303, 7
      %v7305 = vsub.s32 0, %v7304
      %v7306 = vrot.slane %v7253, %v7305
      %v7308 = vadd.f32 %v7300, %v7306
      %v7309 = vadd.f32 %v7301, %v7306
      %v7310 = vld [vmem:[%s85] sm:$0xff]
      %v7311 = vld [vmem:[%s85 + $0x8] sm:$0xff]
      %v7312 = vld [vmem:[%s85 + $0x10] sm:$0xff]
      %v7313 = vld [vmem:[%s85 + $0x18] sm:$0xff]
      %v7314 = vld [vmem:[%s85 + $0x20] sm:$0xff]
      %v7315 = vld [vmem:[%s85 + $0x28] sm:$0xff]
      %v7316 = vld [vmem:[%s85 + $0x30] sm:$0xff]
      %v7317 = vld [vmem:[%s85 + $0x38] sm:$0xff]
      %v7318 = vld [vmem:[%s87] sm:$0x1]
      %v7319 = vld [vmem:[%s89] sm:$0x1]
      %v7320 = vld [vmem:[%s91] sm:$0x1]
      %v7321 = vld [vmem:[%s93] sm:$0xff]
      %v7322 = vld [vmem:[%s93 + $0x8] sm:$0xff]
      %v7323 = vld [vmem:[%s93 + $0x10] sm:$0xff]
      %v7324 = vld [vmem:[%s93 + $0x18] sm:$0xff]
      %v7325 = vld [vmem:[%s93 + $0x20] sm:$0xff]
      %v7326 = vld [vmem:[%s93 + $0x28] sm:$0xff]
      %v7327 = vld [vmem:[%s93 + $0x30] sm:$0xff]
      %v7328 = vld [vmem:[%s93 + $0x38] sm:$0xff]
      %v7329 = vld [vmem:[%s95] sm:$0x1]
      %v7330 = vpack.c.bf16 %v7309, %v7308
      %v7331 = vpack.c.bf16 %v7311, %v7310
      %v7332 = vpack.c.bf16 %v7313, %v7312
      %v7333 = vpack.c.bf16 %v7315, %v7314
      %v7334 = vpack.c.bf16 %v7317, %v7316
      %v7336 = vlaneseq
      %v7337 = vshrl.u32 %v7336, 7
      %v7338 = vsub.s32 0, %v7337
      %v7339 = vrot.slane %v7318, %v7338
      %v7342 = vsel %vm1539, %v7330, 0
      %7344 = vmatprep.subr.bf16.mxu0 0
      %7345 = vmatpush1.bf16.msra.mxu0 0
      %7346 = vmatprep.subr.bf16.mxu0 0
      %7347 = vmatpush1.bf16.msra.mxu0 0
      %7348 = vmatprep.subr.bf16.mxu0 0
      %7349 = vmatpush1.bf16.msra.mxu0 0
      %7350 = vmatprep.subr.bf16.mxu0 0
      %7351 = vmatpush1.bf16.msra.mxu0 0
      %7352 = vmatprep.subr.bf16.mxu0 0
      %7353 = vmatpush1.bf16.msra.mxu0 %v7334
      %7354 = vmatprep.subr.bf16.mxu0 0
      %7355 = vmatpush1.bf16.msra.mxu0 %v7333
      %7356 = vmatprep.subr.bf16.mxu0 0
      %7357 = vmatpush1.bf16.msra.mxu0 %v7332
      %7358 = vmatprep.subr.bf16.mxu0 0
      %7359 = vmatpush1.bf16.msra.mxu0 %v7331
      %7360 = vmatprep.subr.bf16.mxu0 0
      %7361 = vmatpush2.bf16.msra.mxu0 0
      %7362 = vmatprep.subr.bf16.mxu0 0
      %7363 = vmatpush2.bf16.msra.mxu0 0
      %7364 = vmatprep.subr.bf16.mxu0 0
      %7365 = vmatpush2.bf16.msra.mxu0 0
      %7366 = vmatprep.subr.bf16.mxu0 0
      %7367 = vmatpush2.bf16.msra.mxu0 0
      %7368 = vmatprep.subr.bf16.mxu0 0
      %7369 = vmatpush2.bf16.msra.mxu0 0
      %7370 = vmatprep.subr.bf16.mxu0 0
      %7371 = vmatpush2.bf16.msra.mxu0 0
      %7372 = vmatprep.subr.bf16.mxu0 0
      %7373 = vmatpush2.bf16.msra.mxu0 0
      %7374 = vmatprep.subr.bf16.mxu0 0
      %7375 = vmatpush2.bf16.msra.mxu0 0
      %7376 = vmatprep.mubr.bf16.mxu0 0
      %7377 = vmatmul.mubr.bf16.gmra.mxu0 %v7342
      %v7378 = vpop.f32.mrf.mxu0
      %v7379 = vadd.f32 %v7339, %v7378
      %v7380 = vpop.f32.mrf.mxu0
      %v7381 = vpop.f32.mrf.mxu0
      %v7382 = vadd.f32 %v7339, %v7381
      %v7383 = vpop.f32.mrf.mxu0
      %7384 = vdwg.mxu0
      %v7385 = vmax.f32 %v7379, 0.0
      %v7386 = vmax.f32 %v7382, 0.0
      %v7387 = vsel %vm1539, %v7385, 0.0
      %7388 = vadd.xlane.f32.xlu0 %v7387
      %v7389 = vpop.xlane.xlu0 %7388
      %v7390 = vsel %vm1539, %v7386, 0.0
      %7391 = vadd.xlane.f32.xlu0 %v7390
      %v7392 = vpop.xlane.xlu0 %7391
      %v7393 = vmul.f32 %v7389, %v2495
      %v7394 = vmul.f32 %v7392, %v2495
      %v7395 = vsub.f32 %v7385, %v7393
      %v7396 = vsub.f32 %v7386, %v7394
      %v7397 = vmul.f32 %v7395, %v7395
      %v7398 = vmul.f32 %v7396, %v7396
      %v7399 = vsel %vm1539, %v7397, 0.0
      %7400 = vadd.xlane.f32.xlu0 %v7399
      %v7401 = vpop.xlane.xlu0 %7400
      %v7402 = vsel %vm1539, %v7398, 0.0
      %7403 = vadd.xlane.f32.xlu0 %v7402
      %v7404 = vpop.xlane.xlu0 %7403
      %v7405 = vmul.f32 %v7401, 0.015873017
      %v7406 = vmul.f32 %v7404, 0.015873017
      %v7407 = vrsqrt.pop %v7405
      %v7408 = vmul.f32 %v7405, %v7407
      %vm7409 = vcmp.eq.f32.partialorder %v7405, inf
      %v7410 = vsel %vm7409, %v7405, %v7408
      %vm7411 = vcmp.eq.f32.partialorder %v7405, 0.0
      %v7412 = vand.u32 %v7405, 2147483648
      %v7413 = vsel %vm7411, %v7412, %v7410
      %v7414 = vrsqrt.pop %v7406
      %v7415 = vmul.f32 %v7406, %v7414
      %vm7416 = vcmp.eq.f32.partialorder %v7406, inf
      %v7417 = vsel %vm7416, %v7406, %v7415
      %vm7418 = vcmp.eq.f32.partialorder %v7406, 0.0
      %v7419 = vand.u32 %v7406, 2147483648
      %v7420 = vsel %vm7418, %v7419, %v7417
      %v7421 = vadd.f32 %v7413, 0.001
      %v7422 = vadd.f32 %v7420, 0.001
      %v7423 = vrcp.pop %v7421
      %v7424 = vmul.f32 %v7395, %v7423
      %v7425 = vrcp.pop %v7422
      %v7426 = vmul.f32 %v7396, %v7425
      %v7428 = vlaneseq
      %v7429 = vshrl.u32 %v7428, 7
      %v7430 = vsub.s32 0, %v7429
      %v7431 = vrot.slane %v7319, %v7430
      %v7433 = vmul.f32 %v7424, %v7431
      %v7434 = vmul.f32 %v7426, %v7431
      %v7436 = vlaneseq
      %v7437 = vshrl.u32 %v7436, 7
      %v7438 = vsub.s32 0, %v7437
      %v7439 = vrot.slane %v7320, %v7438
      %v7441 = vadd.f32 %v7433, %v7439
      %v7442 = vadd.f32 %v7434, %v7439
      %v7443 = vpack.c.bf16 %v7442, %v7441
      %v7444 = vpack.c.bf16 %v7322, %v7321
      %v7445 = vpack.c.bf16 %v7324, %v7323
      %v7446 = vpack.c.bf16 %v7326, %v7325
      %v7447 = vpack.c.bf16 %v7328, %v7327
      %v7449 = vlaneseq
      %v7450 = vshrl.u32 %v7449, 7
      %v7451 = vsub.s32 0, %v7450
      %v7452 = vrot.slane %v7329, %v7451
      %v7455 = vsel %vm1539, %v7443, 0
      %7457 = vmatprep.subr.bf16.mxu0 0
      %7458 = vmatpush1.bf16.msra.mxu0 0
      %7459 = vmatprep.subr.bf16.mxu0 0
      %7460 = vmatpush1.bf16.msra.mxu0 0
      %7461 = vmatprep.subr.bf16.mxu0 0
      %7462 = vmatpush1.bf16.msra.mxu0 0
      %7463 = vmatprep.subr.bf16.mxu0 0
      %7464 = vmatpush1.bf16.msra.mxu0 0
      %7465 = vmatprep.subr.bf16.mxu0 0
      %7466 = vmatpush1.bf16.msra.mxu0 %v7447
      %7467 = vmatprep.subr.bf16.mxu0 0
      %7468 = vmatpush1.bf16.msra.mxu0 %v7446
      %7469 = vmatprep.subr.bf16.mxu0 0
      %7470 = vmatpush1.bf16.msra.mxu0 %v7445
      %7471 = vmatprep.subr.bf16.mxu0 0
      %7472 = vmatpush1.bf16.msra.mxu0 %v7444
      %7473 = vmatprep.subr.bf16.mxu0 0
      %7474 = vmatpush2.bf16.msra.mxu0 0
      %7475 = vmatprep.subr.bf16.mxu0 0
      %7476 = vmatpush2.bf16.msra.mxu0 0
      %7477 = vmatprep.subr.bf16.mxu0 0
      %7478 = vmatpush2.bf16.msra.mxu0 0
      %7479 = vmatprep.subr.bf16.mxu0 0
      %7480 = vmatpush2.bf16.msra.mxu0 0
      %7481 = vmatprep.subr.bf16.mxu0 0
      %7482 = vmatpush2.bf16.msra.mxu0 0
      %7483 = vmatprep.subr.bf16.mxu0 0
      %7484 = vmatpush2.bf16.msra.mxu0 0
      %7485 = vmatprep.subr.bf16.mxu0 0
      %7486 = vmatpush2.bf16.msra.mxu0 0
      %7487 = vmatprep.subr.bf16.mxu0 0
      %7488 = vmatpush2.bf16.msra.mxu0 0
      %7489 = vmatprep.mubr.bf16.mxu0 0
      %7490 = vmatmul.mubr.bf16.gmra.mxu0 %v7455
      %v7491 = vpop.f32.mrf.mxu0
      %v7492 = vadd.f32 %v7452, %v7491
      %v7493 = vpop.f32.mrf.mxu0
      %v7494 = vpop.f32.mrf.mxu0
      %v7495 = vadd.f32 %v7452, %v7494
      %v7496 = vpop.f32.mrf.mxu0
      %7497 = vdwg.mxu0
      %7498 = vst [vmem:[%s1497] sm:$0xff] %v7492
      %7499 = vst [vmem:[%s1497 + $0x8] sm:$0xff] %v7495
      %p7500 = scmp.lt.s32.totalorder %s111, 1
      %s7501 = scalar_select %p7500, %s111, 1
      %s7502 = smul.addr %s7501, 8
      %s7503 = scalar_lea.vmem %s97, %s7502
      %s7504 = smul.u32 2, %s111
      %p7505 = scmp.lt.s32.totalorder %s7504, 3
      %s7506 = scalar_select %p7505, %s7504, 3
      %s7507 = smul.addr %s7506, 8
      %s7508 = scalar_lea.vmem %s99, %s7507
      // Predicated region
      $region213: #{forward.1} parent=211 // pred_check
        %p7509 = pneg %p1147
      $region214: #{forward.1} parent=211 // pred_check_branch
        %7511 = sbr.rel (%p7509) target = $region216
      $region215: #{forward.1} parent=211 // pred_region
        _
      $region216: #{forward.1} parent=211 // pred_fallthru
        _
      // Predicated region
      $region217: #{forward.1} parent=211 // pred_check
        %p7512 = pneg %p1173
      $region218: #{forward.1} parent=211 // pred_check_branch
        %7514 = sbr.rel (%p7512) target = $region220
      $region219: #{forward.1} parent=211 // pred_region
        %s7515 = smul.u32 2, %s111
      $region220: #{forward.1} parent=211 // pred_fallthru
        _
    $region212: #{forward.1} parent=5 // pred_fallthru
      _
    %p7516 = scmp.le.s32.totalorder 2, %s106
    // Predicated region
    $region221: #{forward.1} parent=5 // pred_check
      %p7517 = pneg %p7516
    $region222: #{forward.1} parent=5 // pred_check_branch
      %7519 = sbr.rel (%p7517) target = $region224
    $region223: #{forward.1} parent=5 // pred_region
      %s7520 = ssub.s32 %s106, 2
      // Predicated region
      $region225: #{forward.1} parent=223 // pred_check
        %p7521 = pneg %p1153
      $region226: #{forward.1} parent=223 // pred_check_branch
        %7523 = sbr.rel (%p7521) target = $region228
      $region227: #{forward.1} parent=223 // pred_region
        %p7524 = scmp.lt.s32.totalorder %s112, 1
        %s7525 = scalar_select %p7524, %s112, 1
        %s7526 = smul.addr %s7525, 8
        %s7527 = scalar_lea.vmem %s97, %s7526
      $region228: #{forward.1} parent=223 // pred_fallthru
        _
      // Predicated region
      $region229: #{forward.1} parent=223 // pred_check
        %p7528 = pneg %p1179
      $region230: #{forward.1} parent=223 // pred_check_branch
        %7530 = sbr.rel (%p7528) target = $region232
      $region231: #{forward.1} parent=223 // pred_region
        %s7531 = smul.u32 2, %s112
        %p7532 = scmp.lt.s32.totalorder %s7531, 3
        %s7533 = scalar_select %p7532, %s7531, 3
        %s7534 = smul.addr %s7533, 8
        %s7535 = scalar_lea.vmem %s99, %s7534
      $region232: #{forward.1} parent=223 // pred_fallthru
        _
    $region224: #{forward.1} parent=5 // pred_fallthru
      _
  $region6: #{forward.1} parent=0 // loop_footer
    %s110 = sadd.s32 1, %s106
  $region7: #{forward.1} parent=0 // loop_footer_branch
    %105 = sbr.rel target = $region3
  $region8: #{forward.1} parent=0 // loop_exit
    _

</llo_original>
